<compile_context>
chip_gen: v5e
topology: v5e:2x2
jax: 0.10.0
libtpu: 0.0.40
codegen_flags: <defaults>
</compile_context>

<pallas_src>
from functools import partial

import jax
import jax.numpy as jnp
from jax.experimental import pallas as pl
from jax.experimental.pallas import tpu as pltpu


def make_inv_freq(channels):
    """Mirror of the module __init__ buffer: 1 / 1e9 ** (arange(0, C, 2) / C)."""
    return (1.0 / (1e9 ** (jnp.arange(0, channels, 2, dtype=jnp.float32)
                           / channels))).astype(jnp.float32)


def _posemb_kernel(strt_ref, ends_ref, invf_ref, phase_ref, base_ref, o_ref):
    """One grid step == one (batch row, siz-block).  Writes o_ref[0] : (tS, C)."""
    b = pl.program_id(0)
    s = strt_ref[b]                       # scalar reads from SMEM
    e = ends_ref[b]
    # pos[k]    = s + (e - s) * k / (siz - 1)              (torch.linspace)
    # ang[k, j] = pos[k] * inv_freq2[j]
    #           = s * inv_freq2[j] + (e - s) * base[k, j]
    # emb       = sin(ang + phase)   -> sin lanes (phase 0) | cos lanes (phase pi/2)
    ang = s * invf_ref[...] + (e - s) * base_ref[...] + phase_ref[...]
    o_ref[0] = jnp.sin(ang)               # single full-width lane-dense store


def positional_embedding(tensor, chrms, strt, ends, inv_freq, *, siz=1001):
    """JAX/Pallas equivalent of PositionalEmbedding.forward.

    tensor   : (B, ...)   only B = tensor.shape[0] is used (as in the reference)
    chrms    : unused by the reference forward (kept for signature parity)
    strt     : (B, >=1)   column 0 is the per-row start coordinate
    ends     : (B, >=1)   column 0 is the per-row end coordinate
    inv_freq : (C/2,)     registered buffer
    returns  : (B, siz, C) float32
    """
    del chrms  # unused, exactly as in the PyTorch forward
    bs = tensor.shape[0]
    half = inv_freq.shape[0]
    channels = 2 * half

    strt0 = strt[:, 0].astype(jnp.float32)               # (B,) scalars -> SMEM
    ends0 = ends[:, 0].astype(jnp.float32)

    invf2 = jnp.concatenate([inv_freq, inv_freq]).reshape(1, channels).astype(jnp.float32)
    phase = jnp.concatenate(
        [jnp.zeros((half,), jnp.float32),
         jnp.full((half,), jnp.float32(jnp.pi / 2.0), jnp.float32)]
    ).reshape(1, channels)

    # Batch-invariant base[k, j] = (k / (siz - 1)) * inv_freq2[j].
    denom = max(siz - 1, 1)                               # guard siz == 1
    frac = (jnp.arange(siz, dtype=jnp.float32) / jnp.float32(denom)).reshape(siz, 1)
    base = frac * invf2                                   # (siz, channels)

    # Small batch: also shard siz so both v7x TensorCores get work.
    if bs < 4 and siz > 512:
        siz_block = 512
    else:
        siz_block = siz
    n_sblk = pl.cdiv(siz, siz_block)

    # Pad base so input blocks never read out of bounds (output tail is masked).
    pad_rows = n_sblk * siz_block - siz
    if pad_rows:
        base = jnp.concatenate(
            [base, jnp.zeros((pad_rows, channels), jnp.float32)], axis=0)

    ce = pl.CostEstimate(
        flops=4 * bs * siz * channels,
        transcendentals=bs * siz * channels,
        bytes_accessed=4 * (bs * siz * channels + siz * channels),
    )

    return pl.pallas_call(
        _posemb_kernel,
        out_shape=jax.ShapeDtypeStruct((bs, siz, channels), jnp.float32),
        grid=(bs, n_sblk),
        in_specs=[
            pl.BlockSpec(memory_space=pltpu.MemorySpace.SMEM),          # strt0 (B,)
            pl.BlockSpec(memory_space=pltpu.MemorySpace.SMEM),          # ends0 (B,)
            pl.BlockSpec((1, channels), lambda b, s: (0, 0)),           # inv_freq x2
            pl.BlockSpec((1, channels), lambda b, s: (0, 0)),           # phase
            pl.BlockSpec((siz_block, channels), lambda b, s: (s, 0)),   # base
        ],
        out_specs=pl.BlockSpec((1, siz_block, channels), lambda b, s: (b, s, 0)),
        compiler_params=pltpu.CompilerParams(
            dimension_semantics=("parallel", "parallel")),
        cost_estimate=ce,
    )(strt0, ends0, invf2, phase, base)


if __name__ == "__main__":
    bs, channels, siz = 2, 128, 1001       # siz is hardcoded to 1001 in the reference
    half = channels // 2

    key = jax.random.PRNGKey(0)
    tensor = jax.random.normal(key, (bs, siz, channels), dtype=jnp.float32)
    chrms = jnp.array([[5.0], [12.0]], jnp.float32)
    strt = jnp.array([[1000.0], [2000.0]], jnp.float32)
    ends = jnp.array([[1500.0], [2600.0]], jnp.float32)
    inv_freq = make_inv_freq(channels)

    fwd = jax.jit(partial(positional_embedding, siz=siz))
    emb = fwd(tensor, chrms, strt, ends, inv_freq)
    jax.block_until_ready(emb)

    # Plain-JAX reference mirroring the PyTorch math (linspace -> outer -> sin|cos).
    kk = jnp.arange(siz, dtype=jnp.float32)[None, :] / jnp.float32(siz - 1)
    pos = strt[:, 0:1] + (ends[:, 0:1] - strt[:, 0:1]) * kk            # (B, siz)
    sin_inp = pos[:, :, None] * inv_freq[None, None, :]                # (B, siz, C/2)
    expect = jnp.concatenate([jnp.sin(sin_inp), jnp.cos(sin_inp)], axis=-1)

    assert emb.shape == (bs, siz, channels) and emb.dtype == jnp.float32
    # Tolerance covers the (documented) sin(x + pi/2) rewrite and the
    # reassociated angle (s*invf + (e-s)*base); both are a few f32 ulps of the
    # angle (|pos| <= ~2600 here), i.e. ~1e-3 worst case.
    assert bool(jnp.allclose(emb, expect, atol=3e-3, rtol=3e-3)), \
        float(jnp.max(jnp.abs(emb - expect)))
    print("KERNEL_OK")
</pallas_src>

<mosaic_0001>
module attributes {stable_mosaic.version = 11 : i64} {
  func.func @_posemb_kernel(%arg0: i32, %arg1: i32, %arg2: memref<2xf32, #tpu.memory_space<smem>>, %arg3: memref<2xf32, #tpu.memory_space<smem>>, %arg4: memref<1x128xf32, #tpu.memory_space<vmem>>, %arg5: memref<1x128xf32, #tpu.memory_space<vmem>>, %arg6: memref<512x128xf32, #tpu.memory_space<vmem>>, %arg7: memref<1x512x128xf32, #tpu.memory_space<vmem>>) attributes {dimension_semantics = [#tpu.dimension_semantics<parallel>, #tpu.dimension_semantics<parallel>], iteration_bounds = array<i64: 2, 2>, scalar_prefetch = 0 : i64, scratch_operands = 0 : i64, tpu.core_type = #tpu.core_type<tc>, window_params = [{transform_indices = @transform_0, window_bounds = array<i64: 2>}, {transform_indices = @transform_1, window_bounds = array<i64: 2>}, {pipeline_mode = #tpu.pipeline_mode<synchronous>, transform_indices = @transform_2, window_bounds = array<i64: 1, 128>}, {pipeline_mode = #tpu.pipeline_mode<synchronous>, transform_indices = @transform_3, window_bounds = array<i64: 1, 128>}, {transform_indices = @transform_4, window_bounds = array<i64: 512, 128>}, {transform_indices = @transform_5, window_bounds = array<i64: 1, 512, 128>}]} {
    %0 = arith.index_cast %arg0 : i32 to index
    %1 = memref.load %arg2[%0] : memref<2xf32, #tpu.memory_space<smem>>
    %2 = arith.index_cast %arg0 : i32 to index
    %3 = memref.load %arg3[%2] : memref<2xf32, #tpu.memory_space<smem>>
    %c0 = arith.constant 0 : index
    %c0_0 = arith.constant 0 : index
    %4 = vector.load %arg4[%c0, %c0_0] : memref<1x128xf32, #tpu.memory_space<vmem>>, vector<1x128xf32>
    %5 = vector.broadcast %1 : f32 to vector<1x128xf32>
    %6 = arith.mulf %5, %4 : vector<1x128xf32>
    %7 = arith.subf %3, %1 : f32
    %c0_1 = arith.constant 0 : index
    %c0_2 = arith.constant 0 : index
    %8 = vector.load %arg6[%c0_1, %c0_2] : memref<512x128xf32, #tpu.memory_space<vmem>>, vector<512x128xf32>
    %9 = vector.broadcast %7 : f32 to vector<512x128xf32>
    %10 = arith.mulf %9, %8 : vector<512x128xf32>
    %11 = vector.broadcast %6 : vector<1x128xf32> to vector<512x128xf32>
    %12 = arith.addf %11, %10 : vector<512x128xf32>
    %c0_3 = arith.constant 0 : index
    %c0_4 = arith.constant 0 : index
    %13 = vector.load %arg5[%c0_3, %c0_4] : memref<1x128xf32, #tpu.memory_space<vmem>>, vector<1x128xf32>
    %14 = vector.broadcast %13 : vector<1x128xf32> to vector<512x128xf32>
    %15 = arith.addf %12, %14 : vector<512x128xf32>
    %16 = math.sin %15 : vector<512x128xf32>
    %c0_5 = arith.constant 0 : index
    %c0_6 = arith.constant 0 : index
    %c0_7 = arith.constant 0 : index
    %17 = vector.load %arg7[%c0_5, %c0_6, %c0_7] : memref<1x512x128xf32, #tpu.memory_space<vmem>>, vector<1x512x128xf32>
    %18 = vector.shape_cast %17 : vector<1x512x128xf32> to vector<512x128xf32>
    %19 = vector.shape_cast %16 : vector<512x128xf32> to vector<1x512x128xf32>
    tpu.vector_store %arg7[%c0_5, %c0_6, %c0_7], %19 {strides = array<i32>} : memref<1x512x128xf32, #tpu.memory_space<vmem>>, vector<1x512x128xf32>,
    return
  }
  func.func @transform_0(%arg0: i32, %arg1: i32) -> i32 {
    %c0_i32 = arith.constant 0 : i32
    %c0_i32_0 = arith.constant 0 : i32
    return %c0_i32 : i32
  }
  func.func @transform_1(%arg0: i32, %arg1: i32) -> i32 {
    %c0_i32 = arith.constant 0 : i32
    %c0_i32_0 = arith.constant 0 : i32
    return %c0_i32 : i32
  }
  func.func @transform_2(%arg0: i32, %arg1: i32) -> (i32, i32) {
    %c0_i32 = arith.constant 0 : i32
    %c0_i32_0 = arith.constant 0 : i32
    %c0_i32_1 = arith.constant 0 : i32
    return %c0_i32, %c0_i32_0 : i32, i32
  }
  func.func @transform_3(%arg0: i32, %arg1: i32) -> (i32, i32) {
    %c0_i32 = arith.constant 0 : i32
    %c0_i32_0 = arith.constant 0 : i32
    %c0_i32_1 = arith.constant 0 : i32
    return %c0_i32, %c0_i32_0 : i32, i32
  }
  func.func @transform_4(%arg0: i32, %arg1: i32) -> (i32, i32) {
    %c0_i32 = arith.constant 0 : i32
    %c0_i32_0 = arith.constant 0 : i32
    return %arg1, %c0_i32 : i32, i32
  }
  func.func @transform_5(%arg0: i32, %arg1: i32) -> (i32, i32, i32) {
    %c0_i32 = arith.constant 0 : i32
    %c0_i32_0 = arith.constant 0 : i32
    return %arg0, %arg1, %c0_i32 : i32, i32, i32
  }
}

</mosaic_0001>

<llo_original>
// kernel: positional_embedding.1
$region0: #{positional_embedding.1}
  #allocation0 [shape = 'u32[]', space=smem, size = 0x4, offset = 0x4, fixed_abs, tag = 'smem constant byte address 0x4 - core index']
  #allocation1 [shape = 'u32[72,128]{1,0:T(1,128)}', space=vmem, size = 0x9000, scoped, tag = 'internal scratch']
  %s0 = inlined_call_operand.vmem [shape: f32[2], index: 0, kind: input, shape index: {}]
  %s1 = inlined_call_operand.vmem [shape: f32[2], index: 1, kind: input, shape index: {}]
  %s2 = inlined_call_operand.vmem [shape: f32[1,128], index: 2, kind: input, shape index: {}]
  %s3 = inlined_call_operand.vmem [shape: f32[1,128], index: 3, kind: input, shape index: {}]
  %s4 = inlined_call_operand.vmem [shape: f32[1024,128], index: 4, kind: input, shape index: {}]
  %s5 = inlined_call_operand.vmem [shape: f32[2,1001,128], index: 5, kind: output, shape index: {}]
  %s6 = sld [smem:[#allocation0]]
  $region109: #{positional_embedding.1} parent=0
    _
  %s8 = ssub.s32 1, %s6
  %s9 = scalar_select 0, %s8, %s6
  $region1: #{positional_embedding.1} parent=0
    #allocation2 [shape = 'u8[512]{0}', space=smem, size = 0x200, scoped, tag = 'input window, operand 0, single buffered']
    #allocation3 [shape = 's32[2]{0}', space=sflag, size = 0x8, scoped, tag = 'scoped memory for positional_embedding.1']
    #allocation4 [shape = 'u8[512]{0}', space=smem, size = 0x200, scoped, tag = 'input window, operand 1, single buffered']
    #allocation5 [shape = 's32[1]{0}', space=sflag, size = 0x4, scoped, tag = 'scoped memory for positional_embedding.1']
    #allocation6 [shape = 'u8[524288]{0}', space=vmem, size = 0x80000, scoped, tag = 'output window, operand 0']
    %10 = vsyncpa [#allocation3], 0
    %11 = vsyncpa [#allocation5], 0
    loop: start=0, step=1, limit=6
    $region2: #{positional_embedding.1} parent=1 // loop_pre_header
      _
    $region3: #{positional_embedding.1} parent=1 // loop_header
      %s13 = sphi 0, %s17
      %p14 = scmp.ge.s32.totalorder %s13, 6
      %s20 = sphi 0, %s32
      %s21 = sphi 0, %s28
      %s22 = sphi 0, %s20
      %s23 = sphi 0, %s21
      %s24 = sphi 0, %s22
      %s25 = sphi 0, %s23
      %s33 = sphi 0, %s33
      %s35 = sphi 0, %s33
      %s36 = sphi 0, %s35
      %s50 = sphi 0, %s36
      %s54 = sphi 0, %s54
      %s56 = sphi 0, %s54
      %s57 = sphi 0, %s56
      %s71 = sphi 0, %s57
      %s75 = sphi 0, %s75
      %s77 = sphi 0, %s75
      %s78 = sphi 0, %s77
      %s92 = sphi 0, %s78
      %s96 = sphi 0, %s96
      %s98 = sphi 0, %s96
      %s99 = sphi 0, %s98
      %s113 = sphi 0, %s99
      %s119 = sphi 0, %s121
      %s122 = sphi 0, %s119
      %s123 = sphi 0, %s122
      %s139 = sphi 0, %s123
      %s147 = sphi 0, %s149
      %s150 = sphi 0, %s147
      %s151 = sphi 0, %s150
      %s167 = sphi 0, %s151
    $region4: #{positional_embedding.1} parent=1 // loop_header_branch
      %16 = sbr.rel (%p14) target = $region8
    $region5: #{positional_embedding.1} parent=1 // loop_body
      %s18 = ssub.s32 %s13, 1
      %s19 = ssub.s32 %s13, 2
      %s26 = sadd.s32 1, %s21
      %p27 = scmp.ge.s32.totalorder %s26, 2
      %s28 = scalar_select %p27, 0, %s26
      %s29 = sadd.s32 1, %s20
      %s30 = scalar_select %p27, %s29, %s20
      %p31 = scmp.ge.s32.totalorder %s30, 2
      %s32 = scalar_select %p31, 0, %s30
      %s34 = sadd.s32 %s33, 1
      %p37 = scmp.eq.s32.totalorder %s13, 3
      %p38 = scmp.ne.s32.totalorder %s33, %s35
      %p39 = scmp.eq.s32.totalorder %s13, 0
      %p40 = por %p38, %p39
      %p41 = scmp.ne.s32.totalorder %s33, %s35
      %p42 = scmp.eq.s32.totalorder %s18, 3
      %p43 = por %p41, %p42
      %p44 = scmp.ne.s32.totalorder %s35, %s36
      %p45 = scmp.eq.s32.totalorder %s18, 0
      %p46 = por %p44, %p45
      %p47 = scmp.ne.s32.totalorder %s35, %s36
      %p48 = scmp.eq.s32.totalorder %s19, 3
      %p49 = por %p47, %p48
      %p51 = scmp.ne.s32.totalorder %s36, %s50
      %p52 = scmp.eq.s32.totalorder %s19, 0
      %p53 = por %p51, %p52
      %s55 = sadd.s32 %s54, 1
      %p58 = scmp.eq.s32.totalorder %s13, 3
      %p59 = scmp.ne.s32.totalorder %s54, %s56
      %p60 = scmp.eq.s32.totalorder %s13, 0
      %p61 = por %p59, %p60
      %p62 = scmp.ne.s32.totalorder %s54, %s56
      %p63 = scmp.eq.s32.totalorder %s18, 3
      %p64 = por %p62, %p63
      %p65 = scmp.ne.s32.totalorder %s56, %s57
      %p66 = scmp.eq.s32.totalorder %s18, 0
      %p67 = por %p65, %p66
      %p68 = scmp.ne.s32.totalorder %s56, %s57
      %p69 = scmp.eq.s32.totalorder %s19, 3
      %p70 = por %p68, %p69
      %p72 = scmp.ne.s32.totalorder %s57, %s71
      %p73 = scmp.eq.s32.totalorder %s19, 0
      %p74 = por %p72, %p73
      %s76 = sadd.s32 %s75, 1
      %p79 = scmp.eq.s32.totalorder %s13, 3
      %p80 = scmp.ne.s32.totalorder %s75, %s77
      %p81 = scmp.eq.s32.totalorder %s13, 0
      %p82 = por %p80, %p81
      %p83 = scmp.ne.s32.totalorder %s75, %s77
      %p84 = scmp.eq.s32.totalorder %s18, 3
      %p85 = por %p83, %p84
      %p86 = scmp.ne.s32.totalorder %s77, %s78
      %p87 = scmp.eq.s32.totalorder %s18, 0
      %p88 = por %p86, %p87
      %p89 = scmp.ne.s32.totalorder %s77, %s78
      %p90 = scmp.eq.s32.totalorder %s19, 3
      %p91 = por %p89, %p90
      %p93 = scmp.ne.s32.totalorder %s78, %s92
      %p94 = scmp.eq.s32.totalorder %s19, 0
      %p95 = por %p93, %p94
      %s97 = sadd.s32 %s96, 1
      %p100 = scmp.eq.s32.totalorder %s13, 3
      %p101 = scmp.ne.s32.totalorder %s96, %s98
      %p102 = scmp.eq.s32.totalorder %s13, 0
      %p103 = por %p101, %p102
      %p104 = scmp.ne.s32.totalorder %s96, %s98
      %p105 = scmp.eq.s32.totalorder %s18, 3
      %p106 = por %p104, %p105
      %p107 = scmp.ne.s32.totalorder %s98, %s99
      %p108 = scmp.eq.s32.totalorder %s18, 0
      %p109 = por %p107, %p108
      %p110 = scmp.ne.s32.totalorder %s98, %s99
      %p111 = scmp.eq.s32.totalorder %s19, 3
      %p112 = por %p110, %p111
      %p114 = scmp.ne.s32.totalorder %s99, %s113
      %p115 = scmp.eq.s32.totalorder %s19, 0
      %p116 = por %p114, %p115
      %s117 = ssub.s32 %s21, %s28
      %p118 = scmp.eq.s32.totalorder %s117, 0
      %s120 = sadd.s32 %s119, 1
      %s121 = scalar_select %p118, %s119, %s120
      %p124 = pneg %p118
      %p125 = scmp.eq.s32.totalorder %s13, 3
      %p126 = por %p124, %p125
      %p127 = scmp.ne.s32.totalorder %s119, %s122
      %p128 = scmp.eq.s32.totalorder %s13, 0
      %p129 = por %p127, %p128
      %p130 = scmp.ne.s32.totalorder %s119, %s122
      %p131 = scmp.eq.s32.totalorder %s18, 3
      %p132 = por %p130, %p131
      %p133 = scmp.ne.s32.totalorder %s122, %s123
      %p134 = scmp.eq.s32.totalorder %s18, 0
      %p135 = por %p133, %p134
      %p136 = scmp.ne.s32.totalorder %s122, %s123
      %p137 = scmp.eq.s32.totalorder %s19, 3
      %p138 = por %p136, %p137
      %p140 = scmp.ne.s32.totalorder %s123, %s139
      %p141 = scmp.eq.s32.totalorder %s19, 0
      %p142 = por %p140, %p141
      %s143 = ssub.s32 %s20, %s32
      %s144 = ssub.s32 %s21, %s28
      %s145 = sor.u32 %s143, %s144
      %p146 = scmp.eq.s32.totalorder %s145, 0
      %s148 = sadd.s32 %s147, 1
      %s149 = scalar_select %p146, %s147, %s148
      %p152 = pneg %p146
      %p153 = scmp.eq.s32.totalorder %s13, 3
      %p154 = por %p152, %p153
      %p155 = scmp.ne.s32.totalorder %s147, %s150
      %p156 = scmp.eq.s32.totalorder %s13, 0
      %p157 = por %p155, %p156
      %p158 = scmp.ne.s32.totalorder %s147, %s150
      %p159 = scmp.eq.s32.totalorder %s18, 3
      %p160 = por %p158, %p159
      %p161 = scmp.ne.s32.totalorder %s150, %s151
      %p162 = scmp.eq.s32.totalorder %s18, 0
      %p163 = por %p161, %p162
      %p164 = scmp.ne.s32.totalorder %s150, %s151
      %p165 = scmp.eq.s32.totalorder %s19, 3
      %p166 = por %p164, %p165
      %p168 = scmp.ne.s32.totalorder %s151, %s167
      %p169 = scmp.eq.s32.totalorder %s19, 0
      %p170 = por %p168, %p169
      %p171 = scmp.le.s32.totalorder 1, %s13
      %p172 = scmp.lt.s32.totalorder %s13, 5
      %p173 = pnand %p171, %p172
      %p174 = pneg %p173
      // Predicated region
      $region9: #{positional_embedding.1} parent=5 // pred_check
        _
      $region10: #{positional_embedding.1} parent=5 // pred_check_branch
        %176 = sbr.rel (%p173) target = $region12
      $region11: #{positional_embedding.1} parent=5 // pred_region
        %s177 = ssub.s32 %s13, 1
        // Predicated region
        $region13: #{positional_embedding.1} parent=11 // pred_check
          %p178 = pneg %p46
        $region14: #{positional_embedding.1} parent=11 // pred_check_branch
          %180 = sbr.rel (%p178) target = $region16
        $region15: #{positional_embedding.1} parent=11 // pred_region
          %182 = vsyncadd [#allocation3], 0
          %s184 = sshll.u32 %s0, 4
          %s185 = int_to_ptr.vmem [resolvable:$true] %s184
          %187 = dma.vmem_to_smem %s185, 16, [#allocation2], [#allocation3]
        $region16: #{positional_embedding.1} parent=11 // pred_fallthru
          _
        // Predicated region
        $region17: #{positional_embedding.1} parent=11 // pred_check
          %p188 = pneg %p67
        $region18: #{positional_embedding.1} parent=11 // pred_check_branch
          %190 = sbr.rel (%p188) target = $region20
        $region19: #{positional_embedding.1} parent=11 // pred_region
          %192 = vsyncadd [#allocation5], 0
          %s194 = sshll.u32 %s1, 4
          %s195 = int_to_ptr.vmem [resolvable:$true] %s194
          %197 = dma.vmem_to_smem %s195, 16, [#allocation4], [#allocation5]
        $region20: #{positional_embedding.1} parent=11 // pred_fallthru
          _
        // Predicated region
        $region21: #{positional_embedding.1} parent=11 // pred_check
          %p198 = pneg %p88
        $region22: #{positional_embedding.1} parent=11 // pred_check_branch
          %200 = sbr.rel (%p198) target = $region24
        $region23: #{positional_embedding.1} parent=11 // pred_region
          _
        $region24: #{positional_embedding.1} parent=11 // pred_fallthru
          _
        // Predicated region
        $region25: #{positional_embedding.1} parent=11 // pred_check
          %p201 = pneg %p109
        $region26: #{positional_embedding.1} parent=11 // pred_check_branch
          %203 = sbr.rel (%p201) target = $region28
        $region27: #{positional_embedding.1} parent=11 // pred_region
          _
        $region28: #{positional_embedding.1} parent=11 // pred_fallthru
          _
      $region12: #{positional_embedding.1} parent=5 // pred_fallthru
        _
      %p204 = scmp.lt.s32.totalorder %s13, 4
      // Predicated region
      $region29: #{positional_embedding.1} parent=5 // pred_check
        %p205 = pneg %p204
      $region30: #{positional_embedding.1} parent=5 // pred_check_branch
        %207 = sbr.rel (%p205) target = $region32
      $region31: #{positional_embedding.1} parent=5 // pred_region
        // Predicated region
        $region33: #{positional_embedding.1} parent=31 // pred_check
          %p208 = pneg %p129
        $region34: #{positional_embedding.1} parent=31 // pred_check_branch
          %210 = sbr.rel (%p208) target = $region36
        $region35: #{positional_embedding.1} parent=31 // pred_region
          %s211 = smul.u32 64, %s21
          %p212 = scmp.lt.s32.totalorder %s211, 127
          %s213 = scalar_select %p212, %s211, 127
          %s214 = smul.addr %s213, 8
          %s215 = scalar_lea.vmem %s4, %s214
          %s216 = smul.u32 64, %s21
        $region36: #{positional_embedding.1} parent=31 // pred_fallthru
          _
      $region32: #{positional_embedding.1} parent=5 // pred_fallthru
        _
      %p217 = scmp.le.s32.totalorder 1, %s13
      %p218 = scmp.lt.s32.totalorder %s13, 5
      %p219 = pnand %p217, %p218
      %p220 = pneg %p219
      // Predicated region
      $region37: #{positional_embedding.1} parent=5 // pred_check
        _
      $region38: #{positional_embedding.1} parent=5 // pred_check_branch
        %222 = sbr.rel (%p219) target = $region40
      $region39: #{positional_embedding.1} parent=5 // pred_region
        %s223 = ssub.s32 %s13, 1
        // Predicated region
        $region41: #{positional_embedding.1} parent=39 // pred_check
          %p224 = pneg %p46
        $region42: #{positional_embedding.1} parent=39 // pred_check_branch
          %226 = sbr.rel (%p224) target = $region44
        $region43: #{positional_embedding.1} parent=39 // pred_region
          %228 = dma.done [#allocation3], 16
        $region44: #{positional_embedding.1} parent=39 // pred_fallthru
          _
        // Predicated region
        $region45: #{positional_embedding.1} parent=39 // pred_check
          %p229 = pneg %p67
        $region46: #{positional_embedding.1} parent=39 // pred_check_branch
          %231 = sbr.rel (%p229) target = $region48
        $region47: #{positional_embedding.1} parent=39 // pred_region
          %233 = dma.done [#allocation5], 16
        $region48: #{positional_embedding.1} parent=39 // pred_fallthru
          _
        %234 = sfence
        %p235 = pneg %p46
        %p236 = pneg %p43
        %p237 = pneg %p67
        %p238 = pneg %p64
        %p239 = pneg %p88
        %p240 = pneg %p85
        %p241 = pneg %p109
        %p242 = pneg %p106
        %s243 = smul.u32 64, %s23
        %p244 = scmp.lt.s32.totalorder %s243, 127
        %s245 = scalar_select %p244, %s243, 127
        %s246 = smul.addr %s245, 8
        %s247 = scalar_lea.vmem %s4, %s246
        %p248 = pneg %p135
        %p249 = pneg %p132
        %p250 = pneg %p163
        %p251 = pneg %p160
        %s252 = sand.u32 %s150, 1
        %s253 = sand.u32 %s150, 1
        %s254 = smul.addr %s253, 512
        %s255 = scalar_lea.vmem [#allocation6], %s254
        %s256 = smul.u32 64, %s23
        %p257 = scmp.lt.s32.totalorder %s256, 127
        %s258 = scalar_select %p257, %s256, 127
        %s259 = smul.addr %s258, 8
        %s260 = scalar_lea.vmem %s4, %s259
        %s261 = smul.u32 64, %s23
        %s262 = smul.u32 64, %s23
        %s263 = ssub.s32 126, %s262
        %p264 = scmp.lt.s32.totalorder %s263, 64
        %s265 = scalar_select %p264, %s263, 64
        %s266 = smul.u32 8, %s265
        %s267 = sld [smem:[#allocation2 + %s22]]
        %s268 = sld [smem:[#allocation4 + %s22]]
        %v269 = vld [vmem:[%s2] sm:$0x1]
        %v270 = vstv %s267
        %v271 = vmul.f32 %v270, %v269
        %s272 = ssub.f32 %s268, %s267
        %v273 = vld [vmem:[%s260] sm:$0xff]
        %v274 = vld [vmem:[%s260 + $0x8] sm:$0xff]
        %v275 = vld [vmem:[%s260 + $0x10] sm:$0xff]
        %v276 = vld [vmem:[%s260 + $0x18] sm:$0xff]
        %v277 = vld [vmem:[%s260 + $0x20] sm:$0xff]
        %v278 = vld [vmem:[%s260 + $0x28] sm:$0xff]
        %v279 = vld [vmem:[%s260 + $0x30] sm:$0xff]
        %v280 = vld [vmem:[%s260 + $0x38] sm:$0xff]
        %v281 = vld [vmem:[%s260 + $0x40] sm:$0xff]
        %v282 = vld [vmem:[%s260 + $0x48] sm:$0xff]
        %v283 = vld [vmem:[%s260 + $0x50] sm:$0xff]
        %v284 = vld [vmem:[%s260 + $0x58] sm:$0xff]
        %v285 = vld [vmem:[%s260 + $0x60] sm:$0xff]
        %v286 = vld [vmem:[%s260 + $0x68] sm:$0xff]
        %v287 = vld [vmem:[%s260 + $0x70] sm:$0xff]
        %v288 = vld [vmem:[%s260 + $0x78] sm:$0xff]
        %v289 = vld [vmem:[%s260 + $0x80] sm:$0xff]
        %v290 = vld [vmem:[%s260 + $0x88] sm:$0xff]
        %v291 = vld [vmem:[%s260 + $0x90] sm:$0xff]
        %v292 = vld [vmem:[%s260 + $0x98] sm:$0xff]
        %v293 = vld [vmem:[%s260 + $0xa0] sm:$0xff]
        %v294 = vld [vmem:[%s260 + $0xa8] sm:$0xff]
        %v295 = vld [vmem:[%s260 + $0xb0] sm:$0xff]
        %v296 = vld [vmem:[%s260 + $0xb8] sm:$0xff]
        %v297 = vld [vmem:[%s260 + $0xc0] sm:$0xff]
        %v298 = vld [vmem:[%s260 + $0xc8] sm:$0xff]
        %v299 = vld [vmem:[%s260 + $0xd0] sm:$0xff]
        %v300 = vld [vmem:[%s260 + $0xd8] sm:$0xff]
        %v301 = vld [vmem:[%s260 + $0xe0] sm:$0xff]
        %v302 = vld [vmem:[%s260 + $0xe8] sm:$0xff]
        %v303 = vld [vmem:[%s260 + $0xf0] sm:$0xff]
        %v304 = vld [vmem:[%s260 + $0xf8] sm:$0xff]
        %v305 = vld [vmem:[%s260 + $0x100] sm:$0xff]
        %v306 = vld [vmem:[%s260 + $0x108] sm:$0xff]
        %v307 = vld [vmem:[%s260 + $0x110] sm:$0xff]
        %v308 = vld [vmem:[%s260 + $0x118] sm:$0xff]
        %v309 = vld [vmem:[%s260 + $0x120] sm:$0xff]
        %v310 = vld [vmem:[%s260 + $0x128] sm:$0xff]
        %v311 = vld [vmem:[%s260 + $0x130] sm:$0xff]
        %v312 = vld [vmem:[%s260 + $0x138] sm:$0xff]
        %v313 = vld [vmem:[%s260 + $0x140] sm:$0xff]
        %v314 = vld [vmem:[%s260 + $0x148] sm:$0xff]
        %v315 = vld [vmem:[%s260 + $0x150] sm:$0xff]
        %v316 = vld [vmem:[%s260 + $0x158] sm:$0xff]
        %v317 = vld [vmem:[%s260 + $0x160] sm:$0xff]
        %v318 = vld [vmem:[%s260 + $0x168] sm:$0xff]
        %v319 = vld [vmem:[%s260 + $0x170] sm:$0xff]
        %v320 = vld [vmem:[%s260 + $0x178] sm:$0xff]
        %v321 = vld [vmem:[%s260 + $0x180] sm:$0xff]
        %v322 = vld [vmem:[%s260 + $0x188] sm:$0xff]
        %v323 = vld [vmem:[%s260 + $0x190] sm:$0xff]
        %v324 = vld [vmem:[%s260 + $0x198] sm:$0xff]
        %v325 = vld [vmem:[%s260 + $0x1a0] sm:$0xff]
        %v326 = vld [vmem:[%s260 + $0x1a8] sm:$0xff]
        %v327 = vld [vmem:[%s260 + $0x1b0] sm:$0xff]
        %v328 = vld [vmem:[%s260 + $0x1b8] sm:$0xff]
        %v329 = vld [vmem:[%s260 + $0x1c0] sm:$0xff]
        %v330 = vld [vmem:[%s260 + $0x1c8] sm:$0xff]
        %v331 = vld [vmem:[%s260 + $0x1d0] sm:$0xff]
        %v332 = vld [vmem:[%s260 + $0x1d8] sm:$0xff]
        %v333 = vld [vmem:[%s260 + $0x1e0] sm:$0xff]
        %v334 = vld [vmem:[%s260 + $0x1e8] sm:$0xff]
        %v335 = vld [vmem:[%s260 + $0x1f0] sm:$0xff]
        %v336 = vld [vmem:[%s260 + $0x1f8] sm:$0xff]
        %v337 = vstv %s272
        %v338 = vmul.f32 %v337, %v273
        %v339 = vmul.f32 %v337, %v274
        %v340 = vmul.f32 %v337, %v275
        %v341 = vmul.f32 %v337, %v276
        %v342 = vmul.f32 %v337, %v277
        %v343 = vmul.f32 %v337, %v278
        %v344 = vmul.f32 %v337, %v279
        %v345 = vmul.f32 %v337, %v280
        %v346 = vmul.f32 %v337, %v281
        %v347 = vmul.f32 %v337, %v282
        %v348 = vmul.f32 %v337, %v283
        %v349 = vmul.f32 %v337, %v284
        %v350 = vmul.f32 %v337, %v285
        %v351 = vmul.f32 %v337, %v286
        %v352 = vmul.f32 %v337, %v287
        %v353 = vmul.f32 %v337, %v288
        %v354 = vmul.f32 %v337, %v289
        %v355 = vmul.f32 %v337, %v290
        %v356 = vmul.f32 %v337, %v291
        %v357 = vmul.f32 %v337, %v292
        %v358 = vmul.f32 %v337, %v293
        %v359 = vmul.f32 %v337, %v294
        %v360 = vmul.f32 %v337, %v295
        %v361 = vmul.f32 %v337, %v296
        %v362 = vmul.f32 %v337, %v297
        %v363 = vmul.f32 %v337, %v298
        %v364 = vmul.f32 %v337, %v299
        %v365 = vmul.f32 %v337, %v300
        %v366 = vmul.f32 %v337, %v301
        %v367 = vmul.f32 %v337, %v302
        %v368 = vmul.f32 %v337, %v303
        %v369 = vmul.f32 %v337, %v304
        %v370 = vmul.f32 %v337, %v305
        %v371 = vmul.f32 %v337, %v306
        %v372 = vmul.f32 %v337, %v307
        %v373 = vmul.f32 %v337, %v308
        %v374 = vmul.f32 %v337, %v309
        %v375 = vmul.f32 %v337, %v310
        %v376 = vmul.f32 %v337, %v311
        %v377 = vmul.f32 %v337, %v312
        %v378 = vmul.f32 %v337, %v313
        %v379 = vmul.f32 %v337, %v314
        %v380 = vmul.f32 %v337, %v315
        %v381 = vmul.f32 %v337, %v316
        %v382 = vmul.f32 %v337, %v317
        %v383 = vmul.f32 %v337, %v318
        %v384 = vmul.f32 %v337, %v319
        %v385 = vmul.f32 %v337, %v320
        %v386 = vmul.f32 %v337, %v321
        %v387 = vmul.f32 %v337, %v322
        %v388 = vmul.f32 %v337, %v323
        %v389 = vmul.f32 %v337, %v324
        %v390 = vmul.f32 %v337, %v325
        %v391 = vmul.f32 %v337, %v326
        %v392 = vmul.f32 %v337, %v327
        %v393 = vmul.f32 %v337, %v328
        %v394 = vmul.f32 %v337, %v329
        %v395 = vmul.f32 %v337, %v330
        %v396 = vmul.f32 %v337, %v331
        %v397 = vmul.f32 %v337, %v332
        %v398 = vmul.f32 %v337, %v333
        %v399 = vmul.f32 %v337, %v334
        %v400 = vmul.f32 %v337, %v335
        %v401 = vmul.f32 %v337, %v336
        %v403 = vperm.slane %v271, 0
        %v405 = vadd.f32 %v403, %v338
        %v406 = vadd.f32 %v403, %v339
        %v407 = vadd.f32 %v403, %v340
        %v408 = vadd.f32 %v403, %v341
        %v409 = vadd.f32 %v403, %v342
        %v410 = vadd.f32 %v403, %v343
        %v411 = vadd.f32 %v403, %v344
        %v412 = vadd.f32 %v403, %v345
        %v413 = vadd.f32 %v403, %v346
        %v414 = vadd.f32 %v403, %v347
        %v415 = vadd.f32 %v403, %v348
        %v416 = vadd.f32 %v403, %v349
        %v417 = vadd.f32 %v403, %v350
        %v418 = vadd.f32 %v403, %v351
        %v419 = vadd.f32 %v403, %v352
        %v420 = vadd.f32 %v403, %v353
        %v421 = vadd.f32 %v403, %v354
        %v422 = vadd.f32 %v403, %v355
        %v423 = vadd.f32 %v403, %v356
        %v424 = vadd.f32 %v403, %v357
        %v425 = vadd.f32 %v403, %v358
        %v426 = vadd.f32 %v403, %v359
        %v427 = vadd.f32 %v403, %v360
        %v428 = vadd.f32 %v403, %v361
        %v429 = vadd.f32 %v403, %v362
        %v430 = vadd.f32 %v403, %v363
        %v431 = vadd.f32 %v403, %v364
        %v432 = vadd.f32 %v403, %v365
        %v433 = vadd.f32 %v403, %v366
        %v434 = vadd.f32 %v403, %v367
        %v435 = vadd.f32 %v403, %v368
        %v436 = vadd.f32 %v403, %v369
        %v437 = vadd.f32 %v403, %v370
        %v438 = vadd.f32 %v403, %v371
        %v439 = vadd.f32 %v403, %v372
        %v440 = vadd.f32 %v403, %v373
        %v441 = vadd.f32 %v403, %v374
        %v442 = vadd.f32 %v403, %v375
        %v443 = vadd.f32 %v403, %v376
        %v444 = vadd.f32 %v403, %v377
        %v445 = vadd.f32 %v403, %v378
        %v446 = vadd.f32 %v403, %v379
        %v447 = vadd.f32 %v403, %v380
        %v448 = vadd.f32 %v403, %v381
        %v449 = vadd.f32 %v403, %v382
        %v450 = vadd.f32 %v403, %v383
        %v451 = vadd.f32 %v403, %v384
        %v452 = vadd.f32 %v403, %v385
        %v453 = vadd.f32 %v403, %v386
        %v454 = vadd.f32 %v403, %v387
        %v455 = vadd.f32 %v403, %v388
        %v456 = vadd.f32 %v403, %v389
        %v457 = vadd.f32 %v403, %v390
        %v458 = vadd.f32 %v403, %v391
        %v459 = vadd.f32 %v403, %v392
        %v460 = vadd.f32 %v403, %v393
        %v461 = vadd.f32 %v403, %v394
        %v462 = vadd.f32 %v403, %v395
        %v463 = vadd.f32 %v403, %v396
        %v464 = vadd.f32 %v403, %v397
        %v465 = vadd.f32 %v403, %v398
        %v466 = vadd.f32 %v403, %v399
        %v467 = vadd.f32 %v403, %v400
        %v468 = vadd.f32 %v403, %v401
        %v469 = vld [vmem:[%s3] sm:$0x1]
        %v471 = vperm.slane %v469, 0
        %v473 = vadd.f32 %v405, %v471
        %v474 = vadd.f32 %v406, %v471
        %v475 = vadd.f32 %v407, %v471
        %v476 = vadd.f32 %v408, %v471
        %v477 = vadd.f32 %v409, %v471
        %v478 = vadd.f32 %v410, %v471
        %v479 = vadd.f32 %v411, %v471
        %v480 = vadd.f32 %v412, %v471
        %v481 = vadd.f32 %v413, %v471
        %v482 = vadd.f32 %v414, %v471
        %v483 = vadd.f32 %v415, %v471
        %v484 = vadd.f32 %v416, %v471
        %v485 = vadd.f32 %v417, %v471
        %v486 = vadd.f32 %v418, %v471
        %v487 = vadd.f32 %v419, %v471
        %v488 = vadd.f32 %v420, %v471
        %v489 = vadd.f32 %v421, %v471
        %v490 = vadd.f32 %v422, %v471
        %v491 = vadd.f32 %v423, %v471
        %v492 = vadd.f32 %v424, %v471
        %v493 = vadd.f32 %v425, %v471
        %v494 = vadd.f32 %v426, %v471
        %v495 = vadd.f32 %v427, %v471
        %v496 = vadd.f32 %v428, %v471
        %v497 = vadd.f32 %v429, %v471
        %v498 = vadd.f32 %v430, %v471
        %v499 = vadd.f32 %v431, %v471
        %v500 = vadd.f32 %v432, %v471
        %v501 = vadd.f32 %v433, %v471
        %v502 = vadd.f32 %v434, %v471
        %v503 = vadd.f32 %v435, %v471
        %v504 = vadd.f32 %v436, %v471
        %v505 = vadd.f32 %v437, %v471
        %v506 = vadd.f32 %v438, %v471
        %v507 = vadd.f32 %v439, %v471
        %v508 = vadd.f32 %v440, %v471
        %v509 = vadd.f32 %v441, %v471
        %v510 = vadd.f32 %v442, %v471
        %v511 = vadd.f32 %v443, %v471
        %v512 = vadd.f32 %v444, %v471
        %v513 = vadd.f32 %v445, %v471
        %v514 = vadd.f32 %v446, %v471
        %v515 = vadd.f32 %v447, %v471
        %v516 = vadd.f32 %v448, %v471
        %v517 = vadd.f32 %v449, %v471
        %v518 = vadd.f32 %v450, %v471
        %v519 = vadd.f32 %v451, %v471
        %v520 = vadd.f32 %v452, %v471
        %v521 = vadd.f32 %v453, %v471
        %v522 = vadd.f32 %v454, %v471
        %v523 = vadd.f32 %v455, %v471
        %v524 = vadd.f32 %v456, %v471
        %v525 = vadd.f32 %v457, %v471
        %v526 = vadd.f32 %v458, %v471
        %v527 = vadd.f32 %v459, %v471
        %v528 = vadd.f32 %v460, %v471
        %v529 = vadd.f32 %v461, %v471
        %v530 = vadd.f32 %v462, %v471
        %v531 = vadd.f32 %v463, %v471
        %v532 = vadd.f32 %v464, %v471
        %v533 = vadd.f32 %v465, %v471
        %v534 = vadd.f32 %v466, %v471
        %v535 = vadd.f32 %v467, %v471
        %v536 = vadd.f32 %v468, %v471
        %v537 = vand.u32 2147483647, %v473
        %vm538 = vcmp.le.f32.partialorder %v537, 0.7853982
        %vm539 = vcmp.lt.s32.totalorder %v473, 0
        %v540 = vand.u32 %v473, 2139095040
        %v541 = vshrl.u32 %v540, 23
        %v542 = vsub.s32 %v541, 127
        %v543 = vand.u32 2147483647, %v473
        %v544 = vand.u32 %v543, 8388607
        %v545 = vor.u32 %v544, 8388608
        %v546 = vsub.s32 0, %v545
        %v547 = vadd.s32 %v542, 1
        %vm548 = vcmp.gt.s32.totalorder %v547, 0
        %v549 = vsel %vm548, %v547, 0
        %v550 = vshrl.u32 %v549, 5
        %v551 = vand.u32 %v549, 31
        %v552 = vsub.s32 32, %v551
        %v553 = vshrl.u32 683565275, %v552
        %v554 = vshll.u32 683565275, %v551
        %v555 = vshrl.u32 2475754826, %v552
        %v556 = vor.u32 %v554, %v555
        %v557 = vshll.u32 2475754826, %v551
        %v558 = vshrl.u32 2131351028, %v552
        %v559 = vor.u32 %v557, %v558
        %v560 = vshll.u32 2131351028, %v551
        %v561 = vshrl.u32 2102212464, %v552
        %v562 = vor.u32 %v560, %v561
        %v563 = vshll.u32 2102212464, %v551
        %v564 = vshrl.u32 920167782, %v552
        %v565 = vor.u32 %v563, %v564
        %v566 = vshll.u32 920167782, %v551
        %v567 = vshrl.u32 1326507024, %v552
        %v568 = vor.u32 %v566, %v567
        %vm569 = vcmp.lt.s32.totalorder %v550, 1
        %vm570 = vcmp.lt.s32.totalorder %v550, 2
        %vm571 = vcmp.lt.s32.totalorder %v550, 3
        %vm572 = vcmp.lt.s32.totalorder %v550, 4
        %v573 = vsel %vm569, %v553, %v556
        %v574 = vsel %vm572, %v562, 2102212464
        %v575 = vsel %vm571, %v559, %v574
        %v576 = vsel %vm570, %v573, %v575
        %v577 = vsel %vm569, %v556, %v559
        %v578 = vsel %vm572, %v565, 920167782
        %v579 = vsel %vm571, %v562, %v578
        %v580 = vsel %vm570, %v577, %v579
        %v581 = vsel %vm569, %v559, %v562
        %v582 = vsel %vm572, %v568, 1326507024
        %v583 = vsel %vm571, %v565, %v582
        %v584 = vsel %vm570, %v581, %v583
        %v585 = vshll.u32 %v545, 8
        %v586 = vand.u32 %v585, 65535
        %v587 = vshrl.u32 %v585, 16
        %v588 = vand.u32 %v584, 65535
        %v589 = vshrl.u32 %v584, 16
        %v590 = vmul.u32 %v586, %v588
        %v591 = vmul.u32 %v586, %v589
        %v592 = vmul.u32 %v587, %v588
        %v593 = vmul.u32 %v587, %v589
        %v594 = vshll.u32 %v591, 16
        %v595 = vshrl.u32 %v591, 16
        %v596 = vshll.u32 %v592, 16
        %v597 = vshrl.u32 %v592, 16
        %vm598 = vc.u32 %v590, %v594
        %v599 = vsel %vm598, 1, 0
        %v600 = vadd.s32 %v590, %v594
        %v601 = vadd.s32 %v593, %v599
        %vm602 = vc.u32 %v600, %v596
        %v603 = vsel %vm602, 1, 0
        %v604 = vadd.s32 %v600, %v596
        %v605 = vadd.s32 %v601, %v603
        %v606 = vadd.s32 %v605, %v595
        %v607 = vadd.s32 %v606, %v597
        %v608 = vand.u32 %v585, 65535
        %v609 = vshrl.u32 %v585, 16
        %v610 = vand.u32 %v580, 65535
        %v611 = vshrl.u32 %v580, 16
        %v612 = vmul.u32 %v608, %v610
        %v613 = vmul.u32 %v608, %v611
        %v614 = vmul.u32 %v609, %v610
        %v615 = vmul.u32 %v609, %v611
        %v616 = vshll.u32 %v613, 16
        %v617 = vshrl.u32 %v613, 16
        %v618 = vshll.u32 %v614, 16
        %v619 = vshrl.u32 %v614, 16
        %vm620 = vc.u32 %v612, %v616
        %v621 = vsel %vm620, 1, 0
        %v622 = vadd.s32 %v612, %v616
        %v623 = vadd.s32 %v615, %v621
        %vm624 = vc.u32 %v622, %v618
        %v625 = vsel %vm624, 1, 0
        %v626 = vadd.s32 %v622, %v618
        %v627 = vadd.s32 %v623, %v625
        %v628 = vadd.s32 %v627, %v617
        %v629 = vadd.s32 %v628, %v619
        %v630 = vmul.u32 %v585, %v576
        %v631 = vadd.s32 %v607, %v626
        %vm632 = vc.u32 %v607, %v626
        %v633 = vadd.s32 %v629, 1
        %v634 = vsel %vm632, %v633, %v629
        %v635 = vadd.s32 %v630, %v634
        %v636 = vadd.s32 %v635, 536870912
        %v637 = vshrl.u32 %v636, 30
        %v638 = vshll.u32 %v637, 30
        %v639 = vsub.s32 %v635, %v638
        %vm640 = vcmp.lt.s32.totalorder %v639, 0
        %v641 = vsub.s32 0, %v639
        %v642 = vsel %vm640, %v641, %v639
        %v643 = vclz %v642
        %v644 = vsub.s32 %v643, 2
        %vm645 = vcmp.gt.s32.totalorder 0, %v644
        %v646 = vsel %vm645, 0, %v644
        %v647 = vsub.s32 32, %v646
        %v648 = vshll.u32 %v639, %v646
        %v649 = vshrl.u32 %v631, %v647
        %v650 = vor.u32 %v648, %v649
        %v651 = vsub.s32 4294967266, %v646
        %v652 = vadd.s32 %v651, 127
        %v653 = vshll.u32 %v652, 23
        %v654 = vor.u32 4788187, %v653
        %v655 = vand.u32 2147483647, %v654
        %v657 = vcvt.s32.f32 %v650
        %v658 = vmul.f32 %v657, %v655
        %v659 = vxor.u32 %v658, 2147483648
        %v660 = vsel %vm539, %v659, %v658
        %v661 = vsub.s32 4, %v637
        %v662 = vsel %vm539, %v661, %v637
        %v663 = vsel %vm538, %v473, %v660
        %v664 = vsel %vm538, 0, %v662
        %v665 = vmul.f32 %v663, %v663
        %v666 = vmul.f32 %v665, -0.001358992
        %v667 = vadd.f32 %v666, 0.041655596
        %v668 = vmul.f32 %v665, %v667
        %v669 = vadd.f32 %v668, -0.4999988
        %v670 = vmul.f32 %v665, %v669
        %v671 = vadd.f32 1.0, %v670
        %v672 = vmul.f32 %v663, %v663
        %v673 = vmul.f32 %v672, -0.00019511016
        %v674 = vadd.f32 %v673, 0.008332121
        %v675 = vmul.f32 %v672, %v674
        %v676 = vadd.f32 %v675, -0.16666654
        %v677 = vmul.f32 %v672, %v676
        %v678 = vadd.f32 %v677, 1.0
        %v679 = vmul.f32 %v678, %v663
        %vm680 = vweird.f32 %v473
        %v681 = vadd.s32 %v664, 3
        %v682 = vand.u32 %v681, 3
        %vm683 = vcmp.lt.s32.totalorder %v682, 2
        %vm684 = vcmp.eq.s32.totalorder %v682, 0
        %v685 = vxor.u32 %v679, 2147483648
        %v686 = vsel %vm684, %v671, %v685
        %vm687 = vcmp.eq.s32.totalorder %v682, 2
        %v688 = vxor.u32 %v671, 2147483648
        %v689 = vsel %vm687, %v688, %v679
        %v690 = vsel %vm683, %v686, %v689
        %v691 = vsel %vm680, nan, %v690
        %v692 = vand.u32 2147483647, %v474
        %vm693 = vcmp.le.f32.partialorder %v692, 0.7853982
        %vm694 = vcmp.lt.s32.totalorder %v474, 0
        %v695 = vand.u32 %v474, 2139095040
        %v696 = vshrl.u32 %v695, 23
        %v697 = vsub.s32 %v696, 127
        %v698 = vand.u32 2147483647, %v474
        %v699 = vand.u32 %v698, 8388607
        %v700 = vor.u32 %v699, 8388608
        %v701 = vsub.s32 0, %v700
        %v702 = vadd.s32 %v697, 1
        %vm703 = vcmp.gt.s32.totalorder %v702, 0
        %v704 = vsel %vm703, %v702, 0
        %v705 = vshrl.u32 %v704, 5
        %v706 = vand.u32 %v704, 31
        %v707 = vsub.s32 32, %v706
        %v708 = vshrl.u32 683565275, %v707
        %v709 = vshll.u32 683565275, %v706
        %v710 = vshrl.u32 2475754826, %v707
        %v711 = vor.u32 %v709, %v710
        %v712 = vshll.u32 2475754826, %v706
        %v713 = vshrl.u32 2131351028, %v707
        %v714 = vor.u32 %v712, %v713
        %v715 = vshll.u32 2131351028, %v706
        %v716 = vshrl.u32 2102212464, %v707
        %v717 = vor.u32 %v715, %v716
        %v718 = vshll.u32 2102212464, %v706
        %v719 = vshrl.u32 920167782, %v707
        %v720 = vor.u32 %v718, %v719
        %v721 = vshll.u32 920167782, %v706
        %v722 = vshrl.u32 1326507024, %v707
        %v723 = vor.u32 %v721, %v722
        %vm724 = vcmp.lt.s32.totalorder %v705, 1
        %vm725 = vcmp.lt.s32.totalorder %v705, 2
        %vm726 = vcmp.lt.s32.totalorder %v705, 3
        %vm727 = vcmp.lt.s32.totalorder %v705, 4
        %v728 = vsel %vm724, %v708, %v711
        %v729 = vsel %vm727, %v717, 2102212464
        %v730 = vsel %vm726, %v714, %v729
        %v731 = vsel %vm725, %v728, %v730
        %v732 = vsel %vm724, %v711, %v714
        %v733 = vsel %vm727, %v720, 920167782
        %v734 = vsel %vm726, %v717, %v733
        %v735 = vsel %vm725, %v732, %v734
        %v736 = vsel %vm724, %v714, %v717
        %v737 = vsel %vm727, %v723, 1326507024
        %v738 = vsel %vm726, %v720, %v737
        %v739 = vsel %vm725, %v736, %v738
        %v740 = vshll.u32 %v700, 8
        %v741 = vand.u32 %v740, 65535
        %v742 = vshrl.u32 %v740, 16
        %v743 = vand.u32 %v739, 65535
        %v744 = vshrl.u32 %v739, 16
        %v745 = vmul.u32 %v741, %v743
        %v746 = vmul.u32 %v741, %v744
        %v747 = vmul.u32 %v742, %v743
        %v748 = vmul.u32 %v742, %v744
        %v749 = vshll.u32 %v746, 16
        %v750 = vshrl.u32 %v746, 16
        %v751 = vshll.u32 %v747, 16
        %v752 = vshrl.u32 %v747, 16
        %vm753 = vc.u32 %v745, %v749
        %v754 = vsel %vm753, 1, 0
        %v755 = vadd.s32 %v745, %v749
        %v756 = vadd.s32 %v748, %v754
        %vm757 = vc.u32 %v755, %v751
        %v758 = vsel %vm757, 1, 0
        %v759 = vadd.s32 %v755, %v751
        %v760 = vadd.s32 %v756, %v758
        %v761 = vadd.s32 %v760, %v750
        %v762 = vadd.s32 %v761, %v752
        %v763 = vand.u32 %v740, 65535
        %v764 = vshrl.u32 %v740, 16
        %v765 = vand.u32 %v735, 65535
        %v766 = vshrl.u32 %v735, 16
        %v767 = vmul.u32 %v763, %v765
        %v768 = vmul.u32 %v763, %v766
        %v769 = vmul.u32 %v764, %v765
        %v770 = vmul.u32 %v764, %v766
        %v771 = vshll.u32 %v768, 16
        %v772 = vshrl.u32 %v768, 16
        %v773 = vshll.u32 %v769, 16
        %v774 = vshrl.u32 %v769, 16
        %vm775 = vc.u32 %v767, %v771
        %v776 = vsel %vm775, 1, 0
        %v777 = vadd.s32 %v767, %v771
        %v778 = vadd.s32 %v770, %v776
        %vm779 = vc.u32 %v777, %v773
        %v780 = vsel %vm779, 1, 0
        %v781 = vadd.s32 %v777, %v773
        %v782 = vadd.s32 %v778, %v780
        %v783 = vadd.s32 %v782, %v772
        %v784 = vadd.s32 %v783, %v774
        %v785 = vmul.u32 %v740, %v731
        %v786 = vadd.s32 %v762, %v781
        %vm787 = vc.u32 %v762, %v781
        %v788 = vadd.s32 %v784, 1
        %v789 = vsel %vm787, %v788, %v784
        %v790 = vadd.s32 %v785, %v789
        %v791 = vadd.s32 %v790, 536870912
        %v792 = vshrl.u32 %v791, 30
        %v793 = vshll.u32 %v792, 30
        %v794 = vsub.s32 %v790, %v793
        %vm795 = vcmp.lt.s32.totalorder %v794, 0
        %v796 = vsub.s32 0, %v794
        %v797 = vsel %vm795, %v796, %v794
        %v798 = vclz %v797
        %v799 = vsub.s32 %v798, 2
        %vm800 = vcmp.gt.s32.totalorder 0, %v799
        %v801 = vsel %vm800, 0, %v799
        %v802 = vsub.s32 32, %v801
        %v803 = vshll.u32 %v794, %v801
        %v804 = vshrl.u32 %v786, %v802
        %v805 = vor.u32 %v803, %v804
        %v806 = vsub.s32 4294967266, %v801
        %v807 = vadd.s32 %v806, 127
        %v808 = vshll.u32 %v807, 23
        %v809 = vor.u32 4788187, %v808
        %v810 = vand.u32 2147483647, %v809
        %v812 = vcvt.s32.f32 %v805
        %v813 = vmul.f32 %v812, %v810
        %v814 = vxor.u32 %v813, 2147483648
        %v815 = vsel %vm694, %v814, %v813
        %v816 = vsub.s32 4, %v792
        %v817 = vsel %vm694, %v816, %v792
        %v818 = vsel %vm693, %v474, %v815
        %v819 = vsel %vm693, 0, %v817
        %v820 = vmul.f32 %v818, %v818
        %v821 = vmul.f32 %v820, -0.001358992
        %v822 = vadd.f32 %v821, 0.041655596
        %v823 = vmul.f32 %v820, %v822
        %v824 = vadd.f32 %v823, -0.4999988
        %v825 = vmul.f32 %v820, %v824
        %v826 = vadd.f32 1.0, %v825
        %v827 = vmul.f32 %v818, %v818
        %v828 = vmul.f32 %v827, -0.00019511016
        %v829 = vadd.f32 %v828, 0.008332121
        %v830 = vmul.f32 %v827, %v829
        %v831 = vadd.f32 %v830, -0.16666654
        %v832 = vmul.f32 %v827, %v831
        %v833 = vadd.f32 %v832, 1.0
        %v834 = vmul.f32 %v833, %v818
        %vm835 = vweird.f32 %v474
        %v836 = vadd.s32 %v819, 3
        %v837 = vand.u32 %v836, 3
        %vm838 = vcmp.lt.s32.totalorder %v837, 2
        %vm839 = vcmp.eq.s32.totalorder %v837, 0
        %v840 = vxor.u32 %v834, 2147483648
        %v841 = vsel %vm839, %v826, %v840
        %vm842 = vcmp.eq.s32.totalorder %v837, 2
        %v843 = vxor.u32 %v826, 2147483648
        %v844 = vsel %vm842, %v843, %v834
        %v845 = vsel %vm838, %v841, %v844
        %v846 = vsel %vm835, nan, %v845
        %v847 = vand.u32 2147483647, %v475
        %vm848 = vcmp.le.f32.partialorder %v847, 0.7853982
        %vm849 = vcmp.lt.s32.totalorder %v475, 0
        %v850 = vand.u32 %v475, 2139095040
        %v851 = vshrl.u32 %v850, 23
        %v852 = vsub.s32 %v851, 127
        %v853 = vand.u32 2147483647, %v475
        %v854 = vand.u32 %v853, 8388607
        %v855 = vor.u32 %v854, 8388608
        %v856 = vsub.s32 0, %v855
        %v857 = vadd.s32 %v852, 1
        %vm858 = vcmp.gt.s32.totalorder %v857, 0
        %v859 = vsel %vm858, %v857, 0
        %v860 = vshrl.u32 %v859, 5
        %v861 = vand.u32 %v859, 31
        %v862 = vsub.s32 32, %v861
        %v863 = vshrl.u32 683565275, %v862
        %v864 = vshll.u32 683565275, %v861
        %v865 = vshrl.u32 2475754826, %v862
        %v866 = vor.u32 %v864, %v865
        %v867 = vshll.u32 2475754826, %v861
        %v868 = vshrl.u32 2131351028, %v862
        %v869 = vor.u32 %v867, %v868
        %v870 = vshll.u32 2131351028, %v861
        %v871 = vshrl.u32 2102212464, %v862
        %v872 = vor.u32 %v870, %v871
        %v873 = vshll.u32 2102212464, %v861
        %v874 = vshrl.u32 920167782, %v862
        %v875 = vor.u32 %v873, %v874
        %v876 = vshll.u32 920167782, %v861
        %v877 = vshrl.u32 1326507024, %v862
        %v878 = vor.u32 %v876, %v877
        %vm879 = vcmp.lt.s32.totalorder %v860, 1
        %vm880 = vcmp.lt.s32.totalorder %v860, 2
        %vm881 = vcmp.lt.s32.totalorder %v860, 3
        %vm882 = vcmp.lt.s32.totalorder %v860, 4
        %v883 = vsel %vm879, %v863, %v866
        %v884 = vsel %vm882, %v872, 2102212464
        %v885 = vsel %vm881, %v869, %v884
        %v886 = vsel %vm880, %v883, %v885
        %v887 = vsel %vm879, %v866, %v869
        %v888 = vsel %vm882, %v875, 920167782
        %v889 = vsel %vm881, %v872, %v888
        %v890 = vsel %vm880, %v887, %v889
        %v891 = vsel %vm879, %v869, %v872
        %v892 = vsel %vm882, %v878, 1326507024
        %v893 = vsel %vm881, %v875, %v892
        %v894 = vsel %vm880, %v891, %v893
        %v895 = vshll.u32 %v855, 8
        %v896 = vand.u32 %v895, 65535
        %v897 = vshrl.u32 %v895, 16
        %v898 = vand.u32 %v894, 65535
        %v899 = vshrl.u32 %v894, 16
        %v900 = vmul.u32 %v896, %v898
        %v901 = vmul.u32 %v896, %v899
        %v902 = vmul.u32 %v897, %v898
        %v903 = vmul.u32 %v897, %v899
        %v904 = vshll.u32 %v901, 16
        %v905 = vshrl.u32 %v901, 16
        %v906 = vshll.u32 %v902, 16
        %v907 = vshrl.u32 %v902, 16
        %vm908 = vc.u32 %v900, %v904
        %v909 = vsel %vm908, 1, 0
        %v910 = vadd.s32 %v900, %v904
        %v911 = vadd.s32 %v903, %v909
        %vm912 = vc.u32 %v910, %v906
        %v913 = vsel %vm912, 1, 0
        %v914 = vadd.s32 %v910, %v906
        %v915 = vadd.s32 %v911, %v913
        %v916 = vadd.s32 %v915, %v905
        %v917 = vadd.s32 %v916, %v907
        %v918 = vand.u32 %v895, 65535
        %v919 = vshrl.u32 %v895, 16
        %v920 = vand.u32 %v890, 65535
        %v921 = vshrl.u32 %v890, 16
        %v922 = vmul.u32 %v918, %v920
        %v923 = vmul.u32 %v918, %v921
        %v924 = vmul.u32 %v919, %v920
        %v925 = vmul.u32 %v919, %v921
        %v926 = vshll.u32 %v923, 16
        %v927 = vshrl.u32 %v923, 16
        %v928 = vshll.u32 %v924, 16
        %v929 = vshrl.u32 %v924, 16
        %vm930 = vc.u32 %v922, %v926
        %v931 = vsel %vm930, 1, 0
        %v932 = vadd.s32 %v922, %v926
        %v933 = vadd.s32 %v925, %v931
        %vm934 = vc.u32 %v932, %v928
        %v935 = vsel %vm934, 1, 0
        %v936 = vadd.s32 %v932, %v928
        %v937 = vadd.s32 %v933, %v935
        %v938 = vadd.s32 %v937, %v927
        %v939 = vadd.s32 %v938, %v929
        %v940 = vmul.u32 %v895, %v886
        %v941 = vadd.s32 %v917, %v936
        %vm942 = vc.u32 %v917, %v936
        %v943 = vadd.s32 %v939, 1
        %v944 = vsel %vm942, %v943, %v939
        %v945 = vadd.s32 %v940, %v944
        %v946 = vadd.s32 %v945, 536870912
        %v947 = vshrl.u32 %v946, 30
        %v948 = vshll.u32 %v947, 30
        %v949 = vsub.s32 %v945, %v948
        %vm950 = vcmp.lt.s32.totalorder %v949, 0
        %v951 = vsub.s32 0, %v949
        %v952 = vsel %vm950, %v951, %v949
        %v953 = vclz %v952
        %v954 = vsub.s32 %v953, 2
        %vm955 = vcmp.gt.s32.totalorder 0, %v954
        %v956 = vsel %vm955, 0, %v954
        %v957 = vsub.s32 32, %v956
        %v958 = vshll.u32 %v949, %v956
        %v959 = vshrl.u32 %v941, %v957
        %v960 = vor.u32 %v958, %v959
        %v961 = vsub.s32 4294967266, %v956
        %v962 = vadd.s32 %v961, 127
        %v963 = vshll.u32 %v962, 23
        %v964 = vor.u32 4788187, %v963
        %v965 = vand.u32 2147483647, %v964
        %v967 = vcvt.s32.f32 %v960
        %v968 = vmul.f32 %v967, %v965
        %v969 = vxor.u32 %v968, 2147483648
        %v970 = vsel %vm849, %v969, %v968
        %v971 = vsub.s32 4, %v947
        %v972 = vsel %vm849, %v971, %v947
        %v973 = vsel %vm848, %v475, %v970
        %v974 = vsel %vm848, 0, %v972
        %v975 = vmul.f32 %v973, %v973
        %v976 = vmul.f32 %v975, -0.001358992
        %v977 = vadd.f32 %v976, 0.041655596
        %v978 = vmul.f32 %v975, %v977
        %v979 = vadd.f32 %v978, -0.4999988
        %v980 = vmul.f32 %v975, %v979
        %v981 = vadd.f32 1.0, %v980
        %v982 = vmul.f32 %v973, %v973
        %v983 = vmul.f32 %v982, -0.00019511016
        %v984 = vadd.f32 %v983, 0.008332121
        %v985 = vmul.f32 %v982, %v984
        %v986 = vadd.f32 %v985, -0.16666654
        %v987 = vmul.f32 %v982, %v986
        %v988 = vadd.f32 %v987, 1.0
        %v989 = vmul.f32 %v988, %v973
        %vm990 = vweird.f32 %v475
        %v991 = vadd.s32 %v974, 3
        %v992 = vand.u32 %v991, 3
        %vm993 = vcmp.lt.s32.totalorder %v992, 2
        %vm994 = vcmp.eq.s32.totalorder %v992, 0
        %v995 = vxor.u32 %v989, 2147483648
        %v996 = vsel %vm994, %v981, %v995
        %vm997 = vcmp.eq.s32.totalorder %v992, 2
        %v998 = vxor.u32 %v981, 2147483648
        %v999 = vsel %vm997, %v998, %v989
        %v1000 = vsel %vm993, %v996, %v999
        %v1001 = vsel %vm990, nan, %v1000
        %v1002 = vand.u32 2147483647, %v476
        %vm1003 = vcmp.le.f32.partialorder %v1002, 0.7853982
        %vm1004 = vcmp.lt.s32.totalorder %v476, 0
        %v1005 = vand.u32 %v476, 2139095040
        %v1006 = vshrl.u32 %v1005, 23
        %v1007 = vsub.s32 %v1006, 127
        %v1008 = vand.u32 2147483647, %v476
        %v1009 = vand.u32 %v1008, 8388607
        %v1010 = vor.u32 %v1009, 8388608
        %v1011 = vsub.s32 0, %v1010
        %v1012 = vadd.s32 %v1007, 1
        %vm1013 = vcmp.gt.s32.totalorder %v1012, 0
        %v1014 = vsel %vm1013, %v1012, 0
        %v1015 = vshrl.u32 %v1014, 5
        %v1016 = vand.u32 %v1014, 31
        %v1017 = vsub.s32 32, %v1016
        %v1018 = vshrl.u32 683565275, %v1017
        %v1019 = vshll.u32 683565275, %v1016
        %v1020 = vshrl.u32 2475754826, %v1017
        %v1021 = vor.u32 %v1019, %v1020
        %v1022 = vshll.u32 2475754826, %v1016
        %v1023 = vshrl.u32 2131351028, %v1017
        %v1024 = vor.u32 %v1022, %v1023
        %v1025 = vshll.u32 2131351028, %v1016
        %v1026 = vshrl.u32 2102212464, %v1017
        %v1027 = vor.u32 %v1025, %v1026
        %v1028 = vshll.u32 2102212464, %v1016
        %v1029 = vshrl.u32 920167782, %v1017
        %v1030 = vor.u32 %v1028, %v1029
        %v1031 = vshll.u32 920167782, %v1016
        %v1032 = vshrl.u32 1326507024, %v1017
        %v1033 = vor.u32 %v1031, %v1032
        %vm1034 = vcmp.lt.s32.totalorder %v1015, 1
        %vm1035 = vcmp.lt.s32.totalorder %v1015, 2
        %vm1036 = vcmp.lt.s32.totalorder %v1015, 3
        %vm1037 = vcmp.lt.s32.totalorder %v1015, 4
        %v1038 = vsel %vm1034, %v1018, %v1021
        %v1039 = vsel %vm1037, %v1027, 2102212464
        %v1040 = vsel %vm1036, %v1024, %v1039
        %v1041 = vsel %vm1035, %v1038, %v1040
        %v1042 = vsel %vm1034, %v1021, %v1024
        %v1043 = vsel %vm1037, %v1030, 920167782
        %v1044 = vsel %vm1036, %v1027, %v1043
        %v1045 = vsel %vm1035, %v1042, %v1044
        %v1046 = vsel %vm1034, %v1024, %v1027
        %v1047 = vsel %vm1037, %v1033, 1326507024
        %v1048 = vsel %vm1036, %v1030, %v1047
        %v1049 = vsel %vm1035, %v1046, %v1048
        %v1050 = vshll.u32 %v1010, 8
        %v1051 = vand.u32 %v1050, 65535
        %v1052 = vshrl.u32 %v1050, 16
        %v1053 = vand.u32 %v1049, 65535
        %v1054 = vshrl.u32 %v1049, 16
        %v1055 = vmul.u32 %v1051, %v1053
        %v1056 = vmul.u32 %v1051, %v1054
        %v1057 = vmul.u32 %v1052, %v1053
        %v1058 = vmul.u32 %v1052, %v1054
        %v1059 = vshll.u32 %v1056, 16
        %v1060 = vshrl.u32 %v1056, 16
        %v1061 = vshll.u32 %v1057, 16
        %v1062 = vshrl.u32 %v1057, 16
        %vm1063 = vc.u32 %v1055, %v1059
        %v1064 = vsel %vm1063, 1, 0
        %v1065 = vadd.s32 %v1055, %v1059
        %v1066 = vadd.s32 %v1058, %v1064
        %vm1067 = vc.u32 %v1065, %v1061
        %v1068 = vsel %vm1067, 1, 0
        %v1069 = vadd.s32 %v1065, %v1061
        %v1070 = vadd.s32 %v1066, %v1068
        %v1071 = vadd.s32 %v1070, %v1060
        %v1072 = vadd.s32 %v1071, %v1062
        %v1073 = vand.u32 %v1050, 65535
        %v1074 = vshrl.u32 %v1050, 16
        %v1075 = vand.u32 %v1045, 65535
        %v1076 = vshrl.u32 %v1045, 16
        %v1077 = vmul.u32 %v1073, %v1075
        %v1078 = vmul.u32 %v1073, %v1076
        %v1079 = vmul.u32 %v1074, %v1075
        %v1080 = vmul.u32 %v1074, %v1076
        %v1081 = vshll.u32 %v1078, 16
        %v1082 = vshrl.u32 %v1078, 16
        %v1083 = vshll.u32 %v1079, 16
        %v1084 = vshrl.u32 %v1079, 16
        %vm1085 = vc.u32 %v1077, %v1081
        %v1086 = vsel %vm1085, 1, 0
        %v1087 = vadd.s32 %v1077, %v1081
        %v1088 = vadd.s32 %v1080, %v1086
        %vm1089 = vc.u32 %v1087, %v1083
        %v1090 = vsel %vm1089, 1, 0
        %v1091 = vadd.s32 %v1087, %v1083
        %v1092 = vadd.s32 %v1088, %v1090
        %v1093 = vadd.s32 %v1092, %v1082
        %v1094 = vadd.s32 %v1093, %v1084
        %v1095 = vmul.u32 %v1050, %v1041
        %v1096 = vadd.s32 %v1072, %v1091
        %vm1097 = vc.u32 %v1072, %v1091
        %v1098 = vadd.s32 %v1094, 1
        %v1099 = vsel %vm1097, %v1098, %v1094
        %v1100 = vadd.s32 %v1095, %v1099
        %v1101 = vadd.s32 %v1100, 536870912
        %v1102 = vshrl.u32 %v1101, 30
        %v1103 = vshll.u32 %v1102, 30
        %v1104 = vsub.s32 %v1100, %v1103
        %vm1105 = vcmp.lt.s32.totalorder %v1104, 0
        %v1106 = vsub.s32 0, %v1104
        %v1107 = vsel %vm1105, %v1106, %v1104
        %v1108 = vclz %v1107
        %v1109 = vsub.s32 %v1108, 2
        %vm1110 = vcmp.gt.s32.totalorder 0, %v1109
        %v1111 = vsel %vm1110, 0, %v1109
        %v1112 = vsub.s32 32, %v1111
        %v1113 = vshll.u32 %v1104, %v1111
        %v1114 = vshrl.u32 %v1096, %v1112
        %v1115 = vor.u32 %v1113, %v1114
        %v1116 = vsub.s32 4294967266, %v1111
        %v1117 = vadd.s32 %v1116, 127
        %v1118 = vshll.u32 %v1117, 23
        %v1119 = vor.u32 4788187, %v1118
        %v1120 = vand.u32 2147483647, %v1119
        %v1122 = vcvt.s32.f32 %v1115
        %v1123 = vmul.f32 %v1122, %v1120
        %v1124 = vxor.u32 %v1123, 2147483648
        %v1125 = vsel %vm1004, %v1124, %v1123
        %v1126 = vsub.s32 4, %v1102
        %v1127 = vsel %vm1004, %v1126, %v1102
        %v1128 = vsel %vm1003, %v476, %v1125
        %v1129 = vsel %vm1003, 0, %v1127
        %v1130 = vmul.f32 %v1128, %v1128
        %v1131 = vmul.f32 %v1130, -0.001358992
        %v1132 = vadd.f32 %v1131, 0.041655596
        %v1133 = vmul.f32 %v1130, %v1132
        %v1134 = vadd.f32 %v1133, -0.4999988
        %v1135 = vmul.f32 %v1130, %v1134
        %v1136 = vadd.f32 1.0, %v1135
        %v1137 = vmul.f32 %v1128, %v1128
        %v1138 = vmul.f32 %v1137, -0.00019511016
        %v1139 = vadd.f32 %v1138, 0.008332121
        %v1140 = vmul.f32 %v1137, %v1139
        %v1141 = vadd.f32 %v1140, -0.16666654
        %v1142 = vmul.f32 %v1137, %v1141
        %v1143 = vadd.f32 %v1142, 1.0
        %v1144 = vmul.f32 %v1143, %v1128
        %vm1145 = vweird.f32 %v476
        %v1146 = vadd.s32 %v1129, 3
        %v1147 = vand.u32 %v1146, 3
        %vm1148 = vcmp.lt.s32.totalorder %v1147, 2
        %vm1149 = vcmp.eq.s32.totalorder %v1147, 0
        %v1150 = vxor.u32 %v1144, 2147483648
        %v1151 = vsel %vm1149, %v1136, %v1150
        %vm1152 = vcmp.eq.s32.totalorder %v1147, 2
        %v1153 = vxor.u32 %v1136, 2147483648
        %v1154 = vsel %vm1152, %v1153, %v1144
        %v1155 = vsel %vm1148, %v1151, %v1154
        %v1156 = vsel %vm1145, nan, %v1155
        %v1157 = vand.u32 2147483647, %v477
        %vm1158 = vcmp.le.f32.partialorder %v1157, 0.7853982
        %vm1159 = vcmp.lt.s32.totalorder %v477, 0
        %v1160 = vand.u32 %v477, 2139095040
        %v1161 = vshrl.u32 %v1160, 23
        %v1162 = vsub.s32 %v1161, 127
        %v1163 = vand.u32 2147483647, %v477
        %v1164 = vand.u32 %v1163, 8388607
        %v1165 = vor.u32 %v1164, 8388608
        %v1166 = vsub.s32 0, %v1165
        %v1167 = vadd.s32 %v1162, 1
        %vm1168 = vcmp.gt.s32.totalorder %v1167, 0
        %v1169 = vsel %vm1168, %v1167, 0
        %v1170 = vshrl.u32 %v1169, 5
        %v1171 = vand.u32 %v1169, 31
        %v1172 = vsub.s32 32, %v1171
        %v1173 = vshrl.u32 683565275, %v1172
        %v1174 = vshll.u32 683565275, %v1171
        %v1175 = vshrl.u32 2475754826, %v1172
        %v1176 = vor.u32 %v1174, %v1175
        %v1177 = vshll.u32 2475754826, %v1171
        %v1178 = vshrl.u32 2131351028, %v1172
        %v1179 = vor.u32 %v1177, %v1178
        %v1180 = vshll.u32 2131351028, %v1171
        %v1181 = vshrl.u32 2102212464, %v1172
        %v1182 = vor.u32 %v1180, %v1181
        %v1183 = vshll.u32 2102212464, %v1171
        %v1184 = vshrl.u32 920167782, %v1172
        %v1185 = vor.u32 %v1183, %v1184
        %v1186 = vshll.u32 920167782, %v1171
        %v1187 = vshrl.u32 1326507024, %v1172
        %v1188 = vor.u32 %v1186, %v1187
        %vm1189 = vcmp.lt.s32.totalorder %v1170, 1
        %vm1190 = vcmp.lt.s32.totalorder %v1170, 2
        %vm1191 = vcmp.lt.s32.totalorder %v1170, 3
        %vm1192 = vcmp.lt.s32.totalorder %v1170, 4
        %v1193 = vsel %vm1189, %v1173, %v1176
        %v1194 = vsel %vm1192, %v1182, 2102212464
        %v1195 = vsel %vm1191, %v1179, %v1194
        %v1196 = vsel %vm1190, %v1193, %v1195
        %v1197 = vsel %vm1189, %v1176, %v1179
        %v1198 = vsel %vm1192, %v1185, 920167782
        %v1199 = vsel %vm1191, %v1182, %v1198
        %v1200 = vsel %vm1190, %v1197, %v1199
        %v1201 = vsel %vm1189, %v1179, %v1182
        %v1202 = vsel %vm1192, %v1188, 1326507024
        %v1203 = vsel %vm1191, %v1185, %v1202
        %v1204 = vsel %vm1190, %v1201, %v1203
        %v1205 = vshll.u32 %v1165, 8
        %v1206 = vand.u32 %v1205, 65535
        %v1207 = vshrl.u32 %v1205, 16
        %v1208 = vand.u32 %v1204, 65535
        %v1209 = vshrl.u32 %v1204, 16
        %v1210 = vmul.u32 %v1206, %v1208
        %v1211 = vmul.u32 %v1206, %v1209
        %v1212 = vmul.u32 %v1207, %v1208
        %v1213 = vmul.u32 %v1207, %v1209
        %v1214 = vshll.u32 %v1211, 16
        %v1215 = vshrl.u32 %v1211, 16
        %v1216 = vshll.u32 %v1212, 16
        %v1217 = vshrl.u32 %v1212, 16
        %vm1218 = vc.u32 %v1210, %v1214
        %v1219 = vsel %vm1218, 1, 0
        %v1220 = vadd.s32 %v1210, %v1214
        %v1221 = vadd.s32 %v1213, %v1219
        %vm1222 = vc.u32 %v1220, %v1216
        %v1223 = vsel %vm1222, 1, 0
        %v1224 = vadd.s32 %v1220, %v1216
        %v1225 = vadd.s32 %v1221, %v1223
        %v1226 = vadd.s32 %v1225, %v1215
        %v1227 = vadd.s32 %v1226, %v1217
        %v1228 = vand.u32 %v1205, 65535
        %v1229 = vshrl.u32 %v1205, 16
        %v1230 = vand.u32 %v1200, 65535
        %v1231 = vshrl.u32 %v1200, 16
        %v1232 = vmul.u32 %v1228, %v1230
        %v1233 = vmul.u32 %v1228, %v1231
        %v1234 = vmul.u32 %v1229, %v1230
        %v1235 = vmul.u32 %v1229, %v1231
        %v1236 = vshll.u32 %v1233, 16
        %v1237 = vshrl.u32 %v1233, 16
        %v1238 = vshll.u32 %v1234, 16
        %v1239 = vshrl.u32 %v1234, 16
        %vm1240 = vc.u32 %v1232, %v1236
        %v1241 = vsel %vm1240, 1, 0
        %v1242 = vadd.s32 %v1232, %v1236
        %v1243 = vadd.s32 %v1235, %v1241
        %vm1244 = vc.u32 %v1242, %v1238
        %v1245 = vsel %vm1244, 1, 0
        %v1246 = vadd.s32 %v1242, %v1238
        %v1247 = vadd.s32 %v1243, %v1245
        %v1248 = vadd.s32 %v1247, %v1237
        %v1249 = vadd.s32 %v1248, %v1239
        %v1250 = vmul.u32 %v1205, %v1196
        %v1251 = vadd.s32 %v1227, %v1246
        %vm1252 = vc.u32 %v1227, %v1246
        %v1253 = vadd.s32 %v1249, 1
        %v1254 = vsel %vm1252, %v1253, %v1249
        %v1255 = vadd.s32 %v1250, %v1254
        %v1256 = vadd.s32 %v1255, 536870912
        %v1257 = vshrl.u32 %v1256, 30
        %v1258 = vshll.u32 %v1257, 30
        %v1259 = vsub.s32 %v1255, %v1258
        %vm1260 = vcmp.lt.s32.totalorder %v1259, 0
        %v1261 = vsub.s32 0, %v1259
        %v1262 = vsel %vm1260, %v1261, %v1259
        %v1263 = vclz %v1262
        %v1264 = vsub.s32 %v1263, 2
        %vm1265 = vcmp.gt.s32.totalorder 0, %v1264
        %v1266 = vsel %vm1265, 0, %v1264
        %v1267 = vsub.s32 32, %v1266
        %v1268 = vshll.u32 %v1259, %v1266
        %v1269 = vshrl.u32 %v1251, %v1267
        %v1270 = vor.u32 %v1268, %v1269
        %v1271 = vsub.s32 4294967266, %v1266
        %v1272 = vadd.s32 %v1271, 127
        %v1273 = vshll.u32 %v1272, 23
        %v1274 = vor.u32 4788187, %v1273
        %v1275 = vand.u32 2147483647, %v1274
        %v1277 = vcvt.s32.f32 %v1270
        %v1278 = vmul.f32 %v1277, %v1275
        %v1279 = vxor.u32 %v1278, 2147483648
        %v1280 = vsel %vm1159, %v1279, %v1278
        %v1281 = vsub.s32 4, %v1257
        %v1282 = vsel %vm1159, %v1281, %v1257
        %v1283 = vsel %vm1158, %v477, %v1280
        %v1284 = vsel %vm1158, 0, %v1282
        %v1285 = vmul.f32 %v1283, %v1283
        %v1286 = vmul.f32 %v1285, -0.001358992
        %v1287 = vadd.f32 %v1286, 0.041655596
        %v1288 = vmul.f32 %v1285, %v1287
        %v1289 = vadd.f32 %v1288, -0.4999988
        %v1290 = vmul.f32 %v1285, %v1289
        %v1291 = vadd.f32 1.0, %v1290
        %v1292 = vmul.f32 %v1283, %v1283
        %v1293 = vmul.f32 %v1292, -0.00019511016
        %v1294 = vadd.f32 %v1293, 0.008332121
        %v1295 = vmul.f32 %v1292, %v1294
        %v1296 = vadd.f32 %v1295, -0.16666654
        %v1297 = vmul.f32 %v1292, %v1296
        %v1298 = vadd.f32 %v1297, 1.0
        %v1299 = vmul.f32 %v1298, %v1283
        %vm1300 = vweird.f32 %v477
        %v1301 = vadd.s32 %v1284, 3
        %v1302 = vand.u32 %v1301, 3
        %vm1303 = vcmp.lt.s32.totalorder %v1302, 2
        %vm1304 = vcmp.eq.s32.totalorder %v1302, 0
        %v1305 = vxor.u32 %v1299, 2147483648
        %v1306 = vsel %vm1304, %v1291, %v1305
        %vm1307 = vcmp.eq.s32.totalorder %v1302, 2
        %v1308 = vxor.u32 %v1291, 2147483648
        %v1309 = vsel %vm1307, %v1308, %v1299
        %v1310 = vsel %vm1303, %v1306, %v1309
        %v1311 = vsel %vm1300, nan, %v1310
        %v1312 = vand.u32 2147483647, %v478
        %vm1313 = vcmp.le.f32.partialorder %v1312, 0.7853982
        %vm1314 = vcmp.lt.s32.totalorder %v478, 0
        %v1315 = vand.u32 %v478, 2139095040
        %v1316 = vshrl.u32 %v1315, 23
        %v1317 = vsub.s32 %v1316, 127
        %v1318 = vand.u32 2147483647, %v478
        %v1319 = vand.u32 %v1318, 8388607
        %v1320 = vor.u32 %v1319, 8388608
        %v1321 = vsub.s32 0, %v1320
        %v1322 = vadd.s32 %v1317, 1
        %vm1323 = vcmp.gt.s32.totalorder %v1322, 0
        %v1324 = vsel %vm1323, %v1322, 0
        %v1325 = vshrl.u32 %v1324, 5
        %v1326 = vand.u32 %v1324, 31
        %v1327 = vsub.s32 32, %v1326
        %v1328 = vshrl.u32 683565275, %v1327
        %v1329 = vshll.u32 683565275, %v1326
        %v1330 = vshrl.u32 2475754826, %v1327
        %v1331 = vor.u32 %v1329, %v1330
        %v1332 = vshll.u32 2475754826, %v1326
        %v1333 = vshrl.u32 2131351028, %v1327
        %v1334 = vor.u32 %v1332, %v1333
        %v1335 = vshll.u32 2131351028, %v1326
        %v1336 = vshrl.u32 2102212464, %v1327
        %v1337 = vor.u32 %v1335, %v1336
        %v1338 = vshll.u32 2102212464, %v1326
        %v1339 = vshrl.u32 920167782, %v1327
        %v1340 = vor.u32 %v1338, %v1339
        %v1341 = vshll.u32 920167782, %v1326
        %v1342 = vshrl.u32 1326507024, %v1327
        %v1343 = vor.u32 %v1341, %v1342
        %vm1344 = vcmp.lt.s32.totalorder %v1325, 1
        %vm1345 = vcmp.lt.s32.totalorder %v1325, 2
        %vm1346 = vcmp.lt.s32.totalorder %v1325, 3
        %vm1347 = vcmp.lt.s32.totalorder %v1325, 4
        %v1348 = vsel %vm1344, %v1328, %v1331
        %v1349 = vsel %vm1347, %v1337, 2102212464
        %v1350 = vsel %vm1346, %v1334, %v1349
        %v1351 = vsel %vm1345, %v1348, %v1350
        %v1352 = vsel %vm1344, %v1331, %v1334
        %v1353 = vsel %vm1347, %v1340, 920167782
        %v1354 = vsel %vm1346, %v1337, %v1353
        %v1355 = vsel %vm1345, %v1352, %v1354
        %v1356 = vsel %vm1344, %v1334, %v1337
        %v1357 = vsel %vm1347, %v1343, 1326507024
        %v1358 = vsel %vm1346, %v1340, %v1357
        %v1359 = vsel %vm1345, %v1356, %v1358
        %v1360 = vshll.u32 %v1320, 8
        %v1361 = vand.u32 %v1360, 65535
        %v1362 = vshrl.u32 %v1360, 16
        %v1363 = vand.u32 %v1359, 65535
        %v1364 = vshrl.u32 %v1359, 16
        %v1365 = vmul.u32 %v1361, %v1363
        %v1366 = vmul.u32 %v1361, %v1364
        %v1367 = vmul.u32 %v1362, %v1363
        %v1368 = vmul.u32 %v1362, %v1364
        %v1369 = vshll.u32 %v1366, 16
        %v1370 = vshrl.u32 %v1366, 16
        %v1371 = vshll.u32 %v1367, 16
        %v1372 = vshrl.u32 %v1367, 16
        %vm1373 = vc.u32 %v1365, %v1369
        %v1374 = vsel %vm1373, 1, 0
        %v1375 = vadd.s32 %v1365, %v1369
        %v1376 = vadd.s32 %v1368, %v1374
        %vm1377 = vc.u32 %v1375, %v1371
        %v1378 = vsel %vm1377, 1, 0
        %v1379 = vadd.s32 %v1375, %v1371
        %v1380 = vadd.s32 %v1376, %v1378
        %v1381 = vadd.s32 %v1380, %v1370
        %v1382 = vadd.s32 %v1381, %v1372
        %v1383 = vand.u32 %v1360, 65535
        %v1384 = vshrl.u32 %v1360, 16
        %v1385 = vand.u32 %v1355, 65535
        %v1386 = vshrl.u32 %v1355, 16
        %v1387 = vmul.u32 %v1383, %v1385
        %v1388 = vmul.u32 %v1383, %v1386
        %v1389 = vmul.u32 %v1384, %v1385
        %v1390 = vmul.u32 %v1384, %v1386
        %v1391 = vshll.u32 %v1388, 16
        %v1392 = vshrl.u32 %v1388, 16
        %v1393 = vshll.u32 %v1389, 16
        %v1394 = vshrl.u32 %v1389, 16
        %vm1395 = vc.u32 %v1387, %v1391
        %v1396 = vsel %vm1395, 1, 0
        %v1397 = vadd.s32 %v1387, %v1391
        %v1398 = vadd.s32 %v1390, %v1396
        %vm1399 = vc.u32 %v1397, %v1393
        %v1400 = vsel %vm1399, 1, 0
        %v1401 = vadd.s32 %v1397, %v1393
        %v1402 = vadd.s32 %v1398, %v1400
        %v1403 = vadd.s32 %v1402, %v1392
        %v1404 = vadd.s32 %v1403, %v1394
        %v1405 = vmul.u32 %v1360, %v1351
        %v1406 = vadd.s32 %v1382, %v1401
        %vm1407 = vc.u32 %v1382, %v1401
        %v1408 = vadd.s32 %v1404, 1
        %v1409 = vsel %vm1407, %v1408, %v1404
        %v1410 = vadd.s32 %v1405, %v1409
        %v1411 = vadd.s32 %v1410, 536870912
        %v1412 = vshrl.u32 %v1411, 30
        %v1413 = vshll.u32 %v1412, 30
        %v1414 = vsub.s32 %v1410, %v1413
        %vm1415 = vcmp.lt.s32.totalorder %v1414, 0
        %v1416 = vsub.s32 0, %v1414
        %v1417 = vsel %vm1415, %v1416, %v1414
        %v1418 = vclz %v1417
        %v1419 = vsub.s32 %v1418, 2
        %vm1420 = vcmp.gt.s32.totalorder 0, %v1419
        %v1421 = vsel %vm1420, 0, %v1419
        %v1422 = vsub.s32 32, %v1421
        %v1423 = vshll.u32 %v1414, %v1421
        %v1424 = vshrl.u32 %v1406, %v1422
        %v1425 = vor.u32 %v1423, %v1424
        %v1426 = vsub.s32 4294967266, %v1421
        %v1427 = vadd.s32 %v1426, 127
        %v1428 = vshll.u32 %v1427, 23
        %v1429 = vor.u32 4788187, %v1428
        %v1430 = vand.u32 2147483647, %v1429
        %v1432 = vcvt.s32.f32 %v1425
        %v1433 = vmul.f32 %v1432, %v1430
        %v1434 = vxor.u32 %v1433, 2147483648
        %v1435 = vsel %vm1314, %v1434, %v1433
        %v1436 = vsub.s32 4, %v1412
        %v1437 = vsel %vm1314, %v1436, %v1412
        %v1438 = vsel %vm1313, %v478, %v1435
        %v1439 = vsel %vm1313, 0, %v1437
        %v1440 = vmul.f32 %v1438, %v1438
        %v1441 = vmul.f32 %v1440, -0.001358992
        %v1442 = vadd.f32 %v1441, 0.041655596
        %v1443 = vmul.f32 %v1440, %v1442
        %v1444 = vadd.f32 %v1443, -0.4999988
        %v1445 = vmul.f32 %v1440, %v1444
        %v1446 = vadd.f32 1.0, %v1445
        %v1447 = vmul.f32 %v1438, %v1438
        %v1448 = vmul.f32 %v1447, -0.00019511016
        %v1449 = vadd.f32 %v1448, 0.008332121
        %v1450 = vmul.f32 %v1447, %v1449
        %v1451 = vadd.f32 %v1450, -0.16666654
        %v1452 = vmul.f32 %v1447, %v1451
        %v1453 = vadd.f32 %v1452, 1.0
        %v1454 = vmul.f32 %v1453, %v1438
        %vm1455 = vweird.f32 %v478
        %v1456 = vadd.s32 %v1439, 3
        %v1457 = vand.u32 %v1456, 3
        %vm1458 = vcmp.lt.s32.totalorder %v1457, 2
        %vm1459 = vcmp.eq.s32.totalorder %v1457, 0
        %v1460 = vxor.u32 %v1454, 2147483648
        %v1461 = vsel %vm1459, %v1446, %v1460
        %vm1462 = vcmp.eq.s32.totalorder %v1457, 2
        %v1463 = vxor.u32 %v1446, 2147483648
        %v1464 = vsel %vm1462, %v1463, %v1454
        %v1465 = vsel %vm1458, %v1461, %v1464
        %v1466 = vsel %vm1455, nan, %v1465
        %v1467 = vand.u32 2147483647, %v479
        %vm1468 = vcmp.le.f32.partialorder %v1467, 0.7853982
        %vm1469 = vcmp.lt.s32.totalorder %v479, 0
        %v1470 = vand.u32 %v479, 2139095040
        %v1471 = vshrl.u32 %v1470, 23
        %v1472 = vsub.s32 %v1471, 127
        %v1473 = vand.u32 2147483647, %v479
        %v1474 = vand.u32 %v1473, 8388607
        %v1475 = vor.u32 %v1474, 8388608
        %v1476 = vsub.s32 0, %v1475
        %v1477 = vadd.s32 %v1472, 1
        %vm1478 = vcmp.gt.s32.totalorder %v1477, 0
        %v1479 = vsel %vm1478, %v1477, 0
        %v1480 = vshrl.u32 %v1479, 5
        %v1481 = vand.u32 %v1479, 31
        %v1482 = vsub.s32 32, %v1481
        %v1483 = vshrl.u32 683565275, %v1482
        %v1484 = vshll.u32 683565275, %v1481
        %v1485 = vshrl.u32 2475754826, %v1482
        %v1486 = vor.u32 %v1484, %v1485
        %v1487 = vshll.u32 2475754826, %v1481
        %v1488 = vshrl.u32 2131351028, %v1482
        %v1489 = vor.u32 %v1487, %v1488
        %v1490 = vshll.u32 2131351028, %v1481
        %v1491 = vshrl.u32 2102212464, %v1482
        %v1492 = vor.u32 %v1490, %v1491
        %v1493 = vshll.u32 2102212464, %v1481
        %v1494 = vshrl.u32 920167782, %v1482
        %v1495 = vor.u32 %v1493, %v1494
        %v1496 = vshll.u32 920167782, %v1481
        %v1497 = vshrl.u32 1326507024, %v1482
        %v1498 = vor.u32 %v1496, %v1497
        %vm1499 = vcmp.lt.s32.totalorder %v1480, 1
        %vm1500 = vcmp.lt.s32.totalorder %v1480, 2
        %vm1501 = vcmp.lt.s32.totalorder %v1480, 3
        %vm1502 = vcmp.lt.s32.totalorder %v1480, 4
        %v1503 = vsel %vm1499, %v1483, %v1486
        %v1504 = vsel %vm1502, %v1492, 2102212464
        %v1505 = vsel %vm1501, %v1489, %v1504
        %v1506 = vsel %vm1500, %v1503, %v1505
        %v1507 = vsel %vm1499, %v1486, %v1489
        %v1508 = vsel %vm1502, %v1495, 920167782
        %v1509 = vsel %vm1501, %v1492, %v1508
        %v1510 = vsel %vm1500, %v1507, %v1509
        %v1511 = vsel %vm1499, %v1489, %v1492
        %v1512 = vsel %vm1502, %v1498, 1326507024
        %v1513 = vsel %vm1501, %v1495, %v1512
        %v1514 = vsel %vm1500, %v1511, %v1513
        %v1515 = vshll.u32 %v1475, 8
        %v1516 = vand.u32 %v1515, 65535
        %v1517 = vshrl.u32 %v1515, 16
        %v1518 = vand.u32 %v1514, 65535
        %v1519 = vshrl.u32 %v1514, 16
        %v1520 = vmul.u32 %v1516, %v1518
        %v1521 = vmul.u32 %v1516, %v1519
        %v1522 = vmul.u32 %v1517, %v1518
        %v1523 = vmul.u32 %v1517, %v1519
        %v1524 = vshll.u32 %v1521, 16
        %v1525 = vshrl.u32 %v1521, 16
        %v1526 = vshll.u32 %v1522, 16
        %v1527 = vshrl.u32 %v1522, 16
        %vm1528 = vc.u32 %v1520, %v1524
        %v1529 = vsel %vm1528, 1, 0
        %v1530 = vadd.s32 %v1520, %v1524
        %v1531 = vadd.s32 %v1523, %v1529
        %vm1532 = vc.u32 %v1530, %v1526
        %v1533 = vsel %vm1532, 1, 0
        %v1534 = vadd.s32 %v1530, %v1526
        %v1535 = vadd.s32 %v1531, %v1533
        %v1536 = vadd.s32 %v1535, %v1525
        %v1537 = vadd.s32 %v1536, %v1527
        %v1538 = vand.u32 %v1515, 65535
        %v1539 = vshrl.u32 %v1515, 16
        %v1540 = vand.u32 %v1510, 65535
        %v1541 = vshrl.u32 %v1510, 16
        %v1542 = vmul.u32 %v1538, %v1540
        %v1543 = vmul.u32 %v1538, %v1541
        %v1544 = vmul.u32 %v1539, %v1540
        %v1545 = vmul.u32 %v1539, %v1541
        %v1546 = vshll.u32 %v1543, 16
        %v1547 = vshrl.u32 %v1543, 16
        %v1548 = vshll.u32 %v1544, 16
        %v1549 = vshrl.u32 %v1544, 16
        %vm1550 = vc.u32 %v1542, %v1546
        %v1551 = vsel %vm1550, 1, 0
        %v1552 = vadd.s32 %v1542, %v1546
        %v1553 = vadd.s32 %v1545, %v1551
        %vm1554 = vc.u32 %v1552, %v1548
        %v1555 = vsel %vm1554, 1, 0
        %v1556 = vadd.s32 %v1552, %v1548
        %v1557 = vadd.s32 %v1553, %v1555
        %v1558 = vadd.s32 %v1557, %v1547
        %v1559 = vadd.s32 %v1558, %v1549
        %v1560 = vmul.u32 %v1515, %v1506
        %v1561 = vadd.s32 %v1537, %v1556
        %vm1562 = vc.u32 %v1537, %v1556
        %v1563 = vadd.s32 %v1559, 1
        %v1564 = vsel %vm1562, %v1563, %v1559
        %v1565 = vadd.s32 %v1560, %v1564
        %v1566 = vadd.s32 %v1565, 536870912
        %v1567 = vshrl.u32 %v1566, 30
        %v1568 = vshll.u32 %v1567, 30
        %v1569 = vsub.s32 %v1565, %v1568
        %vm1570 = vcmp.lt.s32.totalorder %v1569, 0
        %v1571 = vsub.s32 0, %v1569
        %v1572 = vsel %vm1570, %v1571, %v1569
        %v1573 = vclz %v1572
        %v1574 = vsub.s32 %v1573, 2
        %vm1575 = vcmp.gt.s32.totalorder 0, %v1574
        %v1576 = vsel %vm1575, 0, %v1574
        %v1577 = vsub.s32 32, %v1576
        %v1578 = vshll.u32 %v1569, %v1576
        %v1579 = vshrl.u32 %v1561, %v1577
        %v1580 = vor.u32 %v1578, %v1579
        %v1581 = vsub.s32 4294967266, %v1576
        %v1582 = vadd.s32 %v1581, 127
        %v1583 = vshll.u32 %v1582, 23
        %v1584 = vor.u32 4788187, %v1583
        %v1585 = vand.u32 2147483647, %v1584
        %v1587 = vcvt.s32.f32 %v1580
        %v1588 = vmul.f32 %v1587, %v1585
        %v1589 = vxor.u32 %v1588, 2147483648
        %v1590 = vsel %vm1469, %v1589, %v1588
        %v1591 = vsub.s32 4, %v1567
        %v1592 = vsel %vm1469, %v1591, %v1567
        %v1593 = vsel %vm1468, %v479, %v1590
        %v1594 = vsel %vm1468, 0, %v1592
        %v1595 = vmul.f32 %v1593, %v1593
        %v1596 = vmul.f32 %v1595, -0.001358992
        %v1597 = vadd.f32 %v1596, 0.041655596
        %v1598 = vmul.f32 %v1595, %v1597
        %v1599 = vadd.f32 %v1598, -0.4999988
        %v1600 = vmul.f32 %v1595, %v1599
        %v1601 = vadd.f32 1.0, %v1600
        %v1602 = vmul.f32 %v1593, %v1593
        %v1603 = vmul.f32 %v1602, -0.00019511016
        %v1604 = vadd.f32 %v1603, 0.008332121
        %v1605 = vmul.f32 %v1602, %v1604
        %v1606 = vadd.f32 %v1605, -0.16666654
        %v1607 = vmul.f32 %v1602, %v1606
        %v1608 = vadd.f32 %v1607, 1.0
        %v1609 = vmul.f32 %v1608, %v1593
        %vm1610 = vweird.f32 %v479
        %v1611 = vadd.s32 %v1594, 3
        %v1612 = vand.u32 %v1611, 3
        %vm1613 = vcmp.lt.s32.totalorder %v1612, 2
        %vm1614 = vcmp.eq.s32.totalorder %v1612, 0
        %v1615 = vxor.u32 %v1609, 2147483648
        %v1616 = vsel %vm1614, %v1601, %v1615
        %vm1617 = vcmp.eq.s32.totalorder %v1612, 2
        %v1618 = vxor.u32 %v1601, 2147483648
        %v1619 = vsel %vm1617, %v1618, %v1609
        %v1620 = vsel %vm1613, %v1616, %v1619
        %v1621 = vsel %vm1610, nan, %v1620
        %v1622 = vand.u32 2147483647, %v480
        %vm1623 = vcmp.le.f32.partialorder %v1622, 0.7853982
        %vm1624 = vcmp.lt.s32.totalorder %v480, 0
        %v1625 = vand.u32 %v480, 2139095040
        %v1626 = vshrl.u32 %v1625, 23
        %v1627 = vsub.s32 %v1626, 127
        %v1628 = vand.u32 2147483647, %v480
        %v1629 = vand.u32 %v1628, 8388607
        %v1630 = vor.u32 %v1629, 8388608
        %v1631 = vsub.s32 0, %v1630
        %v1632 = vadd.s32 %v1627, 1
        %vm1633 = vcmp.gt.s32.totalorder %v1632, 0
        %v1634 = vsel %vm1633, %v1632, 0
        %v1635 = vshrl.u32 %v1634, 5
        %v1636 = vand.u32 %v1634, 31
        %v1637 = vsub.s32 32, %v1636
        %v1638 = vshrl.u32 683565275, %v1637
        %v1639 = vshll.u32 683565275, %v1636
        %v1640 = vshrl.u32 2475754826, %v1637
        %v1641 = vor.u32 %v1639, %v1640
        %v1642 = vshll.u32 2475754826, %v1636
        %v1643 = vshrl.u32 2131351028, %v1637
        %v1644 = vor.u32 %v1642, %v1643
        %v1645 = vshll.u32 2131351028, %v1636
        %v1646 = vshrl.u32 2102212464, %v1637
        %v1647 = vor.u32 %v1645, %v1646
        %v1648 = vshll.u32 2102212464, %v1636
        %v1649 = vshrl.u32 920167782, %v1637
        %v1650 = vor.u32 %v1648, %v1649
        %v1651 = vshll.u32 920167782, %v1636
        %v1652 = vshrl.u32 1326507024, %v1637
        %v1653 = vor.u32 %v1651, %v1652
        %vm1654 = vcmp.lt.s32.totalorder %v1635, 1
        %vm1655 = vcmp.lt.s32.totalorder %v1635, 2
        %vm1656 = vcmp.lt.s32.totalorder %v1635, 3
        %vm1657 = vcmp.lt.s32.totalorder %v1635, 4
        %v1658 = vsel %vm1654, %v1638, %v1641
        %v1659 = vsel %vm1657, %v1647, 2102212464
        %v1660 = vsel %vm1656, %v1644, %v1659
        %v1661 = vsel %vm1655, %v1658, %v1660
        %v1662 = vsel %vm1654, %v1641, %v1644
        %v1663 = vsel %vm1657, %v1650, 920167782
        %v1664 = vsel %vm1656, %v1647, %v1663
        %v1665 = vsel %vm1655, %v1662, %v1664
        %v1666 = vsel %vm1654, %v1644, %v1647
        %v1667 = vsel %vm1657, %v1653, 1326507024
        %v1668 = vsel %vm1656, %v1650, %v1667
        %v1669 = vsel %vm1655, %v1666, %v1668
        %v1670 = vshll.u32 %v1630, 8
        %v1671 = vand.u32 %v1670, 65535
        %v1672 = vshrl.u32 %v1670, 16
        %v1673 = vand.u32 %v1669, 65535
        %v1674 = vshrl.u32 %v1669, 16
        %v1675 = vmul.u32 %v1671, %v1673
        %v1676 = vmul.u32 %v1671, %v1674
        %v1677 = vmul.u32 %v1672, %v1673
        %v1678 = vmul.u32 %v1672, %v1674
        %v1679 = vshll.u32 %v1676, 16
        %v1680 = vshrl.u32 %v1676, 16
        %v1681 = vshll.u32 %v1677, 16
        %v1682 = vshrl.u32 %v1677, 16
        %vm1683 = vc.u32 %v1675, %v1679
        %v1684 = vsel %vm1683, 1, 0
        %v1685 = vadd.s32 %v1675, %v1679
        %v1686 = vadd.s32 %v1678, %v1684
        %vm1687 = vc.u32 %v1685, %v1681
        %v1688 = vsel %vm1687, 1, 0
        %v1689 = vadd.s32 %v1685, %v1681
        %v1690 = vadd.s32 %v1686, %v1688
        %v1691 = vadd.s32 %v1690, %v1680
        %v1692 = vadd.s32 %v1691, %v1682
        %v1693 = vand.u32 %v1670, 65535
        %v1694 = vshrl.u32 %v1670, 16
        %v1695 = vand.u32 %v1665, 65535
        %v1696 = vshrl.u32 %v1665, 16
        %v1697 = vmul.u32 %v1693, %v1695
        %v1698 = vmul.u32 %v1693, %v1696
        %v1699 = vmul.u32 %v1694, %v1695
        %v1700 = vmul.u32 %v1694, %v1696
        %v1701 = vshll.u32 %v1698, 16
        %v1702 = vshrl.u32 %v1698, 16
        %v1703 = vshll.u32 %v1699, 16
        %v1704 = vshrl.u32 %v1699, 16
        %vm1705 = vc.u32 %v1697, %v1701
        %v1706 = vsel %vm1705, 1, 0
        %v1707 = vadd.s32 %v1697, %v1701
        %v1708 = vadd.s32 %v1700, %v1706
        %vm1709 = vc.u32 %v1707, %v1703
        %v1710 = vsel %vm1709, 1, 0
        %v1711 = vadd.s32 %v1707, %v1703
        %v1712 = vadd.s32 %v1708, %v1710
        %v1713 = vadd.s32 %v1712, %v1702
        %v1714 = vadd.s32 %v1713, %v1704
        %v1715 = vmul.u32 %v1670, %v1661
        %v1716 = vadd.s32 %v1692, %v1711
        %vm1717 = vc.u32 %v1692, %v1711
        %v1718 = vadd.s32 %v1714, 1
        %v1719 = vsel %vm1717, %v1718, %v1714
        %v1720 = vadd.s32 %v1715, %v1719
        %v1721 = vadd.s32 %v1720, 536870912
        %v1722 = vshrl.u32 %v1721, 30
        %v1723 = vshll.u32 %v1722, 30
        %v1724 = vsub.s32 %v1720, %v1723
        %vm1725 = vcmp.lt.s32.totalorder %v1724, 0
        %v1726 = vsub.s32 0, %v1724
        %v1727 = vsel %vm1725, %v1726, %v1724
        %v1728 = vclz %v1727
        %v1729 = vsub.s32 %v1728, 2
        %vm1730 = vcmp.gt.s32.totalorder 0, %v1729
        %v1731 = vsel %vm1730, 0, %v1729
        %v1732 = vsub.s32 32, %v1731
        %v1733 = vshll.u32 %v1724, %v1731
        %v1734 = vshrl.u32 %v1716, %v1732
        %v1735 = vor.u32 %v1733, %v1734
        %v1736 = vsub.s32 4294967266, %v1731
        %v1737 = vadd.s32 %v1736, 127
        %v1738 = vshll.u32 %v1737, 23
        %v1739 = vor.u32 4788187, %v1738
        %v1740 = vand.u32 2147483647, %v1739
        %v1742 = vcvt.s32.f32 %v1735
        %v1743 = vmul.f32 %v1742, %v1740
        %v1744 = vxor.u32 %v1743, 2147483648
        %v1745 = vsel %vm1624, %v1744, %v1743
        %v1746 = vsub.s32 4, %v1722
        %v1747 = vsel %vm1624, %v1746, %v1722
        %v1748 = vsel %vm1623, %v480, %v1745
        %v1749 = vsel %vm1623, 0, %v1747
        %v1750 = vmul.f32 %v1748, %v1748
        %v1751 = vmul.f32 %v1750, -0.001358992
        %v1752 = vadd.f32 %v1751, 0.041655596
        %v1753 = vmul.f32 %v1750, %v1752
        %v1754 = vadd.f32 %v1753, -0.4999988
        %v1755 = vmul.f32 %v1750, %v1754
        %v1756 = vadd.f32 1.0, %v1755
        %v1757 = vmul.f32 %v1748, %v1748
        %v1758 = vmul.f32 %v1757, -0.00019511016
        %v1759 = vadd.f32 %v1758, 0.008332121
        %v1760 = vmul.f32 %v1757, %v1759
        %v1761 = vadd.f32 %v1760, -0.16666654
        %v1762 = vmul.f32 %v1757, %v1761
        %v1763 = vadd.f32 %v1762, 1.0
        %v1764 = vmul.f32 %v1763, %v1748
        %vm1765 = vweird.f32 %v480
        %v1766 = vadd.s32 %v1749, 3
        %v1767 = vand.u32 %v1766, 3
        %vm1768 = vcmp.lt.s32.totalorder %v1767, 2
        %vm1769 = vcmp.eq.s32.totalorder %v1767, 0
        %v1770 = vxor.u32 %v1764, 2147483648
        %v1771 = vsel %vm1769, %v1756, %v1770
        %vm1772 = vcmp.eq.s32.totalorder %v1767, 2
        %v1773 = vxor.u32 %v1756, 2147483648
        %v1774 = vsel %vm1772, %v1773, %v1764
        %v1775 = vsel %vm1768, %v1771, %v1774
        %v1776 = vsel %vm1765, nan, %v1775
        %v1777 = vand.u32 2147483647, %v481
        %vm1778 = vcmp.le.f32.partialorder %v1777, 0.7853982
        %vm1779 = vcmp.lt.s32.totalorder %v481, 0
        %v1780 = vand.u32 %v481, 2139095040
        %v1781 = vshrl.u32 %v1780, 23
        %v1782 = vsub.s32 %v1781, 127
        %v1783 = vand.u32 2147483647, %v481
        %v1784 = vand.u32 %v1783, 8388607
        %v1785 = vor.u32 %v1784, 8388608
        %v1786 = vsub.s32 0, %v1785
        %v1787 = vadd.s32 %v1782, 1
        %vm1788 = vcmp.gt.s32.totalorder %v1787, 0
        %v1789 = vsel %vm1788, %v1787, 0
        %v1790 = vshrl.u32 %v1789, 5
        %v1791 = vand.u32 %v1789, 31
        %v1792 = vsub.s32 32, %v1791
        %v1793 = vshrl.u32 683565275, %v1792
        %v1794 = vshll.u32 683565275, %v1791
        %v1795 = vshrl.u32 2475754826, %v1792
        %v1796 = vor.u32 %v1794, %v1795
        %v1797 = vshll.u32 2475754826, %v1791
        %v1798 = vshrl.u32 2131351028, %v1792
        %v1799 = vor.u32 %v1797, %v1798
        %v1800 = vshll.u32 2131351028, %v1791
        %v1801 = vshrl.u32 2102212464, %v1792
        %v1802 = vor.u32 %v1800, %v1801
        %v1803 = vshll.u32 2102212464, %v1791
        %v1804 = vshrl.u32 920167782, %v1792
        %v1805 = vor.u32 %v1803, %v1804
        %v1806 = vshll.u32 920167782, %v1791
        %v1807 = vshrl.u32 1326507024, %v1792
        %v1808 = vor.u32 %v1806, %v1807
        %vm1809 = vcmp.lt.s32.totalorder %v1790, 1
        %vm1810 = vcmp.lt.s32.totalorder %v1790, 2
        %vm1811 = vcmp.lt.s32.totalorder %v1790, 3
        %vm1812 = vcmp.lt.s32.totalorder %v1790, 4
        %v1813 = vsel %vm1809, %v1793, %v1796
        %v1814 = vsel %vm1812, %v1802, 2102212464
        %v1815 = vsel %vm1811, %v1799, %v1814
        %v1816 = vsel %vm1810, %v1813, %v1815
        %v1817 = vsel %vm1809, %v1796, %v1799
        %v1818 = vsel %vm1812, %v1805, 920167782
        %v1819 = vsel %vm1811, %v1802, %v1818
        %v1820 = vsel %vm1810, %v1817, %v1819
        %v1821 = vsel %vm1809, %v1799, %v1802
        %v1822 = vsel %vm1812, %v1808, 1326507024
        %v1823 = vsel %vm1811, %v1805, %v1822
        %v1824 = vsel %vm1810, %v1821, %v1823
        %v1825 = vshll.u32 %v1785, 8
        %v1826 = vand.u32 %v1825, 65535
        %v1827 = vshrl.u32 %v1825, 16
        %v1828 = vand.u32 %v1824, 65535
        %v1829 = vshrl.u32 %v1824, 16
        %v1830 = vmul.u32 %v1826, %v1828
        %v1831 = vmul.u32 %v1826, %v1829
        %v1832 = vmul.u32 %v1827, %v1828
        %v1833 = vmul.u32 %v1827, %v1829
        %v1834 = vshll.u32 %v1831, 16
        %v1835 = vshrl.u32 %v1831, 16
        %v1836 = vshll.u32 %v1832, 16
        %v1837 = vshrl.u32 %v1832, 16
        %vm1838 = vc.u32 %v1830, %v1834
        %v1839 = vsel %vm1838, 1, 0
        %v1840 = vadd.s32 %v1830, %v1834
        %v1841 = vadd.s32 %v1833, %v1839
        %vm1842 = vc.u32 %v1840, %v1836
        %v1843 = vsel %vm1842, 1, 0
        %v1844 = vadd.s32 %v1840, %v1836
        %v1845 = vadd.s32 %v1841, %v1843
        %v1846 = vadd.s32 %v1845, %v1835
        %v1847 = vadd.s32 %v1846, %v1837
        %v1848 = vand.u32 %v1825, 65535
        %v1849 = vshrl.u32 %v1825, 16
        %v1850 = vand.u32 %v1820, 65535
        %v1851 = vshrl.u32 %v1820, 16
        %v1852 = vmul.u32 %v1848, %v1850
        %v1853 = vmul.u32 %v1848, %v1851
        %v1854 = vmul.u32 %v1849, %v1850
        %v1855 = vmul.u32 %v1849, %v1851
        %v1856 = vshll.u32 %v1853, 16
        %v1857 = vshrl.u32 %v1853, 16
        %v1858 = vshll.u32 %v1854, 16
        %v1859 = vshrl.u32 %v1854, 16
        %vm1860 = vc.u32 %v1852, %v1856
        %v1861 = vsel %vm1860, 1, 0
        %v1862 = vadd.s32 %v1852, %v1856
        %v1863 = vadd.s32 %v1855, %v1861
        %vm1864 = vc.u32 %v1862, %v1858
        %v1865 = vsel %vm1864, 1, 0
        %v1866 = vadd.s32 %v1862, %v1858
        %v1867 = vadd.s32 %v1863, %v1865
        %v1868 = vadd.s32 %v1867, %v1857
        %v1869 = vadd.s32 %v1868, %v1859
        %v1870 = vmul.u32 %v1825, %v1816
        %v1871 = vadd.s32 %v1847, %v1866
        %vm1872 = vc.u32 %v1847, %v1866
        %v1873 = vadd.s32 %v1869, 1
        %v1874 = vsel %vm1872, %v1873, %v1869
        %v1875 = vadd.s32 %v1870, %v1874
        %v1876 = vadd.s32 %v1875, 536870912
        %v1877 = vshrl.u32 %v1876, 30
        %v1878 = vshll.u32 %v1877, 30
        %v1879 = vsub.s32 %v1875, %v1878
        %vm1880 = vcmp.lt.s32.totalorder %v1879, 0
        %v1881 = vsub.s32 0, %v1879
        %v1882 = vsel %vm1880, %v1881, %v1879
        %v1883 = vclz %v1882
        %v1884 = vsub.s32 %v1883, 2
        %vm1885 = vcmp.gt.s32.totalorder 0, %v1884
        %v1886 = vsel %vm1885, 0, %v1884
        %v1887 = vsub.s32 32, %v1886
        %v1888 = vshll.u32 %v1879, %v1886
        %v1889 = vshrl.u32 %v1871, %v1887
        %v1890 = vor.u32 %v1888, %v1889
        %v1891 = vsub.s32 4294967266, %v1886
        %v1892 = vadd.s32 %v1891, 127
        %v1893 = vshll.u32 %v1892, 23
        %v1894 = vor.u32 4788187, %v1893
        %v1895 = vand.u32 2147483647, %v1894
        %v1897 = vcvt.s32.f32 %v1890
        %v1898 = vmul.f32 %v1897, %v1895
        %v1899 = vxor.u32 %v1898, 2147483648
        %v1900 = vsel %vm1779, %v1899, %v1898
        %v1901 = vsub.s32 4, %v1877
        %v1902 = vsel %vm1779, %v1901, %v1877
        %v1903 = vsel %vm1778, %v481, %v1900
        %v1904 = vsel %vm1778, 0, %v1902
        %v1905 = vmul.f32 %v1903, %v1903
        %v1906 = vmul.f32 %v1905, -0.001358992
        %v1907 = vadd.f32 %v1906, 0.041655596
        %v1908 = vmul.f32 %v1905, %v1907
        %v1909 = vadd.f32 %v1908, -0.4999988
        %v1910 = vmul.f32 %v1905, %v1909
        %v1911 = vadd.f32 1.0, %v1910
        %v1912 = vmul.f32 %v1903, %v1903
        %v1913 = vmul.f32 %v1912, -0.00019511016
        %v1914 = vadd.f32 %v1913, 0.008332121
        %v1915 = vmul.f32 %v1912, %v1914
        %v1916 = vadd.f32 %v1915, -0.16666654
        %v1917 = vmul.f32 %v1912, %v1916
        %v1918 = vadd.f32 %v1917, 1.0
        %v1919 = vmul.f32 %v1918, %v1903
        %vm1920 = vweird.f32 %v481
        %v1921 = vadd.s32 %v1904, 3
        %v1922 = vand.u32 %v1921, 3
        %vm1923 = vcmp.lt.s32.totalorder %v1922, 2
        %vm1924 = vcmp.eq.s32.totalorder %v1922, 0
        %v1925 = vxor.u32 %v1919, 2147483648
        %v1926 = vsel %vm1924, %v1911, %v1925
        %vm1927 = vcmp.eq.s32.totalorder %v1922, 2
        %v1928 = vxor.u32 %v1911, 2147483648
        %v1929 = vsel %vm1927, %v1928, %v1919
        %v1930 = vsel %vm1923, %v1926, %v1929
        %v1931 = vsel %vm1920, nan, %v1930
        %v1932 = vand.u32 2147483647, %v482
        %vm1933 = vcmp.le.f32.partialorder %v1932, 0.7853982
        %vm1934 = vcmp.lt.s32.totalorder %v482, 0
        %v1935 = vand.u32 %v482, 2139095040
        %v1936 = vshrl.u32 %v1935, 23
        %v1937 = vsub.s32 %v1936, 127
        %v1938 = vand.u32 2147483647, %v482
        %v1939 = vand.u32 %v1938, 8388607
        %v1940 = vor.u32 %v1939, 8388608
        %v1941 = vsub.s32 0, %v1940
        %v1942 = vadd.s32 %v1937, 1
        %vm1943 = vcmp.gt.s32.totalorder %v1942, 0
        %v1944 = vsel %vm1943, %v1942, 0
        %v1945 = vshrl.u32 %v1944, 5
        %v1946 = vand.u32 %v1944, 31
        %v1947 = vsub.s32 32, %v1946
        %v1948 = vshrl.u32 683565275, %v1947
        %v1949 = vshll.u32 683565275, %v1946
        %v1950 = vshrl.u32 2475754826, %v1947
        %v1951 = vor.u32 %v1949, %v1950
        %v1952 = vshll.u32 2475754826, %v1946
        %v1953 = vshrl.u32 2131351028, %v1947
        %v1954 = vor.u32 %v1952, %v1953
        %v1955 = vshll.u32 2131351028, %v1946
        %v1956 = vshrl.u32 2102212464, %v1947
        %v1957 = vor.u32 %v1955, %v1956
        %v1958 = vshll.u32 2102212464, %v1946
        %v1959 = vshrl.u32 920167782, %v1947
        %v1960 = vor.u32 %v1958, %v1959
        %v1961 = vshll.u32 920167782, %v1946
        %v1962 = vshrl.u32 1326507024, %v1947
        %v1963 = vor.u32 %v1961, %v1962
        %vm1964 = vcmp.lt.s32.totalorder %v1945, 1
        %vm1965 = vcmp.lt.s32.totalorder %v1945, 2
        %vm1966 = vcmp.lt.s32.totalorder %v1945, 3
        %vm1967 = vcmp.lt.s32.totalorder %v1945, 4
        %v1968 = vsel %vm1964, %v1948, %v1951
        %v1969 = vsel %vm1967, %v1957, 2102212464
        %v1970 = vsel %vm1966, %v1954, %v1969
        %v1971 = vsel %vm1965, %v1968, %v1970
        %v1972 = vsel %vm1964, %v1951, %v1954
        %v1973 = vsel %vm1967, %v1960, 920167782
        %v1974 = vsel %vm1966, %v1957, %v1973
        %v1975 = vsel %vm1965, %v1972, %v1974
        %v1976 = vsel %vm1964, %v1954, %v1957
        %v1977 = vsel %vm1967, %v1963, 1326507024
        %v1978 = vsel %vm1966, %v1960, %v1977
        %v1979 = vsel %vm1965, %v1976, %v1978
        %v1980 = vshll.u32 %v1940, 8
        %v1981 = vand.u32 %v1980, 65535
        %v1982 = vshrl.u32 %v1980, 16
        %v1983 = vand.u32 %v1979, 65535
        %v1984 = vshrl.u32 %v1979, 16
        %v1985 = vmul.u32 %v1981, %v1983
        %v1986 = vmul.u32 %v1981, %v1984
        %v1987 = vmul.u32 %v1982, %v1983
        %v1988 = vmul.u32 %v1982, %v1984
        %v1989 = vshll.u32 %v1986, 16
        %v1990 = vshrl.u32 %v1986, 16
        %v1991 = vshll.u32 %v1987, 16
        %v1992 = vshrl.u32 %v1987, 16
        %vm1993 = vc.u32 %v1985, %v1989
        %v1994 = vsel %vm1993, 1, 0
        %v1995 = vadd.s32 %v1985, %v1989
        %v1996 = vadd.s32 %v1988, %v1994
        %vm1997 = vc.u32 %v1995, %v1991
        %v1998 = vsel %vm1997, 1, 0
        %v1999 = vadd.s32 %v1995, %v1991
        %v2000 = vadd.s32 %v1996, %v1998
        %v2001 = vadd.s32 %v2000, %v1990
        %v2002 = vadd.s32 %v2001, %v1992
        %v2003 = vand.u32 %v1980, 65535
        %v2004 = vshrl.u32 %v1980, 16
        %v2005 = vand.u32 %v1975, 65535
        %v2006 = vshrl.u32 %v1975, 16
        %v2007 = vmul.u32 %v2003, %v2005
        %v2008 = vmul.u32 %v2003, %v2006
        %v2009 = vmul.u32 %v2004, %v2005
        %v2010 = vmul.u32 %v2004, %v2006
        %v2011 = vshll.u32 %v2008, 16
        %v2012 = vshrl.u32 %v2008, 16
        %v2013 = vshll.u32 %v2009, 16
        %v2014 = vshrl.u32 %v2009, 16
        %vm2015 = vc.u32 %v2007, %v2011
        %v2016 = vsel %vm2015, 1, 0
        %v2017 = vadd.s32 %v2007, %v2011
        %v2018 = vadd.s32 %v2010, %v2016
        %vm2019 = vc.u32 %v2017, %v2013
        %v2020 = vsel %vm2019, 1, 0
        %v2021 = vadd.s32 %v2017, %v2013
        %v2022 = vadd.s32 %v2018, %v2020
        %v2023 = vadd.s32 %v2022, %v2012
        %v2024 = vadd.s32 %v2023, %v2014
        %v2025 = vmul.u32 %v1980, %v1971
        %v2026 = vadd.s32 %v2002, %v2021
        %vm2027 = vc.u32 %v2002, %v2021
        %v2028 = vadd.s32 %v2024, 1
        %v2029 = vsel %vm2027, %v2028, %v2024
        %v2030 = vadd.s32 %v2025, %v2029
        %v2031 = vadd.s32 %v2030, 536870912
        %v2032 = vshrl.u32 %v2031, 30
        %v2033 = vshll.u32 %v2032, 30
        %v2034 = vsub.s32 %v2030, %v2033
        %vm2035 = vcmp.lt.s32.totalorder %v2034, 0
        %v2036 = vsub.s32 0, %v2034
        %v2037 = vsel %vm2035, %v2036, %v2034
        %v2038 = vclz %v2037
        %v2039 = vsub.s32 %v2038, 2
        %vm2040 = vcmp.gt.s32.totalorder 0, %v2039
        %v2041 = vsel %vm2040, 0, %v2039
        %v2042 = vsub.s32 32, %v2041
        %v2043 = vshll.u32 %v2034, %v2041
        %v2044 = vshrl.u32 %v2026, %v2042
        %v2045 = vor.u32 %v2043, %v2044
        %v2046 = vsub.s32 4294967266, %v2041
        %v2047 = vadd.s32 %v2046, 127
        %v2048 = vshll.u32 %v2047, 23
        %v2049 = vor.u32 4788187, %v2048
        %v2050 = vand.u32 2147483647, %v2049
        %v2052 = vcvt.s32.f32 %v2045
        %v2053 = vmul.f32 %v2052, %v2050
        %v2054 = vxor.u32 %v2053, 2147483648
        %v2055 = vsel %vm1934, %v2054, %v2053
        %v2056 = vsub.s32 4, %v2032
        %v2057 = vsel %vm1934, %v2056, %v2032
        %v2058 = vsel %vm1933, %v482, %v2055
        %v2059 = vsel %vm1933, 0, %v2057
        %v2060 = vmul.f32 %v2058, %v2058
        %v2061 = vmul.f32 %v2060, -0.001358992
        %v2062 = vadd.f32 %v2061, 0.041655596
        %v2063 = vmul.f32 %v2060, %v2062
        %v2064 = vadd.f32 %v2063, -0.4999988
        %v2065 = vmul.f32 %v2060, %v2064
        %v2066 = vadd.f32 1.0, %v2065
        %v2067 = vmul.f32 %v2058, %v2058
        %v2068 = vmul.f32 %v2067, -0.00019511016
        %v2069 = vadd.f32 %v2068, 0.008332121
        %v2070 = vmul.f32 %v2067, %v2069
        %v2071 = vadd.f32 %v2070, -0.16666654
        %v2072 = vmul.f32 %v2067, %v2071
        %v2073 = vadd.f32 %v2072, 1.0
        %v2074 = vmul.f32 %v2073, %v2058
        %vm2075 = vweird.f32 %v482
        %v2076 = vadd.s32 %v2059, 3
        %v2077 = vand.u32 %v2076, 3
        %vm2078 = vcmp.lt.s32.totalorder %v2077, 2
        %vm2079 = vcmp.eq.s32.totalorder %v2077, 0
        %v2080 = vxor.u32 %v2074, 2147483648
        %v2081 = vsel %vm2079, %v2066, %v2080
        %vm2082 = vcmp.eq.s32.totalorder %v2077, 2
        %v2083 = vxor.u32 %v2066, 2147483648
        %v2084 = vsel %vm2082, %v2083, %v2074
        %v2085 = vsel %vm2078, %v2081, %v2084
        %v2086 = vsel %vm2075, nan, %v2085
        %v2087 = vand.u32 2147483647, %v483
        %vm2088 = vcmp.le.f32.partialorder %v2087, 0.7853982
        %vm2089 = vcmp.lt.s32.totalorder %v483, 0
        %v2090 = vand.u32 %v483, 2139095040
        %v2091 = vshrl.u32 %v2090, 23
        %v2092 = vsub.s32 %v2091, 127
        %v2093 = vand.u32 2147483647, %v483
        %v2094 = vand.u32 %v2093, 8388607
        %v2095 = vor.u32 %v2094, 8388608
        %v2096 = vsub.s32 0, %v2095
        %v2097 = vadd.s32 %v2092, 1
        %vm2098 = vcmp.gt.s32.totalorder %v2097, 0
        %v2099 = vsel %vm2098, %v2097, 0
        %v2100 = vshrl.u32 %v2099, 5
        %v2101 = vand.u32 %v2099, 31
        %v2102 = vsub.s32 32, %v2101
        %v2103 = vshrl.u32 683565275, %v2102
        %v2104 = vshll.u32 683565275, %v2101
        %v2105 = vshrl.u32 2475754826, %v2102
        %v2106 = vor.u32 %v2104, %v2105
        %v2107 = vshll.u32 2475754826, %v2101
        %v2108 = vshrl.u32 2131351028, %v2102
        %v2109 = vor.u32 %v2107, %v2108
        %v2110 = vshll.u32 2131351028, %v2101
        %v2111 = vshrl.u32 2102212464, %v2102
        %v2112 = vor.u32 %v2110, %v2111
        %v2113 = vshll.u32 2102212464, %v2101
        %v2114 = vshrl.u32 920167782, %v2102
        %v2115 = vor.u32 %v2113, %v2114
        %v2116 = vshll.u32 920167782, %v2101
        %v2117 = vshrl.u32 1326507024, %v2102
        %v2118 = vor.u32 %v2116, %v2117
        %vm2119 = vcmp.lt.s32.totalorder %v2100, 1
        %vm2120 = vcmp.lt.s32.totalorder %v2100, 2
        %vm2121 = vcmp.lt.s32.totalorder %v2100, 3
        %vm2122 = vcmp.lt.s32.totalorder %v2100, 4
        %v2123 = vsel %vm2119, %v2103, %v2106
        %v2124 = vsel %vm2122, %v2112, 2102212464
        %v2125 = vsel %vm2121, %v2109, %v2124
        %v2126 = vsel %vm2120, %v2123, %v2125
        %v2127 = vsel %vm2119, %v2106, %v2109
        %v2128 = vsel %vm2122, %v2115, 920167782
        %v2129 = vsel %vm2121, %v2112, %v2128
        %v2130 = vsel %vm2120, %v2127, %v2129
        %v2131 = vsel %vm2119, %v2109, %v2112
        %v2132 = vsel %vm2122, %v2118, 1326507024
        %v2133 = vsel %vm2121, %v2115, %v2132
        %v2134 = vsel %vm2120, %v2131, %v2133
        %v2135 = vshll.u32 %v2095, 8
        %v2136 = vand.u32 %v2135, 65535
        %v2137 = vshrl.u32 %v2135, 16
        %v2138 = vand.u32 %v2134, 65535
        %v2139 = vshrl.u32 %v2134, 16
        %v2140 = vmul.u32 %v2136, %v2138
        %v2141 = vmul.u32 %v2136, %v2139
        %v2142 = vmul.u32 %v2137, %v2138
        %v2143 = vmul.u32 %v2137, %v2139
        %v2144 = vshll.u32 %v2141, 16
        %v2145 = vshrl.u32 %v2141, 16
        %v2146 = vshll.u32 %v2142, 16
        %v2147 = vshrl.u32 %v2142, 16
        %vm2148 = vc.u32 %v2140, %v2144
        %v2149 = vsel %vm2148, 1, 0
        %v2150 = vadd.s32 %v2140, %v2144
        %v2151 = vadd.s32 %v2143, %v2149
        %vm2152 = vc.u32 %v2150, %v2146
        %v2153 = vsel %vm2152, 1, 0
        %v2154 = vadd.s32 %v2150, %v2146
        %v2155 = vadd.s32 %v2151, %v2153
        %v2156 = vadd.s32 %v2155, %v2145
        %v2157 = vadd.s32 %v2156, %v2147
        %v2158 = vand.u32 %v2135, 65535
        %v2159 = vshrl.u32 %v2135, 16
        %v2160 = vand.u32 %v2130, 65535
        %v2161 = vshrl.u32 %v2130, 16
        %v2162 = vmul.u32 %v2158, %v2160
        %v2163 = vmul.u32 %v2158, %v2161
        %v2164 = vmul.u32 %v2159, %v2160
        %v2165 = vmul.u32 %v2159, %v2161
        %v2166 = vshll.u32 %v2163, 16
        %v2167 = vshrl.u32 %v2163, 16
        %v2168 = vshll.u32 %v2164, 16
        %v2169 = vshrl.u32 %v2164, 16
        %vm2170 = vc.u32 %v2162, %v2166
        %v2171 = vsel %vm2170, 1, 0
        %v2172 = vadd.s32 %v2162, %v2166
        %v2173 = vadd.s32 %v2165, %v2171
        %vm2174 = vc.u32 %v2172, %v2168
        %v2175 = vsel %vm2174, 1, 0
        %v2176 = vadd.s32 %v2172, %v2168
        %v2177 = vadd.s32 %v2173, %v2175
        %v2178 = vadd.s32 %v2177, %v2167
        %v2179 = vadd.s32 %v2178, %v2169
        %v2180 = vmul.u32 %v2135, %v2126
        %v2181 = vadd.s32 %v2157, %v2176
        %vm2182 = vc.u32 %v2157, %v2176
        %v2183 = vadd.s32 %v2179, 1
        %v2184 = vsel %vm2182, %v2183, %v2179
        %v2185 = vadd.s32 %v2180, %v2184
        %v2186 = vadd.s32 %v2185, 536870912
        %v2187 = vshrl.u32 %v2186, 30
        %v2188 = vshll.u32 %v2187, 30
        %v2189 = vsub.s32 %v2185, %v2188
        %vm2190 = vcmp.lt.s32.totalorder %v2189, 0
        %v2191 = vsub.s32 0, %v2189
        %v2192 = vsel %vm2190, %v2191, %v2189
        %v2193 = vclz %v2192
        %v2194 = vsub.s32 %v2193, 2
        %vm2195 = vcmp.gt.s32.totalorder 0, %v2194
        %v2196 = vsel %vm2195, 0, %v2194
        %v2197 = vsub.s32 32, %v2196
        %v2198 = vshll.u32 %v2189, %v2196
        %v2199 = vshrl.u32 %v2181, %v2197
        %v2200 = vor.u32 %v2198, %v2199
        %v2201 = vsub.s32 4294967266, %v2196
        %v2202 = vadd.s32 %v2201, 127
        %v2203 = vshll.u32 %v2202, 23
        %v2204 = vor.u32 4788187, %v2203
        %v2205 = vand.u32 2147483647, %v2204
        %v2207 = vcvt.s32.f32 %v2200
        %v2208 = vmul.f32 %v2207, %v2205
        %v2209 = vxor.u32 %v2208, 2147483648
        %v2210 = vsel %vm2089, %v2209, %v2208
        %v2211 = vsub.s32 4, %v2187
        %v2212 = vsel %vm2089, %v2211, %v2187
        %v2213 = vsel %vm2088, %v483, %v2210
        %v2214 = vsel %vm2088, 0, %v2212
        %v2215 = vmul.f32 %v2213, %v2213
        %v2216 = vmul.f32 %v2215, -0.001358992
        %v2217 = vadd.f32 %v2216, 0.041655596
        %v2218 = vmul.f32 %v2215, %v2217
        %v2219 = vadd.f32 %v2218, -0.4999988
        %v2220 = vmul.f32 %v2215, %v2219
        %v2221 = vadd.f32 1.0, %v2220
        %v2222 = vmul.f32 %v2213, %v2213
        %v2223 = vmul.f32 %v2222, -0.00019511016
        %v2224 = vadd.f32 %v2223, 0.008332121
        %v2225 = vmul.f32 %v2222, %v2224
        %v2226 = vadd.f32 %v2225, -0.16666654
        %v2227 = vmul.f32 %v2222, %v2226
        %v2228 = vadd.f32 %v2227, 1.0
        %v2229 = vmul.f32 %v2228, %v2213
        %vm2230 = vweird.f32 %v483
        %v2231 = vadd.s32 %v2214, 3
        %v2232 = vand.u32 %v2231, 3
        %vm2233 = vcmp.lt.s32.totalorder %v2232, 2
        %vm2234 = vcmp.eq.s32.totalorder %v2232, 0
        %v2235 = vxor.u32 %v2229, 2147483648
        %v2236 = vsel %vm2234, %v2221, %v2235
        %vm2237 = vcmp.eq.s32.totalorder %v2232, 2
        %v2238 = vxor.u32 %v2221, 2147483648
        %v2239 = vsel %vm2237, %v2238, %v2229
        %v2240 = vsel %vm2233, %v2236, %v2239
        %v2241 = vsel %vm2230, nan, %v2240
        %v2242 = vand.u32 2147483647, %v484
        %vm2243 = vcmp.le.f32.partialorder %v2242, 0.7853982
        %vm2244 = vcmp.lt.s32.totalorder %v484, 0
        %v2245 = vand.u32 %v484, 2139095040
        %v2246 = vshrl.u32 %v2245, 23
        %v2247 = vsub.s32 %v2246, 127
        %v2248 = vand.u32 2147483647, %v484
        %v2249 = vand.u32 %v2248, 8388607
        %v2250 = vor.u32 %v2249, 8388608
        %v2251 = vsub.s32 0, %v2250
        %v2252 = vadd.s32 %v2247, 1
        %vm2253 = vcmp.gt.s32.totalorder %v2252, 0
        %v2254 = vsel %vm2253, %v2252, 0
        %v2255 = vshrl.u32 %v2254, 5
        %v2256 = vand.u32 %v2254, 31
        %v2257 = vsub.s32 32, %v2256
        %v2258 = vshrl.u32 683565275, %v2257
        %v2259 = vshll.u32 683565275, %v2256
        %v2260 = vshrl.u32 2475754826, %v2257
        %v2261 = vor.u32 %v2259, %v2260
        %v2262 = vshll.u32 2475754826, %v2256
        %v2263 = vshrl.u32 2131351028, %v2257
        %v2264 = vor.u32 %v2262, %v2263
        %v2265 = vshll.u32 2131351028, %v2256
        %v2266 = vshrl.u32 2102212464, %v2257
        %v2267 = vor.u32 %v2265, %v2266
        %v2268 = vshll.u32 2102212464, %v2256
        %v2269 = vshrl.u32 920167782, %v2257
        %v2270 = vor.u32 %v2268, %v2269
        %v2271 = vshll.u32 920167782, %v2256
        %v2272 = vshrl.u32 1326507024, %v2257
        %v2273 = vor.u32 %v2271, %v2272
        %vm2274 = vcmp.lt.s32.totalorder %v2255, 1
        %vm2275 = vcmp.lt.s32.totalorder %v2255, 2
        %vm2276 = vcmp.lt.s32.totalorder %v2255, 3
        %vm2277 = vcmp.lt.s32.totalorder %v2255, 4
        %v2278 = vsel %vm2274, %v2258, %v2261
        %v2279 = vsel %vm2277, %v2267, 2102212464
        %v2280 = vsel %vm2276, %v2264, %v2279
        %v2281 = vsel %vm2275, %v2278, %v2280
        %v2282 = vsel %vm2274, %v2261, %v2264
        %v2283 = vsel %vm2277, %v2270, 920167782
        %v2284 = vsel %vm2276, %v2267, %v2283
        %v2285 = vsel %vm2275, %v2282, %v2284
        %v2286 = vsel %vm2274, %v2264, %v2267
        %v2287 = vsel %vm2277, %v2273, 1326507024
        %v2288 = vsel %vm2276, %v2270, %v2287
        %v2289 = vsel %vm2275, %v2286, %v2288
        %v2290 = vshll.u32 %v2250, 8
        %v2291 = vand.u32 %v2290, 65535
        %v2292 = vshrl.u32 %v2290, 16
        %v2293 = vand.u32 %v2289, 65535
        %v2294 = vshrl.u32 %v2289, 16
        %v2295 = vmul.u32 %v2291, %v2293
        %v2296 = vmul.u32 %v2291, %v2294
        %v2297 = vmul.u32 %v2292, %v2293
        %v2298 = vmul.u32 %v2292, %v2294
        %v2299 = vshll.u32 %v2296, 16
        %v2300 = vshrl.u32 %v2296, 16
        %v2301 = vshll.u32 %v2297, 16
        %v2302 = vshrl.u32 %v2297, 16
        %vm2303 = vc.u32 %v2295, %v2299
        %v2304 = vsel %vm2303, 1, 0
        %v2305 = vadd.s32 %v2295, %v2299
        %v2306 = vadd.s32 %v2298, %v2304
        %vm2307 = vc.u32 %v2305, %v2301
        %v2308 = vsel %vm2307, 1, 0
        %v2309 = vadd.s32 %v2305, %v2301
        %v2310 = vadd.s32 %v2306, %v2308
        %v2311 = vadd.s32 %v2310, %v2300
        %v2312 = vadd.s32 %v2311, %v2302
        %v2313 = vand.u32 %v2290, 65535
        %v2314 = vshrl.u32 %v2290, 16
        %v2315 = vand.u32 %v2285, 65535
        %v2316 = vshrl.u32 %v2285, 16
        %v2317 = vmul.u32 %v2313, %v2315
        %v2318 = vmul.u32 %v2313, %v2316
        %v2319 = vmul.u32 %v2314, %v2315
        %v2320 = vmul.u32 %v2314, %v2316
        %v2321 = vshll.u32 %v2318, 16
        %v2322 = vshrl.u32 %v2318, 16
        %v2323 = vshll.u32 %v2319, 16
        %v2324 = vshrl.u32 %v2319, 16
        %vm2325 = vc.u32 %v2317, %v2321
        %v2326 = vsel %vm2325, 1, 0
        %v2327 = vadd.s32 %v2317, %v2321
        %v2328 = vadd.s32 %v2320, %v2326
        %vm2329 = vc.u32 %v2327, %v2323
        %v2330 = vsel %vm2329, 1, 0
        %v2331 = vadd.s32 %v2327, %v2323
        %v2332 = vadd.s32 %v2328, %v2330
        %v2333 = vadd.s32 %v2332, %v2322
        %v2334 = vadd.s32 %v2333, %v2324
        %v2335 = vmul.u32 %v2290, %v2281
        %v2336 = vadd.s32 %v2312, %v2331
        %vm2337 = vc.u32 %v2312, %v2331
        %v2338 = vadd.s32 %v2334, 1
        %v2339 = vsel %vm2337, %v2338, %v2334
        %v2340 = vadd.s32 %v2335, %v2339
        %v2341 = vadd.s32 %v2340, 536870912
        %v2342 = vshrl.u32 %v2341, 30
        %v2343 = vshll.u32 %v2342, 30
        %v2344 = vsub.s32 %v2340, %v2343
        %vm2345 = vcmp.lt.s32.totalorder %v2344, 0
        %v2346 = vsub.s32 0, %v2344
        %v2347 = vsel %vm2345, %v2346, %v2344
        %v2348 = vclz %v2347
        %v2349 = vsub.s32 %v2348, 2
        %vm2350 = vcmp.gt.s32.totalorder 0, %v2349
        %v2351 = vsel %vm2350, 0, %v2349
        %v2352 = vsub.s32 32, %v2351
        %v2353 = vshll.u32 %v2344, %v2351
        %v2354 = vshrl.u32 %v2336, %v2352
        %v2355 = vor.u32 %v2353, %v2354
        %v2356 = vsub.s32 4294967266, %v2351
        %v2357 = vadd.s32 %v2356, 127
        %v2358 = vshll.u32 %v2357, 23
        %v2359 = vor.u32 4788187, %v2358
        %v2360 = vand.u32 2147483647, %v2359
        %v2362 = vcvt.s32.f32 %v2355
        %v2363 = vmul.f32 %v2362, %v2360
        %v2364 = vxor.u32 %v2363, 2147483648
        %v2365 = vsel %vm2244, %v2364, %v2363
        %v2366 = vsub.s32 4, %v2342
        %v2367 = vsel %vm2244, %v2366, %v2342
        %v2368 = vsel %vm2243, %v484, %v2365
        %v2369 = vsel %vm2243, 0, %v2367
        %v2370 = vmul.f32 %v2368, %v2368
        %v2371 = vmul.f32 %v2370, -0.001358992
        %v2372 = vadd.f32 %v2371, 0.041655596
        %v2373 = vmul.f32 %v2370, %v2372
        %v2374 = vadd.f32 %v2373, -0.4999988
        %v2375 = vmul.f32 %v2370, %v2374
        %v2376 = vadd.f32 1.0, %v2375
        %v2377 = vmul.f32 %v2368, %v2368
        %v2378 = vmul.f32 %v2377, -0.00019511016
        %v2379 = vadd.f32 %v2378, 0.008332121
        %v2380 = vmul.f32 %v2377, %v2379
        %v2381 = vadd.f32 %v2380, -0.16666654
        %v2382 = vmul.f32 %v2377, %v2381
        %v2383 = vadd.f32 %v2382, 1.0
        %v2384 = vmul.f32 %v2383, %v2368
        %vm2385 = vweird.f32 %v484
        %v2386 = vadd.s32 %v2369, 3
        %v2387 = vand.u32 %v2386, 3
        %vm2388 = vcmp.lt.s32.totalorder %v2387, 2
        %vm2389 = vcmp.eq.s32.totalorder %v2387, 0
        %v2390 = vxor.u32 %v2384, 2147483648
        %v2391 = vsel %vm2389, %v2376, %v2390
        %vm2392 = vcmp.eq.s32.totalorder %v2387, 2
        %v2393 = vxor.u32 %v2376, 2147483648
        %v2394 = vsel %vm2392, %v2393, %v2384
        %v2395 = vsel %vm2388, %v2391, %v2394
        %v2396 = vsel %vm2385, nan, %v2395
        %v2397 = vand.u32 2147483647, %v485
        %vm2398 = vcmp.le.f32.partialorder %v2397, 0.7853982
        %vm2399 = vcmp.lt.s32.totalorder %v485, 0
        %v2400 = vand.u32 %v485, 2139095040
        %v2401 = vshrl.u32 %v2400, 23
        %v2402 = vsub.s32 %v2401, 127
        %v2403 = vand.u32 2147483647, %v485
        %v2404 = vand.u32 %v2403, 8388607
        %v2405 = vor.u32 %v2404, 8388608
        %v2406 = vsub.s32 0, %v2405
        %v2407 = vadd.s32 %v2402, 1
        %vm2408 = vcmp.gt.s32.totalorder %v2407, 0
        %v2409 = vsel %vm2408, %v2407, 0
        %v2410 = vshrl.u32 %v2409, 5
        %v2411 = vand.u32 %v2409, 31
        %v2412 = vsub.s32 32, %v2411
        %v2413 = vshrl.u32 683565275, %v2412
        %v2414 = vshll.u32 683565275, %v2411
        %v2415 = vshrl.u32 2475754826, %v2412
        %v2416 = vor.u32 %v2414, %v2415
        %v2417 = vshll.u32 2475754826, %v2411
        %v2418 = vshrl.u32 2131351028, %v2412
        %v2419 = vor.u32 %v2417, %v2418
        %v2420 = vshll.u32 2131351028, %v2411
        %v2421 = vshrl.u32 2102212464, %v2412
        %v2422 = vor.u32 %v2420, %v2421
        %v2423 = vshll.u32 2102212464, %v2411
        %v2424 = vshrl.u32 920167782, %v2412
        %v2425 = vor.u32 %v2423, %v2424
        %v2426 = vshll.u32 920167782, %v2411
        %v2427 = vshrl.u32 1326507024, %v2412
        %v2428 = vor.u32 %v2426, %v2427
        %vm2429 = vcmp.lt.s32.totalorder %v2410, 1
        %vm2430 = vcmp.lt.s32.totalorder %v2410, 2
        %vm2431 = vcmp.lt.s32.totalorder %v2410, 3
        %vm2432 = vcmp.lt.s32.totalorder %v2410, 4
        %v2433 = vsel %vm2429, %v2413, %v2416
        %v2434 = vsel %vm2432, %v2422, 2102212464
        %v2435 = vsel %vm2431, %v2419, %v2434
        %v2436 = vsel %vm2430, %v2433, %v2435
        %v2437 = vsel %vm2429, %v2416, %v2419
        %v2438 = vsel %vm2432, %v2425, 920167782
        %v2439 = vsel %vm2431, %v2422, %v2438
        %v2440 = vsel %vm2430, %v2437, %v2439
        %v2441 = vsel %vm2429, %v2419, %v2422
        %v2442 = vsel %vm2432, %v2428, 1326507024
        %v2443 = vsel %vm2431, %v2425, %v2442
        %v2444 = vsel %vm2430, %v2441, %v2443
        %v2445 = vshll.u32 %v2405, 8
        %v2446 = vand.u32 %v2445, 65535
        %v2447 = vshrl.u32 %v2445, 16
        %v2448 = vand.u32 %v2444, 65535
        %v2449 = vshrl.u32 %v2444, 16
        %v2450 = vmul.u32 %v2446, %v2448
        %v2451 = vmul.u32 %v2446, %v2449
        %v2452 = vmul.u32 %v2447, %v2448
        %v2453 = vmul.u32 %v2447, %v2449
        %v2454 = vshll.u32 %v2451, 16
        %v2455 = vshrl.u32 %v2451, 16
        %v2456 = vshll.u32 %v2452, 16
        %v2457 = vshrl.u32 %v2452, 16
        %vm2458 = vc.u32 %v2450, %v2454
        %v2459 = vsel %vm2458, 1, 0
        %v2460 = vadd.s32 %v2450, %v2454
        %v2461 = vadd.s32 %v2453, %v2459
        %vm2462 = vc.u32 %v2460, %v2456
        %v2463 = vsel %vm2462, 1, 0
        %v2464 = vadd.s32 %v2460, %v2456
        %v2465 = vadd.s32 %v2461, %v2463
        %v2466 = vadd.s32 %v2465, %v2455
        %v2467 = vadd.s32 %v2466, %v2457
        %v2468 = vand.u32 %v2445, 65535
        %v2469 = vshrl.u32 %v2445, 16
        %v2470 = vand.u32 %v2440, 65535
        %v2471 = vshrl.u32 %v2440, 16
        %v2472 = vmul.u32 %v2468, %v2470
        %v2473 = vmul.u32 %v2468, %v2471
        %v2474 = vmul.u32 %v2469, %v2470
        %v2475 = vmul.u32 %v2469, %v2471
        %v2476 = vshll.u32 %v2473, 16
        %v2477 = vshrl.u32 %v2473, 16
        %v2478 = vshll.u32 %v2474, 16
        %v2479 = vshrl.u32 %v2474, 16
        %vm2480 = vc.u32 %v2472, %v2476
        %v2481 = vsel %vm2480, 1, 0
        %v2482 = vadd.s32 %v2472, %v2476
        %v2483 = vadd.s32 %v2475, %v2481
        %vm2484 = vc.u32 %v2482, %v2478
        %v2485 = vsel %vm2484, 1, 0
        %v2486 = vadd.s32 %v2482, %v2478
        %v2487 = vadd.s32 %v2483, %v2485
        %v2488 = vadd.s32 %v2487, %v2477
        %v2489 = vadd.s32 %v2488, %v2479
        %v2490 = vmul.u32 %v2445, %v2436
        %v2491 = vadd.s32 %v2467, %v2486
        %vm2492 = vc.u32 %v2467, %v2486
        %v2493 = vadd.s32 %v2489, 1
        %v2494 = vsel %vm2492, %v2493, %v2489
        %v2495 = vadd.s32 %v2490, %v2494
        %v2496 = vadd.s32 %v2495, 536870912
        %v2497 = vshrl.u32 %v2496, 30
        %v2498 = vshll.u32 %v2497, 30
        %v2499 = vsub.s32 %v2495, %v2498
        %vm2500 = vcmp.lt.s32.totalorder %v2499, 0
        %v2501 = vsub.s32 0, %v2499
        %v2502 = vsel %vm2500, %v2501, %v2499
        %v2503 = vclz %v2502
        %v2504 = vsub.s32 %v2503, 2
        %vm2505 = vcmp.gt.s32.totalorder 0, %v2504
        %v2506 = vsel %vm2505, 0, %v2504
        %v2507 = vsub.s32 32, %v2506
        %v2508 = vshll.u32 %v2499, %v2506
        %v2509 = vshrl.u32 %v2491, %v2507
        %v2510 = vor.u32 %v2508, %v2509
        %v2511 = vsub.s32 4294967266, %v2506
        %v2512 = vadd.s32 %v2511, 127
        %v2513 = vshll.u32 %v2512, 23
        %v2514 = vor.u32 4788187, %v2513
        %v2515 = vand.u32 2147483647, %v2514
        %v2517 = vcvt.s32.f32 %v2510
        %v2518 = vmul.f32 %v2517, %v2515
        %v2519 = vxor.u32 %v2518, 2147483648
        %v2520 = vsel %vm2399, %v2519, %v2518
        %v2521 = vsub.s32 4, %v2497
        %v2522 = vsel %vm2399, %v2521, %v2497
        %v2523 = vsel %vm2398, %v485, %v2520
        %v2524 = vsel %vm2398, 0, %v2522
        %v2525 = vmul.f32 %v2523, %v2523
        %v2526 = vmul.f32 %v2525, -0.001358992
        %v2527 = vadd.f32 %v2526, 0.041655596
        %v2528 = vmul.f32 %v2525, %v2527
        %v2529 = vadd.f32 %v2528, -0.4999988
        %v2530 = vmul.f32 %v2525, %v2529
        %v2531 = vadd.f32 1.0, %v2530
        %v2532 = vmul.f32 %v2523, %v2523
        %v2533 = vmul.f32 %v2532, -0.00019511016
        %v2534 = vadd.f32 %v2533, 0.008332121
        %v2535 = vmul.f32 %v2532, %v2534
        %v2536 = vadd.f32 %v2535, -0.16666654
        %v2537 = vmul.f32 %v2532, %v2536
        %v2538 = vadd.f32 %v2537, 1.0
        %v2539 = vmul.f32 %v2538, %v2523
        %vm2540 = vweird.f32 %v485
        %v2541 = vadd.s32 %v2524, 3
        %v2542 = vand.u32 %v2541, 3
        %vm2543 = vcmp.lt.s32.totalorder %v2542, 2
        %vm2544 = vcmp.eq.s32.totalorder %v2542, 0
        %v2545 = vxor.u32 %v2539, 2147483648
        %v2546 = vsel %vm2544, %v2531, %v2545
        %vm2547 = vcmp.eq.s32.totalorder %v2542, 2
        %v2548 = vxor.u32 %v2531, 2147483648
        %v2549 = vsel %vm2547, %v2548, %v2539
        %v2550 = vsel %vm2543, %v2546, %v2549
        %v2551 = vsel %vm2540, nan, %v2550
        %v2552 = vand.u32 2147483647, %v486
        %vm2553 = vcmp.le.f32.partialorder %v2552, 0.7853982
        %vm2554 = vcmp.lt.s32.totalorder %v486, 0
        %v2555 = vand.u32 %v486, 2139095040
        %v2556 = vshrl.u32 %v2555, 23
        %v2557 = vsub.s32 %v2556, 127
        %v2558 = vand.u32 2147483647, %v486
        %v2559 = vand.u32 %v2558, 8388607
        %v2560 = vor.u32 %v2559, 8388608
        %v2561 = vsub.s32 0, %v2560
        %v2562 = vadd.s32 %v2557, 1
        %vm2563 = vcmp.gt.s32.totalorder %v2562, 0
        %v2564 = vsel %vm2563, %v2562, 0
        %v2565 = vshrl.u32 %v2564, 5
        %v2566 = vand.u32 %v2564, 31
        %v2567 = vsub.s32 32, %v2566
        %v2568 = vshrl.u32 683565275, %v2567
        %v2569 = vshll.u32 683565275, %v2566
        %v2570 = vshrl.u32 2475754826, %v2567
        %v2571 = vor.u32 %v2569, %v2570
        %v2572 = vshll.u32 2475754826, %v2566
        %v2573 = vshrl.u32 2131351028, %v2567
        %v2574 = vor.u32 %v2572, %v2573
        %v2575 = vshll.u32 2131351028, %v2566
        %v2576 = vshrl.u32 2102212464, %v2567
        %v2577 = vor.u32 %v2575, %v2576
        %v2578 = vshll.u32 2102212464, %v2566
        %v2579 = vshrl.u32 920167782, %v2567
        %v2580 = vor.u32 %v2578, %v2579
        %v2581 = vshll.u32 920167782, %v2566
        %v2582 = vshrl.u32 1326507024, %v2567
        %v2583 = vor.u32 %v2581, %v2582
        %vm2584 = vcmp.lt.s32.totalorder %v2565, 1
        %vm2585 = vcmp.lt.s32.totalorder %v2565, 2
        %vm2586 = vcmp.lt.s32.totalorder %v2565, 3
        %vm2587 = vcmp.lt.s32.totalorder %v2565, 4
        %v2588 = vsel %vm2584, %v2568, %v2571
        %v2589 = vsel %vm2587, %v2577, 2102212464
        %v2590 = vsel %vm2586, %v2574, %v2589
        %v2591 = vsel %vm2585, %v2588, %v2590
        %v2592 = vsel %vm2584, %v2571, %v2574
        %v2593 = vsel %vm2587, %v2580, 920167782
        %v2594 = vsel %vm2586, %v2577, %v2593
        %v2595 = vsel %vm2585, %v2592, %v2594
        %v2596 = vsel %vm2584, %v2574, %v2577
        %v2597 = vsel %vm2587, %v2583, 1326507024
        %v2598 = vsel %vm2586, %v2580, %v2597
        %v2599 = vsel %vm2585, %v2596, %v2598
        %v2600 = vshll.u32 %v2560, 8
        %v2601 = vand.u32 %v2600, 65535
        %v2602 = vshrl.u32 %v2600, 16
        %v2603 = vand.u32 %v2599, 65535
        %v2604 = vshrl.u32 %v2599, 16
        %v2605 = vmul.u32 %v2601, %v2603
        %v2606 = vmul.u32 %v2601, %v2604
        %v2607 = vmul.u32 %v2602, %v2603
        %v2608 = vmul.u32 %v2602, %v2604
        %v2609 = vshll.u32 %v2606, 16
        %v2610 = vshrl.u32 %v2606, 16
        %v2611 = vshll.u32 %v2607, 16
        %v2612 = vshrl.u32 %v2607, 16
        %vm2613 = vc.u32 %v2605, %v2609
        %v2614 = vsel %vm2613, 1, 0
        %v2615 = vadd.s32 %v2605, %v2609
        %v2616 = vadd.s32 %v2608, %v2614
        %vm2617 = vc.u32 %v2615, %v2611
        %v2618 = vsel %vm2617, 1, 0
        %v2619 = vadd.s32 %v2615, %v2611
        %v2620 = vadd.s32 %v2616, %v2618
        %v2621 = vadd.s32 %v2620, %v2610
        %v2622 = vadd.s32 %v2621, %v2612
        %v2623 = vand.u32 %v2600, 65535
        %v2624 = vshrl.u32 %v2600, 16
        %v2625 = vand.u32 %v2595, 65535
        %v2626 = vshrl.u32 %v2595, 16
        %v2627 = vmul.u32 %v2623, %v2625
        %v2628 = vmul.u32 %v2623, %v2626
        %v2629 = vmul.u32 %v2624, %v2625
        %v2630 = vmul.u32 %v2624, %v2626
        %v2631 = vshll.u32 %v2628, 16
        %v2632 = vshrl.u32 %v2628, 16
        %v2633 = vshll.u32 %v2629, 16
        %v2634 = vshrl.u32 %v2629, 16
        %vm2635 = vc.u32 %v2627, %v2631
        %v2636 = vsel %vm2635, 1, 0
        %v2637 = vadd.s32 %v2627, %v2631
        %v2638 = vadd.s32 %v2630, %v2636
        %vm2639 = vc.u32 %v2637, %v2633
        %v2640 = vsel %vm2639, 1, 0
        %v2641 = vadd.s32 %v2637, %v2633
        %v2642 = vadd.s32 %v2638, %v2640
        %v2643 = vadd.s32 %v2642, %v2632
        %v2644 = vadd.s32 %v2643, %v2634
        %v2645 = vmul.u32 %v2600, %v2591
        %v2646 = vadd.s32 %v2622, %v2641
        %vm2647 = vc.u32 %v2622, %v2641
        %v2648 = vadd.s32 %v2644, 1
        %v2649 = vsel %vm2647, %v2648, %v2644
        %v2650 = vadd.s32 %v2645, %v2649
        %v2651 = vadd.s32 %v2650, 536870912
        %v2652 = vshrl.u32 %v2651, 30
        %v2653 = vshll.u32 %v2652, 30
        %v2654 = vsub.s32 %v2650, %v2653
        %vm2655 = vcmp.lt.s32.totalorder %v2654, 0
        %v2656 = vsub.s32 0, %v2654
        %v2657 = vsel %vm2655, %v2656, %v2654
        %v2658 = vclz %v2657
        %v2659 = vsub.s32 %v2658, 2
        %vm2660 = vcmp.gt.s32.totalorder 0, %v2659
        %v2661 = vsel %vm2660, 0, %v2659
        %v2662 = vsub.s32 32, %v2661
        %v2663 = vshll.u32 %v2654, %v2661
        %v2664 = vshrl.u32 %v2646, %v2662
        %v2665 = vor.u32 %v2663, %v2664
        %v2666 = vsub.s32 4294967266, %v2661
        %v2667 = vadd.s32 %v2666, 127
        %v2668 = vshll.u32 %v2667, 23
        %v2669 = vor.u32 4788187, %v2668
        %v2670 = vand.u32 2147483647, %v2669
        %v2672 = vcvt.s32.f32 %v2665
        %v2673 = vmul.f32 %v2672, %v2670
        %v2674 = vxor.u32 %v2673, 2147483648
        %v2675 = vsel %vm2554, %v2674, %v2673
        %v2676 = vsub.s32 4, %v2652
        %v2677 = vsel %vm2554, %v2676, %v2652
        %v2678 = vsel %vm2553, %v486, %v2675
        %v2679 = vsel %vm2553, 0, %v2677
        %v2680 = vmul.f32 %v2678, %v2678
        %v2681 = vmul.f32 %v2680, -0.001358992
        %v2682 = vadd.f32 %v2681, 0.041655596
        %v2683 = vmul.f32 %v2680, %v2682
        %v2684 = vadd.f32 %v2683, -0.4999988
        %v2685 = vmul.f32 %v2680, %v2684
        %v2686 = vadd.f32 1.0, %v2685
        %v2687 = vmul.f32 %v2678, %v2678
        %v2688 = vmul.f32 %v2687, -0.00019511016
        %v2689 = vadd.f32 %v2688, 0.008332121
        %v2690 = vmul.f32 %v2687, %v2689
        %v2691 = vadd.f32 %v2690, -0.16666654
        %v2692 = vmul.f32 %v2687, %v2691
        %v2693 = vadd.f32 %v2692, 1.0
        %v2694 = vmul.f32 %v2693, %v2678
        %vm2695 = vweird.f32 %v486
        %v2696 = vadd.s32 %v2679, 3
        %v2697 = vand.u32 %v2696, 3
        %vm2698 = vcmp.lt.s32.totalorder %v2697, 2
        %vm2699 = vcmp.eq.s32.totalorder %v2697, 0
        %v2700 = vxor.u32 %v2694, 2147483648
        %v2701 = vsel %vm2699, %v2686, %v2700
        %vm2702 = vcmp.eq.s32.totalorder %v2697, 2
        %v2703 = vxor.u32 %v2686, 2147483648
        %v2704 = vsel %vm2702, %v2703, %v2694
        %v2705 = vsel %vm2698, %v2701, %v2704
        %v2706 = vsel %vm2695, nan, %v2705
        %v2707 = vand.u32 2147483647, %v487
        %vm2708 = vcmp.le.f32.partialorder %v2707, 0.7853982
        %vm2709 = vcmp.lt.s32.totalorder %v487, 0
        %v2710 = vand.u32 %v487, 2139095040
        %v2711 = vshrl.u32 %v2710, 23
        %v2712 = vsub.s32 %v2711, 127
        %v2713 = vand.u32 2147483647, %v487
        %v2714 = vand.u32 %v2713, 8388607
        %v2715 = vor.u32 %v2714, 8388608
        %v2716 = vsub.s32 0, %v2715
        %v2717 = vadd.s32 %v2712, 1
        %vm2718 = vcmp.gt.s32.totalorder %v2717, 0
        %v2719 = vsel %vm2718, %v2717, 0
        %v2720 = vshrl.u32 %v2719, 5
        %v2721 = vand.u32 %v2719, 31
        %v2722 = vsub.s32 32, %v2721
        %v2723 = vshrl.u32 683565275, %v2722
        %v2724 = vshll.u32 683565275, %v2721
        %v2725 = vshrl.u32 2475754826, %v2722
        %v2726 = vor.u32 %v2724, %v2725
        %v2727 = vshll.u32 2475754826, %v2721
        %v2728 = vshrl.u32 2131351028, %v2722
        %v2729 = vor.u32 %v2727, %v2728
        %v2730 = vshll.u32 2131351028, %v2721
        %v2731 = vshrl.u32 2102212464, %v2722
        %v2732 = vor.u32 %v2730, %v2731
        %v2733 = vshll.u32 2102212464, %v2721
        %v2734 = vshrl.u32 920167782, %v2722
        %v2735 = vor.u32 %v2733, %v2734
        %v2736 = vshll.u32 920167782, %v2721
        %v2737 = vshrl.u32 1326507024, %v2722
        %v2738 = vor.u32 %v2736, %v2737
        %vm2739 = vcmp.lt.s32.totalorder %v2720, 1
        %vm2740 = vcmp.lt.s32.totalorder %v2720, 2
        %vm2741 = vcmp.lt.s32.totalorder %v2720, 3
        %vm2742 = vcmp.lt.s32.totalorder %v2720, 4
        %v2743 = vsel %vm2739, %v2723, %v2726
        %v2744 = vsel %vm2742, %v2732, 2102212464
        %v2745 = vsel %vm2741, %v2729, %v2744
        %v2746 = vsel %vm2740, %v2743, %v2745
        %v2747 = vsel %vm2739, %v2726, %v2729
        %v2748 = vsel %vm2742, %v2735, 920167782
        %v2749 = vsel %vm2741, %v2732, %v2748
        %v2750 = vsel %vm2740, %v2747, %v2749
        %v2751 = vsel %vm2739, %v2729, %v2732
        %v2752 = vsel %vm2742, %v2738, 1326507024
        %v2753 = vsel %vm2741, %v2735, %v2752
        %v2754 = vsel %vm2740, %v2751, %v2753
        %v2755 = vshll.u32 %v2715, 8
        %v2756 = vand.u32 %v2755, 65535
        %v2757 = vshrl.u32 %v2755, 16
        %v2758 = vand.u32 %v2754, 65535
        %v2759 = vshrl.u32 %v2754, 16
        %v2760 = vmul.u32 %v2756, %v2758
        %v2761 = vmul.u32 %v2756, %v2759
        %v2762 = vmul.u32 %v2757, %v2758
        %v2763 = vmul.u32 %v2757, %v2759
        %v2764 = vshll.u32 %v2761, 16
        %v2765 = vshrl.u32 %v2761, 16
        %v2766 = vshll.u32 %v2762, 16
        %v2767 = vshrl.u32 %v2762, 16
        %vm2768 = vc.u32 %v2760, %v2764
        %v2769 = vsel %vm2768, 1, 0
        %v2770 = vadd.s32 %v2760, %v2764
        %v2771 = vadd.s32 %v2763, %v2769
        %vm2772 = vc.u32 %v2770, %v2766
        %v2773 = vsel %vm2772, 1, 0
        %v2774 = vadd.s32 %v2770, %v2766
        %v2775 = vadd.s32 %v2771, %v2773
        %v2776 = vadd.s32 %v2775, %v2765
        %v2777 = vadd.s32 %v2776, %v2767
        %v2778 = vand.u32 %v2755, 65535
        %v2779 = vshrl.u32 %v2755, 16
        %v2780 = vand.u32 %v2750, 65535
        %v2781 = vshrl.u32 %v2750, 16
        %v2782 = vmul.u32 %v2778, %v2780
        %v2783 = vmul.u32 %v2778, %v2781
        %v2784 = vmul.u32 %v2779, %v2780
        %v2785 = vmul.u32 %v2779, %v2781
        %v2786 = vshll.u32 %v2783, 16
        %v2787 = vshrl.u32 %v2783, 16
        %v2788 = vshll.u32 %v2784, 16
        %v2789 = vshrl.u32 %v2784, 16
        %vm2790 = vc.u32 %v2782, %v2786
        %v2791 = vsel %vm2790, 1, 0
        %v2792 = vadd.s32 %v2782, %v2786
        %v2793 = vadd.s32 %v2785, %v2791
        %vm2794 = vc.u32 %v2792, %v2788
        %v2795 = vsel %vm2794, 1, 0
        %v2796 = vadd.s32 %v2792, %v2788
        %v2797 = vadd.s32 %v2793, %v2795
        %v2798 = vadd.s32 %v2797, %v2787
        %v2799 = vadd.s32 %v2798, %v2789
        %v2800 = vmul.u32 %v2755, %v2746
        %v2801 = vadd.s32 %v2777, %v2796
        %vm2802 = vc.u32 %v2777, %v2796
        %v2803 = vadd.s32 %v2799, 1
        %v2804 = vsel %vm2802, %v2803, %v2799
        %v2805 = vadd.s32 %v2800, %v2804
        %v2806 = vadd.s32 %v2805, 536870912
        %v2807 = vshrl.u32 %v2806, 30
        %v2808 = vshll.u32 %v2807, 30
        %v2809 = vsub.s32 %v2805, %v2808
        %vm2810 = vcmp.lt.s32.totalorder %v2809, 0
        %v2811 = vsub.s32 0, %v2809
        %v2812 = vsel %vm2810, %v2811, %v2809
        %v2813 = vclz %v2812
        %v2814 = vsub.s32 %v2813, 2
        %vm2815 = vcmp.gt.s32.totalorder 0, %v2814
        %v2816 = vsel %vm2815, 0, %v2814
        %v2817 = vsub.s32 32, %v2816
        %v2818 = vshll.u32 %v2809, %v2816
        %v2819 = vshrl.u32 %v2801, %v2817
        %v2820 = vor.u32 %v2818, %v2819
        %v2821 = vsub.s32 4294967266, %v2816
        %v2822 = vadd.s32 %v2821, 127
        %v2823 = vshll.u32 %v2822, 23
        %v2824 = vor.u32 4788187, %v2823
        %v2825 = vand.u32 2147483647, %v2824
        %v2827 = vcvt.s32.f32 %v2820
        %v2828 = vmul.f32 %v2827, %v2825
        %v2829 = vxor.u32 %v2828, 2147483648
        %v2830 = vsel %vm2709, %v2829, %v2828
        %v2831 = vsub.s32 4, %v2807
        %v2832 = vsel %vm2709, %v2831, %v2807
        %v2833 = vsel %vm2708, %v487, %v2830
        %v2834 = vsel %vm2708, 0, %v2832
        %v2835 = vmul.f32 %v2833, %v2833
        %v2836 = vmul.f32 %v2835, -0.001358992
        %v2837 = vadd.f32 %v2836, 0.041655596
        %v2838 = vmul.f32 %v2835, %v2837
        %v2839 = vadd.f32 %v2838, -0.4999988
        %v2840 = vmul.f32 %v2835, %v2839
        %v2841 = vadd.f32 1.0, %v2840
        %v2842 = vmul.f32 %v2833, %v2833
        %v2843 = vmul.f32 %v2842, -0.00019511016
        %v2844 = vadd.f32 %v2843, 0.008332121
        %v2845 = vmul.f32 %v2842, %v2844
        %v2846 = vadd.f32 %v2845, -0.16666654
        %v2847 = vmul.f32 %v2842, %v2846
        %v2848 = vadd.f32 %v2847, 1.0
        %v2849 = vmul.f32 %v2848, %v2833
        %vm2850 = vweird.f32 %v487
        %v2851 = vadd.s32 %v2834, 3
        %v2852 = vand.u32 %v2851, 3
        %vm2853 = vcmp.lt.s32.totalorder %v2852, 2
        %vm2854 = vcmp.eq.s32.totalorder %v2852, 0
        %v2855 = vxor.u32 %v2849, 2147483648
        %v2856 = vsel %vm2854, %v2841, %v2855
        %vm2857 = vcmp.eq.s32.totalorder %v2852, 2
        %v2858 = vxor.u32 %v2841, 2147483648
        %v2859 = vsel %vm2857, %v2858, %v2849
        %v2860 = vsel %vm2853, %v2856, %v2859
        %v2861 = vsel %vm2850, nan, %v2860
        %v2862 = vand.u32 2147483647, %v488
        %vm2863 = vcmp.le.f32.partialorder %v2862, 0.7853982
        %vm2864 = vcmp.lt.s32.totalorder %v488, 0
        %v2865 = vand.u32 %v488, 2139095040
        %v2866 = vshrl.u32 %v2865, 23
        %v2867 = vsub.s32 %v2866, 127
        %v2868 = vand.u32 2147483647, %v488
        %v2869 = vand.u32 %v2868, 8388607
        %v2870 = vor.u32 %v2869, 8388608
        %v2871 = vsub.s32 0, %v2870
        %v2872 = vadd.s32 %v2867, 1
        %vm2873 = vcmp.gt.s32.totalorder %v2872, 0
        %v2874 = vsel %vm2873, %v2872, 0
        %v2875 = vshrl.u32 %v2874, 5
        %v2876 = vand.u32 %v2874, 31
        %v2877 = vsub.s32 32, %v2876
        %v2878 = vshrl.u32 683565275, %v2877
        %v2879 = vshll.u32 683565275, %v2876
        %v2880 = vshrl.u32 2475754826, %v2877
        %v2881 = vor.u32 %v2879, %v2880
        %v2882 = vshll.u32 2475754826, %v2876
        %v2883 = vshrl.u32 2131351028, %v2877
        %v2884 = vor.u32 %v2882, %v2883
        %v2885 = vshll.u32 2131351028, %v2876
        %v2886 = vshrl.u32 2102212464, %v2877
        %v2887 = vor.u32 %v2885, %v2886
        %v2888 = vshll.u32 2102212464, %v2876
        %v2889 = vshrl.u32 920167782, %v2877
        %v2890 = vor.u32 %v2888, %v2889
        %v2891 = vshll.u32 920167782, %v2876
        %v2892 = vshrl.u32 1326507024, %v2877
        %v2893 = vor.u32 %v2891, %v2892
        %vm2894 = vcmp.lt.s32.totalorder %v2875, 1
        %vm2895 = vcmp.lt.s32.totalorder %v2875, 2
        %vm2896 = vcmp.lt.s32.totalorder %v2875, 3
        %vm2897 = vcmp.lt.s32.totalorder %v2875, 4
        %v2898 = vsel %vm2894, %v2878, %v2881
        %v2899 = vsel %vm2897, %v2887, 2102212464
        %v2900 = vsel %vm2896, %v2884, %v2899
        %v2901 = vsel %vm2895, %v2898, %v2900
        %v2902 = vsel %vm2894, %v2881, %v2884
        %v2903 = vsel %vm2897, %v2890, 920167782
        %v2904 = vsel %vm2896, %v2887, %v2903
        %v2905 = vsel %vm2895, %v2902, %v2904
        %v2906 = vsel %vm2894, %v2884, %v2887
        %v2907 = vsel %vm2897, %v2893, 1326507024
        %v2908 = vsel %vm2896, %v2890, %v2907
        %v2909 = vsel %vm2895, %v2906, %v2908
        %v2910 = vshll.u32 %v2870, 8
        %v2911 = vand.u32 %v2910, 65535
        %v2912 = vshrl.u32 %v2910, 16
        %v2913 = vand.u32 %v2909, 65535
        %v2914 = vshrl.u32 %v2909, 16
        %v2915 = vmul.u32 %v2911, %v2913
        %v2916 = vmul.u32 %v2911, %v2914
        %v2917 = vmul.u32 %v2912, %v2913
        %v2918 = vmul.u32 %v2912, %v2914
        %v2919 = vshll.u32 %v2916, 16
        %v2920 = vshrl.u32 %v2916, 16
        %v2921 = vshll.u32 %v2917, 16
        %v2922 = vshrl.u32 %v2917, 16
        %vm2923 = vc.u32 %v2915, %v2919
        %v2924 = vsel %vm2923, 1, 0
        %v2925 = vadd.s32 %v2915, %v2919
        %v2926 = vadd.s32 %v2918, %v2924
        %vm2927 = vc.u32 %v2925, %v2921
        %v2928 = vsel %vm2927, 1, 0
        %v2929 = vadd.s32 %v2925, %v2921
        %v2930 = vadd.s32 %v2926, %v2928
        %v2931 = vadd.s32 %v2930, %v2920
        %v2932 = vadd.s32 %v2931, %v2922
        %v2933 = vand.u32 %v2910, 65535
        %v2934 = vshrl.u32 %v2910, 16
        %v2935 = vand.u32 %v2905, 65535
        %v2936 = vshrl.u32 %v2905, 16
        %v2937 = vmul.u32 %v2933, %v2935
        %v2938 = vmul.u32 %v2933, %v2936
        %v2939 = vmul.u32 %v2934, %v2935
        %v2940 = vmul.u32 %v2934, %v2936
        %v2941 = vshll.u32 %v2938, 16
        %v2942 = vshrl.u32 %v2938, 16
        %v2943 = vshll.u32 %v2939, 16
        %v2944 = vshrl.u32 %v2939, 16
        %vm2945 = vc.u32 %v2937, %v2941
        %v2946 = vsel %vm2945, 1, 0
        %v2947 = vadd.s32 %v2937, %v2941
        %v2948 = vadd.s32 %v2940, %v2946
        %vm2949 = vc.u32 %v2947, %v2943
        %v2950 = vsel %vm2949, 1, 0
        %v2951 = vadd.s32 %v2947, %v2943
        %v2952 = vadd.s32 %v2948, %v2950
        %v2953 = vadd.s32 %v2952, %v2942
        %v2954 = vadd.s32 %v2953, %v2944
        %v2955 = vmul.u32 %v2910, %v2901
        %v2956 = vadd.s32 %v2932, %v2951
        %vm2957 = vc.u32 %v2932, %v2951
        %v2958 = vadd.s32 %v2954, 1
        %v2959 = vsel %vm2957, %v2958, %v2954
        %v2960 = vadd.s32 %v2955, %v2959
        %v2961 = vadd.s32 %v2960, 536870912
        %v2962 = vshrl.u32 %v2961, 30
        %v2963 = vshll.u32 %v2962, 30
        %v2964 = vsub.s32 %v2960, %v2963
        %vm2965 = vcmp.lt.s32.totalorder %v2964, 0
        %v2966 = vsub.s32 0, %v2964
        %v2967 = vsel %vm2965, %v2966, %v2964
        %v2968 = vclz %v2967
        %v2969 = vsub.s32 %v2968, 2
        %vm2970 = vcmp.gt.s32.totalorder 0, %v2969
        %v2971 = vsel %vm2970, 0, %v2969
        %v2972 = vsub.s32 32, %v2971
        %v2973 = vshll.u32 %v2964, %v2971
        %v2974 = vshrl.u32 %v2956, %v2972
        %v2975 = vor.u32 %v2973, %v2974
        %v2976 = vsub.s32 4294967266, %v2971
        %v2977 = vadd.s32 %v2976, 127
        %v2978 = vshll.u32 %v2977, 23
        %v2979 = vor.u32 4788187, %v2978
        %v2980 = vand.u32 2147483647, %v2979
        %v2982 = vcvt.s32.f32 %v2975
        %v2983 = vmul.f32 %v2982, %v2980
        %v2984 = vxor.u32 %v2983, 2147483648
        %v2985 = vsel %vm2864, %v2984, %v2983
        %v2986 = vsub.s32 4, %v2962
        %v2987 = vsel %vm2864, %v2986, %v2962
        %v2988 = vsel %vm2863, %v488, %v2985
        %v2989 = vsel %vm2863, 0, %v2987
        %v2990 = vmul.f32 %v2988, %v2988
        %v2991 = vmul.f32 %v2990, -0.001358992
        %v2992 = vadd.f32 %v2991, 0.041655596
        %v2993 = vmul.f32 %v2990, %v2992
        %v2994 = vadd.f32 %v2993, -0.4999988
        %v2995 = vmul.f32 %v2990, %v2994
        %v2996 = vadd.f32 1.0, %v2995
        %v2997 = vmul.f32 %v2988, %v2988
        %v2998 = vmul.f32 %v2997, -0.00019511016
        %v2999 = vadd.f32 %v2998, 0.008332121
        %v3000 = vmul.f32 %v2997, %v2999
        %v3001 = vadd.f32 %v3000, -0.16666654
        %v3002 = vmul.f32 %v2997, %v3001
        %v3003 = vadd.f32 %v3002, 1.0
        %v3004 = vmul.f32 %v3003, %v2988
        %vm3005 = vweird.f32 %v488
        %v3006 = vadd.s32 %v2989, 3
        %v3007 = vand.u32 %v3006, 3
        %vm3008 = vcmp.lt.s32.totalorder %v3007, 2
        %vm3009 = vcmp.eq.s32.totalorder %v3007, 0
        %v3010 = vxor.u32 %v3004, 2147483648
        %v3011 = vsel %vm3009, %v2996, %v3010
        %vm3012 = vcmp.eq.s32.totalorder %v3007, 2
        %v3013 = vxor.u32 %v2996, 2147483648
        %v3014 = vsel %vm3012, %v3013, %v3004
        %v3015 = vsel %vm3008, %v3011, %v3014
        %v3016 = vsel %vm3005, nan, %v3015
        %v3017 = vand.u32 2147483647, %v489
        %vm3018 = vcmp.le.f32.partialorder %v3017, 0.7853982
        %vm3019 = vcmp.lt.s32.totalorder %v489, 0
        %v3020 = vand.u32 %v489, 2139095040
        %v3021 = vshrl.u32 %v3020, 23
        %v3022 = vsub.s32 %v3021, 127
        %v3023 = vand.u32 2147483647, %v489
        %v3024 = vand.u32 %v3023, 8388607
        %v3025 = vor.u32 %v3024, 8388608
        %v3026 = vsub.s32 0, %v3025
        %v3027 = vadd.s32 %v3022, 1
        %vm3028 = vcmp.gt.s32.totalorder %v3027, 0
        %v3029 = vsel %vm3028, %v3027, 0
        %v3030 = vshrl.u32 %v3029, 5
        %v3031 = vand.u32 %v3029, 31
        %v3032 = vsub.s32 32, %v3031
        %v3033 = vshrl.u32 683565275, %v3032
        %v3034 = vshll.u32 683565275, %v3031
        %v3035 = vshrl.u32 2475754826, %v3032
        %v3036 = vor.u32 %v3034, %v3035
        %v3037 = vshll.u32 2475754826, %v3031
        %v3038 = vshrl.u32 2131351028, %v3032
        %v3039 = vor.u32 %v3037, %v3038
        %v3040 = vshll.u32 2131351028, %v3031
        %v3041 = vshrl.u32 2102212464, %v3032
        %v3042 = vor.u32 %v3040, %v3041
        %v3043 = vshll.u32 2102212464, %v3031
        %v3044 = vshrl.u32 920167782, %v3032
        %v3045 = vor.u32 %v3043, %v3044
        %v3046 = vshll.u32 920167782, %v3031
        %v3047 = vshrl.u32 1326507024, %v3032
        %v3048 = vor.u32 %v3046, %v3047
        %vm3049 = vcmp.lt.s32.totalorder %v3030, 1
        %vm3050 = vcmp.lt.s32.totalorder %v3030, 2
        %vm3051 = vcmp.lt.s32.totalorder %v3030, 3
        %vm3052 = vcmp.lt.s32.totalorder %v3030, 4
        %v3053 = vsel %vm3049, %v3033, %v3036
        %v3054 = vsel %vm3052, %v3042, 2102212464
        %v3055 = vsel %vm3051, %v3039, %v3054
        %v3056 = vsel %vm3050, %v3053, %v3055
        %v3057 = vsel %vm3049, %v3036, %v3039
        %v3058 = vsel %vm3052, %v3045, 920167782
        %v3059 = vsel %vm3051, %v3042, %v3058
        %v3060 = vsel %vm3050, %v3057, %v3059
        %v3061 = vsel %vm3049, %v3039, %v3042
        %v3062 = vsel %vm3052, %v3048, 1326507024
        %v3063 = vsel %vm3051, %v3045, %v3062
        %v3064 = vsel %vm3050, %v3061, %v3063
        %v3065 = vshll.u32 %v3025, 8
        %v3066 = vand.u32 %v3065, 65535
        %v3067 = vshrl.u32 %v3065, 16
        %v3068 = vand.u32 %v3064, 65535
        %v3069 = vshrl.u32 %v3064, 16
        %v3070 = vmul.u32 %v3066, %v3068
        %v3071 = vmul.u32 %v3066, %v3069
        %v3072 = vmul.u32 %v3067, %v3068
        %v3073 = vmul.u32 %v3067, %v3069
        %v3074 = vshll.u32 %v3071, 16
        %v3075 = vshrl.u32 %v3071, 16
        %v3076 = vshll.u32 %v3072, 16
        %v3077 = vshrl.u32 %v3072, 16
        %vm3078 = vc.u32 %v3070, %v3074
        %v3079 = vsel %vm3078, 1, 0
        %v3080 = vadd.s32 %v3070, %v3074
        %v3081 = vadd.s32 %v3073, %v3079
        %vm3082 = vc.u32 %v3080, %v3076
        %v3083 = vsel %vm3082, 1, 0
        %v3084 = vadd.s32 %v3080, %v3076
        %v3085 = vadd.s32 %v3081, %v3083
        %v3086 = vadd.s32 %v3085, %v3075
        %v3087 = vadd.s32 %v3086, %v3077
        %v3088 = vand.u32 %v3065, 65535
        %v3089 = vshrl.u32 %v3065, 16
        %v3090 = vand.u32 %v3060, 65535
        %v3091 = vshrl.u32 %v3060, 16
        %v3092 = vmul.u32 %v3088, %v3090
        %v3093 = vmul.u32 %v3088, %v3091
        %v3094 = vmul.u32 %v3089, %v3090
        %v3095 = vmul.u32 %v3089, %v3091
        %v3096 = vshll.u32 %v3093, 16
        %v3097 = vshrl.u32 %v3093, 16
        %v3098 = vshll.u32 %v3094, 16
        %v3099 = vshrl.u32 %v3094, 16
        %vm3100 = vc.u32 %v3092, %v3096
        %v3101 = vsel %vm3100, 1, 0
        %v3102 = vadd.s32 %v3092, %v3096
        %v3103 = vadd.s32 %v3095, %v3101
        %vm3104 = vc.u32 %v3102, %v3098
        %v3105 = vsel %vm3104, 1, 0
        %v3106 = vadd.s32 %v3102, %v3098
        %v3107 = vadd.s32 %v3103, %v3105
        %v3108 = vadd.s32 %v3107, %v3097
        %v3109 = vadd.s32 %v3108, %v3099
        %v3110 = vmul.u32 %v3065, %v3056
        %v3111 = vadd.s32 %v3087, %v3106
        %vm3112 = vc.u32 %v3087, %v3106
        %v3113 = vadd.s32 %v3109, 1
        %v3114 = vsel %vm3112, %v3113, %v3109
        %v3115 = vadd.s32 %v3110, %v3114
        %v3116 = vadd.s32 %v3115, 536870912
        %v3117 = vshrl.u32 %v3116, 30
        %v3118 = vshll.u32 %v3117, 30
        %v3119 = vsub.s32 %v3115, %v3118
        %vm3120 = vcmp.lt.s32.totalorder %v3119, 0
        %v3121 = vsub.s32 0, %v3119
        %v3122 = vsel %vm3120, %v3121, %v3119
        %v3123 = vclz %v3122
        %v3124 = vsub.s32 %v3123, 2
        %vm3125 = vcmp.gt.s32.totalorder 0, %v3124
        %v3126 = vsel %vm3125, 0, %v3124
        %v3127 = vsub.s32 32, %v3126
        %v3128 = vshll.u32 %v3119, %v3126
        %v3129 = vshrl.u32 %v3111, %v3127
        %v3130 = vor.u32 %v3128, %v3129
        %v3131 = vsub.s32 4294967266, %v3126
        %v3132 = vadd.s32 %v3131, 127
        %v3133 = vshll.u32 %v3132, 23
        %v3134 = vor.u32 4788187, %v3133
        %v3135 = vand.u32 2147483647, %v3134
        %v3137 = vcvt.s32.f32 %v3130
        %v3138 = vmul.f32 %v3137, %v3135
        %v3139 = vxor.u32 %v3138, 2147483648
        %v3140 = vsel %vm3019, %v3139, %v3138
        %v3141 = vsub.s32 4, %v3117
        %v3142 = vsel %vm3019, %v3141, %v3117
        %v3143 = vsel %vm3018, %v489, %v3140
        %v3144 = vsel %vm3018, 0, %v3142
        %v3145 = vmul.f32 %v3143, %v3143
        %v3146 = vmul.f32 %v3145, -0.001358992
        %v3147 = vadd.f32 %v3146, 0.041655596
        %v3148 = vmul.f32 %v3145, %v3147
        %v3149 = vadd.f32 %v3148, -0.4999988
        %v3150 = vmul.f32 %v3145, %v3149
        %v3151 = vadd.f32 1.0, %v3150
        %v3152 = vmul.f32 %v3143, %v3143
        %v3153 = vmul.f32 %v3152, -0.00019511016
        %v3154 = vadd.f32 %v3153, 0.008332121
        %v3155 = vmul.f32 %v3152, %v3154
        %v3156 = vadd.f32 %v3155, -0.16666654
        %v3157 = vmul.f32 %v3152, %v3156
        %v3158 = vadd.f32 %v3157, 1.0
        %v3159 = vmul.f32 %v3158, %v3143
        %vm3160 = vweird.f32 %v489
        %v3161 = vadd.s32 %v3144, 3
        %v3162 = vand.u32 %v3161, 3
        %vm3163 = vcmp.lt.s32.totalorder %v3162, 2
        %vm3164 = vcmp.eq.s32.totalorder %v3162, 0
        %v3165 = vxor.u32 %v3159, 2147483648
        %v3166 = vsel %vm3164, %v3151, %v3165
        %vm3167 = vcmp.eq.s32.totalorder %v3162, 2
        %v3168 = vxor.u32 %v3151, 2147483648
        %v3169 = vsel %vm3167, %v3168, %v3159
        %v3170 = vsel %vm3163, %v3166, %v3169
        %v3171 = vsel %vm3160, nan, %v3170
        %v3172 = vand.u32 2147483647, %v490
        %vm3173 = vcmp.le.f32.partialorder %v3172, 0.7853982
        %vm3174 = vcmp.lt.s32.totalorder %v490, 0
        %v3175 = vand.u32 %v490, 2139095040
        %v3176 = vshrl.u32 %v3175, 23
        %v3177 = vsub.s32 %v3176, 127
        %v3178 = vand.u32 2147483647, %v490
        %v3179 = vand.u32 %v3178, 8388607
        %v3180 = vor.u32 %v3179, 8388608
        %v3181 = vsub.s32 0, %v3180
        %v3182 = vadd.s32 %v3177, 1
        %vm3183 = vcmp.gt.s32.totalorder %v3182, 0
        %v3184 = vsel %vm3183, %v3182, 0
        %v3185 = vshrl.u32 %v3184, 5
        %v3186 = vand.u32 %v3184, 31
        %v3187 = vsub.s32 32, %v3186
        %v3188 = vshrl.u32 683565275, %v3187
        %v3189 = vshll.u32 683565275, %v3186
        %v3190 = vshrl.u32 2475754826, %v3187
        %v3191 = vor.u32 %v3189, %v3190
        %v3192 = vshll.u32 2475754826, %v3186
        %v3193 = vshrl.u32 2131351028, %v3187
        %v3194 = vor.u32 %v3192, %v3193
        %v3195 = vshll.u32 2131351028, %v3186
        %v3196 = vshrl.u32 2102212464, %v3187
        %v3197 = vor.u32 %v3195, %v3196
        %v3198 = vshll.u32 2102212464, %v3186
        %v3199 = vshrl.u32 920167782, %v3187
        %v3200 = vor.u32 %v3198, %v3199
        %v3201 = vshll.u32 920167782, %v3186
        %v3202 = vshrl.u32 1326507024, %v3187
        %v3203 = vor.u32 %v3201, %v3202
        %vm3204 = vcmp.lt.s32.totalorder %v3185, 1
        %vm3205 = vcmp.lt.s32.totalorder %v3185, 2
        %vm3206 = vcmp.lt.s32.totalorder %v3185, 3
        %vm3207 = vcmp.lt.s32.totalorder %v3185, 4
        %v3208 = vsel %vm3204, %v3188, %v3191
        %v3209 = vsel %vm3207, %v3197, 2102212464
        %v3210 = vsel %vm3206, %v3194, %v3209
        %v3211 = vsel %vm3205, %v3208, %v3210
        %v3212 = vsel %vm3204, %v3191, %v3194
        %v3213 = vsel %vm3207, %v3200, 920167782
        %v3214 = vsel %vm3206, %v3197, %v3213
        %v3215 = vsel %vm3205, %v3212, %v3214
        %v3216 = vsel %vm3204, %v3194, %v3197
        %v3217 = vsel %vm3207, %v3203, 1326507024
        %v3218 = vsel %vm3206, %v3200, %v3217
        %v3219 = vsel %vm3205, %v3216, %v3218
        %v3220 = vshll.u32 %v3180, 8
        %v3221 = vand.u32 %v3220, 65535
        %v3222 = vshrl.u32 %v3220, 16
        %v3223 = vand.u32 %v3219, 65535
        %v3224 = vshrl.u32 %v3219, 16
        %v3225 = vmul.u32 %v3221, %v3223
        %v3226 = vmul.u32 %v3221, %v3224
        %v3227 = vmul.u32 %v3222, %v3223
        %v3228 = vmul.u32 %v3222, %v3224
        %v3229 = vshll.u32 %v3226, 16
        %v3230 = vshrl.u32 %v3226, 16
        %v3231 = vshll.u32 %v3227, 16
        %v3232 = vshrl.u32 %v3227, 16
        %vm3233 = vc.u32 %v3225, %v3229
        %v3234 = vsel %vm3233, 1, 0
        %v3235 = vadd.s32 %v3225, %v3229
        %v3236 = vadd.s32 %v3228, %v3234
        %vm3237 = vc.u32 %v3235, %v3231
        %v3238 = vsel %vm3237, 1, 0
        %v3239 = vadd.s32 %v3235, %v3231
        %v3240 = vadd.s32 %v3236, %v3238
        %v3241 = vadd.s32 %v3240, %v3230
        %v3242 = vadd.s32 %v3241, %v3232
        %v3243 = vand.u32 %v3220, 65535
        %v3244 = vshrl.u32 %v3220, 16
        %v3245 = vand.u32 %v3215, 65535
        %v3246 = vshrl.u32 %v3215, 16
        %v3247 = vmul.u32 %v3243, %v3245
        %v3248 = vmul.u32 %v3243, %v3246
        %v3249 = vmul.u32 %v3244, %v3245
        %v3250 = vmul.u32 %v3244, %v3246
        %v3251 = vshll.u32 %v3248, 16
        %v3252 = vshrl.u32 %v3248, 16
        %v3253 = vshll.u32 %v3249, 16
        %v3254 = vshrl.u32 %v3249, 16
        %vm3255 = vc.u32 %v3247, %v3251
        %v3256 = vsel %vm3255, 1, 0
        %v3257 = vadd.s32 %v3247, %v3251
        %v3258 = vadd.s32 %v3250, %v3256
        %vm3259 = vc.u32 %v3257, %v3253
        %v3260 = vsel %vm3259, 1, 0
        %v3261 = vadd.s32 %v3257, %v3253
        %v3262 = vadd.s32 %v3258, %v3260
        %v3263 = vadd.s32 %v3262, %v3252
        %v3264 = vadd.s32 %v3263, %v3254
        %v3265 = vmul.u32 %v3220, %v3211
        %v3266 = vadd.s32 %v3242, %v3261
        %vm3267 = vc.u32 %v3242, %v3261
        %v3268 = vadd.s32 %v3264, 1
        %v3269 = vsel %vm3267, %v3268, %v3264
        %v3270 = vadd.s32 %v3265, %v3269
        %v3271 = vadd.s32 %v3270, 536870912
        %v3272 = vshrl.u32 %v3271, 30
        %v3273 = vshll.u32 %v3272, 30
        %v3274 = vsub.s32 %v3270, %v3273
        %vm3275 = vcmp.lt.s32.totalorder %v3274, 0
        %v3276 = vsub.s32 0, %v3274
        %v3277 = vsel %vm3275, %v3276, %v3274
        %v3278 = vclz %v3277
        %v3279 = vsub.s32 %v3278, 2
        %vm3280 = vcmp.gt.s32.totalorder 0, %v3279
        %v3281 = vsel %vm3280, 0, %v3279
        %v3282 = vsub.s32 32, %v3281
        %v3283 = vshll.u32 %v3274, %v3281
        %v3284 = vshrl.u32 %v3266, %v3282
        %v3285 = vor.u32 %v3283, %v3284
        %v3286 = vsub.s32 4294967266, %v3281
        %v3287 = vadd.s32 %v3286, 127
        %v3288 = vshll.u32 %v3287, 23
        %v3289 = vor.u32 4788187, %v3288
        %v3290 = vand.u32 2147483647, %v3289
        %v3292 = vcvt.s32.f32 %v3285
        %v3293 = vmul.f32 %v3292, %v3290
        %v3294 = vxor.u32 %v3293, 2147483648
        %v3295 = vsel %vm3174, %v3294, %v3293
        %v3296 = vsub.s32 4, %v3272
        %v3297 = vsel %vm3174, %v3296, %v3272
        %v3298 = vsel %vm3173, %v490, %v3295
        %v3299 = vsel %vm3173, 0, %v3297
        %v3300 = vmul.f32 %v3298, %v3298
        %v3301 = vmul.f32 %v3300, -0.001358992
        %v3302 = vadd.f32 %v3301, 0.041655596
        %v3303 = vmul.f32 %v3300, %v3302
        %v3304 = vadd.f32 %v3303, -0.4999988
        %v3305 = vmul.f32 %v3300, %v3304
        %v3306 = vadd.f32 1.0, %v3305
        %v3307 = vmul.f32 %v3298, %v3298
        %v3308 = vmul.f32 %v3307, -0.00019511016
        %v3309 = vadd.f32 %v3308, 0.008332121
        %v3310 = vmul.f32 %v3307, %v3309
        %v3311 = vadd.f32 %v3310, -0.16666654
        %v3312 = vmul.f32 %v3307, %v3311
        %v3313 = vadd.f32 %v3312, 1.0
        %v3314 = vmul.f32 %v3313, %v3298
        %vm3315 = vweird.f32 %v490
        %v3316 = vadd.s32 %v3299, 3
        %v3317 = vand.u32 %v3316, 3
        %vm3318 = vcmp.lt.s32.totalorder %v3317, 2
        %vm3319 = vcmp.eq.s32.totalorder %v3317, 0
        %v3320 = vxor.u32 %v3314, 2147483648
        %v3321 = vsel %vm3319, %v3306, %v3320
        %vm3322 = vcmp.eq.s32.totalorder %v3317, 2
        %v3323 = vxor.u32 %v3306, 2147483648
        %v3324 = vsel %vm3322, %v3323, %v3314
        %v3325 = vsel %vm3318, %v3321, %v3324
        %v3326 = vsel %vm3315, nan, %v3325
        %v3327 = vand.u32 2147483647, %v491
        %vm3328 = vcmp.le.f32.partialorder %v3327, 0.7853982
        %vm3329 = vcmp.lt.s32.totalorder %v491, 0
        %v3330 = vand.u32 %v491, 2139095040
        %v3331 = vshrl.u32 %v3330, 23
        %v3332 = vsub.s32 %v3331, 127
        %v3333 = vand.u32 2147483647, %v491
        %v3334 = vand.u32 %v3333, 8388607
        %v3335 = vor.u32 %v3334, 8388608
        %v3336 = vsub.s32 0, %v3335
        %v3337 = vadd.s32 %v3332, 1
        %vm3338 = vcmp.gt.s32.totalorder %v3337, 0
        %v3339 = vsel %vm3338, %v3337, 0
        %v3340 = vshrl.u32 %v3339, 5
        %v3341 = vand.u32 %v3339, 31
        %v3342 = vsub.s32 32, %v3341
        %v3343 = vshrl.u32 683565275, %v3342
        %v3344 = vshll.u32 683565275, %v3341
        %v3345 = vshrl.u32 2475754826, %v3342
        %v3346 = vor.u32 %v3344, %v3345
        %v3347 = vshll.u32 2475754826, %v3341
        %v3348 = vshrl.u32 2131351028, %v3342
        %v3349 = vor.u32 %v3347, %v3348
        %v3350 = vshll.u32 2131351028, %v3341
        %v3351 = vshrl.u32 2102212464, %v3342
        %v3352 = vor.u32 %v3350, %v3351
        %v3353 = vshll.u32 2102212464, %v3341
        %v3354 = vshrl.u32 920167782, %v3342
        %v3355 = vor.u32 %v3353, %v3354
        %v3356 = vshll.u32 920167782, %v3341
        %v3357 = vshrl.u32 1326507024, %v3342
        %v3358 = vor.u32 %v3356, %v3357
        %vm3359 = vcmp.lt.s32.totalorder %v3340, 1
        %vm3360 = vcmp.lt.s32.totalorder %v3340, 2
        %vm3361 = vcmp.lt.s32.totalorder %v3340, 3
        %vm3362 = vcmp.lt.s32.totalorder %v3340, 4
        %v3363 = vsel %vm3359, %v3343, %v3346
        %v3364 = vsel %vm3362, %v3352, 2102212464
        %v3365 = vsel %vm3361, %v3349, %v3364
        %v3366 = vsel %vm3360, %v3363, %v3365
        %v3367 = vsel %vm3359, %v3346, %v3349
        %v3368 = vsel %vm3362, %v3355, 920167782
        %v3369 = vsel %vm3361, %v3352, %v3368
        %v3370 = vsel %vm3360, %v3367, %v3369
        %v3371 = vsel %vm3359, %v3349, %v3352
        %v3372 = vsel %vm3362, %v3358, 1326507024
        %v3373 = vsel %vm3361, %v3355, %v3372
        %v3374 = vsel %vm3360, %v3371, %v3373
        %v3375 = vshll.u32 %v3335, 8
        %v3376 = vand.u32 %v3375, 65535
        %v3377 = vshrl.u32 %v3375, 16
        %v3378 = vand.u32 %v3374, 65535
        %v3379 = vshrl.u32 %v3374, 16
        %v3380 = vmul.u32 %v3376, %v3378
        %v3381 = vmul.u32 %v3376, %v3379
        %v3382 = vmul.u32 %v3377, %v3378
        %v3383 = vmul.u32 %v3377, %v3379
        %v3384 = vshll.u32 %v3381, 16
        %v3385 = vshrl.u32 %v3381, 16
        %v3386 = vshll.u32 %v3382, 16
        %v3387 = vshrl.u32 %v3382, 16
        %vm3388 = vc.u32 %v3380, %v3384
        %v3389 = vsel %vm3388, 1, 0
        %v3390 = vadd.s32 %v3380, %v3384
        %v3391 = vadd.s32 %v3383, %v3389
        %vm3392 = vc.u32 %v3390, %v3386
        %v3393 = vsel %vm3392, 1, 0
        %v3394 = vadd.s32 %v3390, %v3386
        %v3395 = vadd.s32 %v3391, %v3393
        %v3396 = vadd.s32 %v3395, %v3385
        %v3397 = vadd.s32 %v3396, %v3387
        %v3398 = vand.u32 %v3375, 65535
        %v3399 = vshrl.u32 %v3375, 16
        %v3400 = vand.u32 %v3370, 65535
        %v3401 = vshrl.u32 %v3370, 16
        %v3402 = vmul.u32 %v3398, %v3400
        %v3403 = vmul.u32 %v3398, %v3401
        %v3404 = vmul.u32 %v3399, %v3400
        %v3405 = vmul.u32 %v3399, %v3401
        %v3406 = vshll.u32 %v3403, 16
        %v3407 = vshrl.u32 %v3403, 16
        %v3408 = vshll.u32 %v3404, 16
        %v3409 = vshrl.u32 %v3404, 16
        %vm3410 = vc.u32 %v3402, %v3406
        %v3411 = vsel %vm3410, 1, 0
        %v3412 = vadd.s32 %v3402, %v3406
        %v3413 = vadd.s32 %v3405, %v3411
        %vm3414 = vc.u32 %v3412, %v3408
        %v3415 = vsel %vm3414, 1, 0
        %v3416 = vadd.s32 %v3412, %v3408
        %v3417 = vadd.s32 %v3413, %v3415
        %v3418 = vadd.s32 %v3417, %v3407
        %v3419 = vadd.s32 %v3418, %v3409
        %v3420 = vmul.u32 %v3375, %v3366
        %v3421 = vadd.s32 %v3397, %v3416
        %vm3422 = vc.u32 %v3397, %v3416
        %v3423 = vadd.s32 %v3419, 1
        %v3424 = vsel %vm3422, %v3423, %v3419
        %v3425 = vadd.s32 %v3420, %v3424
        %v3426 = vadd.s32 %v3425, 536870912
        %v3427 = vshrl.u32 %v3426, 30
        %v3428 = vshll.u32 %v3427, 30
        %v3429 = vsub.s32 %v3425, %v3428
        %vm3430 = vcmp.lt.s32.totalorder %v3429, 0
        %v3431 = vsub.s32 0, %v3429
        %v3432 = vsel %vm3430, %v3431, %v3429
        %v3433 = vclz %v3432
        %v3434 = vsub.s32 %v3433, 2
        %vm3435 = vcmp.gt.s32.totalorder 0, %v3434
        %v3436 = vsel %vm3435, 0, %v3434
        %v3437 = vsub.s32 32, %v3436
        %v3438 = vshll.u32 %v3429, %v3436
        %v3439 = vshrl.u32 %v3421, %v3437
        %v3440 = vor.u32 %v3438, %v3439
        %v3441 = vsub.s32 4294967266, %v3436
        %v3442 = vadd.s32 %v3441, 127
        %v3443 = vshll.u32 %v3442, 23
        %v3444 = vor.u32 4788187, %v3443
        %v3445 = vand.u32 2147483647, %v3444
        %v3447 = vcvt.s32.f32 %v3440
        %v3448 = vmul.f32 %v3447, %v3445
        %v3449 = vxor.u32 %v3448, 2147483648
        %v3450 = vsel %vm3329, %v3449, %v3448
        %v3451 = vsub.s32 4, %v3427
        %v3452 = vsel %vm3329, %v3451, %v3427
        %v3453 = vsel %vm3328, %v491, %v3450
        %v3454 = vsel %vm3328, 0, %v3452
        %v3455 = vmul.f32 %v3453, %v3453
        %v3456 = vmul.f32 %v3455, -0.001358992
        %v3457 = vadd.f32 %v3456, 0.041655596
        %v3458 = vmul.f32 %v3455, %v3457
        %v3459 = vadd.f32 %v3458, -0.4999988
        %v3460 = vmul.f32 %v3455, %v3459
        %v3461 = vadd.f32 1.0, %v3460
        %v3462 = vmul.f32 %v3453, %v3453
        %v3463 = vmul.f32 %v3462, -0.00019511016
        %v3464 = vadd.f32 %v3463, 0.008332121
        %v3465 = vmul.f32 %v3462, %v3464
        %v3466 = vadd.f32 %v3465, -0.16666654
        %v3467 = vmul.f32 %v3462, %v3466
        %v3468 = vadd.f32 %v3467, 1.0
        %v3469 = vmul.f32 %v3468, %v3453
        %vm3470 = vweird.f32 %v491
        %v3471 = vadd.s32 %v3454, 3
        %v3472 = vand.u32 %v3471, 3
        %vm3473 = vcmp.lt.s32.totalorder %v3472, 2
        %vm3474 = vcmp.eq.s32.totalorder %v3472, 0
        %v3475 = vxor.u32 %v3469, 2147483648
        %v3476 = vsel %vm3474, %v3461, %v3475
        %vm3477 = vcmp.eq.s32.totalorder %v3472, 2
        %v3478 = vxor.u32 %v3461, 2147483648
        %v3479 = vsel %vm3477, %v3478, %v3469
        %v3480 = vsel %vm3473, %v3476, %v3479
        %v3481 = vsel %vm3470, nan, %v3480
        %v3482 = vand.u32 2147483647, %v492
        %vm3483 = vcmp.le.f32.partialorder %v3482, 0.7853982
        %vm3484 = vcmp.lt.s32.totalorder %v492, 0
        %v3485 = vand.u32 %v492, 2139095040
        %v3486 = vshrl.u32 %v3485, 23
        %v3487 = vsub.s32 %v3486, 127
        %v3488 = vand.u32 2147483647, %v492
        %v3489 = vand.u32 %v3488, 8388607
        %v3490 = vor.u32 %v3489, 8388608
        %v3491 = vsub.s32 0, %v3490
        %v3492 = vadd.s32 %v3487, 1
        %vm3493 = vcmp.gt.s32.totalorder %v3492, 0
        %v3494 = vsel %vm3493, %v3492, 0
        %v3495 = vshrl.u32 %v3494, 5
        %v3496 = vand.u32 %v3494, 31
        %v3497 = vsub.s32 32, %v3496
        %v3498 = vshrl.u32 683565275, %v3497
        %v3499 = vshll.u32 683565275, %v3496
        %v3500 = vshrl.u32 2475754826, %v3497
        %v3501 = vor.u32 %v3499, %v3500
        %v3502 = vshll.u32 2475754826, %v3496
        %v3503 = vshrl.u32 2131351028, %v3497
        %v3504 = vor.u32 %v3502, %v3503
        %v3505 = vshll.u32 2131351028, %v3496
        %v3506 = vshrl.u32 2102212464, %v3497
        %v3507 = vor.u32 %v3505, %v3506
        %v3508 = vshll.u32 2102212464, %v3496
        %v3509 = vshrl.u32 920167782, %v3497
        %v3510 = vor.u32 %v3508, %v3509
        %v3511 = vshll.u32 920167782, %v3496
        %v3512 = vshrl.u32 1326507024, %v3497
        %v3513 = vor.u32 %v3511, %v3512
        %vm3514 = vcmp.lt.s32.totalorder %v3495, 1
        %vm3515 = vcmp.lt.s32.totalorder %v3495, 2
        %vm3516 = vcmp.lt.s32.totalorder %v3495, 3
        %vm3517 = vcmp.lt.s32.totalorder %v3495, 4
        %v3518 = vsel %vm3514, %v3498, %v3501
        %v3519 = vsel %vm3517, %v3507, 2102212464
        %v3520 = vsel %vm3516, %v3504, %v3519
        %v3521 = vsel %vm3515, %v3518, %v3520
        %v3522 = vsel %vm3514, %v3501, %v3504
        %v3523 = vsel %vm3517, %v3510, 920167782
        %v3524 = vsel %vm3516, %v3507, %v3523
        %v3525 = vsel %vm3515, %v3522, %v3524
        %v3526 = vsel %vm3514, %v3504, %v3507
        %v3527 = vsel %vm3517, %v3513, 1326507024
        %v3528 = vsel %vm3516, %v3510, %v3527
        %v3529 = vsel %vm3515, %v3526, %v3528
        %v3530 = vshll.u32 %v3490, 8
        %v3531 = vand.u32 %v3530, 65535
        %v3532 = vshrl.u32 %v3530, 16
        %v3533 = vand.u32 %v3529, 65535
        %v3534 = vshrl.u32 %v3529, 16
        %v3535 = vmul.u32 %v3531, %v3533
        %v3536 = vmul.u32 %v3531, %v3534
        %v3537 = vmul.u32 %v3532, %v3533
        %v3538 = vmul.u32 %v3532, %v3534
        %v3539 = vshll.u32 %v3536, 16
        %v3540 = vshrl.u32 %v3536, 16
        %v3541 = vshll.u32 %v3537, 16
        %v3542 = vshrl.u32 %v3537, 16
        %vm3543 = vc.u32 %v3535, %v3539
        %v3544 = vsel %vm3543, 1, 0
        %v3545 = vadd.s32 %v3535, %v3539
        %v3546 = vadd.s32 %v3538, %v3544
        %vm3547 = vc.u32 %v3545, %v3541
        %v3548 = vsel %vm3547, 1, 0
        %v3549 = vadd.s32 %v3545, %v3541
        %v3550 = vadd.s32 %v3546, %v3548
        %v3551 = vadd.s32 %v3550, %v3540
        %v3552 = vadd.s32 %v3551, %v3542
        %v3553 = vand.u32 %v3530, 65535
        %v3554 = vshrl.u32 %v3530, 16
        %v3555 = vand.u32 %v3525, 65535
        %v3556 = vshrl.u32 %v3525, 16
        %v3557 = vmul.u32 %v3553, %v3555
        %v3558 = vmul.u32 %v3553, %v3556
        %v3559 = vmul.u32 %v3554, %v3555
        %v3560 = vmul.u32 %v3554, %v3556
        %v3561 = vshll.u32 %v3558, 16
        %v3562 = vshrl.u32 %v3558, 16
        %v3563 = vshll.u32 %v3559, 16
        %v3564 = vshrl.u32 %v3559, 16
        %vm3565 = vc.u32 %v3557, %v3561
        %v3566 = vsel %vm3565, 1, 0
        %v3567 = vadd.s32 %v3557, %v3561
        %v3568 = vadd.s32 %v3560, %v3566
        %vm3569 = vc.u32 %v3567, %v3563
        %v3570 = vsel %vm3569, 1, 0
        %v3571 = vadd.s32 %v3567, %v3563
        %v3572 = vadd.s32 %v3568, %v3570
        %v3573 = vadd.s32 %v3572, %v3562
        %v3574 = vadd.s32 %v3573, %v3564
        %v3575 = vmul.u32 %v3530, %v3521
        %v3576 = vadd.s32 %v3552, %v3571
        %vm3577 = vc.u32 %v3552, %v3571
        %v3578 = vadd.s32 %v3574, 1
        %v3579 = vsel %vm3577, %v3578, %v3574
        %v3580 = vadd.s32 %v3575, %v3579
        %v3581 = vadd.s32 %v3580, 536870912
        %v3582 = vshrl.u32 %v3581, 30
        %v3583 = vshll.u32 %v3582, 30
        %v3584 = vsub.s32 %v3580, %v3583
        %vm3585 = vcmp.lt.s32.totalorder %v3584, 0
        %v3586 = vsub.s32 0, %v3584
        %v3587 = vsel %vm3585, %v3586, %v3584
        %v3588 = vclz %v3587
        %v3589 = vsub.s32 %v3588, 2
        %vm3590 = vcmp.gt.s32.totalorder 0, %v3589
        %v3591 = vsel %vm3590, 0, %v3589
        %v3592 = vsub.s32 32, %v3591
        %v3593 = vshll.u32 %v3584, %v3591
        %v3594 = vshrl.u32 %v3576, %v3592
        %v3595 = vor.u32 %v3593, %v3594
        %v3596 = vsub.s32 4294967266, %v3591
        %v3597 = vadd.s32 %v3596, 127
        %v3598 = vshll.u32 %v3597, 23
        %v3599 = vor.u32 4788187, %v3598
        %v3600 = vand.u32 2147483647, %v3599
        %v3602 = vcvt.s32.f32 %v3595
        %v3603 = vmul.f32 %v3602, %v3600
        %v3604 = vxor.u32 %v3603, 2147483648
        %v3605 = vsel %vm3484, %v3604, %v3603
        %v3606 = vsub.s32 4, %v3582
        %v3607 = vsel %vm3484, %v3606, %v3582
        %v3608 = vsel %vm3483, %v492, %v3605
        %v3609 = vsel %vm3483, 0, %v3607
        %v3610 = vmul.f32 %v3608, %v3608
        %v3611 = vmul.f32 %v3610, -0.001358992
        %v3612 = vadd.f32 %v3611, 0.041655596
        %v3613 = vmul.f32 %v3610, %v3612
        %v3614 = vadd.f32 %v3613, -0.4999988
        %v3615 = vmul.f32 %v3610, %v3614
        %v3616 = vadd.f32 1.0, %v3615
        %v3617 = vmul.f32 %v3608, %v3608
        %v3618 = vmul.f32 %v3617, -0.00019511016
        %v3619 = vadd.f32 %v3618, 0.008332121
        %v3620 = vmul.f32 %v3617, %v3619
        %v3621 = vadd.f32 %v3620, -0.16666654
        %v3622 = vmul.f32 %v3617, %v3621
        %v3623 = vadd.f32 %v3622, 1.0
        %v3624 = vmul.f32 %v3623, %v3608
        %vm3625 = vweird.f32 %v492
        %v3626 = vadd.s32 %v3609, 3
        %v3627 = vand.u32 %v3626, 3
        %vm3628 = vcmp.lt.s32.totalorder %v3627, 2
        %vm3629 = vcmp.eq.s32.totalorder %v3627, 0
        %v3630 = vxor.u32 %v3624, 2147483648
        %v3631 = vsel %vm3629, %v3616, %v3630
        %vm3632 = vcmp.eq.s32.totalorder %v3627, 2
        %v3633 = vxor.u32 %v3616, 2147483648
        %v3634 = vsel %vm3632, %v3633, %v3624
        %v3635 = vsel %vm3628, %v3631, %v3634
        %v3636 = vsel %vm3625, nan, %v3635
        %v3637 = vand.u32 2147483647, %v493
        %vm3638 = vcmp.le.f32.partialorder %v3637, 0.7853982
        %vm3639 = vcmp.lt.s32.totalorder %v493, 0
        %v3640 = vand.u32 %v493, 2139095040
        %v3641 = vshrl.u32 %v3640, 23
        %v3642 = vsub.s32 %v3641, 127
        %v3643 = vand.u32 2147483647, %v493
        %v3644 = vand.u32 %v3643, 8388607
        %v3645 = vor.u32 %v3644, 8388608
        %v3646 = vsub.s32 0, %v3645
        %v3647 = vadd.s32 %v3642, 1
        %vm3648 = vcmp.gt.s32.totalorder %v3647, 0
        %v3649 = vsel %vm3648, %v3647, 0
        %v3650 = vshrl.u32 %v3649, 5
        %v3651 = vand.u32 %v3649, 31
        %v3652 = vsub.s32 32, %v3651
        %v3653 = vshrl.u32 683565275, %v3652
        %v3654 = vshll.u32 683565275, %v3651
        %v3655 = vshrl.u32 2475754826, %v3652
        %v3656 = vor.u32 %v3654, %v3655
        %v3657 = vshll.u32 2475754826, %v3651
        %v3658 = vshrl.u32 2131351028, %v3652
        %v3659 = vor.u32 %v3657, %v3658
        %v3660 = vshll.u32 2131351028, %v3651
        %v3661 = vshrl.u32 2102212464, %v3652
        %v3662 = vor.u32 %v3660, %v3661
        %v3663 = vshll.u32 2102212464, %v3651
        %v3664 = vshrl.u32 920167782, %v3652
        %v3665 = vor.u32 %v3663, %v3664
        %v3666 = vshll.u32 920167782, %v3651
        %v3667 = vshrl.u32 1326507024, %v3652
        %v3668 = vor.u32 %v3666, %v3667
        %vm3669 = vcmp.lt.s32.totalorder %v3650, 1
        %vm3670 = vcmp.lt.s32.totalorder %v3650, 2
        %vm3671 = vcmp.lt.s32.totalorder %v3650, 3
        %vm3672 = vcmp.lt.s32.totalorder %v3650, 4
        %v3673 = vsel %vm3669, %v3653, %v3656
        %v3674 = vsel %vm3672, %v3662, 2102212464
        %v3675 = vsel %vm3671, %v3659, %v3674
        %v3676 = vsel %vm3670, %v3673, %v3675
        %v3677 = vsel %vm3669, %v3656, %v3659
        %v3678 = vsel %vm3672, %v3665, 920167782
        %v3679 = vsel %vm3671, %v3662, %v3678
        %v3680 = vsel %vm3670, %v3677, %v3679
        %v3681 = vsel %vm3669, %v3659, %v3662
        %v3682 = vsel %vm3672, %v3668, 1326507024
        %v3683 = vsel %vm3671, %v3665, %v3682
        %v3684 = vsel %vm3670, %v3681, %v3683
        %v3685 = vshll.u32 %v3645, 8
        %v3686 = vand.u32 %v3685, 65535
        %v3687 = vshrl.u32 %v3685, 16
        %v3688 = vand.u32 %v3684, 65535
        %v3689 = vshrl.u32 %v3684, 16
        %v3690 = vmul.u32 %v3686, %v3688
        %v3691 = vmul.u32 %v3686, %v3689
        %v3692 = vmul.u32 %v3687, %v3688
        %v3693 = vmul.u32 %v3687, %v3689
        %v3694 = vshll.u32 %v3691, 16
        %v3695 = vshrl.u32 %v3691, 16
        %v3696 = vshll.u32 %v3692, 16
        %v3697 = vshrl.u32 %v3692, 16
        %vm3698 = vc.u32 %v3690, %v3694
        %v3699 = vsel %vm3698, 1, 0
        %v3700 = vadd.s32 %v3690, %v3694
        %v3701 = vadd.s32 %v3693, %v3699
        %vm3702 = vc.u32 %v3700, %v3696
        %v3703 = vsel %vm3702, 1, 0
        %v3704 = vadd.s32 %v3700, %v3696
        %v3705 = vadd.s32 %v3701, %v3703
        %v3706 = vadd.s32 %v3705, %v3695
        %v3707 = vadd.s32 %v3706, %v3697
        %v3708 = vand.u32 %v3685, 65535
        %v3709 = vshrl.u32 %v3685, 16
        %v3710 = vand.u32 %v3680, 65535
        %v3711 = vshrl.u32 %v3680, 16
        %v3712 = vmul.u32 %v3708, %v3710
        %v3713 = vmul.u32 %v3708, %v3711
        %v3714 = vmul.u32 %v3709, %v3710
        %v3715 = vmul.u32 %v3709, %v3711
        %v3716 = vshll.u32 %v3713, 16
        %v3717 = vshrl.u32 %v3713, 16
        %v3718 = vshll.u32 %v3714, 16
        %v3719 = vshrl.u32 %v3714, 16
        %vm3720 = vc.u32 %v3712, %v3716
        %v3721 = vsel %vm3720, 1, 0
        %v3722 = vadd.s32 %v3712, %v3716
        %v3723 = vadd.s32 %v3715, %v3721
        %vm3724 = vc.u32 %v3722, %v3718
        %v3725 = vsel %vm3724, 1, 0
        %v3726 = vadd.s32 %v3722, %v3718
        %v3727 = vadd.s32 %v3723, %v3725
        %v3728 = vadd.s32 %v3727, %v3717
        %v3729 = vadd.s32 %v3728, %v3719
        %v3730 = vmul.u32 %v3685, %v3676
        %v3731 = vadd.s32 %v3707, %v3726
        %vm3732 = vc.u32 %v3707, %v3726
        %v3733 = vadd.s32 %v3729, 1
        %v3734 = vsel %vm3732, %v3733, %v3729
        %v3735 = vadd.s32 %v3730, %v3734
        %v3736 = vadd.s32 %v3735, 536870912
        %v3737 = vshrl.u32 %v3736, 30
        %v3738 = vshll.u32 %v3737, 30
        %v3739 = vsub.s32 %v3735, %v3738
        %vm3740 = vcmp.lt.s32.totalorder %v3739, 0
        %v3741 = vsub.s32 0, %v3739
        %v3742 = vsel %vm3740, %v3741, %v3739
        %v3743 = vclz %v3742
        %v3744 = vsub.s32 %v3743, 2
        %vm3745 = vcmp.gt.s32.totalorder 0, %v3744
        %v3746 = vsel %vm3745, 0, %v3744
        %v3747 = vsub.s32 32, %v3746
        %v3748 = vshll.u32 %v3739, %v3746
        %v3749 = vshrl.u32 %v3731, %v3747
        %v3750 = vor.u32 %v3748, %v3749
        %v3751 = vsub.s32 4294967266, %v3746
        %v3752 = vadd.s32 %v3751, 127
        %v3753 = vshll.u32 %v3752, 23
        %v3754 = vor.u32 4788187, %v3753
        %v3755 = vand.u32 2147483647, %v3754
        %v3757 = vcvt.s32.f32 %v3750
        %v3758 = vmul.f32 %v3757, %v3755
        %v3759 = vxor.u32 %v3758, 2147483648
        %v3760 = vsel %vm3639, %v3759, %v3758
        %v3761 = vsub.s32 4, %v3737
        %v3762 = vsel %vm3639, %v3761, %v3737
        %v3763 = vsel %vm3638, %v493, %v3760
        %v3764 = vsel %vm3638, 0, %v3762
        %v3765 = vmul.f32 %v3763, %v3763
        %v3766 = vmul.f32 %v3765, -0.001358992
        %v3767 = vadd.f32 %v3766, 0.041655596
        %v3768 = vmul.f32 %v3765, %v3767
        %v3769 = vadd.f32 %v3768, -0.4999988
        %v3770 = vmul.f32 %v3765, %v3769
        %v3771 = vadd.f32 1.0, %v3770
        %v3772 = vmul.f32 %v3763, %v3763
        %v3773 = vmul.f32 %v3772, -0.00019511016
        %v3774 = vadd.f32 %v3773, 0.008332121
        %v3775 = vmul.f32 %v3772, %v3774
        %v3776 = vadd.f32 %v3775, -0.16666654
        %v3777 = vmul.f32 %v3772, %v3776
        %v3778 = vadd.f32 %v3777, 1.0
        %v3779 = vmul.f32 %v3778, %v3763
        %vm3780 = vweird.f32 %v493
        %v3781 = vadd.s32 %v3764, 3
        %v3782 = vand.u32 %v3781, 3
        %vm3783 = vcmp.lt.s32.totalorder %v3782, 2
        %vm3784 = vcmp.eq.s32.totalorder %v3782, 0
        %v3785 = vxor.u32 %v3779, 2147483648
        %v3786 = vsel %vm3784, %v3771, %v3785
        %vm3787 = vcmp.eq.s32.totalorder %v3782, 2
        %v3788 = vxor.u32 %v3771, 2147483648
        %v3789 = vsel %vm3787, %v3788, %v3779
        %v3790 = vsel %vm3783, %v3786, %v3789
        %v3791 = vsel %vm3780, nan, %v3790
        %v3792 = vand.u32 2147483647, %v494
        %vm3793 = vcmp.le.f32.partialorder %v3792, 0.7853982
        %vm3794 = vcmp.lt.s32.totalorder %v494, 0
        %v3795 = vand.u32 %v494, 2139095040
        %v3796 = vshrl.u32 %v3795, 23
        %v3797 = vsub.s32 %v3796, 127
        %v3798 = vand.u32 2147483647, %v494
        %v3799 = vand.u32 %v3798, 8388607
        %v3800 = vor.u32 %v3799, 8388608
        %v3801 = vsub.s32 0, %v3800
        %v3802 = vadd.s32 %v3797, 1
        %vm3803 = vcmp.gt.s32.totalorder %v3802, 0
        %v3804 = vsel %vm3803, %v3802, 0
        %v3805 = vshrl.u32 %v3804, 5
        %v3806 = vand.u32 %v3804, 31
        %v3807 = vsub.s32 32, %v3806
        %v3808 = vshrl.u32 683565275, %v3807
        %v3809 = vshll.u32 683565275, %v3806
        %v3810 = vshrl.u32 2475754826, %v3807
        %v3811 = vor.u32 %v3809, %v3810
        %v3812 = vshll.u32 2475754826, %v3806
        %v3813 = vshrl.u32 2131351028, %v3807
        %v3814 = vor.u32 %v3812, %v3813
        %v3815 = vshll.u32 2131351028, %v3806
        %v3816 = vshrl.u32 2102212464, %v3807
        %v3817 = vor.u32 %v3815, %v3816
        %v3818 = vshll.u32 2102212464, %v3806
        %v3819 = vshrl.u32 920167782, %v3807
        %v3820 = vor.u32 %v3818, %v3819
        %v3821 = vshll.u32 920167782, %v3806
        %v3822 = vshrl.u32 1326507024, %v3807
        %v3823 = vor.u32 %v3821, %v3822
        %vm3824 = vcmp.lt.s32.totalorder %v3805, 1
        %vm3825 = vcmp.lt.s32.totalorder %v3805, 2
        %vm3826 = vcmp.lt.s32.totalorder %v3805, 3
        %vm3827 = vcmp.lt.s32.totalorder %v3805, 4
        %v3828 = vsel %vm3824, %v3808, %v3811
        %v3829 = vsel %vm3827, %v3817, 2102212464
        %v3830 = vsel %vm3826, %v3814, %v3829
        %v3831 = vsel %vm3825, %v3828, %v3830
        %v3832 = vsel %vm3824, %v3811, %v3814
        %v3833 = vsel %vm3827, %v3820, 920167782
        %v3834 = vsel %vm3826, %v3817, %v3833
        %v3835 = vsel %vm3825, %v3832, %v3834
        %v3836 = vsel %vm3824, %v3814, %v3817
        %v3837 = vsel %vm3827, %v3823, 1326507024
        %v3838 = vsel %vm3826, %v3820, %v3837
        %v3839 = vsel %vm3825, %v3836, %v3838
        %v3840 = vshll.u32 %v3800, 8
        %v3841 = vand.u32 %v3840, 65535
        %v3842 = vshrl.u32 %v3840, 16
        %v3843 = vand.u32 %v3839, 65535
        %v3844 = vshrl.u32 %v3839, 16
        %v3845 = vmul.u32 %v3841, %v3843
        %v3846 = vmul.u32 %v3841, %v3844
        %v3847 = vmul.u32 %v3842, %v3843
        %v3848 = vmul.u32 %v3842, %v3844
        %v3849 = vshll.u32 %v3846, 16
        %v3850 = vshrl.u32 %v3846, 16
        %v3851 = vshll.u32 %v3847, 16
        %v3852 = vshrl.u32 %v3847, 16
        %vm3853 = vc.u32 %v3845, %v3849
        %v3854 = vsel %vm3853, 1, 0
        %v3855 = vadd.s32 %v3845, %v3849
        %v3856 = vadd.s32 %v3848, %v3854
        %vm3857 = vc.u32 %v3855, %v3851
        %v3858 = vsel %vm3857, 1, 0
        %v3859 = vadd.s32 %v3855, %v3851
        %v3860 = vadd.s32 %v3856, %v3858
        %v3861 = vadd.s32 %v3860, %v3850
        %v3862 = vadd.s32 %v3861, %v3852
        %v3863 = vand.u32 %v3840, 65535
        %v3864 = vshrl.u32 %v3840, 16
        %v3865 = vand.u32 %v3835, 65535
        %v3866 = vshrl.u32 %v3835, 16
        %v3867 = vmul.u32 %v3863, %v3865
        %v3868 = vmul.u32 %v3863, %v3866
        %v3869 = vmul.u32 %v3864, %v3865
        %v3870 = vmul.u32 %v3864, %v3866
        %v3871 = vshll.u32 %v3868, 16
        %v3872 = vshrl.u32 %v3868, 16
        %v3873 = vshll.u32 %v3869, 16
        %v3874 = vshrl.u32 %v3869, 16
        %vm3875 = vc.u32 %v3867, %v3871
        %v3876 = vsel %vm3875, 1, 0
        %v3877 = vadd.s32 %v3867, %v3871
        %v3878 = vadd.s32 %v3870, %v3876
        %vm3879 = vc.u32 %v3877, %v3873
        %v3880 = vsel %vm3879, 1, 0
        %v3881 = vadd.s32 %v3877, %v3873
        %v3882 = vadd.s32 %v3878, %v3880
        %v3883 = vadd.s32 %v3882, %v3872
        %v3884 = vadd.s32 %v3883, %v3874
        %v3885 = vmul.u32 %v3840, %v3831
        %v3886 = vadd.s32 %v3862, %v3881
        %vm3887 = vc.u32 %v3862, %v3881
        %v3888 = vadd.s32 %v3884, 1
        %v3889 = vsel %vm3887, %v3888, %v3884
        %v3890 = vadd.s32 %v3885, %v3889
        %v3891 = vadd.s32 %v3890, 536870912
        %v3892 = vshrl.u32 %v3891, 30
        %v3893 = vshll.u32 %v3892, 30
        %v3894 = vsub.s32 %v3890, %v3893
        %vm3895 = vcmp.lt.s32.totalorder %v3894, 0
        %v3896 = vsub.s32 0, %v3894
        %v3897 = vsel %vm3895, %v3896, %v3894
        %v3898 = vclz %v3897
        %v3899 = vsub.s32 %v3898, 2
        %vm3900 = vcmp.gt.s32.totalorder 0, %v3899
        %v3901 = vsel %vm3900, 0, %v3899
        %v3902 = vsub.s32 32, %v3901
        %v3903 = vshll.u32 %v3894, %v3901
        %v3904 = vshrl.u32 %v3886, %v3902
        %v3905 = vor.u32 %v3903, %v3904
        %v3906 = vsub.s32 4294967266, %v3901
        %v3907 = vadd.s32 %v3906, 127
        %v3908 = vshll.u32 %v3907, 23
        %v3909 = vor.u32 4788187, %v3908
        %v3910 = vand.u32 2147483647, %v3909
        %v3912 = vcvt.s32.f32 %v3905
        %v3913 = vmul.f32 %v3912, %v3910
        %v3914 = vxor.u32 %v3913, 2147483648
        %v3915 = vsel %vm3794, %v3914, %v3913
        %v3916 = vsub.s32 4, %v3892
        %v3917 = vsel %vm3794, %v3916, %v3892
        %v3918 = vsel %vm3793, %v494, %v3915
        %v3919 = vsel %vm3793, 0, %v3917
        %v3920 = vmul.f32 %v3918, %v3918
        %v3921 = vmul.f32 %v3920, -0.001358992
        %v3922 = vadd.f32 %v3921, 0.041655596
        %v3923 = vmul.f32 %v3920, %v3922
        %v3924 = vadd.f32 %v3923, -0.4999988
        %v3925 = vmul.f32 %v3920, %v3924
        %v3926 = vadd.f32 1.0, %v3925
        %v3927 = vmul.f32 %v3918, %v3918
        %v3928 = vmul.f32 %v3927, -0.00019511016
        %v3929 = vadd.f32 %v3928, 0.008332121
        %v3930 = vmul.f32 %v3927, %v3929
        %v3931 = vadd.f32 %v3930, -0.16666654
        %v3932 = vmul.f32 %v3927, %v3931
        %v3933 = vadd.f32 %v3932, 1.0
        %v3934 = vmul.f32 %v3933, %v3918
        %vm3935 = vweird.f32 %v494
        %v3936 = vadd.s32 %v3919, 3
        %v3937 = vand.u32 %v3936, 3
        %vm3938 = vcmp.lt.s32.totalorder %v3937, 2
        %vm3939 = vcmp.eq.s32.totalorder %v3937, 0
        %v3940 = vxor.u32 %v3934, 2147483648
        %v3941 = vsel %vm3939, %v3926, %v3940
        %vm3942 = vcmp.eq.s32.totalorder %v3937, 2
        %v3943 = vxor.u32 %v3926, 2147483648
        %v3944 = vsel %vm3942, %v3943, %v3934
        %v3945 = vsel %vm3938, %v3941, %v3944
        %v3946 = vsel %vm3935, nan, %v3945
        %v3947 = vand.u32 2147483647, %v495
        %vm3948 = vcmp.le.f32.partialorder %v3947, 0.7853982
        %vm3949 = vcmp.lt.s32.totalorder %v495, 0
        %v3950 = vand.u32 %v495, 2139095040
        %v3951 = vshrl.u32 %v3950, 23
        %v3952 = vsub.s32 %v3951, 127
        %v3953 = vand.u32 2147483647, %v495
        %v3954 = vand.u32 %v3953, 8388607
        %v3955 = vor.u32 %v3954, 8388608
        %v3956 = vsub.s32 0, %v3955
        %v3957 = vadd.s32 %v3952, 1
        %vm3958 = vcmp.gt.s32.totalorder %v3957, 0
        %v3959 = vsel %vm3958, %v3957, 0
        %v3960 = vshrl.u32 %v3959, 5
        %v3961 = vand.u32 %v3959, 31
        %v3962 = vsub.s32 32, %v3961
        %v3963 = vshrl.u32 683565275, %v3962
        %v3964 = vshll.u32 683565275, %v3961
        %v3965 = vshrl.u32 2475754826, %v3962
        %v3966 = vor.u32 %v3964, %v3965
        %v3967 = vshll.u32 2475754826, %v3961
        %v3968 = vshrl.u32 2131351028, %v3962
        %v3969 = vor.u32 %v3967, %v3968
        %v3970 = vshll.u32 2131351028, %v3961
        %v3971 = vshrl.u32 2102212464, %v3962
        %v3972 = vor.u32 %v3970, %v3971
        %v3973 = vshll.u32 2102212464, %v3961
        %v3974 = vshrl.u32 920167782, %v3962
        %v3975 = vor.u32 %v3973, %v3974
        %v3976 = vshll.u32 920167782, %v3961
        %v3977 = vshrl.u32 1326507024, %v3962
        %v3978 = vor.u32 %v3976, %v3977
        %vm3979 = vcmp.lt.s32.totalorder %v3960, 1
        %vm3980 = vcmp.lt.s32.totalorder %v3960, 2
        %vm3981 = vcmp.lt.s32.totalorder %v3960, 3
        %vm3982 = vcmp.lt.s32.totalorder %v3960, 4
        %v3983 = vsel %vm3979, %v3963, %v3966
        %v3984 = vsel %vm3982, %v3972, 2102212464
        %v3985 = vsel %vm3981, %v3969, %v3984
        %v3986 = vsel %vm3980, %v3983, %v3985
        %v3987 = vsel %vm3979, %v3966, %v3969
        %v3988 = vsel %vm3982, %v3975, 920167782
        %v3989 = vsel %vm3981, %v3972, %v3988
        %v3990 = vsel %vm3980, %v3987, %v3989
        %v3991 = vsel %vm3979, %v3969, %v3972
        %v3992 = vsel %vm3982, %v3978, 1326507024
        %v3993 = vsel %vm3981, %v3975, %v3992
        %v3994 = vsel %vm3980, %v3991, %v3993
        %v3995 = vshll.u32 %v3955, 8
        %v3996 = vand.u32 %v3995, 65535
        %v3997 = vshrl.u32 %v3995, 16
        %v3998 = vand.u32 %v3994, 65535
        %v3999 = vshrl.u32 %v3994, 16
        %v4000 = vmul.u32 %v3996, %v3998
        %v4001 = vmul.u32 %v3996, %v3999
        %v4002 = vmul.u32 %v3997, %v3998
        %v4003 = vmul.u32 %v3997, %v3999
        %v4004 = vshll.u32 %v4001, 16
        %v4005 = vshrl.u32 %v4001, 16
        %v4006 = vshll.u32 %v4002, 16
        %v4007 = vshrl.u32 %v4002, 16
        %vm4008 = vc.u32 %v4000, %v4004
        %v4009 = vsel %vm4008, 1, 0
        %v4010 = vadd.s32 %v4000, %v4004
        %v4011 = vadd.s32 %v4003, %v4009
        %vm4012 = vc.u32 %v4010, %v4006
        %v4013 = vsel %vm4012, 1, 0
        %v4014 = vadd.s32 %v4010, %v4006
        %v4015 = vadd.s32 %v4011, %v4013
        %v4016 = vadd.s32 %v4015, %v4005
        %v4017 = vadd.s32 %v4016, %v4007
        %v4018 = vand.u32 %v3995, 65535
        %v4019 = vshrl.u32 %v3995, 16
        %v4020 = vand.u32 %v3990, 65535
        %v4021 = vshrl.u32 %v3990, 16
        %v4022 = vmul.u32 %v4018, %v4020
        %v4023 = vmul.u32 %v4018, %v4021
        %v4024 = vmul.u32 %v4019, %v4020
        %v4025 = vmul.u32 %v4019, %v4021
        %v4026 = vshll.u32 %v4023, 16
        %v4027 = vshrl.u32 %v4023, 16
        %v4028 = vshll.u32 %v4024, 16
        %v4029 = vshrl.u32 %v4024, 16
        %vm4030 = vc.u32 %v4022, %v4026
        %v4031 = vsel %vm4030, 1, 0
        %v4032 = vadd.s32 %v4022, %v4026
        %v4033 = vadd.s32 %v4025, %v4031
        %vm4034 = vc.u32 %v4032, %v4028
        %v4035 = vsel %vm4034, 1, 0
        %v4036 = vadd.s32 %v4032, %v4028
        %v4037 = vadd.s32 %v4033, %v4035
        %v4038 = vadd.s32 %v4037, %v4027
        %v4039 = vadd.s32 %v4038, %v4029
        %v4040 = vmul.u32 %v3995, %v3986
        %v4041 = vadd.s32 %v4017, %v4036
        %vm4042 = vc.u32 %v4017, %v4036
        %v4043 = vadd.s32 %v4039, 1
        %v4044 = vsel %vm4042, %v4043, %v4039
        %v4045 = vadd.s32 %v4040, %v4044
        %v4046 = vadd.s32 %v4045, 536870912
        %v4047 = vshrl.u32 %v4046, 30
        %v4048 = vshll.u32 %v4047, 30
        %v4049 = vsub.s32 %v4045, %v4048
        %vm4050 = vcmp.lt.s32.totalorder %v4049, 0
        %v4051 = vsub.s32 0, %v4049
        %v4052 = vsel %vm4050, %v4051, %v4049
        %v4053 = vclz %v4052
        %v4054 = vsub.s32 %v4053, 2
        %vm4055 = vcmp.gt.s32.totalorder 0, %v4054
        %v4056 = vsel %vm4055, 0, %v4054
        %v4057 = vsub.s32 32, %v4056
        %v4058 = vshll.u32 %v4049, %v4056
        %v4059 = vshrl.u32 %v4041, %v4057
        %v4060 = vor.u32 %v4058, %v4059
        %v4061 = vsub.s32 4294967266, %v4056
        %v4062 = vadd.s32 %v4061, 127
        %v4063 = vshll.u32 %v4062, 23
        %v4064 = vor.u32 4788187, %v4063
        %v4065 = vand.u32 2147483647, %v4064
        %v4067 = vcvt.s32.f32 %v4060
        %v4068 = vmul.f32 %v4067, %v4065
        %v4069 = vxor.u32 %v4068, 2147483648
        %v4070 = vsel %vm3949, %v4069, %v4068
        %v4071 = vsub.s32 4, %v4047
        %v4072 = vsel %vm3949, %v4071, %v4047
        %v4073 = vsel %vm3948, %v495, %v4070
        %v4074 = vsel %vm3948, 0, %v4072
        %v4075 = vmul.f32 %v4073, %v4073
        %v4076 = vmul.f32 %v4075, -0.001358992
        %v4077 = vadd.f32 %v4076, 0.041655596
        %v4078 = vmul.f32 %v4075, %v4077
        %v4079 = vadd.f32 %v4078, -0.4999988
        %v4080 = vmul.f32 %v4075, %v4079
        %v4081 = vadd.f32 1.0, %v4080
        %v4082 = vmul.f32 %v4073, %v4073
        %v4083 = vmul.f32 %v4082, -0.00019511016
        %v4084 = vadd.f32 %v4083, 0.008332121
        %v4085 = vmul.f32 %v4082, %v4084
        %v4086 = vadd.f32 %v4085, -0.16666654
        %v4087 = vmul.f32 %v4082, %v4086
        %v4088 = vadd.f32 %v4087, 1.0
        %v4089 = vmul.f32 %v4088, %v4073
        %vm4090 = vweird.f32 %v495
        %v4091 = vadd.s32 %v4074, 3
        %v4092 = vand.u32 %v4091, 3
        %vm4093 = vcmp.lt.s32.totalorder %v4092, 2
        %vm4094 = vcmp.eq.s32.totalorder %v4092, 0
        %v4095 = vxor.u32 %v4089, 2147483648
        %v4096 = vsel %vm4094, %v4081, %v4095
        %vm4097 = vcmp.eq.s32.totalorder %v4092, 2
        %v4098 = vxor.u32 %v4081, 2147483648
        %v4099 = vsel %vm4097, %v4098, %v4089
        %v4100 = vsel %vm4093, %v4096, %v4099
        %v4101 = vsel %vm4090, nan, %v4100
        %v4102 = vand.u32 2147483647, %v496
        %vm4103 = vcmp.le.f32.partialorder %v4102, 0.7853982
        %vm4104 = vcmp.lt.s32.totalorder %v496, 0
        %v4105 = vand.u32 %v496, 2139095040
        %v4106 = vshrl.u32 %v4105, 23
        %v4107 = vsub.s32 %v4106, 127
        %v4108 = vand.u32 2147483647, %v496
        %v4109 = vand.u32 %v4108, 8388607
        %v4110 = vor.u32 %v4109, 8388608
        %v4111 = vsub.s32 0, %v4110
        %v4112 = vadd.s32 %v4107, 1
        %vm4113 = vcmp.gt.s32.totalorder %v4112, 0
        %v4114 = vsel %vm4113, %v4112, 0
        %v4115 = vshrl.u32 %v4114, 5
        %v4116 = vand.u32 %v4114, 31
        %v4117 = vsub.s32 32, %v4116
        %v4118 = vshrl.u32 683565275, %v4117
        %v4119 = vshll.u32 683565275, %v4116
        %v4120 = vshrl.u32 2475754826, %v4117
        %v4121 = vor.u32 %v4119, %v4120
        %v4122 = vshll.u32 2475754826, %v4116
        %v4123 = vshrl.u32 2131351028, %v4117
        %v4124 = vor.u32 %v4122, %v4123
        %v4125 = vshll.u32 2131351028, %v4116
        %v4126 = vshrl.u32 2102212464, %v4117
        %v4127 = vor.u32 %v4125, %v4126
        %v4128 = vshll.u32 2102212464, %v4116
        %v4129 = vshrl.u32 920167782, %v4117
        %v4130 = vor.u32 %v4128, %v4129
        %v4131 = vshll.u32 920167782, %v4116
        %v4132 = vshrl.u32 1326507024, %v4117
        %v4133 = vor.u32 %v4131, %v4132
        %vm4134 = vcmp.lt.s32.totalorder %v4115, 1
        %vm4135 = vcmp.lt.s32.totalorder %v4115, 2
        %vm4136 = vcmp.lt.s32.totalorder %v4115, 3
        %vm4137 = vcmp.lt.s32.totalorder %v4115, 4
        %v4138 = vsel %vm4134, %v4118, %v4121
        %v4139 = vsel %vm4137, %v4127, 2102212464
        %v4140 = vsel %vm4136, %v4124, %v4139
        %v4141 = vsel %vm4135, %v4138, %v4140
        %v4142 = vsel %vm4134, %v4121, %v4124
        %v4143 = vsel %vm4137, %v4130, 920167782
        %v4144 = vsel %vm4136, %v4127, %v4143
        %v4145 = vsel %vm4135, %v4142, %v4144
        %v4146 = vsel %vm4134, %v4124, %v4127
        %v4147 = vsel %vm4137, %v4133, 1326507024
        %v4148 = vsel %vm4136, %v4130, %v4147
        %v4149 = vsel %vm4135, %v4146, %v4148
        %v4150 = vshll.u32 %v4110, 8
        %v4151 = vand.u32 %v4150, 65535
        %v4152 = vshrl.u32 %v4150, 16
        %v4153 = vand.u32 %v4149, 65535
        %v4154 = vshrl.u32 %v4149, 16
        %v4155 = vmul.u32 %v4151, %v4153
        %v4156 = vmul.u32 %v4151, %v4154
        %v4157 = vmul.u32 %v4152, %v4153
        %v4158 = vmul.u32 %v4152, %v4154
        %v4159 = vshll.u32 %v4156, 16
        %v4160 = vshrl.u32 %v4156, 16
        %v4161 = vshll.u32 %v4157, 16
        %v4162 = vshrl.u32 %v4157, 16
        %vm4163 = vc.u32 %v4155, %v4159
        %v4164 = vsel %vm4163, 1, 0
        %v4165 = vadd.s32 %v4155, %v4159
        %v4166 = vadd.s32 %v4158, %v4164
        %vm4167 = vc.u32 %v4165, %v4161
        %v4168 = vsel %vm4167, 1, 0
        %v4169 = vadd.s32 %v4165, %v4161
        %v4170 = vadd.s32 %v4166, %v4168
        %v4171 = vadd.s32 %v4170, %v4160
        %v4172 = vadd.s32 %v4171, %v4162
        %v4173 = vand.u32 %v4150, 65535
        %v4174 = vshrl.u32 %v4150, 16
        %v4175 = vand.u32 %v4145, 65535
        %v4176 = vshrl.u32 %v4145, 16
        %v4177 = vmul.u32 %v4173, %v4175
        %v4178 = vmul.u32 %v4173, %v4176
        %v4179 = vmul.u32 %v4174, %v4175
        %v4180 = vmul.u32 %v4174, %v4176
        %v4181 = vshll.u32 %v4178, 16
        %v4182 = vshrl.u32 %v4178, 16
        %v4183 = vshll.u32 %v4179, 16
        %v4184 = vshrl.u32 %v4179, 16
        %vm4185 = vc.u32 %v4177, %v4181
        %v4186 = vsel %vm4185, 1, 0
        %v4187 = vadd.s32 %v4177, %v4181
        %v4188 = vadd.s32 %v4180, %v4186
        %vm4189 = vc.u32 %v4187, %v4183
        %v4190 = vsel %vm4189, 1, 0
        %v4191 = vadd.s32 %v4187, %v4183
        %v4192 = vadd.s32 %v4188, %v4190
        %v4193 = vadd.s32 %v4192, %v4182
        %v4194 = vadd.s32 %v4193, %v4184
        %v4195 = vmul.u32 %v4150, %v4141
        %v4196 = vadd.s32 %v4172, %v4191
        %vm4197 = vc.u32 %v4172, %v4191
        %v4198 = vadd.s32 %v4194, 1
        %v4199 = vsel %vm4197, %v4198, %v4194
        %v4200 = vadd.s32 %v4195, %v4199
        %v4201 = vadd.s32 %v4200, 536870912
        %v4202 = vshrl.u32 %v4201, 30
        %v4203 = vshll.u32 %v4202, 30
        %v4204 = vsub.s32 %v4200, %v4203
        %vm4205 = vcmp.lt.s32.totalorder %v4204, 0
        %v4206 = vsub.s32 0, %v4204
        %v4207 = vsel %vm4205, %v4206, %v4204
        %v4208 = vclz %v4207
        %v4209 = vsub.s32 %v4208, 2
        %vm4210 = vcmp.gt.s32.totalorder 0, %v4209
        %v4211 = vsel %vm4210, 0, %v4209
        %v4212 = vsub.s32 32, %v4211
        %v4213 = vshll.u32 %v4204, %v4211
        %v4214 = vshrl.u32 %v4196, %v4212
        %v4215 = vor.u32 %v4213, %v4214
        %v4216 = vsub.s32 4294967266, %v4211
        %v4217 = vadd.s32 %v4216, 127
        %v4218 = vshll.u32 %v4217, 23
        %v4219 = vor.u32 4788187, %v4218
        %v4220 = vand.u32 2147483647, %v4219
        %v4222 = vcvt.s32.f32 %v4215
        %v4223 = vmul.f32 %v4222, %v4220
        %v4224 = vxor.u32 %v4223, 2147483648
        %v4225 = vsel %vm4104, %v4224, %v4223
        %v4226 = vsub.s32 4, %v4202
        %v4227 = vsel %vm4104, %v4226, %v4202
        %v4228 = vsel %vm4103, %v496, %v4225
        %v4229 = vsel %vm4103, 0, %v4227
        %v4230 = vmul.f32 %v4228, %v4228
        %v4231 = vmul.f32 %v4230, -0.001358992
        %v4232 = vadd.f32 %v4231, 0.041655596
        %v4233 = vmul.f32 %v4230, %v4232
        %v4234 = vadd.f32 %v4233, -0.4999988
        %v4235 = vmul.f32 %v4230, %v4234
        %v4236 = vadd.f32 1.0, %v4235
        %v4237 = vmul.f32 %v4228, %v4228
        %v4238 = vmul.f32 %v4237, -0.00019511016
        %v4239 = vadd.f32 %v4238, 0.008332121
        %v4240 = vmul.f32 %v4237, %v4239
        %v4241 = vadd.f32 %v4240, -0.16666654
        %v4242 = vmul.f32 %v4237, %v4241
        %v4243 = vadd.f32 %v4242, 1.0
        %v4244 = vmul.f32 %v4243, %v4228
        %vm4245 = vweird.f32 %v496
        %v4246 = vadd.s32 %v4229, 3
        %v4247 = vand.u32 %v4246, 3
        %vm4248 = vcmp.lt.s32.totalorder %v4247, 2
        %vm4249 = vcmp.eq.s32.totalorder %v4247, 0
        %v4250 = vxor.u32 %v4244, 2147483648
        %v4251 = vsel %vm4249, %v4236, %v4250
        %vm4252 = vcmp.eq.s32.totalorder %v4247, 2
        %v4253 = vxor.u32 %v4236, 2147483648
        %v4254 = vsel %vm4252, %v4253, %v4244
        %v4255 = vsel %vm4248, %v4251, %v4254
        %v4256 = vsel %vm4245, nan, %v4255
        %v4257 = vand.u32 2147483647, %v497
        %vm4258 = vcmp.le.f32.partialorder %v4257, 0.7853982
        %vm4259 = vcmp.lt.s32.totalorder %v497, 0
        %v4260 = vand.u32 %v497, 2139095040
        %v4261 = vshrl.u32 %v4260, 23
        %v4262 = vsub.s32 %v4261, 127
        %v4263 = vand.u32 2147483647, %v497
        %v4264 = vand.u32 %v4263, 8388607
        %v4265 = vor.u32 %v4264, 8388608
        %v4266 = vsub.s32 0, %v4265
        %v4267 = vadd.s32 %v4262, 1
        %vm4268 = vcmp.gt.s32.totalorder %v4267, 0
        %v4269 = vsel %vm4268, %v4267, 0
        %v4270 = vshrl.u32 %v4269, 5
        %v4271 = vand.u32 %v4269, 31
        %v4272 = vsub.s32 32, %v4271
        %v4273 = vshrl.u32 683565275, %v4272
        %v4274 = vshll.u32 683565275, %v4271
        %v4275 = vshrl.u32 2475754826, %v4272
        %v4276 = vor.u32 %v4274, %v4275
        %v4277 = vshll.u32 2475754826, %v4271
        %v4278 = vshrl.u32 2131351028, %v4272
        %v4279 = vor.u32 %v4277, %v4278
        %v4280 = vshll.u32 2131351028, %v4271
        %v4281 = vshrl.u32 2102212464, %v4272
        %v4282 = vor.u32 %v4280, %v4281
        %v4283 = vshll.u32 2102212464, %v4271
        %v4284 = vshrl.u32 920167782, %v4272
        %v4285 = vor.u32 %v4283, %v4284
        %v4286 = vshll.u32 920167782, %v4271
        %v4287 = vshrl.u32 1326507024, %v4272
        %v4288 = vor.u32 %v4286, %v4287
        %vm4289 = vcmp.lt.s32.totalorder %v4270, 1
        %vm4290 = vcmp.lt.s32.totalorder %v4270, 2
        %vm4291 = vcmp.lt.s32.totalorder %v4270, 3
        %vm4292 = vcmp.lt.s32.totalorder %v4270, 4
        %v4293 = vsel %vm4289, %v4273, %v4276
        %v4294 = vsel %vm4292, %v4282, 2102212464
        %v4295 = vsel %vm4291, %v4279, %v4294
        %v4296 = vsel %vm4290, %v4293, %v4295
        %v4297 = vsel %vm4289, %v4276, %v4279
        %v4298 = vsel %vm4292, %v4285, 920167782
        %v4299 = vsel %vm4291, %v4282, %v4298
        %v4300 = vsel %vm4290, %v4297, %v4299
        %v4301 = vsel %vm4289, %v4279, %v4282
        %v4302 = vsel %vm4292, %v4288, 1326507024
        %v4303 = vsel %vm4291, %v4285, %v4302
        %v4304 = vsel %vm4290, %v4301, %v4303
        %v4305 = vshll.u32 %v4265, 8
        %v4306 = vand.u32 %v4305, 65535
        %v4307 = vshrl.u32 %v4305, 16
        %v4308 = vand.u32 %v4304, 65535
        %v4309 = vshrl.u32 %v4304, 16
        %v4310 = vmul.u32 %v4306, %v4308
        %v4311 = vmul.u32 %v4306, %v4309
        %v4312 = vmul.u32 %v4307, %v4308
        %v4313 = vmul.u32 %v4307, %v4309
        %v4314 = vshll.u32 %v4311, 16
        %v4315 = vshrl.u32 %v4311, 16
        %v4316 = vshll.u32 %v4312, 16
        %v4317 = vshrl.u32 %v4312, 16
        %vm4318 = vc.u32 %v4310, %v4314
        %v4319 = vsel %vm4318, 1, 0
        %v4320 = vadd.s32 %v4310, %v4314
        %v4321 = vadd.s32 %v4313, %v4319
        %vm4322 = vc.u32 %v4320, %v4316
        %v4323 = vsel %vm4322, 1, 0
        %v4324 = vadd.s32 %v4320, %v4316
        %v4325 = vadd.s32 %v4321, %v4323
        %v4326 = vadd.s32 %v4325, %v4315
        %v4327 = vadd.s32 %v4326, %v4317
        %v4328 = vand.u32 %v4305, 65535
        %v4329 = vshrl.u32 %v4305, 16
        %v4330 = vand.u32 %v4300, 65535
        %v4331 = vshrl.u32 %v4300, 16
        %v4332 = vmul.u32 %v4328, %v4330
        %v4333 = vmul.u32 %v4328, %v4331
        %v4334 = vmul.u32 %v4329, %v4330
        %v4335 = vmul.u32 %v4329, %v4331
        %v4336 = vshll.u32 %v4333, 16
        %v4337 = vshrl.u32 %v4333, 16
        %v4338 = vshll.u32 %v4334, 16
        %v4339 = vshrl.u32 %v4334, 16
        %vm4340 = vc.u32 %v4332, %v4336
        %v4341 = vsel %vm4340, 1, 0
        %v4342 = vadd.s32 %v4332, %v4336
        %v4343 = vadd.s32 %v4335, %v4341
        %vm4344 = vc.u32 %v4342, %v4338
        %v4345 = vsel %vm4344, 1, 0
        %v4346 = vadd.s32 %v4342, %v4338
        %v4347 = vadd.s32 %v4343, %v4345
        %v4348 = vadd.s32 %v4347, %v4337
        %v4349 = vadd.s32 %v4348, %v4339
        %v4350 = vmul.u32 %v4305, %v4296
        %v4351 = vadd.s32 %v4327, %v4346
        %vm4352 = vc.u32 %v4327, %v4346
        %v4353 = vadd.s32 %v4349, 1
        %v4354 = vsel %vm4352, %v4353, %v4349
        %v4355 = vadd.s32 %v4350, %v4354
        %v4356 = vadd.s32 %v4355, 536870912
        %v4357 = vshrl.u32 %v4356, 30
        %v4358 = vshll.u32 %v4357, 30
        %v4359 = vsub.s32 %v4355, %v4358
        %vm4360 = vcmp.lt.s32.totalorder %v4359, 0
        %v4361 = vsub.s32 0, %v4359
        %v4362 = vsel %vm4360, %v4361, %v4359
        %v4363 = vclz %v4362
        %v4364 = vsub.s32 %v4363, 2
        %vm4365 = vcmp.gt.s32.totalorder 0, %v4364
        %v4366 = vsel %vm4365, 0, %v4364
        %v4367 = vsub.s32 32, %v4366
        %v4368 = vshll.u32 %v4359, %v4366
        %v4369 = vshrl.u32 %v4351, %v4367
        %v4370 = vor.u32 %v4368, %v4369
        %v4371 = vsub.s32 4294967266, %v4366
        %v4372 = vadd.s32 %v4371, 127
        %v4373 = vshll.u32 %v4372, 23
        %v4374 = vor.u32 4788187, %v4373
        %v4375 = vand.u32 2147483647, %v4374
        %v4377 = vcvt.s32.f32 %v4370
        %v4378 = vmul.f32 %v4377, %v4375
        %v4379 = vxor.u32 %v4378, 2147483648
        %v4380 = vsel %vm4259, %v4379, %v4378
        %v4381 = vsub.s32 4, %v4357
        %v4382 = vsel %vm4259, %v4381, %v4357
        %v4383 = vsel %vm4258, %v497, %v4380
        %v4384 = vsel %vm4258, 0, %v4382
        %v4385 = vmul.f32 %v4383, %v4383
        %v4386 = vmul.f32 %v4385, -0.001358992
        %v4387 = vadd.f32 %v4386, 0.041655596
        %v4388 = vmul.f32 %v4385, %v4387
        %v4389 = vadd.f32 %v4388, -0.4999988
        %v4390 = vmul.f32 %v4385, %v4389
        %v4391 = vadd.f32 1.0, %v4390
        %v4392 = vmul.f32 %v4383, %v4383
        %v4393 = vmul.f32 %v4392, -0.00019511016
        %v4394 = vadd.f32 %v4393, 0.008332121
        %v4395 = vmul.f32 %v4392, %v4394
        %v4396 = vadd.f32 %v4395, -0.16666654
        %v4397 = vmul.f32 %v4392, %v4396
        %v4398 = vadd.f32 %v4397, 1.0
        %v4399 = vmul.f32 %v4398, %v4383
        %vm4400 = vweird.f32 %v497
        %v4401 = vadd.s32 %v4384, 3
        %v4402 = vand.u32 %v4401, 3
        %vm4403 = vcmp.lt.s32.totalorder %v4402, 2
        %vm4404 = vcmp.eq.s32.totalorder %v4402, 0
        %v4405 = vxor.u32 %v4399, 2147483648
        %v4406 = vsel %vm4404, %v4391, %v4405
        %vm4407 = vcmp.eq.s32.totalorder %v4402, 2
        %v4408 = vxor.u32 %v4391, 2147483648
        %v4409 = vsel %vm4407, %v4408, %v4399
        %v4410 = vsel %vm4403, %v4406, %v4409
        %v4411 = vsel %vm4400, nan, %v4410
        %v4412 = vand.u32 2147483647, %v498
        %vm4413 = vcmp.le.f32.partialorder %v4412, 0.7853982
        %vm4414 = vcmp.lt.s32.totalorder %v498, 0
        %v4415 = vand.u32 %v498, 2139095040
        %v4416 = vshrl.u32 %v4415, 23
        %v4417 = vsub.s32 %v4416, 127
        %v4418 = vand.u32 2147483647, %v498
        %v4419 = vand.u32 %v4418, 8388607
        %v4420 = vor.u32 %v4419, 8388608
        %v4421 = vsub.s32 0, %v4420
        %v4422 = vadd.s32 %v4417, 1
        %vm4423 = vcmp.gt.s32.totalorder %v4422, 0
        %v4424 = vsel %vm4423, %v4422, 0
        %v4425 = vshrl.u32 %v4424, 5
        %v4426 = vand.u32 %v4424, 31
        %v4427 = vsub.s32 32, %v4426
        %v4428 = vshrl.u32 683565275, %v4427
        %v4429 = vshll.u32 683565275, %v4426
        %v4430 = vshrl.u32 2475754826, %v4427
        %v4431 = vor.u32 %v4429, %v4430
        %v4432 = vshll.u32 2475754826, %v4426
        %v4433 = vshrl.u32 2131351028, %v4427
        %v4434 = vor.u32 %v4432, %v4433
        %v4435 = vshll.u32 2131351028, %v4426
        %v4436 = vshrl.u32 2102212464, %v4427
        %v4437 = vor.u32 %v4435, %v4436
        %v4438 = vshll.u32 2102212464, %v4426
        %v4439 = vshrl.u32 920167782, %v4427
        %v4440 = vor.u32 %v4438, %v4439
        %v4441 = vshll.u32 920167782, %v4426
        %v4442 = vshrl.u32 1326507024, %v4427
        %v4443 = vor.u32 %v4441, %v4442
        %vm4444 = vcmp.lt.s32.totalorder %v4425, 1
        %vm4445 = vcmp.lt.s32.totalorder %v4425, 2
        %vm4446 = vcmp.lt.s32.totalorder %v4425, 3
        %vm4447 = vcmp.lt.s32.totalorder %v4425, 4
        %v4448 = vsel %vm4444, %v4428, %v4431
        %v4449 = vsel %vm4447, %v4437, 2102212464
        %v4450 = vsel %vm4446, %v4434, %v4449
        %v4451 = vsel %vm4445, %v4448, %v4450
        %v4452 = vsel %vm4444, %v4431, %v4434
        %v4453 = vsel %vm4447, %v4440, 920167782
        %v4454 = vsel %vm4446, %v4437, %v4453
        %v4455 = vsel %vm4445, %v4452, %v4454
        %v4456 = vsel %vm4444, %v4434, %v4437
        %v4457 = vsel %vm4447, %v4443, 1326507024
        %v4458 = vsel %vm4446, %v4440, %v4457
        %v4459 = vsel %vm4445, %v4456, %v4458
        %v4460 = vshll.u32 %v4420, 8
        %v4461 = vand.u32 %v4460, 65535
        %v4462 = vshrl.u32 %v4460, 16
        %v4463 = vand.u32 %v4459, 65535
        %v4464 = vshrl.u32 %v4459, 16
        %v4465 = vmul.u32 %v4461, %v4463
        %v4466 = vmul.u32 %v4461, %v4464
        %v4467 = vmul.u32 %v4462, %v4463
        %v4468 = vmul.u32 %v4462, %v4464
        %v4469 = vshll.u32 %v4466, 16
        %v4470 = vshrl.u32 %v4466, 16
        %v4471 = vshll.u32 %v4467, 16
        %v4472 = vshrl.u32 %v4467, 16
        %vm4473 = vc.u32 %v4465, %v4469
        %v4474 = vsel %vm4473, 1, 0
        %v4475 = vadd.s32 %v4465, %v4469
        %v4476 = vadd.s32 %v4468, %v4474
        %vm4477 = vc.u32 %v4475, %v4471
        %v4478 = vsel %vm4477, 1, 0
        %v4479 = vadd.s32 %v4475, %v4471
        %v4480 = vadd.s32 %v4476, %v4478
        %v4481 = vadd.s32 %v4480, %v4470
        %v4482 = vadd.s32 %v4481, %v4472
        %v4483 = vand.u32 %v4460, 65535
        %v4484 = vshrl.u32 %v4460, 16
        %v4485 = vand.u32 %v4455, 65535
        %v4486 = vshrl.u32 %v4455, 16
        %v4487 = vmul.u32 %v4483, %v4485
        %v4488 = vmul.u32 %v4483, %v4486
        %v4489 = vmul.u32 %v4484, %v4485
        %v4490 = vmul.u32 %v4484, %v4486
        %v4491 = vshll.u32 %v4488, 16
        %v4492 = vshrl.u32 %v4488, 16
        %v4493 = vshll.u32 %v4489, 16
        %v4494 = vshrl.u32 %v4489, 16
        %vm4495 = vc.u32 %v4487, %v4491
        %v4496 = vsel %vm4495, 1, 0
        %v4497 = vadd.s32 %v4487, %v4491
        %v4498 = vadd.s32 %v4490, %v4496
        %vm4499 = vc.u32 %v4497, %v4493
        %v4500 = vsel %vm4499, 1, 0
        %v4501 = vadd.s32 %v4497, %v4493
        %v4502 = vadd.s32 %v4498, %v4500
        %v4503 = vadd.s32 %v4502, %v4492
        %v4504 = vadd.s32 %v4503, %v4494
        %v4505 = vmul.u32 %v4460, %v4451
        %v4506 = vadd.s32 %v4482, %v4501
        %vm4507 = vc.u32 %v4482, %v4501
        %v4508 = vadd.s32 %v4504, 1
        %v4509 = vsel %vm4507, %v4508, %v4504
        %v4510 = vadd.s32 %v4505, %v4509
        %v4511 = vadd.s32 %v4510, 536870912
        %v4512 = vshrl.u32 %v4511, 30
        %v4513 = vshll.u32 %v4512, 30
        %v4514 = vsub.s32 %v4510, %v4513
        %vm4515 = vcmp.lt.s32.totalorder %v4514, 0
        %v4516 = vsub.s32 0, %v4514
        %v4517 = vsel %vm4515, %v4516, %v4514
        %v4518 = vclz %v4517
        %v4519 = vsub.s32 %v4518, 2
        %vm4520 = vcmp.gt.s32.totalorder 0, %v4519
        %v4521 = vsel %vm4520, 0, %v4519
        %v4522 = vsub.s32 32, %v4521
        %v4523 = vshll.u32 %v4514, %v4521
        %v4524 = vshrl.u32 %v4506, %v4522
        %v4525 = vor.u32 %v4523, %v4524
        %v4526 = vsub.s32 4294967266, %v4521
        %v4527 = vadd.s32 %v4526, 127
        %v4528 = vshll.u32 %v4527, 23
        %v4529 = vor.u32 4788187, %v4528
        %v4530 = vand.u32 2147483647, %v4529
        %v4532 = vcvt.s32.f32 %v4525
        %v4533 = vmul.f32 %v4532, %v4530
        %v4534 = vxor.u32 %v4533, 2147483648
        %v4535 = vsel %vm4414, %v4534, %v4533
        %v4536 = vsub.s32 4, %v4512
        %v4537 = vsel %vm4414, %v4536, %v4512
        %v4538 = vsel %vm4413, %v498, %v4535
        %v4539 = vsel %vm4413, 0, %v4537
        %v4540 = vmul.f32 %v4538, %v4538
        %v4541 = vmul.f32 %v4540, -0.001358992
        %v4542 = vadd.f32 %v4541, 0.041655596
        %v4543 = vmul.f32 %v4540, %v4542
        %v4544 = vadd.f32 %v4543, -0.4999988
        %v4545 = vmul.f32 %v4540, %v4544
        %v4546 = vadd.f32 1.0, %v4545
        %v4547 = vmul.f32 %v4538, %v4538
        %v4548 = vmul.f32 %v4547, -0.00019511016
        %v4549 = vadd.f32 %v4548, 0.008332121
        %v4550 = vmul.f32 %v4547, %v4549
        %v4551 = vadd.f32 %v4550, -0.16666654
        %v4552 = vmul.f32 %v4547, %v4551
        %v4553 = vadd.f32 %v4552, 1.0
        %v4554 = vmul.f32 %v4553, %v4538
        %vm4555 = vweird.f32 %v498
        %v4556 = vadd.s32 %v4539, 3
        %v4557 = vand.u32 %v4556, 3
        %vm4558 = vcmp.lt.s32.totalorder %v4557, 2
        %vm4559 = vcmp.eq.s32.totalorder %v4557, 0
        %v4560 = vxor.u32 %v4554, 2147483648
        %v4561 = vsel %vm4559, %v4546, %v4560
        %vm4562 = vcmp.eq.s32.totalorder %v4557, 2
        %v4563 = vxor.u32 %v4546, 2147483648
        %v4564 = vsel %vm4562, %v4563, %v4554
        %v4565 = vsel %vm4558, %v4561, %v4564
        %v4566 = vsel %vm4555, nan, %v4565
        %v4567 = vand.u32 2147483647, %v499
        %vm4568 = vcmp.le.f32.partialorder %v4567, 0.7853982
        %vm4569 = vcmp.lt.s32.totalorder %v499, 0
        %v4570 = vand.u32 %v499, 2139095040
        %v4571 = vshrl.u32 %v4570, 23
        %v4572 = vsub.s32 %v4571, 127
        %v4573 = vand.u32 2147483647, %v499
        %v4574 = vand.u32 %v4573, 8388607
        %v4575 = vor.u32 %v4574, 8388608
        %v4576 = vsub.s32 0, %v4575
        %v4577 = vadd.s32 %v4572, 1
        %vm4578 = vcmp.gt.s32.totalorder %v4577, 0
        %v4579 = vsel %vm4578, %v4577, 0
        %v4580 = vshrl.u32 %v4579, 5
        %v4581 = vand.u32 %v4579, 31
        %v4582 = vsub.s32 32, %v4581
        %v4583 = vshrl.u32 683565275, %v4582
        %v4584 = vshll.u32 683565275, %v4581
        %v4585 = vshrl.u32 2475754826, %v4582
        %v4586 = vor.u32 %v4584, %v4585
        %v4587 = vshll.u32 2475754826, %v4581
        %v4588 = vshrl.u32 2131351028, %v4582
        %v4589 = vor.u32 %v4587, %v4588
        %v4590 = vshll.u32 2131351028, %v4581
        %v4591 = vshrl.u32 2102212464, %v4582
        %v4592 = vor.u32 %v4590, %v4591
        %v4593 = vshll.u32 2102212464, %v4581
        %v4594 = vshrl.u32 920167782, %v4582
        %v4595 = vor.u32 %v4593, %v4594
        %v4596 = vshll.u32 920167782, %v4581
        %v4597 = vshrl.u32 1326507024, %v4582
        %v4598 = vor.u32 %v4596, %v4597
        %vm4599 = vcmp.lt.s32.totalorder %v4580, 1
        %vm4600 = vcmp.lt.s32.totalorder %v4580, 2
        %vm4601 = vcmp.lt.s32.totalorder %v4580, 3
        %vm4602 = vcmp.lt.s32.totalorder %v4580, 4
        %v4603 = vsel %vm4599, %v4583, %v4586
        %v4604 = vsel %vm4602, %v4592, 2102212464
        %v4605 = vsel %vm4601, %v4589, %v4604
        %v4606 = vsel %vm4600, %v4603, %v4605
        %v4607 = vsel %vm4599, %v4586, %v4589
        %v4608 = vsel %vm4602, %v4595, 920167782
        %v4609 = vsel %vm4601, %v4592, %v4608
        %v4610 = vsel %vm4600, %v4607, %v4609
        %v4611 = vsel %vm4599, %v4589, %v4592
        %v4612 = vsel %vm4602, %v4598, 1326507024
        %v4613 = vsel %vm4601, %v4595, %v4612
        %v4614 = vsel %vm4600, %v4611, %v4613
        %v4615 = vshll.u32 %v4575, 8
        %v4616 = vand.u32 %v4615, 65535
        %v4617 = vshrl.u32 %v4615, 16
        %v4618 = vand.u32 %v4614, 65535
        %v4619 = vshrl.u32 %v4614, 16
        %v4620 = vmul.u32 %v4616, %v4618
        %v4621 = vmul.u32 %v4616, %v4619
        %v4622 = vmul.u32 %v4617, %v4618
        %v4623 = vmul.u32 %v4617, %v4619
        %v4624 = vshll.u32 %v4621, 16
        %v4625 = vshrl.u32 %v4621, 16
        %v4626 = vshll.u32 %v4622, 16
        %v4627 = vshrl.u32 %v4622, 16
        %vm4628 = vc.u32 %v4620, %v4624
        %v4629 = vsel %vm4628, 1, 0
        %v4630 = vadd.s32 %v4620, %v4624
        %v4631 = vadd.s32 %v4623, %v4629
        %vm4632 = vc.u32 %v4630, %v4626
        %v4633 = vsel %vm4632, 1, 0
        %v4634 = vadd.s32 %v4630, %v4626
        %v4635 = vadd.s32 %v4631, %v4633
        %v4636 = vadd.s32 %v4635, %v4625
        %v4637 = vadd.s32 %v4636, %v4627
        %v4638 = vand.u32 %v4615, 65535
        %v4639 = vshrl.u32 %v4615, 16
        %v4640 = vand.u32 %v4610, 65535
        %v4641 = vshrl.u32 %v4610, 16
        %v4642 = vmul.u32 %v4638, %v4640
        %v4643 = vmul.u32 %v4638, %v4641
        %v4644 = vmul.u32 %v4639, %v4640
        %v4645 = vmul.u32 %v4639, %v4641
        %v4646 = vshll.u32 %v4643, 16
        %v4647 = vshrl.u32 %v4643, 16
        %v4648 = vshll.u32 %v4644, 16
        %v4649 = vshrl.u32 %v4644, 16
        %vm4650 = vc.u32 %v4642, %v4646
        %v4651 = vsel %vm4650, 1, 0
        %v4652 = vadd.s32 %v4642, %v4646
        %v4653 = vadd.s32 %v4645, %v4651
        %vm4654 = vc.u32 %v4652, %v4648
        %v4655 = vsel %vm4654, 1, 0
        %v4656 = vadd.s32 %v4652, %v4648
        %v4657 = vadd.s32 %v4653, %v4655
        %v4658 = vadd.s32 %v4657, %v4647
        %v4659 = vadd.s32 %v4658, %v4649
        %v4660 = vmul.u32 %v4615, %v4606
        %v4661 = vadd.s32 %v4637, %v4656
        %vm4662 = vc.u32 %v4637, %v4656
        %v4663 = vadd.s32 %v4659, 1
        %v4664 = vsel %vm4662, %v4663, %v4659
        %v4665 = vadd.s32 %v4660, %v4664
        %v4666 = vadd.s32 %v4665, 536870912
        %v4667 = vshrl.u32 %v4666, 30
        %v4668 = vshll.u32 %v4667, 30
        %v4669 = vsub.s32 %v4665, %v4668
        %vm4670 = vcmp.lt.s32.totalorder %v4669, 0
        %v4671 = vsub.s32 0, %v4669
        %v4672 = vsel %vm4670, %v4671, %v4669
        %v4673 = vclz %v4672
        %v4674 = vsub.s32 %v4673, 2
        %vm4675 = vcmp.gt.s32.totalorder 0, %v4674
        %v4676 = vsel %vm4675, 0, %v4674
        %v4677 = vsub.s32 32, %v4676
        %v4678 = vshll.u32 %v4669, %v4676
        %v4679 = vshrl.u32 %v4661, %v4677
        %v4680 = vor.u32 %v4678, %v4679
        %v4681 = vsub.s32 4294967266, %v4676
        %v4682 = vadd.s32 %v4681, 127
        %v4683 = vshll.u32 %v4682, 23
        %v4684 = vor.u32 4788187, %v4683
        %v4685 = vand.u32 2147483647, %v4684
        %v4687 = vcvt.s32.f32 %v4680
        %v4688 = vmul.f32 %v4687, %v4685
        %v4689 = vxor.u32 %v4688, 2147483648
        %v4690 = vsel %vm4569, %v4689, %v4688
        %v4691 = vsub.s32 4, %v4667
        %v4692 = vsel %vm4569, %v4691, %v4667
        %v4693 = vsel %vm4568, %v499, %v4690
        %v4694 = vsel %vm4568, 0, %v4692
        %v4695 = vmul.f32 %v4693, %v4693
        %v4696 = vmul.f32 %v4695, -0.001358992
        %v4697 = vadd.f32 %v4696, 0.041655596
        %v4698 = vmul.f32 %v4695, %v4697
        %v4699 = vadd.f32 %v4698, -0.4999988
        %v4700 = vmul.f32 %v4695, %v4699
        %v4701 = vadd.f32 1.0, %v4700
        %v4702 = vmul.f32 %v4693, %v4693
        %v4703 = vmul.f32 %v4702, -0.00019511016
        %v4704 = vadd.f32 %v4703, 0.008332121
        %v4705 = vmul.f32 %v4702, %v4704
        %v4706 = vadd.f32 %v4705, -0.16666654
        %v4707 = vmul.f32 %v4702, %v4706
        %v4708 = vadd.f32 %v4707, 1.0
        %v4709 = vmul.f32 %v4708, %v4693
        %vm4710 = vweird.f32 %v499
        %v4711 = vadd.s32 %v4694, 3
        %v4712 = vand.u32 %v4711, 3
        %vm4713 = vcmp.lt.s32.totalorder %v4712, 2
        %vm4714 = vcmp.eq.s32.totalorder %v4712, 0
        %v4715 = vxor.u32 %v4709, 2147483648
        %v4716 = vsel %vm4714, %v4701, %v4715
        %vm4717 = vcmp.eq.s32.totalorder %v4712, 2
        %v4718 = vxor.u32 %v4701, 2147483648
        %v4719 = vsel %vm4717, %v4718, %v4709
        %v4720 = vsel %vm4713, %v4716, %v4719
        %v4721 = vsel %vm4710, nan, %v4720
        %v4722 = vand.u32 2147483647, %v500
        %vm4723 = vcmp.le.f32.partialorder %v4722, 0.7853982
        %vm4724 = vcmp.lt.s32.totalorder %v500, 0
        %v4725 = vand.u32 %v500, 2139095040
        %v4726 = vshrl.u32 %v4725, 23
        %v4727 = vsub.s32 %v4726, 127
        %v4728 = vand.u32 2147483647, %v500
        %v4729 = vand.u32 %v4728, 8388607
        %v4730 = vor.u32 %v4729, 8388608
        %v4731 = vsub.s32 0, %v4730
        %v4732 = vadd.s32 %v4727, 1
        %vm4733 = vcmp.gt.s32.totalorder %v4732, 0
        %v4734 = vsel %vm4733, %v4732, 0
        %v4735 = vshrl.u32 %v4734, 5
        %v4736 = vand.u32 %v4734, 31
        %v4737 = vsub.s32 32, %v4736
        %v4738 = vshrl.u32 683565275, %v4737
        %v4739 = vshll.u32 683565275, %v4736
        %v4740 = vshrl.u32 2475754826, %v4737
        %v4741 = vor.u32 %v4739, %v4740
        %v4742 = vshll.u32 2475754826, %v4736
        %v4743 = vshrl.u32 2131351028, %v4737
        %v4744 = vor.u32 %v4742, %v4743
        %v4745 = vshll.u32 2131351028, %v4736
        %v4746 = vshrl.u32 2102212464, %v4737
        %v4747 = vor.u32 %v4745, %v4746
        %v4748 = vshll.u32 2102212464, %v4736
        %v4749 = vshrl.u32 920167782, %v4737
        %v4750 = vor.u32 %v4748, %v4749
        %v4751 = vshll.u32 920167782, %v4736
        %v4752 = vshrl.u32 1326507024, %v4737
        %v4753 = vor.u32 %v4751, %v4752
        %vm4754 = vcmp.lt.s32.totalorder %v4735, 1
        %vm4755 = vcmp.lt.s32.totalorder %v4735, 2
        %vm4756 = vcmp.lt.s32.totalorder %v4735, 3
        %vm4757 = vcmp.lt.s32.totalorder %v4735, 4
        %v4758 = vsel %vm4754, %v4738, %v4741
        %v4759 = vsel %vm4757, %v4747, 2102212464
        %v4760 = vsel %vm4756, %v4744, %v4759
        %v4761 = vsel %vm4755, %v4758, %v4760
        %v4762 = vsel %vm4754, %v4741, %v4744
        %v4763 = vsel %vm4757, %v4750, 920167782
        %v4764 = vsel %vm4756, %v4747, %v4763
        %v4765 = vsel %vm4755, %v4762, %v4764
        %v4766 = vsel %vm4754, %v4744, %v4747
        %v4767 = vsel %vm4757, %v4753, 1326507024
        %v4768 = vsel %vm4756, %v4750, %v4767
        %v4769 = vsel %vm4755, %v4766, %v4768
        %v4770 = vshll.u32 %v4730, 8
        %v4771 = vand.u32 %v4770, 65535
        %v4772 = vshrl.u32 %v4770, 16
        %v4773 = vand.u32 %v4769, 65535
        %v4774 = vshrl.u32 %v4769, 16
        %v4775 = vmul.u32 %v4771, %v4773
        %v4776 = vmul.u32 %v4771, %v4774
        %v4777 = vmul.u32 %v4772, %v4773
        %v4778 = vmul.u32 %v4772, %v4774
        %v4779 = vshll.u32 %v4776, 16
        %v4780 = vshrl.u32 %v4776, 16
        %v4781 = vshll.u32 %v4777, 16
        %v4782 = vshrl.u32 %v4777, 16
        %vm4783 = vc.u32 %v4775, %v4779
        %v4784 = vsel %vm4783, 1, 0
        %v4785 = vadd.s32 %v4775, %v4779
        %v4786 = vadd.s32 %v4778, %v4784
        %vm4787 = vc.u32 %v4785, %v4781
        %v4788 = vsel %vm4787, 1, 0
        %v4789 = vadd.s32 %v4785, %v4781
        %v4790 = vadd.s32 %v4786, %v4788
        %v4791 = vadd.s32 %v4790, %v4780
        %v4792 = vadd.s32 %v4791, %v4782
        %v4793 = vand.u32 %v4770, 65535
        %v4794 = vshrl.u32 %v4770, 16
        %v4795 = vand.u32 %v4765, 65535
        %v4796 = vshrl.u32 %v4765, 16
        %v4797 = vmul.u32 %v4793, %v4795
        %v4798 = vmul.u32 %v4793, %v4796
        %v4799 = vmul.u32 %v4794, %v4795
        %v4800 = vmul.u32 %v4794, %v4796
        %v4801 = vshll.u32 %v4798, 16
        %v4802 = vshrl.u32 %v4798, 16
        %v4803 = vshll.u32 %v4799, 16
        %v4804 = vshrl.u32 %v4799, 16
        %vm4805 = vc.u32 %v4797, %v4801
        %v4806 = vsel %vm4805, 1, 0
        %v4807 = vadd.s32 %v4797, %v4801
        %v4808 = vadd.s32 %v4800, %v4806
        %vm4809 = vc.u32 %v4807, %v4803
        %v4810 = vsel %vm4809, 1, 0
        %v4811 = vadd.s32 %v4807, %v4803
        %v4812 = vadd.s32 %v4808, %v4810
        %v4813 = vadd.s32 %v4812, %v4802
        %v4814 = vadd.s32 %v4813, %v4804
        %v4815 = vmul.u32 %v4770, %v4761
        %v4816 = vadd.s32 %v4792, %v4811
        %vm4817 = vc.u32 %v4792, %v4811
        %v4818 = vadd.s32 %v4814, 1
        %v4819 = vsel %vm4817, %v4818, %v4814
        %v4820 = vadd.s32 %v4815, %v4819
        %v4821 = vadd.s32 %v4820, 536870912
        %v4822 = vshrl.u32 %v4821, 30
        %v4823 = vshll.u32 %v4822, 30
        %v4824 = vsub.s32 %v4820, %v4823
        %vm4825 = vcmp.lt.s32.totalorder %v4824, 0
        %v4826 = vsub.s32 0, %v4824
        %v4827 = vsel %vm4825, %v4826, %v4824
        %v4828 = vclz %v4827
        %v4829 = vsub.s32 %v4828, 2
        %vm4830 = vcmp.gt.s32.totalorder 0, %v4829
        %v4831 = vsel %vm4830, 0, %v4829
        %v4832 = vsub.s32 32, %v4831
        %v4833 = vshll.u32 %v4824, %v4831
        %v4834 = vshrl.u32 %v4816, %v4832
        %v4835 = vor.u32 %v4833, %v4834
        %v4836 = vsub.s32 4294967266, %v4831
        %v4837 = vadd.s32 %v4836, 127
        %v4838 = vshll.u32 %v4837, 23
        %v4839 = vor.u32 4788187, %v4838
        %v4840 = vand.u32 2147483647, %v4839
        %v4842 = vcvt.s32.f32 %v4835
        %v4843 = vmul.f32 %v4842, %v4840
        %v4844 = vxor.u32 %v4843, 2147483648
        %v4845 = vsel %vm4724, %v4844, %v4843
        %v4846 = vsub.s32 4, %v4822
        %v4847 = vsel %vm4724, %v4846, %v4822
        %v4848 = vsel %vm4723, %v500, %v4845
        %v4849 = vsel %vm4723, 0, %v4847
        %v4850 = vmul.f32 %v4848, %v4848
        %v4851 = vmul.f32 %v4850, -0.001358992
        %v4852 = vadd.f32 %v4851, 0.041655596
        %v4853 = vmul.f32 %v4850, %v4852
        %v4854 = vadd.f32 %v4853, -0.4999988
        %v4855 = vmul.f32 %v4850, %v4854
        %v4856 = vadd.f32 1.0, %v4855
        %v4857 = vmul.f32 %v4848, %v4848
        %v4858 = vmul.f32 %v4857, -0.00019511016
        %v4859 = vadd.f32 %v4858, 0.008332121
        %v4860 = vmul.f32 %v4857, %v4859
        %v4861 = vadd.f32 %v4860, -0.16666654
        %v4862 = vmul.f32 %v4857, %v4861
        %v4863 = vadd.f32 %v4862, 1.0
        %v4864 = vmul.f32 %v4863, %v4848
        %vm4865 = vweird.f32 %v500
        %v4866 = vadd.s32 %v4849, 3
        %v4867 = vand.u32 %v4866, 3
        %vm4868 = vcmp.lt.s32.totalorder %v4867, 2
        %vm4869 = vcmp.eq.s32.totalorder %v4867, 0
        %v4870 = vxor.u32 %v4864, 2147483648
        %v4871 = vsel %vm4869, %v4856, %v4870
        %vm4872 = vcmp.eq.s32.totalorder %v4867, 2
        %v4873 = vxor.u32 %v4856, 2147483648
        %v4874 = vsel %vm4872, %v4873, %v4864
        %v4875 = vsel %vm4868, %v4871, %v4874
        %v4876 = vsel %vm4865, nan, %v4875
        %v4877 = vand.u32 2147483647, %v501
        %vm4878 = vcmp.le.f32.partialorder %v4877, 0.7853982
        %vm4879 = vcmp.lt.s32.totalorder %v501, 0
        %v4880 = vand.u32 %v501, 2139095040
        %v4881 = vshrl.u32 %v4880, 23
        %v4882 = vsub.s32 %v4881, 127
        %v4883 = vand.u32 2147483647, %v501
        %v4884 = vand.u32 %v4883, 8388607
        %v4885 = vor.u32 %v4884, 8388608
        %v4886 = vsub.s32 0, %v4885
        %v4887 = vadd.s32 %v4882, 1
        %vm4888 = vcmp.gt.s32.totalorder %v4887, 0
        %v4889 = vsel %vm4888, %v4887, 0
        %v4890 = vshrl.u32 %v4889, 5
        %v4891 = vand.u32 %v4889, 31
        %v4892 = vsub.s32 32, %v4891
        %v4893 = vshrl.u32 683565275, %v4892
        %v4894 = vshll.u32 683565275, %v4891
        %v4895 = vshrl.u32 2475754826, %v4892
        %v4896 = vor.u32 %v4894, %v4895
        %v4897 = vshll.u32 2475754826, %v4891
        %v4898 = vshrl.u32 2131351028, %v4892
        %v4899 = vor.u32 %v4897, %v4898
        %v4900 = vshll.u32 2131351028, %v4891
        %v4901 = vshrl.u32 2102212464, %v4892
        %v4902 = vor.u32 %v4900, %v4901
        %v4903 = vshll.u32 2102212464, %v4891
        %v4904 = vshrl.u32 920167782, %v4892
        %v4905 = vor.u32 %v4903, %v4904
        %v4906 = vshll.u32 920167782, %v4891
        %v4907 = vshrl.u32 1326507024, %v4892
        %v4908 = vor.u32 %v4906, %v4907
        %vm4909 = vcmp.lt.s32.totalorder %v4890, 1
        %vm4910 = vcmp.lt.s32.totalorder %v4890, 2
        %vm4911 = vcmp.lt.s32.totalorder %v4890, 3
        %vm4912 = vcmp.lt.s32.totalorder %v4890, 4
        %v4913 = vsel %vm4909, %v4893, %v4896
        %v4914 = vsel %vm4912, %v4902, 2102212464
        %v4915 = vsel %vm4911, %v4899, %v4914
        %v4916 = vsel %vm4910, %v4913, %v4915
        %v4917 = vsel %vm4909, %v4896, %v4899
        %v4918 = vsel %vm4912, %v4905, 920167782
        %v4919 = vsel %vm4911, %v4902, %v4918
        %v4920 = vsel %vm4910, %v4917, %v4919
        %v4921 = vsel %vm4909, %v4899, %v4902
        %v4922 = vsel %vm4912, %v4908, 1326507024
        %v4923 = vsel %vm4911, %v4905, %v4922
        %v4924 = vsel %vm4910, %v4921, %v4923
        %v4925 = vshll.u32 %v4885, 8
        %v4926 = vand.u32 %v4925, 65535
        %v4927 = vshrl.u32 %v4925, 16
        %v4928 = vand.u32 %v4924, 65535
        %v4929 = vshrl.u32 %v4924, 16
        %v4930 = vmul.u32 %v4926, %v4928
        %v4931 = vmul.u32 %v4926, %v4929
        %v4932 = vmul.u32 %v4927, %v4928
        %v4933 = vmul.u32 %v4927, %v4929
        %v4934 = vshll.u32 %v4931, 16
        %v4935 = vshrl.u32 %v4931, 16
        %v4936 = vshll.u32 %v4932, 16
        %v4937 = vshrl.u32 %v4932, 16
        %vm4938 = vc.u32 %v4930, %v4934
        %v4939 = vsel %vm4938, 1, 0
        %v4940 = vadd.s32 %v4930, %v4934
        %v4941 = vadd.s32 %v4933, %v4939
        %vm4942 = vc.u32 %v4940, %v4936
        %v4943 = vsel %vm4942, 1, 0
        %v4944 = vadd.s32 %v4940, %v4936
        %v4945 = vadd.s32 %v4941, %v4943
        %v4946 = vadd.s32 %v4945, %v4935
        %v4947 = vadd.s32 %v4946, %v4937
        %v4948 = vand.u32 %v4925, 65535
        %v4949 = vshrl.u32 %v4925, 16
        %v4950 = vand.u32 %v4920, 65535
        %v4951 = vshrl.u32 %v4920, 16
        %v4952 = vmul.u32 %v4948, %v4950
        %v4953 = vmul.u32 %v4948, %v4951
        %v4954 = vmul.u32 %v4949, %v4950
        %v4955 = vmul.u32 %v4949, %v4951
        %v4956 = vshll.u32 %v4953, 16
        %v4957 = vshrl.u32 %v4953, 16
        %v4958 = vshll.u32 %v4954, 16
        %v4959 = vshrl.u32 %v4954, 16
        %vm4960 = vc.u32 %v4952, %v4956
        %v4961 = vsel %vm4960, 1, 0
        %v4962 = vadd.s32 %v4952, %v4956
        %v4963 = vadd.s32 %v4955, %v4961
        %vm4964 = vc.u32 %v4962, %v4958
        %v4965 = vsel %vm4964, 1, 0
        %v4966 = vadd.s32 %v4962, %v4958
        %v4967 = vadd.s32 %v4963, %v4965
        %v4968 = vadd.s32 %v4967, %v4957
        %v4969 = vadd.s32 %v4968, %v4959
        %v4970 = vmul.u32 %v4925, %v4916
        %v4971 = vadd.s32 %v4947, %v4966
        %vm4972 = vc.u32 %v4947, %v4966
        %v4973 = vadd.s32 %v4969, 1
        %v4974 = vsel %vm4972, %v4973, %v4969
        %v4975 = vadd.s32 %v4970, %v4974
        %v4976 = vadd.s32 %v4975, 536870912
        %v4977 = vshrl.u32 %v4976, 30
        %v4978 = vshll.u32 %v4977, 30
        %v4979 = vsub.s32 %v4975, %v4978
        %vm4980 = vcmp.lt.s32.totalorder %v4979, 0
        %v4981 = vsub.s32 0, %v4979
        %v4982 = vsel %vm4980, %v4981, %v4979
        %v4983 = vclz %v4982
        %v4984 = vsub.s32 %v4983, 2
        %vm4985 = vcmp.gt.s32.totalorder 0, %v4984
        %v4986 = vsel %vm4985, 0, %v4984
        %v4987 = vsub.s32 32, %v4986
        %v4988 = vshll.u32 %v4979, %v4986
        %v4989 = vshrl.u32 %v4971, %v4987
        %v4990 = vor.u32 %v4988, %v4989
        %v4991 = vsub.s32 4294967266, %v4986
        %v4992 = vadd.s32 %v4991, 127
        %v4993 = vshll.u32 %v4992, 23
        %v4994 = vor.u32 4788187, %v4993
        %v4995 = vand.u32 2147483647, %v4994
        %v4997 = vcvt.s32.f32 %v4990
        %v4998 = vmul.f32 %v4997, %v4995
        %v4999 = vxor.u32 %v4998, 2147483648
        %v5000 = vsel %vm4879, %v4999, %v4998
        %v5001 = vsub.s32 4, %v4977
        %v5002 = vsel %vm4879, %v5001, %v4977
        %v5003 = vsel %vm4878, %v501, %v5000
        %v5004 = vsel %vm4878, 0, %v5002
        %v5005 = vmul.f32 %v5003, %v5003
        %v5006 = vmul.f32 %v5005, -0.001358992
        %v5007 = vadd.f32 %v5006, 0.041655596
        %v5008 = vmul.f32 %v5005, %v5007
        %v5009 = vadd.f32 %v5008, -0.4999988
        %v5010 = vmul.f32 %v5005, %v5009
        %v5011 = vadd.f32 1.0, %v5010
        %v5012 = vmul.f32 %v5003, %v5003
        %v5013 = vmul.f32 %v5012, -0.00019511016
        %v5014 = vadd.f32 %v5013, 0.008332121
        %v5015 = vmul.f32 %v5012, %v5014
        %v5016 = vadd.f32 %v5015, -0.16666654
        %v5017 = vmul.f32 %v5012, %v5016
        %v5018 = vadd.f32 %v5017, 1.0
        %v5019 = vmul.f32 %v5018, %v5003
        %vm5020 = vweird.f32 %v501
        %v5021 = vadd.s32 %v5004, 3
        %v5022 = vand.u32 %v5021, 3
        %vm5023 = vcmp.lt.s32.totalorder %v5022, 2
        %vm5024 = vcmp.eq.s32.totalorder %v5022, 0
        %v5025 = vxor.u32 %v5019, 2147483648
        %v5026 = vsel %vm5024, %v5011, %v5025
        %vm5027 = vcmp.eq.s32.totalorder %v5022, 2
        %v5028 = vxor.u32 %v5011, 2147483648
        %v5029 = vsel %vm5027, %v5028, %v5019
        %v5030 = vsel %vm5023, %v5026, %v5029
        %v5031 = vsel %vm5020, nan, %v5030
        %v5032 = vand.u32 2147483647, %v502
        %vm5033 = vcmp.le.f32.partialorder %v5032, 0.7853982
        %vm5034 = vcmp.lt.s32.totalorder %v502, 0
        %v5035 = vand.u32 %v502, 2139095040
        %v5036 = vshrl.u32 %v5035, 23
        %v5037 = vsub.s32 %v5036, 127
        %v5038 = vand.u32 2147483647, %v502
        %v5039 = vand.u32 %v5038, 8388607
        %v5040 = vor.u32 %v5039, 8388608
        %v5041 = vsub.s32 0, %v5040
        %v5042 = vadd.s32 %v5037, 1
        %vm5043 = vcmp.gt.s32.totalorder %v5042, 0
        %v5044 = vsel %vm5043, %v5042, 0
        %v5045 = vshrl.u32 %v5044, 5
        %v5046 = vand.u32 %v5044, 31
        %v5047 = vsub.s32 32, %v5046
        %v5048 = vshrl.u32 683565275, %v5047
        %v5049 = vshll.u32 683565275, %v5046
        %v5050 = vshrl.u32 2475754826, %v5047
        %v5051 = vor.u32 %v5049, %v5050
        %v5052 = vshll.u32 2475754826, %v5046
        %v5053 = vshrl.u32 2131351028, %v5047
        %v5054 = vor.u32 %v5052, %v5053
        %v5055 = vshll.u32 2131351028, %v5046
        %v5056 = vshrl.u32 2102212464, %v5047
        %v5057 = vor.u32 %v5055, %v5056
        %v5058 = vshll.u32 2102212464, %v5046
        %v5059 = vshrl.u32 920167782, %v5047
        %v5060 = vor.u32 %v5058, %v5059
        %v5061 = vshll.u32 920167782, %v5046
        %v5062 = vshrl.u32 1326507024, %v5047
        %v5063 = vor.u32 %v5061, %v5062
        %vm5064 = vcmp.lt.s32.totalorder %v5045, 1
        %vm5065 = vcmp.lt.s32.totalorder %v5045, 2
        %vm5066 = vcmp.lt.s32.totalorder %v5045, 3
        %vm5067 = vcmp.lt.s32.totalorder %v5045, 4
        %v5068 = vsel %vm5064, %v5048, %v5051
        %v5069 = vsel %vm5067, %v5057, 2102212464
        %v5070 = vsel %vm5066, %v5054, %v5069
        %v5071 = vsel %vm5065, %v5068, %v5070
        %v5072 = vsel %vm5064, %v5051, %v5054
        %v5073 = vsel %vm5067, %v5060, 920167782
        %v5074 = vsel %vm5066, %v5057, %v5073
        %v5075 = vsel %vm5065, %v5072, %v5074
        %v5076 = vsel %vm5064, %v5054, %v5057
        %v5077 = vsel %vm5067, %v5063, 1326507024
        %v5078 = vsel %vm5066, %v5060, %v5077
        %v5079 = vsel %vm5065, %v5076, %v5078
        %v5080 = vshll.u32 %v5040, 8
        %v5081 = vand.u32 %v5080, 65535
        %v5082 = vshrl.u32 %v5080, 16
        %v5083 = vand.u32 %v5079, 65535
        %v5084 = vshrl.u32 %v5079, 16
        %v5085 = vmul.u32 %v5081, %v5083
        %v5086 = vmul.u32 %v5081, %v5084
        %v5087 = vmul.u32 %v5082, %v5083
        %v5088 = vmul.u32 %v5082, %v5084
        %v5089 = vshll.u32 %v5086, 16
        %v5090 = vshrl.u32 %v5086, 16
        %v5091 = vshll.u32 %v5087, 16
        %v5092 = vshrl.u32 %v5087, 16
        %vm5093 = vc.u32 %v5085, %v5089
        %v5094 = vsel %vm5093, 1, 0
        %v5095 = vadd.s32 %v5085, %v5089
        %v5096 = vadd.s32 %v5088, %v5094
        %vm5097 = vc.u32 %v5095, %v5091
        %v5098 = vsel %vm5097, 1, 0
        %v5099 = vadd.s32 %v5095, %v5091
        %v5100 = vadd.s32 %v5096, %v5098
        %v5101 = vadd.s32 %v5100, %v5090
        %v5102 = vadd.s32 %v5101, %v5092
        %v5103 = vand.u32 %v5080, 65535
        %v5104 = vshrl.u32 %v5080, 16
        %v5105 = vand.u32 %v5075, 65535
        %v5106 = vshrl.u32 %v5075, 16
        %v5107 = vmul.u32 %v5103, %v5105
        %v5108 = vmul.u32 %v5103, %v5106
        %v5109 = vmul.u32 %v5104, %v5105
        %v5110 = vmul.u32 %v5104, %v5106
        %v5111 = vshll.u32 %v5108, 16
        %v5112 = vshrl.u32 %v5108, 16
        %v5113 = vshll.u32 %v5109, 16
        %v5114 = vshrl.u32 %v5109, 16
        %vm5115 = vc.u32 %v5107, %v5111
        %v5116 = vsel %vm5115, 1, 0
        %v5117 = vadd.s32 %v5107, %v5111
        %v5118 = vadd.s32 %v5110, %v5116
        %vm5119 = vc.u32 %v5117, %v5113
        %v5120 = vsel %vm5119, 1, 0
        %v5121 = vadd.s32 %v5117, %v5113
        %v5122 = vadd.s32 %v5118, %v5120
        %v5123 = vadd.s32 %v5122, %v5112
        %v5124 = vadd.s32 %v5123, %v5114
        %v5125 = vmul.u32 %v5080, %v5071
        %v5126 = vadd.s32 %v5102, %v5121
        %vm5127 = vc.u32 %v5102, %v5121
        %v5128 = vadd.s32 %v5124, 1
        %v5129 = vsel %vm5127, %v5128, %v5124
        %v5130 = vadd.s32 %v5125, %v5129
        %v5131 = vadd.s32 %v5130, 536870912
        %v5132 = vshrl.u32 %v5131, 30
        %v5133 = vshll.u32 %v5132, 30
        %v5134 = vsub.s32 %v5130, %v5133
        %vm5135 = vcmp.lt.s32.totalorder %v5134, 0
        %v5136 = vsub.s32 0, %v5134
        %v5137 = vsel %vm5135, %v5136, %v5134
        %v5138 = vclz %v5137
        %v5139 = vsub.s32 %v5138, 2
        %vm5140 = vcmp.gt.s32.totalorder 0, %v5139
        %v5141 = vsel %vm5140, 0, %v5139
        %v5142 = vsub.s32 32, %v5141
        %v5143 = vshll.u32 %v5134, %v5141
        %v5144 = vshrl.u32 %v5126, %v5142
        %v5145 = vor.u32 %v5143, %v5144
        %v5146 = vsub.s32 4294967266, %v5141
        %v5147 = vadd.s32 %v5146, 127
        %v5148 = vshll.u32 %v5147, 23
        %v5149 = vor.u32 4788187, %v5148
        %v5150 = vand.u32 2147483647, %v5149
        %v5152 = vcvt.s32.f32 %v5145
        %v5153 = vmul.f32 %v5152, %v5150
        %v5154 = vxor.u32 %v5153, 2147483648
        %v5155 = vsel %vm5034, %v5154, %v5153
        %v5156 = vsub.s32 4, %v5132
        %v5157 = vsel %vm5034, %v5156, %v5132
        %v5158 = vsel %vm5033, %v502, %v5155
        %v5159 = vsel %vm5033, 0, %v5157
        %v5160 = vmul.f32 %v5158, %v5158
        %v5161 = vmul.f32 %v5160, -0.001358992
        %v5162 = vadd.f32 %v5161, 0.041655596
        %v5163 = vmul.f32 %v5160, %v5162
        %v5164 = vadd.f32 %v5163, -0.4999988
        %v5165 = vmul.f32 %v5160, %v5164
        %v5166 = vadd.f32 1.0, %v5165
        %v5167 = vmul.f32 %v5158, %v5158
        %v5168 = vmul.f32 %v5167, -0.00019511016
        %v5169 = vadd.f32 %v5168, 0.008332121
        %v5170 = vmul.f32 %v5167, %v5169
        %v5171 = vadd.f32 %v5170, -0.16666654
        %v5172 = vmul.f32 %v5167, %v5171
        %v5173 = vadd.f32 %v5172, 1.0
        %v5174 = vmul.f32 %v5173, %v5158
        %vm5175 = vweird.f32 %v502
        %v5176 = vadd.s32 %v5159, 3
        %v5177 = vand.u32 %v5176, 3
        %vm5178 = vcmp.lt.s32.totalorder %v5177, 2
        %vm5179 = vcmp.eq.s32.totalorder %v5177, 0
        %v5180 = vxor.u32 %v5174, 2147483648
        %v5181 = vsel %vm5179, %v5166, %v5180
        %vm5182 = vcmp.eq.s32.totalorder %v5177, 2
        %v5183 = vxor.u32 %v5166, 2147483648
        %v5184 = vsel %vm5182, %v5183, %v5174
        %v5185 = vsel %vm5178, %v5181, %v5184
        %v5186 = vsel %vm5175, nan, %v5185
        %v5187 = vand.u32 2147483647, %v503
        %vm5188 = vcmp.le.f32.partialorder %v5187, 0.7853982
        %vm5189 = vcmp.lt.s32.totalorder %v503, 0
        %v5190 = vand.u32 %v503, 2139095040
        %v5191 = vshrl.u32 %v5190, 23
        %v5192 = vsub.s32 %v5191, 127
        %v5193 = vand.u32 2147483647, %v503
        %v5194 = vand.u32 %v5193, 8388607
        %v5195 = vor.u32 %v5194, 8388608
        %v5196 = vsub.s32 0, %v5195
        %v5197 = vadd.s32 %v5192, 1
        %vm5198 = vcmp.gt.s32.totalorder %v5197, 0
        %v5199 = vsel %vm5198, %v5197, 0
        %v5200 = vshrl.u32 %v5199, 5
        %v5201 = vand.u32 %v5199, 31
        %v5202 = vsub.s32 32, %v5201
        %v5203 = vshrl.u32 683565275, %v5202
        %v5204 = vshll.u32 683565275, %v5201
        %v5205 = vshrl.u32 2475754826, %v5202
        %v5206 = vor.u32 %v5204, %v5205
        %v5207 = vshll.u32 2475754826, %v5201
        %v5208 = vshrl.u32 2131351028, %v5202
        %v5209 = vor.u32 %v5207, %v5208
        %v5210 = vshll.u32 2131351028, %v5201
        %v5211 = vshrl.u32 2102212464, %v5202
        %v5212 = vor.u32 %v5210, %v5211
        %v5213 = vshll.u32 2102212464, %v5201
        %v5214 = vshrl.u32 920167782, %v5202
        %v5215 = vor.u32 %v5213, %v5214
        %v5216 = vshll.u32 920167782, %v5201
        %v5217 = vshrl.u32 1326507024, %v5202
        %v5218 = vor.u32 %v5216, %v5217
        %vm5219 = vcmp.lt.s32.totalorder %v5200, 1
        %vm5220 = vcmp.lt.s32.totalorder %v5200, 2
        %vm5221 = vcmp.lt.s32.totalorder %v5200, 3
        %vm5222 = vcmp.lt.s32.totalorder %v5200, 4
        %v5223 = vsel %vm5219, %v5203, %v5206
        %v5224 = vsel %vm5222, %v5212, 2102212464
        %v5225 = vsel %vm5221, %v5209, %v5224
        %v5226 = vsel %vm5220, %v5223, %v5225
        %v5227 = vsel %vm5219, %v5206, %v5209
        %v5228 = vsel %vm5222, %v5215, 920167782
        %v5229 = vsel %vm5221, %v5212, %v5228
        %v5230 = vsel %vm5220, %v5227, %v5229
        %v5231 = vsel %vm5219, %v5209, %v5212
        %v5232 = vsel %vm5222, %v5218, 1326507024
        %v5233 = vsel %vm5221, %v5215, %v5232
        %v5234 = vsel %vm5220, %v5231, %v5233
        %v5235 = vshll.u32 %v5195, 8
        %v5236 = vand.u32 %v5235, 65535
        %v5237 = vshrl.u32 %v5235, 16
        %v5238 = vand.u32 %v5234, 65535
        %v5239 = vshrl.u32 %v5234, 16
        %v5240 = vmul.u32 %v5236, %v5238
        %v5241 = vmul.u32 %v5236, %v5239
        %v5242 = vmul.u32 %v5237, %v5238
        %v5243 = vmul.u32 %v5237, %v5239
        %v5244 = vshll.u32 %v5241, 16
        %v5245 = vshrl.u32 %v5241, 16
        %v5246 = vshll.u32 %v5242, 16
        %v5247 = vshrl.u32 %v5242, 16
        %vm5248 = vc.u32 %v5240, %v5244
        %v5249 = vsel %vm5248, 1, 0
        %v5250 = vadd.s32 %v5240, %v5244
        %v5251 = vadd.s32 %v5243, %v5249
        %vm5252 = vc.u32 %v5250, %v5246
        %v5253 = vsel %vm5252, 1, 0
        %v5254 = vadd.s32 %v5250, %v5246
        %v5255 = vadd.s32 %v5251, %v5253
        %v5256 = vadd.s32 %v5255, %v5245
        %v5257 = vadd.s32 %v5256, %v5247
        %v5258 = vand.u32 %v5235, 65535
        %v5259 = vshrl.u32 %v5235, 16
        %v5260 = vand.u32 %v5230, 65535
        %v5261 = vshrl.u32 %v5230, 16
        %v5262 = vmul.u32 %v5258, %v5260
        %v5263 = vmul.u32 %v5258, %v5261
        %v5264 = vmul.u32 %v5259, %v5260
        %v5265 = vmul.u32 %v5259, %v5261
        %v5266 = vshll.u32 %v5263, 16
        %v5267 = vshrl.u32 %v5263, 16
        %v5268 = vshll.u32 %v5264, 16
        %v5269 = vshrl.u32 %v5264, 16
        %vm5270 = vc.u32 %v5262, %v5266
        %v5271 = vsel %vm5270, 1, 0
        %v5272 = vadd.s32 %v5262, %v5266
        %v5273 = vadd.s32 %v5265, %v5271
        %vm5274 = vc.u32 %v5272, %v5268
        %v5275 = vsel %vm5274, 1, 0
        %v5276 = vadd.s32 %v5272, %v5268
        %v5277 = vadd.s32 %v5273, %v5275
        %v5278 = vadd.s32 %v5277, %v5267
        %v5279 = vadd.s32 %v5278, %v5269
        %v5280 = vmul.u32 %v5235, %v5226
        %v5281 = vadd.s32 %v5257, %v5276
        %vm5282 = vc.u32 %v5257, %v5276
        %v5283 = vadd.s32 %v5279, 1
        %v5284 = vsel %vm5282, %v5283, %v5279
        %v5285 = vadd.s32 %v5280, %v5284
        %v5286 = vadd.s32 %v5285, 536870912
        %v5287 = vshrl.u32 %v5286, 30
        %v5288 = vshll.u32 %v5287, 30
        %v5289 = vsub.s32 %v5285, %v5288
        %vm5290 = vcmp.lt.s32.totalorder %v5289, 0
        %v5291 = vsub.s32 0, %v5289
        %v5292 = vsel %vm5290, %v5291, %v5289
        %v5293 = vclz %v5292
        %v5294 = vsub.s32 %v5293, 2
        %vm5295 = vcmp.gt.s32.totalorder 0, %v5294
        %v5296 = vsel %vm5295, 0, %v5294
        %v5297 = vsub.s32 32, %v5296
        %v5298 = vshll.u32 %v5289, %v5296
        %v5299 = vshrl.u32 %v5281, %v5297
        %v5300 = vor.u32 %v5298, %v5299
        %v5301 = vsub.s32 4294967266, %v5296
        %v5302 = vadd.s32 %v5301, 127
        %v5303 = vshll.u32 %v5302, 23
        %v5304 = vor.u32 4788187, %v5303
        %v5305 = vand.u32 2147483647, %v5304
        %v5307 = vcvt.s32.f32 %v5300
        %v5308 = vmul.f32 %v5307, %v5305
        %v5309 = vxor.u32 %v5308, 2147483648
        %v5310 = vsel %vm5189, %v5309, %v5308
        %v5311 = vsub.s32 4, %v5287
        %v5312 = vsel %vm5189, %v5311, %v5287
        %v5313 = vsel %vm5188, %v503, %v5310
        %v5314 = vsel %vm5188, 0, %v5312
        %v5315 = vmul.f32 %v5313, %v5313
        %v5316 = vmul.f32 %v5315, -0.001358992
        %v5317 = vadd.f32 %v5316, 0.041655596
        %v5318 = vmul.f32 %v5315, %v5317
        %v5319 = vadd.f32 %v5318, -0.4999988
        %v5320 = vmul.f32 %v5315, %v5319
        %v5321 = vadd.f32 1.0, %v5320
        %v5322 = vmul.f32 %v5313, %v5313
        %v5323 = vmul.f32 %v5322, -0.00019511016
        %v5324 = vadd.f32 %v5323, 0.008332121
        %v5325 = vmul.f32 %v5322, %v5324
        %v5326 = vadd.f32 %v5325, -0.16666654
        %v5327 = vmul.f32 %v5322, %v5326
        %v5328 = vadd.f32 %v5327, 1.0
        %v5329 = vmul.f32 %v5328, %v5313
        %vm5330 = vweird.f32 %v503
        %v5331 = vadd.s32 %v5314, 3
        %v5332 = vand.u32 %v5331, 3
        %vm5333 = vcmp.lt.s32.totalorder %v5332, 2
        %vm5334 = vcmp.eq.s32.totalorder %v5332, 0
        %v5335 = vxor.u32 %v5329, 2147483648
        %v5336 = vsel %vm5334, %v5321, %v5335
        %vm5337 = vcmp.eq.s32.totalorder %v5332, 2
        %v5338 = vxor.u32 %v5321, 2147483648
        %v5339 = vsel %vm5337, %v5338, %v5329
        %v5340 = vsel %vm5333, %v5336, %v5339
        %v5341 = vsel %vm5330, nan, %v5340
        %v5342 = vand.u32 2147483647, %v504
        %vm5343 = vcmp.le.f32.partialorder %v5342, 0.7853982
        %vm5344 = vcmp.lt.s32.totalorder %v504, 0
        %v5345 = vand.u32 %v504, 2139095040
        %v5346 = vshrl.u32 %v5345, 23
        %v5347 = vsub.s32 %v5346, 127
        %v5348 = vand.u32 2147483647, %v504
        %v5349 = vand.u32 %v5348, 8388607
        %v5350 = vor.u32 %v5349, 8388608
        %v5351 = vsub.s32 0, %v5350
        %v5352 = vadd.s32 %v5347, 1
        %vm5353 = vcmp.gt.s32.totalorder %v5352, 0
        %v5354 = vsel %vm5353, %v5352, 0
        %v5355 = vshrl.u32 %v5354, 5
        %v5356 = vand.u32 %v5354, 31
        %v5357 = vsub.s32 32, %v5356
        %v5358 = vshrl.u32 683565275, %v5357
        %v5359 = vshll.u32 683565275, %v5356
        %v5360 = vshrl.u32 2475754826, %v5357
        %v5361 = vor.u32 %v5359, %v5360
        %v5362 = vshll.u32 2475754826, %v5356
        %v5363 = vshrl.u32 2131351028, %v5357
        %v5364 = vor.u32 %v5362, %v5363
        %v5365 = vshll.u32 2131351028, %v5356
        %v5366 = vshrl.u32 2102212464, %v5357
        %v5367 = vor.u32 %v5365, %v5366
        %v5368 = vshll.u32 2102212464, %v5356
        %v5369 = vshrl.u32 920167782, %v5357
        %v5370 = vor.u32 %v5368, %v5369
        %v5371 = vshll.u32 920167782, %v5356
        %v5372 = vshrl.u32 1326507024, %v5357
        %v5373 = vor.u32 %v5371, %v5372
        %vm5374 = vcmp.lt.s32.totalorder %v5355, 1
        %vm5375 = vcmp.lt.s32.totalorder %v5355, 2
        %vm5376 = vcmp.lt.s32.totalorder %v5355, 3
        %vm5377 = vcmp.lt.s32.totalorder %v5355, 4
        %v5378 = vsel %vm5374, %v5358, %v5361
        %v5379 = vsel %vm5377, %v5367, 2102212464
        %v5380 = vsel %vm5376, %v5364, %v5379
        %v5381 = vsel %vm5375, %v5378, %v5380
        %v5382 = vsel %vm5374, %v5361, %v5364
        %v5383 = vsel %vm5377, %v5370, 920167782
        %v5384 = vsel %vm5376, %v5367, %v5383
        %v5385 = vsel %vm5375, %v5382, %v5384
        %v5386 = vsel %vm5374, %v5364, %v5367
        %v5387 = vsel %vm5377, %v5373, 1326507024
        %v5388 = vsel %vm5376, %v5370, %v5387
        %v5389 = vsel %vm5375, %v5386, %v5388
        %v5390 = vshll.u32 %v5350, 8
        %v5391 = vand.u32 %v5390, 65535
        %v5392 = vshrl.u32 %v5390, 16
        %v5393 = vand.u32 %v5389, 65535
        %v5394 = vshrl.u32 %v5389, 16
        %v5395 = vmul.u32 %v5391, %v5393
        %v5396 = vmul.u32 %v5391, %v5394
        %v5397 = vmul.u32 %v5392, %v5393
        %v5398 = vmul.u32 %v5392, %v5394
        %v5399 = vshll.u32 %v5396, 16
        %v5400 = vshrl.u32 %v5396, 16
        %v5401 = vshll.u32 %v5397, 16
        %v5402 = vshrl.u32 %v5397, 16
        %vm5403 = vc.u32 %v5395, %v5399
        %v5404 = vsel %vm5403, 1, 0
        %v5405 = vadd.s32 %v5395, %v5399
        %v5406 = vadd.s32 %v5398, %v5404
        %vm5407 = vc.u32 %v5405, %v5401
        %v5408 = vsel %vm5407, 1, 0
        %v5409 = vadd.s32 %v5405, %v5401
        %v5410 = vadd.s32 %v5406, %v5408
        %v5411 = vadd.s32 %v5410, %v5400
        %v5412 = vadd.s32 %v5411, %v5402
        %v5413 = vand.u32 %v5390, 65535
        %v5414 = vshrl.u32 %v5390, 16
        %v5415 = vand.u32 %v5385, 65535
        %v5416 = vshrl.u32 %v5385, 16
        %v5417 = vmul.u32 %v5413, %v5415
        %v5418 = vmul.u32 %v5413, %v5416
        %v5419 = vmul.u32 %v5414, %v5415
        %v5420 = vmul.u32 %v5414, %v5416
        %v5421 = vshll.u32 %v5418, 16
        %v5422 = vshrl.u32 %v5418, 16
        %v5423 = vshll.u32 %v5419, 16
        %v5424 = vshrl.u32 %v5419, 16
        %vm5425 = vc.u32 %v5417, %v5421
        %v5426 = vsel %vm5425, 1, 0
        %v5427 = vadd.s32 %v5417, %v5421
        %v5428 = vadd.s32 %v5420, %v5426
        %vm5429 = vc.u32 %v5427, %v5423
        %v5430 = vsel %vm5429, 1, 0
        %v5431 = vadd.s32 %v5427, %v5423
        %v5432 = vadd.s32 %v5428, %v5430
        %v5433 = vadd.s32 %v5432, %v5422
        %v5434 = vadd.s32 %v5433, %v5424
        %v5435 = vmul.u32 %v5390, %v5381
        %v5436 = vadd.s32 %v5412, %v5431
        %vm5437 = vc.u32 %v5412, %v5431
        %v5438 = vadd.s32 %v5434, 1
        %v5439 = vsel %vm5437, %v5438, %v5434
        %v5440 = vadd.s32 %v5435, %v5439
        %v5441 = vadd.s32 %v5440, 536870912
        %v5442 = vshrl.u32 %v5441, 30
        %v5443 = vshll.u32 %v5442, 30
        %v5444 = vsub.s32 %v5440, %v5443
        %vm5445 = vcmp.lt.s32.totalorder %v5444, 0
        %v5446 = vsub.s32 0, %v5444
        %v5447 = vsel %vm5445, %v5446, %v5444
        %v5448 = vclz %v5447
        %v5449 = vsub.s32 %v5448, 2
        %vm5450 = vcmp.gt.s32.totalorder 0, %v5449
        %v5451 = vsel %vm5450, 0, %v5449
        %v5452 = vsub.s32 32, %v5451
        %v5453 = vshll.u32 %v5444, %v5451
        %v5454 = vshrl.u32 %v5436, %v5452
        %v5455 = vor.u32 %v5453, %v5454
        %v5456 = vsub.s32 4294967266, %v5451
        %v5457 = vadd.s32 %v5456, 127
        %v5458 = vshll.u32 %v5457, 23
        %v5459 = vor.u32 4788187, %v5458
        %v5460 = vand.u32 2147483647, %v5459
        %v5462 = vcvt.s32.f32 %v5455
        %v5463 = vmul.f32 %v5462, %v5460
        %v5464 = vxor.u32 %v5463, 2147483648
        %v5465 = vsel %vm5344, %v5464, %v5463
        %v5466 = vsub.s32 4, %v5442
        %v5467 = vsel %vm5344, %v5466, %v5442
        %v5468 = vsel %vm5343, %v504, %v5465
        %v5469 = vsel %vm5343, 0, %v5467
        %v5470 = vmul.f32 %v5468, %v5468
        %v5471 = vmul.f32 %v5470, -0.001358992
        %v5472 = vadd.f32 %v5471, 0.041655596
        %v5473 = vmul.f32 %v5470, %v5472
        %v5474 = vadd.f32 %v5473, -0.4999988
        %v5475 = vmul.f32 %v5470, %v5474
        %v5476 = vadd.f32 1.0, %v5475
        %v5477 = vmul.f32 %v5468, %v5468
        %v5478 = vmul.f32 %v5477, -0.00019511016
        %v5479 = vadd.f32 %v5478, 0.008332121
        %v5480 = vmul.f32 %v5477, %v5479
        %v5481 = vadd.f32 %v5480, -0.16666654
        %v5482 = vmul.f32 %v5477, %v5481
        %v5483 = vadd.f32 %v5482, 1.0
        %v5484 = vmul.f32 %v5483, %v5468
        %vm5485 = vweird.f32 %v504
        %v5486 = vadd.s32 %v5469, 3
        %v5487 = vand.u32 %v5486, 3
        %vm5488 = vcmp.lt.s32.totalorder %v5487, 2
        %vm5489 = vcmp.eq.s32.totalorder %v5487, 0
        %v5490 = vxor.u32 %v5484, 2147483648
        %v5491 = vsel %vm5489, %v5476, %v5490
        %vm5492 = vcmp.eq.s32.totalorder %v5487, 2
        %v5493 = vxor.u32 %v5476, 2147483648
        %v5494 = vsel %vm5492, %v5493, %v5484
        %v5495 = vsel %vm5488, %v5491, %v5494
        %v5496 = vsel %vm5485, nan, %v5495
        %v5497 = vand.u32 2147483647, %v505
        %vm5498 = vcmp.le.f32.partialorder %v5497, 0.7853982
        %vm5499 = vcmp.lt.s32.totalorder %v505, 0
        %v5500 = vand.u32 %v505, 2139095040
        %v5501 = vshrl.u32 %v5500, 23
        %v5502 = vsub.s32 %v5501, 127
        %v5503 = vand.u32 2147483647, %v505
        %v5504 = vand.u32 %v5503, 8388607
        %v5505 = vor.u32 %v5504, 8388608
        %v5506 = vsub.s32 0, %v5505
        %v5507 = vadd.s32 %v5502, 1
        %vm5508 = vcmp.gt.s32.totalorder %v5507, 0
        %v5509 = vsel %vm5508, %v5507, 0
        %v5510 = vshrl.u32 %v5509, 5
        %v5511 = vand.u32 %v5509, 31
        %v5512 = vsub.s32 32, %v5511
        %v5513 = vshrl.u32 683565275, %v5512
        %v5514 = vshll.u32 683565275, %v5511
        %v5515 = vshrl.u32 2475754826, %v5512
        %v5516 = vor.u32 %v5514, %v5515
        %v5517 = vshll.u32 2475754826, %v5511
        %v5518 = vshrl.u32 2131351028, %v5512
        %v5519 = vor.u32 %v5517, %v5518
        %v5520 = vshll.u32 2131351028, %v5511
        %v5521 = vshrl.u32 2102212464, %v5512
        %v5522 = vor.u32 %v5520, %v5521
        %v5523 = vshll.u32 2102212464, %v5511
        %v5524 = vshrl.u32 920167782, %v5512
        %v5525 = vor.u32 %v5523, %v5524
        %v5526 = vshll.u32 920167782, %v5511
        %v5527 = vshrl.u32 1326507024, %v5512
        %v5528 = vor.u32 %v5526, %v5527
        %vm5529 = vcmp.lt.s32.totalorder %v5510, 1
        %vm5530 = vcmp.lt.s32.totalorder %v5510, 2
        %vm5531 = vcmp.lt.s32.totalorder %v5510, 3
        %vm5532 = vcmp.lt.s32.totalorder %v5510, 4
        %v5533 = vsel %vm5529, %v5513, %v5516
        %v5534 = vsel %vm5532, %v5522, 2102212464
        %v5535 = vsel %vm5531, %v5519, %v5534
        %v5536 = vsel %vm5530, %v5533, %v5535
        %v5537 = vsel %vm5529, %v5516, %v5519
        %v5538 = vsel %vm5532, %v5525, 920167782
        %v5539 = vsel %vm5531, %v5522, %v5538
        %v5540 = vsel %vm5530, %v5537, %v5539
        %v5541 = vsel %vm5529, %v5519, %v5522
        %v5542 = vsel %vm5532, %v5528, 1326507024
        %v5543 = vsel %vm5531, %v5525, %v5542
        %v5544 = vsel %vm5530, %v5541, %v5543
        %v5545 = vshll.u32 %v5505, 8
        %v5546 = vand.u32 %v5545, 65535
        %v5547 = vshrl.u32 %v5545, 16
        %v5548 = vand.u32 %v5544, 65535
        %v5549 = vshrl.u32 %v5544, 16
        %v5550 = vmul.u32 %v5546, %v5548
        %v5551 = vmul.u32 %v5546, %v5549
        %v5552 = vmul.u32 %v5547, %v5548
        %v5553 = vmul.u32 %v5547, %v5549
        %v5554 = vshll.u32 %v5551, 16
        %v5555 = vshrl.u32 %v5551, 16
        %v5556 = vshll.u32 %v5552, 16
        %v5557 = vshrl.u32 %v5552, 16
        %vm5558 = vc.u32 %v5550, %v5554
        %v5559 = vsel %vm5558, 1, 0
        %v5560 = vadd.s32 %v5550, %v5554
        %v5561 = vadd.s32 %v5553, %v5559
        %vm5562 = vc.u32 %v5560, %v5556
        %v5563 = vsel %vm5562, 1, 0
        %v5564 = vadd.s32 %v5560, %v5556
        %v5565 = vadd.s32 %v5561, %v5563
        %v5566 = vadd.s32 %v5565, %v5555
        %v5567 = vadd.s32 %v5566, %v5557
        %v5568 = vand.u32 %v5545, 65535
        %v5569 = vshrl.u32 %v5545, 16
        %v5570 = vand.u32 %v5540, 65535
        %v5571 = vshrl.u32 %v5540, 16
        %v5572 = vmul.u32 %v5568, %v5570
        %v5573 = vmul.u32 %v5568, %v5571
        %v5574 = vmul.u32 %v5569, %v5570
        %v5575 = vmul.u32 %v5569, %v5571
        %v5576 = vshll.u32 %v5573, 16
        %v5577 = vshrl.u32 %v5573, 16
        %v5578 = vshll.u32 %v5574, 16
        %v5579 = vshrl.u32 %v5574, 16
        %vm5580 = vc.u32 %v5572, %v5576
        %v5581 = vsel %vm5580, 1, 0
        %v5582 = vadd.s32 %v5572, %v5576
        %v5583 = vadd.s32 %v5575, %v5581
        %vm5584 = vc.u32 %v5582, %v5578
        %v5585 = vsel %vm5584, 1, 0
        %v5586 = vadd.s32 %v5582, %v5578
        %v5587 = vadd.s32 %v5583, %v5585
        %v5588 = vadd.s32 %v5587, %v5577
        %v5589 = vadd.s32 %v5588, %v5579
        %v5590 = vmul.u32 %v5545, %v5536
        %v5591 = vadd.s32 %v5567, %v5586
        %vm5592 = vc.u32 %v5567, %v5586
        %v5593 = vadd.s32 %v5589, 1
        %v5594 = vsel %vm5592, %v5593, %v5589
        %v5595 = vadd.s32 %v5590, %v5594
        %v5596 = vadd.s32 %v5595, 536870912
        %v5597 = vshrl.u32 %v5596, 30
        %v5598 = vshll.u32 %v5597, 30
        %v5599 = vsub.s32 %v5595, %v5598
        %vm5600 = vcmp.lt.s32.totalorder %v5599, 0
        %v5601 = vsub.s32 0, %v5599
        %v5602 = vsel %vm5600, %v5601, %v5599
        %v5603 = vclz %v5602
        %v5604 = vsub.s32 %v5603, 2
        %vm5605 = vcmp.gt.s32.totalorder 0, %v5604
        %v5606 = vsel %vm5605, 0, %v5604
        %v5607 = vsub.s32 32, %v5606
        %v5608 = vshll.u32 %v5599, %v5606
        %v5609 = vshrl.u32 %v5591, %v5607
        %v5610 = vor.u32 %v5608, %v5609
        %v5611 = vsub.s32 4294967266, %v5606
        %v5612 = vadd.s32 %v5611, 127
        %v5613 = vshll.u32 %v5612, 23
        %v5614 = vor.u32 4788187, %v5613
        %v5615 = vand.u32 2147483647, %v5614
        %v5617 = vcvt.s32.f32 %v5610
        %v5618 = vmul.f32 %v5617, %v5615
        %v5619 = vxor.u32 %v5618, 2147483648
        %v5620 = vsel %vm5499, %v5619, %v5618
        %v5621 = vsub.s32 4, %v5597
        %v5622 = vsel %vm5499, %v5621, %v5597
        %v5623 = vsel %vm5498, %v505, %v5620
        %v5624 = vsel %vm5498, 0, %v5622
        %v5625 = vmul.f32 %v5623, %v5623
        %v5626 = vmul.f32 %v5625, -0.001358992
        %v5627 = vadd.f32 %v5626, 0.041655596
        %v5628 = vmul.f32 %v5625, %v5627
        %v5629 = vadd.f32 %v5628, -0.4999988
        %v5630 = vmul.f32 %v5625, %v5629
        %v5631 = vadd.f32 1.0, %v5630
        %v5632 = vmul.f32 %v5623, %v5623
        %v5633 = vmul.f32 %v5632, -0.00019511016
        %v5634 = vadd.f32 %v5633, 0.008332121
        %v5635 = vmul.f32 %v5632, %v5634
        %v5636 = vadd.f32 %v5635, -0.16666654
        %v5637 = vmul.f32 %v5632, %v5636
        %v5638 = vadd.f32 %v5637, 1.0
        %v5639 = vmul.f32 %v5638, %v5623
        %vm5640 = vweird.f32 %v505
        %v5641 = vadd.s32 %v5624, 3
        %v5642 = vand.u32 %v5641, 3
        %vm5643 = vcmp.lt.s32.totalorder %v5642, 2
        %vm5644 = vcmp.eq.s32.totalorder %v5642, 0
        %v5645 = vxor.u32 %v5639, 2147483648
        %v5646 = vsel %vm5644, %v5631, %v5645
        %vm5647 = vcmp.eq.s32.totalorder %v5642, 2
        %v5648 = vxor.u32 %v5631, 2147483648
        %v5649 = vsel %vm5647, %v5648, %v5639
        %v5650 = vsel %vm5643, %v5646, %v5649
        %v5651 = vsel %vm5640, nan, %v5650
        %v5652 = vand.u32 2147483647, %v506
        %vm5653 = vcmp.le.f32.partialorder %v5652, 0.7853982
        %vm5654 = vcmp.lt.s32.totalorder %v506, 0
        %v5655 = vand.u32 %v506, 2139095040
        %v5656 = vshrl.u32 %v5655, 23
        %v5657 = vsub.s32 %v5656, 127
        %v5658 = vand.u32 2147483647, %v506
        %v5659 = vand.u32 %v5658, 8388607
        %v5660 = vor.u32 %v5659, 8388608
        %v5661 = vsub.s32 0, %v5660
        %v5662 = vadd.s32 %v5657, 1
        %vm5663 = vcmp.gt.s32.totalorder %v5662, 0
        %v5664 = vsel %vm5663, %v5662, 0
        %v5665 = vshrl.u32 %v5664, 5
        %v5666 = vand.u32 %v5664, 31
        %v5667 = vsub.s32 32, %v5666
        %v5668 = vshrl.u32 683565275, %v5667
        %v5669 = vshll.u32 683565275, %v5666
        %v5670 = vshrl.u32 2475754826, %v5667
        %v5671 = vor.u32 %v5669, %v5670
        %v5672 = vshll.u32 2475754826, %v5666
        %v5673 = vshrl.u32 2131351028, %v5667
        %v5674 = vor.u32 %v5672, %v5673
        %v5675 = vshll.u32 2131351028, %v5666
        %v5676 = vshrl.u32 2102212464, %v5667
        %v5677 = vor.u32 %v5675, %v5676
        %v5678 = vshll.u32 2102212464, %v5666
        %v5679 = vshrl.u32 920167782, %v5667
        %v5680 = vor.u32 %v5678, %v5679
        %v5681 = vshll.u32 920167782, %v5666
        %v5682 = vshrl.u32 1326507024, %v5667
        %v5683 = vor.u32 %v5681, %v5682
        %vm5684 = vcmp.lt.s32.totalorder %v5665, 1
        %vm5685 = vcmp.lt.s32.totalorder %v5665, 2
        %vm5686 = vcmp.lt.s32.totalorder %v5665, 3
        %vm5687 = vcmp.lt.s32.totalorder %v5665, 4
        %v5688 = vsel %vm5684, %v5668, %v5671
        %v5689 = vsel %vm5687, %v5677, 2102212464
        %v5690 = vsel %vm5686, %v5674, %v5689
        %v5691 = vsel %vm5685, %v5688, %v5690
        %v5692 = vsel %vm5684, %v5671, %v5674
        %v5693 = vsel %vm5687, %v5680, 920167782
        %v5694 = vsel %vm5686, %v5677, %v5693
        %v5695 = vsel %vm5685, %v5692, %v5694
        %v5696 = vsel %vm5684, %v5674, %v5677
        %v5697 = vsel %vm5687, %v5683, 1326507024
        %v5698 = vsel %vm5686, %v5680, %v5697
        %v5699 = vsel %vm5685, %v5696, %v5698
        %v5700 = vshll.u32 %v5660, 8
        %v5701 = vand.u32 %v5700, 65535
        %v5702 = vshrl.u32 %v5700, 16
        %v5703 = vand.u32 %v5699, 65535
        %v5704 = vshrl.u32 %v5699, 16
        %v5705 = vmul.u32 %v5701, %v5703
        %v5706 = vmul.u32 %v5701, %v5704
        %v5707 = vmul.u32 %v5702, %v5703
        %v5708 = vmul.u32 %v5702, %v5704
        %v5709 = vshll.u32 %v5706, 16
        %v5710 = vshrl.u32 %v5706, 16
        %v5711 = vshll.u32 %v5707, 16
        %v5712 = vshrl.u32 %v5707, 16
        %vm5713 = vc.u32 %v5705, %v5709
        %v5714 = vsel %vm5713, 1, 0
        %v5715 = vadd.s32 %v5705, %v5709
        %v5716 = vadd.s32 %v5708, %v5714
        %vm5717 = vc.u32 %v5715, %v5711
        %v5718 = vsel %vm5717, 1, 0
        %v5719 = vadd.s32 %v5715, %v5711
        %v5720 = vadd.s32 %v5716, %v5718
        %v5721 = vadd.s32 %v5720, %v5710
        %v5722 = vadd.s32 %v5721, %v5712
        %v5723 = vand.u32 %v5700, 65535
        %v5724 = vshrl.u32 %v5700, 16
        %v5725 = vand.u32 %v5695, 65535
        %v5726 = vshrl.u32 %v5695, 16
        %v5727 = vmul.u32 %v5723, %v5725
        %v5728 = vmul.u32 %v5723, %v5726
        %v5729 = vmul.u32 %v5724, %v5725
        %v5730 = vmul.u32 %v5724, %v5726
        %v5731 = vshll.u32 %v5728, 16
        %v5732 = vshrl.u32 %v5728, 16
        %v5733 = vshll.u32 %v5729, 16
        %v5734 = vshrl.u32 %v5729, 16
        %vm5735 = vc.u32 %v5727, %v5731
        %v5736 = vsel %vm5735, 1, 0
        %v5737 = vadd.s32 %v5727, %v5731
        %v5738 = vadd.s32 %v5730, %v5736
        %vm5739 = vc.u32 %v5737, %v5733
        %v5740 = vsel %vm5739, 1, 0
        %v5741 = vadd.s32 %v5737, %v5733
        %v5742 = vadd.s32 %v5738, %v5740
        %v5743 = vadd.s32 %v5742, %v5732
        %v5744 = vadd.s32 %v5743, %v5734
        %v5745 = vmul.u32 %v5700, %v5691
        %v5746 = vadd.s32 %v5722, %v5741
        %vm5747 = vc.u32 %v5722, %v5741
        %v5748 = vadd.s32 %v5744, 1
        %v5749 = vsel %vm5747, %v5748, %v5744
        %v5750 = vadd.s32 %v5745, %v5749
        %v5751 = vadd.s32 %v5750, 536870912
        %v5752 = vshrl.u32 %v5751, 30
        %v5753 = vshll.u32 %v5752, 30
        %v5754 = vsub.s32 %v5750, %v5753
        %vm5755 = vcmp.lt.s32.totalorder %v5754, 0
        %v5756 = vsub.s32 0, %v5754
        %v5757 = vsel %vm5755, %v5756, %v5754
        %v5758 = vclz %v5757
        %v5759 = vsub.s32 %v5758, 2
        %vm5760 = vcmp.gt.s32.totalorder 0, %v5759
        %v5761 = vsel %vm5760, 0, %v5759
        %v5762 = vsub.s32 32, %v5761
        %v5763 = vshll.u32 %v5754, %v5761
        %v5764 = vshrl.u32 %v5746, %v5762
        %v5765 = vor.u32 %v5763, %v5764
        %v5766 = vsub.s32 4294967266, %v5761
        %v5767 = vadd.s32 %v5766, 127
        %v5768 = vshll.u32 %v5767, 23
        %v5769 = vor.u32 4788187, %v5768
        %v5770 = vand.u32 2147483647, %v5769
        %v5772 = vcvt.s32.f32 %v5765
        %v5773 = vmul.f32 %v5772, %v5770
        %v5774 = vxor.u32 %v5773, 2147483648
        %v5775 = vsel %vm5654, %v5774, %v5773
        %v5776 = vsub.s32 4, %v5752
        %v5777 = vsel %vm5654, %v5776, %v5752
        %v5778 = vsel %vm5653, %v506, %v5775
        %v5779 = vsel %vm5653, 0, %v5777
        %v5780 = vmul.f32 %v5778, %v5778
        %v5781 = vmul.f32 %v5780, -0.001358992
        %v5782 = vadd.f32 %v5781, 0.041655596
        %v5783 = vmul.f32 %v5780, %v5782
        %v5784 = vadd.f32 %v5783, -0.4999988
        %v5785 = vmul.f32 %v5780, %v5784
        %v5786 = vadd.f32 1.0, %v5785
        %v5787 = vmul.f32 %v5778, %v5778
        %v5788 = vmul.f32 %v5787, -0.00019511016
        %v5789 = vadd.f32 %v5788, 0.008332121
        %v5790 = vmul.f32 %v5787, %v5789
        %v5791 = vadd.f32 %v5790, -0.16666654
        %v5792 = vmul.f32 %v5787, %v5791
        %v5793 = vadd.f32 %v5792, 1.0
        %v5794 = vmul.f32 %v5793, %v5778
        %vm5795 = vweird.f32 %v506
        %v5796 = vadd.s32 %v5779, 3
        %v5797 = vand.u32 %v5796, 3
        %vm5798 = vcmp.lt.s32.totalorder %v5797, 2
        %vm5799 = vcmp.eq.s32.totalorder %v5797, 0
        %v5800 = vxor.u32 %v5794, 2147483648
        %v5801 = vsel %vm5799, %v5786, %v5800
        %vm5802 = vcmp.eq.s32.totalorder %v5797, 2
        %v5803 = vxor.u32 %v5786, 2147483648
        %v5804 = vsel %vm5802, %v5803, %v5794
        %v5805 = vsel %vm5798, %v5801, %v5804
        %v5806 = vsel %vm5795, nan, %v5805
        %v5807 = vand.u32 2147483647, %v507
        %vm5808 = vcmp.le.f32.partialorder %v5807, 0.7853982
        %vm5809 = vcmp.lt.s32.totalorder %v507, 0
        %v5810 = vand.u32 %v507, 2139095040
        %v5811 = vshrl.u32 %v5810, 23
        %v5812 = vsub.s32 %v5811, 127
        %v5813 = vand.u32 2147483647, %v507
        %v5814 = vand.u32 %v5813, 8388607
        %v5815 = vor.u32 %v5814, 8388608
        %v5816 = vsub.s32 0, %v5815
        %v5817 = vadd.s32 %v5812, 1
        %vm5818 = vcmp.gt.s32.totalorder %v5817, 0
        %v5819 = vsel %vm5818, %v5817, 0
        %v5820 = vshrl.u32 %v5819, 5
        %v5821 = vand.u32 %v5819, 31
        %v5822 = vsub.s32 32, %v5821
        %v5823 = vshrl.u32 683565275, %v5822
        %v5824 = vshll.u32 683565275, %v5821
        %v5825 = vshrl.u32 2475754826, %v5822
        %v5826 = vor.u32 %v5824, %v5825
        %v5827 = vshll.u32 2475754826, %v5821
        %v5828 = vshrl.u32 2131351028, %v5822
        %v5829 = vor.u32 %v5827, %v5828
        %v5830 = vshll.u32 2131351028, %v5821
        %v5831 = vshrl.u32 2102212464, %v5822
        %v5832 = vor.u32 %v5830, %v5831
        %v5833 = vshll.u32 2102212464, %v5821
        %v5834 = vshrl.u32 920167782, %v5822
        %v5835 = vor.u32 %v5833, %v5834
        %v5836 = vshll.u32 920167782, %v5821
        %v5837 = vshrl.u32 1326507024, %v5822
        %v5838 = vor.u32 %v5836, %v5837
        %vm5839 = vcmp.lt.s32.totalorder %v5820, 1
        %vm5840 = vcmp.lt.s32.totalorder %v5820, 2
        %vm5841 = vcmp.lt.s32.totalorder %v5820, 3
        %vm5842 = vcmp.lt.s32.totalorder %v5820, 4
        %v5843 = vsel %vm5839, %v5823, %v5826
        %v5844 = vsel %vm5842, %v5832, 2102212464
        %v5845 = vsel %vm5841, %v5829, %v5844
        %v5846 = vsel %vm5840, %v5843, %v5845
        %v5847 = vsel %vm5839, %v5826, %v5829
        %v5848 = vsel %vm5842, %v5835, 920167782
        %v5849 = vsel %vm5841, %v5832, %v5848
        %v5850 = vsel %vm5840, %v5847, %v5849
        %v5851 = vsel %vm5839, %v5829, %v5832
        %v5852 = vsel %vm5842, %v5838, 1326507024
        %v5853 = vsel %vm5841, %v5835, %v5852
        %v5854 = vsel %vm5840, %v5851, %v5853
        %v5855 = vshll.u32 %v5815, 8
        %v5856 = vand.u32 %v5855, 65535
        %v5857 = vshrl.u32 %v5855, 16
        %v5858 = vand.u32 %v5854, 65535
        %v5859 = vshrl.u32 %v5854, 16
        %v5860 = vmul.u32 %v5856, %v5858
        %v5861 = vmul.u32 %v5856, %v5859
        %v5862 = vmul.u32 %v5857, %v5858
        %v5863 = vmul.u32 %v5857, %v5859
        %v5864 = vshll.u32 %v5861, 16
        %v5865 = vshrl.u32 %v5861, 16
        %v5866 = vshll.u32 %v5862, 16
        %v5867 = vshrl.u32 %v5862, 16
        %vm5868 = vc.u32 %v5860, %v5864
        %v5869 = vsel %vm5868, 1, 0
        %v5870 = vadd.s32 %v5860, %v5864
        %v5871 = vadd.s32 %v5863, %v5869
        %vm5872 = vc.u32 %v5870, %v5866
        %v5873 = vsel %vm5872, 1, 0
        %v5874 = vadd.s32 %v5870, %v5866
        %v5875 = vadd.s32 %v5871, %v5873
        %v5876 = vadd.s32 %v5875, %v5865
        %v5877 = vadd.s32 %v5876, %v5867
        %v5878 = vand.u32 %v5855, 65535
        %v5879 = vshrl.u32 %v5855, 16
        %v5880 = vand.u32 %v5850, 65535
        %v5881 = vshrl.u32 %v5850, 16
        %v5882 = vmul.u32 %v5878, %v5880
        %v5883 = vmul.u32 %v5878, %v5881
        %v5884 = vmul.u32 %v5879, %v5880
        %v5885 = vmul.u32 %v5879, %v5881
        %v5886 = vshll.u32 %v5883, 16
        %v5887 = vshrl.u32 %v5883, 16
        %v5888 = vshll.u32 %v5884, 16
        %v5889 = vshrl.u32 %v5884, 16
        %vm5890 = vc.u32 %v5882, %v5886
        %v5891 = vsel %vm5890, 1, 0
        %v5892 = vadd.s32 %v5882, %v5886
        %v5893 = vadd.s32 %v5885, %v5891
        %vm5894 = vc.u32 %v5892, %v5888
        %v5895 = vsel %vm5894, 1, 0
        %v5896 = vadd.s32 %v5892, %v5888
        %v5897 = vadd.s32 %v5893, %v5895
        %v5898 = vadd.s32 %v5897, %v5887
        %v5899 = vadd.s32 %v5898, %v5889
        %v5900 = vmul.u32 %v5855, %v5846
        %v5901 = vadd.s32 %v5877, %v5896
        %vm5902 = vc.u32 %v5877, %v5896
        %v5903 = vadd.s32 %v5899, 1
        %v5904 = vsel %vm5902, %v5903, %v5899
        %v5905 = vadd.s32 %v5900, %v5904
        %v5906 = vadd.s32 %v5905, 536870912
        %v5907 = vshrl.u32 %v5906, 30
        %v5908 = vshll.u32 %v5907, 30
        %v5909 = vsub.s32 %v5905, %v5908
        %vm5910 = vcmp.lt.s32.totalorder %v5909, 0
        %v5911 = vsub.s32 0, %v5909
        %v5912 = vsel %vm5910, %v5911, %v5909
        %v5913 = vclz %v5912
        %v5914 = vsub.s32 %v5913, 2
        %vm5915 = vcmp.gt.s32.totalorder 0, %v5914
        %v5916 = vsel %vm5915, 0, %v5914
        %v5917 = vsub.s32 32, %v5916
        %v5918 = vshll.u32 %v5909, %v5916
        %v5919 = vshrl.u32 %v5901, %v5917
        %v5920 = vor.u32 %v5918, %v5919
        %v5921 = vsub.s32 4294967266, %v5916
        %v5922 = vadd.s32 %v5921, 127
        %v5923 = vshll.u32 %v5922, 23
        %v5924 = vor.u32 4788187, %v5923
        %v5925 = vand.u32 2147483647, %v5924
        %v5927 = vcvt.s32.f32 %v5920
        %v5928 = vmul.f32 %v5927, %v5925
        %v5929 = vxor.u32 %v5928, 2147483648
        %v5930 = vsel %vm5809, %v5929, %v5928
        %v5931 = vsub.s32 4, %v5907
        %v5932 = vsel %vm5809, %v5931, %v5907
        %v5933 = vsel %vm5808, %v507, %v5930
        %v5934 = vsel %vm5808, 0, %v5932
        %v5935 = vmul.f32 %v5933, %v5933
        %v5936 = vmul.f32 %v5935, -0.001358992
        %v5937 = vadd.f32 %v5936, 0.041655596
        %v5938 = vmul.f32 %v5935, %v5937
        %v5939 = vadd.f32 %v5938, -0.4999988
        %v5940 = vmul.f32 %v5935, %v5939
        %v5941 = vadd.f32 1.0, %v5940
        %v5942 = vmul.f32 %v5933, %v5933
        %v5943 = vmul.f32 %v5942, -0.00019511016
        %v5944 = vadd.f32 %v5943, 0.008332121
        %v5945 = vmul.f32 %v5942, %v5944
        %v5946 = vadd.f32 %v5945, -0.16666654
        %v5947 = vmul.f32 %v5942, %v5946
        %v5948 = vadd.f32 %v5947, 1.0
        %v5949 = vmul.f32 %v5948, %v5933
        %vm5950 = vweird.f32 %v507
        %v5951 = vadd.s32 %v5934, 3
        %v5952 = vand.u32 %v5951, 3
        %vm5953 = vcmp.lt.s32.totalorder %v5952, 2
        %vm5954 = vcmp.eq.s32.totalorder %v5952, 0
        %v5955 = vxor.u32 %v5949, 2147483648
        %v5956 = vsel %vm5954, %v5941, %v5955
        %vm5957 = vcmp.eq.s32.totalorder %v5952, 2
        %v5958 = vxor.u32 %v5941, 2147483648
        %v5959 = vsel %vm5957, %v5958, %v5949
        %v5960 = vsel %vm5953, %v5956, %v5959
        %v5961 = vsel %vm5950, nan, %v5960
        %v5962 = vand.u32 2147483647, %v508
        %vm5963 = vcmp.le.f32.partialorder %v5962, 0.7853982
        %vm5964 = vcmp.lt.s32.totalorder %v508, 0
        %v5965 = vand.u32 %v508, 2139095040
        %v5966 = vshrl.u32 %v5965, 23
        %v5967 = vsub.s32 %v5966, 127
        %v5968 = vand.u32 2147483647, %v508
        %v5969 = vand.u32 %v5968, 8388607
        %v5970 = vor.u32 %v5969, 8388608
        %v5971 = vsub.s32 0, %v5970
        %v5972 = vadd.s32 %v5967, 1
        %vm5973 = vcmp.gt.s32.totalorder %v5972, 0
        %v5974 = vsel %vm5973, %v5972, 0
        %v5975 = vshrl.u32 %v5974, 5
        %v5976 = vand.u32 %v5974, 31
        %v5977 = vsub.s32 32, %v5976
        %v5978 = vshrl.u32 683565275, %v5977
        %v5979 = vshll.u32 683565275, %v5976
        %v5980 = vshrl.u32 2475754826, %v5977
        %v5981 = vor.u32 %v5979, %v5980
        %v5982 = vshll.u32 2475754826, %v5976
        %v5983 = vshrl.u32 2131351028, %v5977
        %v5984 = vor.u32 %v5982, %v5983
        %v5985 = vshll.u32 2131351028, %v5976
        %v5986 = vshrl.u32 2102212464, %v5977
        %v5987 = vor.u32 %v5985, %v5986
        %v5988 = vshll.u32 2102212464, %v5976
        %v5989 = vshrl.u32 920167782, %v5977
        %v5990 = vor.u32 %v5988, %v5989
        %v5991 = vshll.u32 920167782, %v5976
        %v5992 = vshrl.u32 1326507024, %v5977
        %v5993 = vor.u32 %v5991, %v5992
        %vm5994 = vcmp.lt.s32.totalorder %v5975, 1
        %vm5995 = vcmp.lt.s32.totalorder %v5975, 2
        %vm5996 = vcmp.lt.s32.totalorder %v5975, 3
        %vm5997 = vcmp.lt.s32.totalorder %v5975, 4
        %v5998 = vsel %vm5994, %v5978, %v5981
        %v5999 = vsel %vm5997, %v5987, 2102212464
        %v6000 = vsel %vm5996, %v5984, %v5999
        %v6001 = vsel %vm5995, %v5998, %v6000
        %v6002 = vsel %vm5994, %v5981, %v5984
        %v6003 = vsel %vm5997, %v5990, 920167782
        %v6004 = vsel %vm5996, %v5987, %v6003
        %v6005 = vsel %vm5995, %v6002, %v6004
        %v6006 = vsel %vm5994, %v5984, %v5987
        %v6007 = vsel %vm5997, %v5993, 1326507024
        %v6008 = vsel %vm5996, %v5990, %v6007
        %v6009 = vsel %vm5995, %v6006, %v6008
        %v6010 = vshll.u32 %v5970, 8
        %v6011 = vand.u32 %v6010, 65535
        %v6012 = vshrl.u32 %v6010, 16
        %v6013 = vand.u32 %v6009, 65535
        %v6014 = vshrl.u32 %v6009, 16
        %v6015 = vmul.u32 %v6011, %v6013
        %v6016 = vmul.u32 %v6011, %v6014
        %v6017 = vmul.u32 %v6012, %v6013
        %v6018 = vmul.u32 %v6012, %v6014
        %v6019 = vshll.u32 %v6016, 16
        %v6020 = vshrl.u32 %v6016, 16
        %v6021 = vshll.u32 %v6017, 16
        %v6022 = vshrl.u32 %v6017, 16
        %vm6023 = vc.u32 %v6015, %v6019
        %v6024 = vsel %vm6023, 1, 0
        %v6025 = vadd.s32 %v6015, %v6019
        %v6026 = vadd.s32 %v6018, %v6024
        %vm6027 = vc.u32 %v6025, %v6021
        %v6028 = vsel %vm6027, 1, 0
        %v6029 = vadd.s32 %v6025, %v6021
        %v6030 = vadd.s32 %v6026, %v6028
        %v6031 = vadd.s32 %v6030, %v6020
        %v6032 = vadd.s32 %v6031, %v6022
        %v6033 = vand.u32 %v6010, 65535
        %v6034 = vshrl.u32 %v6010, 16
        %v6035 = vand.u32 %v6005, 65535
        %v6036 = vshrl.u32 %v6005, 16
        %v6037 = vmul.u32 %v6033, %v6035
        %v6038 = vmul.u32 %v6033, %v6036
        %v6039 = vmul.u32 %v6034, %v6035
        %v6040 = vmul.u32 %v6034, %v6036
        %v6041 = vshll.u32 %v6038, 16
        %v6042 = vshrl.u32 %v6038, 16
        %v6043 = vshll.u32 %v6039, 16
        %v6044 = vshrl.u32 %v6039, 16
        %vm6045 = vc.u32 %v6037, %v6041
        %v6046 = vsel %vm6045, 1, 0
        %v6047 = vadd.s32 %v6037, %v6041
        %v6048 = vadd.s32 %v6040, %v6046
        %vm6049 = vc.u32 %v6047, %v6043
        %v6050 = vsel %vm6049, 1, 0
        %v6051 = vadd.s32 %v6047, %v6043
        %v6052 = vadd.s32 %v6048, %v6050
        %v6053 = vadd.s32 %v6052, %v6042
        %v6054 = vadd.s32 %v6053, %v6044
        %v6055 = vmul.u32 %v6010, %v6001
        %v6056 = vadd.s32 %v6032, %v6051
        %vm6057 = vc.u32 %v6032, %v6051
        %v6058 = vadd.s32 %v6054, 1
        %v6059 = vsel %vm6057, %v6058, %v6054
        %v6060 = vadd.s32 %v6055, %v6059
        %v6061 = vadd.s32 %v6060, 536870912
        %v6062 = vshrl.u32 %v6061, 30
        %v6063 = vshll.u32 %v6062, 30
        %v6064 = vsub.s32 %v6060, %v6063
        %vm6065 = vcmp.lt.s32.totalorder %v6064, 0
        %v6066 = vsub.s32 0, %v6064
        %v6067 = vsel %vm6065, %v6066, %v6064
        %v6068 = vclz %v6067
        %v6069 = vsub.s32 %v6068, 2
        %vm6070 = vcmp.gt.s32.totalorder 0, %v6069
        %v6071 = vsel %vm6070, 0, %v6069
        %v6072 = vsub.s32 32, %v6071
        %v6073 = vshll.u32 %v6064, %v6071
        %v6074 = vshrl.u32 %v6056, %v6072
        %v6075 = vor.u32 %v6073, %v6074
        %v6076 = vsub.s32 4294967266, %v6071
        %v6077 = vadd.s32 %v6076, 127
        %v6078 = vshll.u32 %v6077, 23
        %v6079 = vor.u32 4788187, %v6078
        %v6080 = vand.u32 2147483647, %v6079
        %v6082 = vcvt.s32.f32 %v6075
        %v6083 = vmul.f32 %v6082, %v6080
        %v6084 = vxor.u32 %v6083, 2147483648
        %v6085 = vsel %vm5964, %v6084, %v6083
        %v6086 = vsub.s32 4, %v6062
        %v6087 = vsel %vm5964, %v6086, %v6062
        %v6088 = vsel %vm5963, %v508, %v6085
        %v6089 = vsel %vm5963, 0, %v6087
        %v6090 = vmul.f32 %v6088, %v6088
        %v6091 = vmul.f32 %v6090, -0.001358992
        %v6092 = vadd.f32 %v6091, 0.041655596
        %v6093 = vmul.f32 %v6090, %v6092
        %v6094 = vadd.f32 %v6093, -0.4999988
        %v6095 = vmul.f32 %v6090, %v6094
        %v6096 = vadd.f32 1.0, %v6095
        %v6097 = vmul.f32 %v6088, %v6088
        %v6098 = vmul.f32 %v6097, -0.00019511016
        %v6099 = vadd.f32 %v6098, 0.008332121
        %v6100 = vmul.f32 %v6097, %v6099
        %v6101 = vadd.f32 %v6100, -0.16666654
        %v6102 = vmul.f32 %v6097, %v6101
        %v6103 = vadd.f32 %v6102, 1.0
        %v6104 = vmul.f32 %v6103, %v6088
        %vm6105 = vweird.f32 %v508
        %v6106 = vadd.s32 %v6089, 3
        %v6107 = vand.u32 %v6106, 3
        %vm6108 = vcmp.lt.s32.totalorder %v6107, 2
        %vm6109 = vcmp.eq.s32.totalorder %v6107, 0
        %v6110 = vxor.u32 %v6104, 2147483648
        %v6111 = vsel %vm6109, %v6096, %v6110
        %vm6112 = vcmp.eq.s32.totalorder %v6107, 2
        %v6113 = vxor.u32 %v6096, 2147483648
        %v6114 = vsel %vm6112, %v6113, %v6104
        %v6115 = vsel %vm6108, %v6111, %v6114
        %v6116 = vsel %vm6105, nan, %v6115
        %v6117 = vand.u32 2147483647, %v509
        %vm6118 = vcmp.le.f32.partialorder %v6117, 0.7853982
        %vm6119 = vcmp.lt.s32.totalorder %v509, 0
        %v6120 = vand.u32 %v509, 2139095040
        %v6121 = vshrl.u32 %v6120, 23
        %v6122 = vsub.s32 %v6121, 127
        %v6123 = vand.u32 2147483647, %v509
        %v6124 = vand.u32 %v6123, 8388607
        %v6125 = vor.u32 %v6124, 8388608
        %v6126 = vsub.s32 0, %v6125
        %v6127 = vadd.s32 %v6122, 1
        %vm6128 = vcmp.gt.s32.totalorder %v6127, 0
        %v6129 = vsel %vm6128, %v6127, 0
        %v6130 = vshrl.u32 %v6129, 5
        %v6131 = vand.u32 %v6129, 31
        %v6132 = vsub.s32 32, %v6131
        %v6133 = vshrl.u32 683565275, %v6132
        %v6134 = vshll.u32 683565275, %v6131
        %v6135 = vshrl.u32 2475754826, %v6132
        %v6136 = vor.u32 %v6134, %v6135
        %v6137 = vshll.u32 2475754826, %v6131
        %v6138 = vshrl.u32 2131351028, %v6132
        %v6139 = vor.u32 %v6137, %v6138
        %v6140 = vshll.u32 2131351028, %v6131
        %v6141 = vshrl.u32 2102212464, %v6132
        %v6142 = vor.u32 %v6140, %v6141
        %v6143 = vshll.u32 2102212464, %v6131
        %v6144 = vshrl.u32 920167782, %v6132
        %v6145 = vor.u32 %v6143, %v6144
        %v6146 = vshll.u32 920167782, %v6131
        %v6147 = vshrl.u32 1326507024, %v6132
        %v6148 = vor.u32 %v6146, %v6147
        %vm6149 = vcmp.lt.s32.totalorder %v6130, 1
        %vm6150 = vcmp.lt.s32.totalorder %v6130, 2
        %vm6151 = vcmp.lt.s32.totalorder %v6130, 3
        %vm6152 = vcmp.lt.s32.totalorder %v6130, 4
        %v6153 = vsel %vm6149, %v6133, %v6136
        %v6154 = vsel %vm6152, %v6142, 2102212464
        %v6155 = vsel %vm6151, %v6139, %v6154
        %v6156 = vsel %vm6150, %v6153, %v6155
        %v6157 = vsel %vm6149, %v6136, %v6139
        %v6158 = vsel %vm6152, %v6145, 920167782
        %v6159 = vsel %vm6151, %v6142, %v6158
        %v6160 = vsel %vm6150, %v6157, %v6159
        %v6161 = vsel %vm6149, %v6139, %v6142
        %v6162 = vsel %vm6152, %v6148, 1326507024
        %v6163 = vsel %vm6151, %v6145, %v6162
        %v6164 = vsel %vm6150, %v6161, %v6163
        %v6165 = vshll.u32 %v6125, 8
        %v6166 = vand.u32 %v6165, 65535
        %v6167 = vshrl.u32 %v6165, 16
        %v6168 = vand.u32 %v6164, 65535
        %v6169 = vshrl.u32 %v6164, 16
        %v6170 = vmul.u32 %v6166, %v6168
        %v6171 = vmul.u32 %v6166, %v6169
        %v6172 = vmul.u32 %v6167, %v6168
        %v6173 = vmul.u32 %v6167, %v6169
        %v6174 = vshll.u32 %v6171, 16
        %v6175 = vshrl.u32 %v6171, 16
        %v6176 = vshll.u32 %v6172, 16
        %v6177 = vshrl.u32 %v6172, 16
        %vm6178 = vc.u32 %v6170, %v6174
        %v6179 = vsel %vm6178, 1, 0
        %v6180 = vadd.s32 %v6170, %v6174
        %v6181 = vadd.s32 %v6173, %v6179
        %vm6182 = vc.u32 %v6180, %v6176
        %v6183 = vsel %vm6182, 1, 0
        %v6184 = vadd.s32 %v6180, %v6176
        %v6185 = vadd.s32 %v6181, %v6183
        %v6186 = vadd.s32 %v6185, %v6175
        %v6187 = vadd.s32 %v6186, %v6177
        %v6188 = vand.u32 %v6165, 65535
        %v6189 = vshrl.u32 %v6165, 16
        %v6190 = vand.u32 %v6160, 65535
        %v6191 = vshrl.u32 %v6160, 16
        %v6192 = vmul.u32 %v6188, %v6190
        %v6193 = vmul.u32 %v6188, %v6191
        %v6194 = vmul.u32 %v6189, %v6190
        %v6195 = vmul.u32 %v6189, %v6191
        %v6196 = vshll.u32 %v6193, 16
        %v6197 = vshrl.u32 %v6193, 16
        %v6198 = vshll.u32 %v6194, 16
        %v6199 = vshrl.u32 %v6194, 16
        %vm6200 = vc.u32 %v6192, %v6196
        %v6201 = vsel %vm6200, 1, 0
        %v6202 = vadd.s32 %v6192, %v6196
        %v6203 = vadd.s32 %v6195, %v6201
        %vm6204 = vc.u32 %v6202, %v6198
        %v6205 = vsel %vm6204, 1, 0
        %v6206 = vadd.s32 %v6202, %v6198
        %v6207 = vadd.s32 %v6203, %v6205
        %v6208 = vadd.s32 %v6207, %v6197
        %v6209 = vadd.s32 %v6208, %v6199
        %v6210 = vmul.u32 %v6165, %v6156
        %v6211 = vadd.s32 %v6187, %v6206
        %vm6212 = vc.u32 %v6187, %v6206
        %v6213 = vadd.s32 %v6209, 1
        %v6214 = vsel %vm6212, %v6213, %v6209
        %v6215 = vadd.s32 %v6210, %v6214
        %v6216 = vadd.s32 %v6215, 536870912
        %v6217 = vshrl.u32 %v6216, 30
        %v6218 = vshll.u32 %v6217, 30
        %v6219 = vsub.s32 %v6215, %v6218
        %vm6220 = vcmp.lt.s32.totalorder %v6219, 0
        %v6221 = vsub.s32 0, %v6219
        %v6222 = vsel %vm6220, %v6221, %v6219
        %v6223 = vclz %v6222
        %v6224 = vsub.s32 %v6223, 2
        %vm6225 = vcmp.gt.s32.totalorder 0, %v6224
        %v6226 = vsel %vm6225, 0, %v6224
        %v6227 = vsub.s32 32, %v6226
        %v6228 = vshll.u32 %v6219, %v6226
        %v6229 = vshrl.u32 %v6211, %v6227
        %v6230 = vor.u32 %v6228, %v6229
        %v6231 = vsub.s32 4294967266, %v6226
        %v6232 = vadd.s32 %v6231, 127
        %v6233 = vshll.u32 %v6232, 23
        %v6234 = vor.u32 4788187, %v6233
        %v6235 = vand.u32 2147483647, %v6234
        %v6237 = vcvt.s32.f32 %v6230
        %v6238 = vmul.f32 %v6237, %v6235
        %v6239 = vxor.u32 %v6238, 2147483648
        %v6240 = vsel %vm6119, %v6239, %v6238
        %v6241 = vsub.s32 4, %v6217
        %v6242 = vsel %vm6119, %v6241, %v6217
        %v6243 = vsel %vm6118, %v509, %v6240
        %v6244 = vsel %vm6118, 0, %v6242
        %v6245 = vmul.f32 %v6243, %v6243
        %v6246 = vmul.f32 %v6245, -0.001358992
        %v6247 = vadd.f32 %v6246, 0.041655596
        %v6248 = vmul.f32 %v6245, %v6247
        %v6249 = vadd.f32 %v6248, -0.4999988
        %v6250 = vmul.f32 %v6245, %v6249
        %v6251 = vadd.f32 1.0, %v6250
        %v6252 = vmul.f32 %v6243, %v6243
        %v6253 = vmul.f32 %v6252, -0.00019511016
        %v6254 = vadd.f32 %v6253, 0.008332121
        %v6255 = vmul.f32 %v6252, %v6254
        %v6256 = vadd.f32 %v6255, -0.16666654
        %v6257 = vmul.f32 %v6252, %v6256
        %v6258 = vadd.f32 %v6257, 1.0
        %v6259 = vmul.f32 %v6258, %v6243
        %vm6260 = vweird.f32 %v509
        %v6261 = vadd.s32 %v6244, 3
        %v6262 = vand.u32 %v6261, 3
        %vm6263 = vcmp.lt.s32.totalorder %v6262, 2
        %vm6264 = vcmp.eq.s32.totalorder %v6262, 0
        %v6265 = vxor.u32 %v6259, 2147483648
        %v6266 = vsel %vm6264, %v6251, %v6265
        %vm6267 = vcmp.eq.s32.totalorder %v6262, 2
        %v6268 = vxor.u32 %v6251, 2147483648
        %v6269 = vsel %vm6267, %v6268, %v6259
        %v6270 = vsel %vm6263, %v6266, %v6269
        %v6271 = vsel %vm6260, nan, %v6270
        %v6272 = vand.u32 2147483647, %v510
        %vm6273 = vcmp.le.f32.partialorder %v6272, 0.7853982
        %vm6274 = vcmp.lt.s32.totalorder %v510, 0
        %v6275 = vand.u32 %v510, 2139095040
        %v6276 = vshrl.u32 %v6275, 23
        %v6277 = vsub.s32 %v6276, 127
        %v6278 = vand.u32 2147483647, %v510
        %v6279 = vand.u32 %v6278, 8388607
        %v6280 = vor.u32 %v6279, 8388608
        %v6281 = vsub.s32 0, %v6280
        %v6282 = vadd.s32 %v6277, 1
        %vm6283 = vcmp.gt.s32.totalorder %v6282, 0
        %v6284 = vsel %vm6283, %v6282, 0
        %v6285 = vshrl.u32 %v6284, 5
        %v6286 = vand.u32 %v6284, 31
        %v6287 = vsub.s32 32, %v6286
        %v6288 = vshrl.u32 683565275, %v6287
        %v6289 = vshll.u32 683565275, %v6286
        %v6290 = vshrl.u32 2475754826, %v6287
        %v6291 = vor.u32 %v6289, %v6290
        %v6292 = vshll.u32 2475754826, %v6286
        %v6293 = vshrl.u32 2131351028, %v6287
        %v6294 = vor.u32 %v6292, %v6293
        %v6295 = vshll.u32 2131351028, %v6286
        %v6296 = vshrl.u32 2102212464, %v6287
        %v6297 = vor.u32 %v6295, %v6296
        %v6298 = vshll.u32 2102212464, %v6286
        %v6299 = vshrl.u32 920167782, %v6287
        %v6300 = vor.u32 %v6298, %v6299
        %v6301 = vshll.u32 920167782, %v6286
        %v6302 = vshrl.u32 1326507024, %v6287
        %v6303 = vor.u32 %v6301, %v6302
        %vm6304 = vcmp.lt.s32.totalorder %v6285, 1
        %vm6305 = vcmp.lt.s32.totalorder %v6285, 2
        %vm6306 = vcmp.lt.s32.totalorder %v6285, 3
        %vm6307 = vcmp.lt.s32.totalorder %v6285, 4
        %v6308 = vsel %vm6304, %v6288, %v6291
        %v6309 = vsel %vm6307, %v6297, 2102212464
        %v6310 = vsel %vm6306, %v6294, %v6309
        %v6311 = vsel %vm6305, %v6308, %v6310
        %v6312 = vsel %vm6304, %v6291, %v6294
        %v6313 = vsel %vm6307, %v6300, 920167782
        %v6314 = vsel %vm6306, %v6297, %v6313
        %v6315 = vsel %vm6305, %v6312, %v6314
        %v6316 = vsel %vm6304, %v6294, %v6297
        %v6317 = vsel %vm6307, %v6303, 1326507024
        %v6318 = vsel %vm6306, %v6300, %v6317
        %v6319 = vsel %vm6305, %v6316, %v6318
        %v6320 = vshll.u32 %v6280, 8
        %v6321 = vand.u32 %v6320, 65535
        %v6322 = vshrl.u32 %v6320, 16
        %v6323 = vand.u32 %v6319, 65535
        %v6324 = vshrl.u32 %v6319, 16
        %v6325 = vmul.u32 %v6321, %v6323
        %v6326 = vmul.u32 %v6321, %v6324
        %v6327 = vmul.u32 %v6322, %v6323
        %v6328 = vmul.u32 %v6322, %v6324
        %v6329 = vshll.u32 %v6326, 16
        %v6330 = vshrl.u32 %v6326, 16
        %v6331 = vshll.u32 %v6327, 16
        %v6332 = vshrl.u32 %v6327, 16
        %vm6333 = vc.u32 %v6325, %v6329
        %v6334 = vsel %vm6333, 1, 0
        %v6335 = vadd.s32 %v6325, %v6329
        %v6336 = vadd.s32 %v6328, %v6334
        %vm6337 = vc.u32 %v6335, %v6331
        %v6338 = vsel %vm6337, 1, 0
        %v6339 = vadd.s32 %v6335, %v6331
        %v6340 = vadd.s32 %v6336, %v6338
        %v6341 = vadd.s32 %v6340, %v6330
        %v6342 = vadd.s32 %v6341, %v6332
        %v6343 = vand.u32 %v6320, 65535
        %v6344 = vshrl.u32 %v6320, 16
        %v6345 = vand.u32 %v6315, 65535
        %v6346 = vshrl.u32 %v6315, 16
        %v6347 = vmul.u32 %v6343, %v6345
        %v6348 = vmul.u32 %v6343, %v6346
        %v6349 = vmul.u32 %v6344, %v6345
        %v6350 = vmul.u32 %v6344, %v6346
        %v6351 = vshll.u32 %v6348, 16
        %v6352 = vshrl.u32 %v6348, 16
        %v6353 = vshll.u32 %v6349, 16
        %v6354 = vshrl.u32 %v6349, 16
        %vm6355 = vc.u32 %v6347, %v6351
        %v6356 = vsel %vm6355, 1, 0
        %v6357 = vadd.s32 %v6347, %v6351
        %v6358 = vadd.s32 %v6350, %v6356
        %vm6359 = vc.u32 %v6357, %v6353
        %v6360 = vsel %vm6359, 1, 0
        %v6361 = vadd.s32 %v6357, %v6353
        %v6362 = vadd.s32 %v6358, %v6360
        %v6363 = vadd.s32 %v6362, %v6352
        %v6364 = vadd.s32 %v6363, %v6354
        %v6365 = vmul.u32 %v6320, %v6311
        %v6366 = vadd.s32 %v6342, %v6361
        %vm6367 = vc.u32 %v6342, %v6361
        %v6368 = vadd.s32 %v6364, 1
        %v6369 = vsel %vm6367, %v6368, %v6364
        %v6370 = vadd.s32 %v6365, %v6369
        %v6371 = vadd.s32 %v6370, 536870912
        %v6372 = vshrl.u32 %v6371, 30
        %v6373 = vshll.u32 %v6372, 30
        %v6374 = vsub.s32 %v6370, %v6373
        %vm6375 = vcmp.lt.s32.totalorder %v6374, 0
        %v6376 = vsub.s32 0, %v6374
        %v6377 = vsel %vm6375, %v6376, %v6374
        %v6378 = vclz %v6377
        %v6379 = vsub.s32 %v6378, 2
        %vm6380 = vcmp.gt.s32.totalorder 0, %v6379
        %v6381 = vsel %vm6380, 0, %v6379
        %v6382 = vsub.s32 32, %v6381
        %v6383 = vshll.u32 %v6374, %v6381
        %v6384 = vshrl.u32 %v6366, %v6382
        %v6385 = vor.u32 %v6383, %v6384
        %v6386 = vsub.s32 4294967266, %v6381
        %v6387 = vadd.s32 %v6386, 127
        %v6388 = vshll.u32 %v6387, 23
        %v6389 = vor.u32 4788187, %v6388
        %v6390 = vand.u32 2147483647, %v6389
        %v6392 = vcvt.s32.f32 %v6385
        %v6393 = vmul.f32 %v6392, %v6390
        %v6394 = vxor.u32 %v6393, 2147483648
        %v6395 = vsel %vm6274, %v6394, %v6393
        %v6396 = vsub.s32 4, %v6372
        %v6397 = vsel %vm6274, %v6396, %v6372
        %v6398 = vsel %vm6273, %v510, %v6395
        %v6399 = vsel %vm6273, 0, %v6397
        %v6400 = vmul.f32 %v6398, %v6398
        %v6401 = vmul.f32 %v6400, -0.001358992
        %v6402 = vadd.f32 %v6401, 0.041655596
        %v6403 = vmul.f32 %v6400, %v6402
        %v6404 = vadd.f32 %v6403, -0.4999988
        %v6405 = vmul.f32 %v6400, %v6404
        %v6406 = vadd.f32 1.0, %v6405
        %v6407 = vmul.f32 %v6398, %v6398
        %v6408 = vmul.f32 %v6407, -0.00019511016
        %v6409 = vadd.f32 %v6408, 0.008332121
        %v6410 = vmul.f32 %v6407, %v6409
        %v6411 = vadd.f32 %v6410, -0.16666654
        %v6412 = vmul.f32 %v6407, %v6411
        %v6413 = vadd.f32 %v6412, 1.0
        %v6414 = vmul.f32 %v6413, %v6398
        %vm6415 = vweird.f32 %v510
        %v6416 = vadd.s32 %v6399, 3
        %v6417 = vand.u32 %v6416, 3
        %vm6418 = vcmp.lt.s32.totalorder %v6417, 2
        %vm6419 = vcmp.eq.s32.totalorder %v6417, 0
        %v6420 = vxor.u32 %v6414, 2147483648
        %v6421 = vsel %vm6419, %v6406, %v6420
        %vm6422 = vcmp.eq.s32.totalorder %v6417, 2
        %v6423 = vxor.u32 %v6406, 2147483648
        %v6424 = vsel %vm6422, %v6423, %v6414
        %v6425 = vsel %vm6418, %v6421, %v6424
        %v6426 = vsel %vm6415, nan, %v6425
        %v6427 = vand.u32 2147483647, %v511
        %vm6428 = vcmp.le.f32.partialorder %v6427, 0.7853982
        %vm6429 = vcmp.lt.s32.totalorder %v511, 0
        %v6430 = vand.u32 %v511, 2139095040
        %v6431 = vshrl.u32 %v6430, 23
        %v6432 = vsub.s32 %v6431, 127
        %v6433 = vand.u32 2147483647, %v511
        %v6434 = vand.u32 %v6433, 8388607
        %v6435 = vor.u32 %v6434, 8388608
        %v6436 = vsub.s32 0, %v6435
        %v6437 = vadd.s32 %v6432, 1
        %vm6438 = vcmp.gt.s32.totalorder %v6437, 0
        %v6439 = vsel %vm6438, %v6437, 0
        %v6440 = vshrl.u32 %v6439, 5
        %v6441 = vand.u32 %v6439, 31
        %v6442 = vsub.s32 32, %v6441
        %v6443 = vshrl.u32 683565275, %v6442
        %v6444 = vshll.u32 683565275, %v6441
        %v6445 = vshrl.u32 2475754826, %v6442
        %v6446 = vor.u32 %v6444, %v6445
        %v6447 = vshll.u32 2475754826, %v6441
        %v6448 = vshrl.u32 2131351028, %v6442
        %v6449 = vor.u32 %v6447, %v6448
        %v6450 = vshll.u32 2131351028, %v6441
        %v6451 = vshrl.u32 2102212464, %v6442
        %v6452 = vor.u32 %v6450, %v6451
        %v6453 = vshll.u32 2102212464, %v6441
        %v6454 = vshrl.u32 920167782, %v6442
        %v6455 = vor.u32 %v6453, %v6454
        %v6456 = vshll.u32 920167782, %v6441
        %v6457 = vshrl.u32 1326507024, %v6442
        %v6458 = vor.u32 %v6456, %v6457
        %vm6459 = vcmp.lt.s32.totalorder %v6440, 1
        %vm6460 = vcmp.lt.s32.totalorder %v6440, 2
        %vm6461 = vcmp.lt.s32.totalorder %v6440, 3
        %vm6462 = vcmp.lt.s32.totalorder %v6440, 4
        %v6463 = vsel %vm6459, %v6443, %v6446
        %v6464 = vsel %vm6462, %v6452, 2102212464
        %v6465 = vsel %vm6461, %v6449, %v6464
        %v6466 = vsel %vm6460, %v6463, %v6465
        %v6467 = vsel %vm6459, %v6446, %v6449
        %v6468 = vsel %vm6462, %v6455, 920167782
        %v6469 = vsel %vm6461, %v6452, %v6468
        %v6470 = vsel %vm6460, %v6467, %v6469
        %v6471 = vsel %vm6459, %v6449, %v6452
        %v6472 = vsel %vm6462, %v6458, 1326507024
        %v6473 = vsel %vm6461, %v6455, %v6472
        %v6474 = vsel %vm6460, %v6471, %v6473
        %v6475 = vshll.u32 %v6435, 8
        %v6476 = vand.u32 %v6475, 65535
        %v6477 = vshrl.u32 %v6475, 16
        %v6478 = vand.u32 %v6474, 65535
        %v6479 = vshrl.u32 %v6474, 16
        %v6480 = vmul.u32 %v6476, %v6478
        %v6481 = vmul.u32 %v6476, %v6479
        %v6482 = vmul.u32 %v6477, %v6478
        %v6483 = vmul.u32 %v6477, %v6479
        %v6484 = vshll.u32 %v6481, 16
        %v6485 = vshrl.u32 %v6481, 16
        %v6486 = vshll.u32 %v6482, 16
        %v6487 = vshrl.u32 %v6482, 16
        %vm6488 = vc.u32 %v6480, %v6484
        %v6489 = vsel %vm6488, 1, 0
        %v6490 = vadd.s32 %v6480, %v6484
        %v6491 = vadd.s32 %v6483, %v6489
        %vm6492 = vc.u32 %v6490, %v6486
        %v6493 = vsel %vm6492, 1, 0
        %v6494 = vadd.s32 %v6490, %v6486
        %v6495 = vadd.s32 %v6491, %v6493
        %v6496 = vadd.s32 %v6495, %v6485
        %v6497 = vadd.s32 %v6496, %v6487
        %v6498 = vand.u32 %v6475, 65535
        %v6499 = vshrl.u32 %v6475, 16
        %v6500 = vand.u32 %v6470, 65535
        %v6501 = vshrl.u32 %v6470, 16
        %v6502 = vmul.u32 %v6498, %v6500
        %v6503 = vmul.u32 %v6498, %v6501
        %v6504 = vmul.u32 %v6499, %v6500
        %v6505 = vmul.u32 %v6499, %v6501
        %v6506 = vshll.u32 %v6503, 16
        %v6507 = vshrl.u32 %v6503, 16
        %v6508 = vshll.u32 %v6504, 16
        %v6509 = vshrl.u32 %v6504, 16
        %vm6510 = vc.u32 %v6502, %v6506
        %v6511 = vsel %vm6510, 1, 0
        %v6512 = vadd.s32 %v6502, %v6506
        %v6513 = vadd.s32 %v6505, %v6511
        %vm6514 = vc.u32 %v6512, %v6508
        %v6515 = vsel %vm6514, 1, 0
        %v6516 = vadd.s32 %v6512, %v6508
        %v6517 = vadd.s32 %v6513, %v6515
        %v6518 = vadd.s32 %v6517, %v6507
        %v6519 = vadd.s32 %v6518, %v6509
        %v6520 = vmul.u32 %v6475, %v6466
        %v6521 = vadd.s32 %v6497, %v6516
        %vm6522 = vc.u32 %v6497, %v6516
        %v6523 = vadd.s32 %v6519, 1
        %v6524 = vsel %vm6522, %v6523, %v6519
        %v6525 = vadd.s32 %v6520, %v6524
        %v6526 = vadd.s32 %v6525, 536870912
        %v6527 = vshrl.u32 %v6526, 30
        %v6528 = vshll.u32 %v6527, 30
        %v6529 = vsub.s32 %v6525, %v6528
        %vm6530 = vcmp.lt.s32.totalorder %v6529, 0
        %v6531 = vsub.s32 0, %v6529
        %v6532 = vsel %vm6530, %v6531, %v6529
        %v6533 = vclz %v6532
        %v6534 = vsub.s32 %v6533, 2
        %vm6535 = vcmp.gt.s32.totalorder 0, %v6534
        %v6536 = vsel %vm6535, 0, %v6534
        %v6537 = vsub.s32 32, %v6536
        %v6538 = vshll.u32 %v6529, %v6536
        %v6539 = vshrl.u32 %v6521, %v6537
        %v6540 = vor.u32 %v6538, %v6539
        %v6541 = vsub.s32 4294967266, %v6536
        %v6542 = vadd.s32 %v6541, 127
        %v6543 = vshll.u32 %v6542, 23
        %v6544 = vor.u32 4788187, %v6543
        %v6545 = vand.u32 2147483647, %v6544
        %v6547 = vcvt.s32.f32 %v6540
        %v6548 = vmul.f32 %v6547, %v6545
        %v6549 = vxor.u32 %v6548, 2147483648
        %v6550 = vsel %vm6429, %v6549, %v6548
        %v6551 = vsub.s32 4, %v6527
        %v6552 = vsel %vm6429, %v6551, %v6527
        %v6553 = vsel %vm6428, %v511, %v6550
        %v6554 = vsel %vm6428, 0, %v6552
        %v6555 = vmul.f32 %v6553, %v6553
        %v6556 = vmul.f32 %v6555, -0.001358992
        %v6557 = vadd.f32 %v6556, 0.041655596
        %v6558 = vmul.f32 %v6555, %v6557
        %v6559 = vadd.f32 %v6558, -0.4999988
        %v6560 = vmul.f32 %v6555, %v6559
        %v6561 = vadd.f32 1.0, %v6560
        %v6562 = vmul.f32 %v6553, %v6553
        %v6563 = vmul.f32 %v6562, -0.00019511016
        %v6564 = vadd.f32 %v6563, 0.008332121
        %v6565 = vmul.f32 %v6562, %v6564
        %v6566 = vadd.f32 %v6565, -0.16666654
        %v6567 = vmul.f32 %v6562, %v6566
        %v6568 = vadd.f32 %v6567, 1.0
        %v6569 = vmul.f32 %v6568, %v6553
        %vm6570 = vweird.f32 %v511
        %v6571 = vadd.s32 %v6554, 3
        %v6572 = vand.u32 %v6571, 3
        %vm6573 = vcmp.lt.s32.totalorder %v6572, 2
        %vm6574 = vcmp.eq.s32.totalorder %v6572, 0
        %v6575 = vxor.u32 %v6569, 2147483648
        %v6576 = vsel %vm6574, %v6561, %v6575
        %vm6577 = vcmp.eq.s32.totalorder %v6572, 2
        %v6578 = vxor.u32 %v6561, 2147483648
        %v6579 = vsel %vm6577, %v6578, %v6569
        %v6580 = vsel %vm6573, %v6576, %v6579
        %v6581 = vsel %vm6570, nan, %v6580
        %v6582 = vand.u32 2147483647, %v512
        %vm6583 = vcmp.le.f32.partialorder %v6582, 0.7853982
        %vm6584 = vcmp.lt.s32.totalorder %v512, 0
        %v6585 = vand.u32 %v512, 2139095040
        %v6586 = vshrl.u32 %v6585, 23
        %v6587 = vsub.s32 %v6586, 127
        %v6588 = vand.u32 2147483647, %v512
        %v6589 = vand.u32 %v6588, 8388607
        %v6590 = vor.u32 %v6589, 8388608
        %v6591 = vsub.s32 0, %v6590
        %v6592 = vadd.s32 %v6587, 1
        %vm6593 = vcmp.gt.s32.totalorder %v6592, 0
        %v6594 = vsel %vm6593, %v6592, 0
        %v6595 = vshrl.u32 %v6594, 5
        %v6596 = vand.u32 %v6594, 31
        %v6597 = vsub.s32 32, %v6596
        %v6598 = vshrl.u32 683565275, %v6597
        %v6599 = vshll.u32 683565275, %v6596
        %v6600 = vshrl.u32 2475754826, %v6597
        %v6601 = vor.u32 %v6599, %v6600
        %v6602 = vshll.u32 2475754826, %v6596
        %v6603 = vshrl.u32 2131351028, %v6597
        %v6604 = vor.u32 %v6602, %v6603
        %v6605 = vshll.u32 2131351028, %v6596
        %v6606 = vshrl.u32 2102212464, %v6597
        %v6607 = vor.u32 %v6605, %v6606
        %v6608 = vshll.u32 2102212464, %v6596
        %v6609 = vshrl.u32 920167782, %v6597
        %v6610 = vor.u32 %v6608, %v6609
        %v6611 = vshll.u32 920167782, %v6596
        %v6612 = vshrl.u32 1326507024, %v6597
        %v6613 = vor.u32 %v6611, %v6612
        %vm6614 = vcmp.lt.s32.totalorder %v6595, 1
        %vm6615 = vcmp.lt.s32.totalorder %v6595, 2
        %vm6616 = vcmp.lt.s32.totalorder %v6595, 3
        %vm6617 = vcmp.lt.s32.totalorder %v6595, 4
        %v6618 = vsel %vm6614, %v6598, %v6601
        %v6619 = vsel %vm6617, %v6607, 2102212464
        %v6620 = vsel %vm6616, %v6604, %v6619
        %v6621 = vsel %vm6615, %v6618, %v6620
        %v6622 = vsel %vm6614, %v6601, %v6604
        %v6623 = vsel %vm6617, %v6610, 920167782
        %v6624 = vsel %vm6616, %v6607, %v6623
        %v6625 = vsel %vm6615, %v6622, %v6624
        %v6626 = vsel %vm6614, %v6604, %v6607
        %v6627 = vsel %vm6617, %v6613, 1326507024
        %v6628 = vsel %vm6616, %v6610, %v6627
        %v6629 = vsel %vm6615, %v6626, %v6628
        %v6630 = vshll.u32 %v6590, 8
        %v6631 = vand.u32 %v6630, 65535
        %v6632 = vshrl.u32 %v6630, 16
        %v6633 = vand.u32 %v6629, 65535
        %v6634 = vshrl.u32 %v6629, 16
        %v6635 = vmul.u32 %v6631, %v6633
        %v6636 = vmul.u32 %v6631, %v6634
        %v6637 = vmul.u32 %v6632, %v6633
        %v6638 = vmul.u32 %v6632, %v6634
        %v6639 = vshll.u32 %v6636, 16
        %v6640 = vshrl.u32 %v6636, 16
        %v6641 = vshll.u32 %v6637, 16
        %v6642 = vshrl.u32 %v6637, 16
        %vm6643 = vc.u32 %v6635, %v6639
        %v6644 = vsel %vm6643, 1, 0
        %v6645 = vadd.s32 %v6635, %v6639
        %v6646 = vadd.s32 %v6638, %v6644
        %vm6647 = vc.u32 %v6645, %v6641
        %v6648 = vsel %vm6647, 1, 0
        %v6649 = vadd.s32 %v6645, %v6641
        %v6650 = vadd.s32 %v6646, %v6648
        %v6651 = vadd.s32 %v6650, %v6640
        %v6652 = vadd.s32 %v6651, %v6642
        %v6653 = vand.u32 %v6630, 65535
        %v6654 = vshrl.u32 %v6630, 16
        %v6655 = vand.u32 %v6625, 65535
        %v6656 = vshrl.u32 %v6625, 16
        %v6657 = vmul.u32 %v6653, %v6655
        %v6658 = vmul.u32 %v6653, %v6656
        %v6659 = vmul.u32 %v6654, %v6655
        %v6660 = vmul.u32 %v6654, %v6656
        %v6661 = vshll.u32 %v6658, 16
        %v6662 = vshrl.u32 %v6658, 16
        %v6663 = vshll.u32 %v6659, 16
        %v6664 = vshrl.u32 %v6659, 16
        %vm6665 = vc.u32 %v6657, %v6661
        %v6666 = vsel %vm6665, 1, 0
        %v6667 = vadd.s32 %v6657, %v6661
        %v6668 = vadd.s32 %v6660, %v6666
        %vm6669 = vc.u32 %v6667, %v6663
        %v6670 = vsel %vm6669, 1, 0
        %v6671 = vadd.s32 %v6667, %v6663
        %v6672 = vadd.s32 %v6668, %v6670
        %v6673 = vadd.s32 %v6672, %v6662
        %v6674 = vadd.s32 %v6673, %v6664
        %v6675 = vmul.u32 %v6630, %v6621
        %v6676 = vadd.s32 %v6652, %v6671
        %vm6677 = vc.u32 %v6652, %v6671
        %v6678 = vadd.s32 %v6674, 1
        %v6679 = vsel %vm6677, %v6678, %v6674
        %v6680 = vadd.s32 %v6675, %v6679
        %v6681 = vadd.s32 %v6680, 536870912
        %v6682 = vshrl.u32 %v6681, 30
        %v6683 = vshll.u32 %v6682, 30
        %v6684 = vsub.s32 %v6680, %v6683
        %vm6685 = vcmp.lt.s32.totalorder %v6684, 0
        %v6686 = vsub.s32 0, %v6684
        %v6687 = vsel %vm6685, %v6686, %v6684
        %v6688 = vclz %v6687
        %v6689 = vsub.s32 %v6688, 2
        %vm6690 = vcmp.gt.s32.totalorder 0, %v6689
        %v6691 = vsel %vm6690, 0, %v6689
        %v6692 = vsub.s32 32, %v6691
        %v6693 = vshll.u32 %v6684, %v6691
        %v6694 = vshrl.u32 %v6676, %v6692
        %v6695 = vor.u32 %v6693, %v6694
        %v6696 = vsub.s32 4294967266, %v6691
        %v6697 = vadd.s32 %v6696, 127
        %v6698 = vshll.u32 %v6697, 23
        %v6699 = vor.u32 4788187, %v6698
        %v6700 = vand.u32 2147483647, %v6699
        %v6702 = vcvt.s32.f32 %v6695
        %v6703 = vmul.f32 %v6702, %v6700
        %v6704 = vxor.u32 %v6703, 2147483648
        %v6705 = vsel %vm6584, %v6704, %v6703
        %v6706 = vsub.s32 4, %v6682
        %v6707 = vsel %vm6584, %v6706, %v6682
        %v6708 = vsel %vm6583, %v512, %v6705
        %v6709 = vsel %vm6583, 0, %v6707
        %v6710 = vmul.f32 %v6708, %v6708
        %v6711 = vmul.f32 %v6710, -0.001358992
        %v6712 = vadd.f32 %v6711, 0.041655596
        %v6713 = vmul.f32 %v6710, %v6712
        %v6714 = vadd.f32 %v6713, -0.4999988
        %v6715 = vmul.f32 %v6710, %v6714
        %v6716 = vadd.f32 1.0, %v6715
        %v6717 = vmul.f32 %v6708, %v6708
        %v6718 = vmul.f32 %v6717, -0.00019511016
        %v6719 = vadd.f32 %v6718, 0.008332121
        %v6720 = vmul.f32 %v6717, %v6719
        %v6721 = vadd.f32 %v6720, -0.16666654
        %v6722 = vmul.f32 %v6717, %v6721
        %v6723 = vadd.f32 %v6722, 1.0
        %v6724 = vmul.f32 %v6723, %v6708
        %vm6725 = vweird.f32 %v512
        %v6726 = vadd.s32 %v6709, 3
        %v6727 = vand.u32 %v6726, 3
        %vm6728 = vcmp.lt.s32.totalorder %v6727, 2
        %vm6729 = vcmp.eq.s32.totalorder %v6727, 0
        %v6730 = vxor.u32 %v6724, 2147483648
        %v6731 = vsel %vm6729, %v6716, %v6730
        %vm6732 = vcmp.eq.s32.totalorder %v6727, 2
        %v6733 = vxor.u32 %v6716, 2147483648
        %v6734 = vsel %vm6732, %v6733, %v6724
        %v6735 = vsel %vm6728, %v6731, %v6734
        %v6736 = vsel %vm6725, nan, %v6735
        %v6737 = vand.u32 2147483647, %v513
        %vm6738 = vcmp.le.f32.partialorder %v6737, 0.7853982
        %vm6739 = vcmp.lt.s32.totalorder %v513, 0
        %v6740 = vand.u32 %v513, 2139095040
        %v6741 = vshrl.u32 %v6740, 23
        %v6742 = vsub.s32 %v6741, 127
        %v6743 = vand.u32 2147483647, %v513
        %v6744 = vand.u32 %v6743, 8388607
        %v6745 = vor.u32 %v6744, 8388608
        %v6746 = vsub.s32 0, %v6745
        %v6747 = vadd.s32 %v6742, 1
        %vm6748 = vcmp.gt.s32.totalorder %v6747, 0
        %v6749 = vsel %vm6748, %v6747, 0
        %v6750 = vshrl.u32 %v6749, 5
        %v6751 = vand.u32 %v6749, 31
        %v6752 = vsub.s32 32, %v6751
        %v6753 = vshrl.u32 683565275, %v6752
        %v6754 = vshll.u32 683565275, %v6751
        %v6755 = vshrl.u32 2475754826, %v6752
        %v6756 = vor.u32 %v6754, %v6755
        %v6757 = vshll.u32 2475754826, %v6751
        %v6758 = vshrl.u32 2131351028, %v6752
        %v6759 = vor.u32 %v6757, %v6758
        %v6760 = vshll.u32 2131351028, %v6751
        %v6761 = vshrl.u32 2102212464, %v6752
        %v6762 = vor.u32 %v6760, %v6761
        %v6763 = vshll.u32 2102212464, %v6751
        %v6764 = vshrl.u32 920167782, %v6752
        %v6765 = vor.u32 %v6763, %v6764
        %v6766 = vshll.u32 920167782, %v6751
        %v6767 = vshrl.u32 1326507024, %v6752
        %v6768 = vor.u32 %v6766, %v6767
        %vm6769 = vcmp.lt.s32.totalorder %v6750, 1
        %vm6770 = vcmp.lt.s32.totalorder %v6750, 2
        %vm6771 = vcmp.lt.s32.totalorder %v6750, 3
        %vm6772 = vcmp.lt.s32.totalorder %v6750, 4
        %v6773 = vsel %vm6769, %v6753, %v6756
        %v6774 = vsel %vm6772, %v6762, 2102212464
        %v6775 = vsel %vm6771, %v6759, %v6774
        %v6776 = vsel %vm6770, %v6773, %v6775
        %v6777 = vsel %vm6769, %v6756, %v6759
        %v6778 = vsel %vm6772, %v6765, 920167782
        %v6779 = vsel %vm6771, %v6762, %v6778
        %v6780 = vsel %vm6770, %v6777, %v6779
        %v6781 = vsel %vm6769, %v6759, %v6762
        %v6782 = vsel %vm6772, %v6768, 1326507024
        %v6783 = vsel %vm6771, %v6765, %v6782
        %v6784 = vsel %vm6770, %v6781, %v6783
        %v6785 = vshll.u32 %v6745, 8
        %v6786 = vand.u32 %v6785, 65535
        %v6787 = vshrl.u32 %v6785, 16
        %v6788 = vand.u32 %v6784, 65535
        %v6789 = vshrl.u32 %v6784, 16
        %v6790 = vmul.u32 %v6786, %v6788
        %v6791 = vmul.u32 %v6786, %v6789
        %v6792 = vmul.u32 %v6787, %v6788
        %v6793 = vmul.u32 %v6787, %v6789
        %v6794 = vshll.u32 %v6791, 16
        %v6795 = vshrl.u32 %v6791, 16
        %v6796 = vshll.u32 %v6792, 16
        %v6797 = vshrl.u32 %v6792, 16
        %vm6798 = vc.u32 %v6790, %v6794
        %v6799 = vsel %vm6798, 1, 0
        %v6800 = vadd.s32 %v6790, %v6794
        %v6801 = vadd.s32 %v6793, %v6799
        %vm6802 = vc.u32 %v6800, %v6796
        %v6803 = vsel %vm6802, 1, 0
        %v6804 = vadd.s32 %v6800, %v6796
        %v6805 = vadd.s32 %v6801, %v6803
        %v6806 = vadd.s32 %v6805, %v6795
        %v6807 = vadd.s32 %v6806, %v6797
        %v6808 = vand.u32 %v6785, 65535
        %v6809 = vshrl.u32 %v6785, 16
        %v6810 = vand.u32 %v6780, 65535
        %v6811 = vshrl.u32 %v6780, 16
        %v6812 = vmul.u32 %v6808, %v6810
        %v6813 = vmul.u32 %v6808, %v6811
        %v6814 = vmul.u32 %v6809, %v6810
        %v6815 = vmul.u32 %v6809, %v6811
        %v6816 = vshll.u32 %v6813, 16
        %v6817 = vshrl.u32 %v6813, 16
        %v6818 = vshll.u32 %v6814, 16
        %v6819 = vshrl.u32 %v6814, 16
        %vm6820 = vc.u32 %v6812, %v6816
        %v6821 = vsel %vm6820, 1, 0
        %v6822 = vadd.s32 %v6812, %v6816
        %v6823 = vadd.s32 %v6815, %v6821
        %vm6824 = vc.u32 %v6822, %v6818
        %v6825 = vsel %vm6824, 1, 0
        %v6826 = vadd.s32 %v6822, %v6818
        %v6827 = vadd.s32 %v6823, %v6825
        %v6828 = vadd.s32 %v6827, %v6817
        %v6829 = vadd.s32 %v6828, %v6819
        %v6830 = vmul.u32 %v6785, %v6776
        %v6831 = vadd.s32 %v6807, %v6826
        %vm6832 = vc.u32 %v6807, %v6826
        %v6833 = vadd.s32 %v6829, 1
        %v6834 = vsel %vm6832, %v6833, %v6829
        %v6835 = vadd.s32 %v6830, %v6834
        %v6836 = vadd.s32 %v6835, 536870912
        %v6837 = vshrl.u32 %v6836, 30
        %v6838 = vshll.u32 %v6837, 30
        %v6839 = vsub.s32 %v6835, %v6838
        %vm6840 = vcmp.lt.s32.totalorder %v6839, 0
        %v6841 = vsub.s32 0, %v6839
        %v6842 = vsel %vm6840, %v6841, %v6839
        %v6843 = vclz %v6842
        %v6844 = vsub.s32 %v6843, 2
        %vm6845 = vcmp.gt.s32.totalorder 0, %v6844
        %v6846 = vsel %vm6845, 0, %v6844
        %v6847 = vsub.s32 32, %v6846
        %v6848 = vshll.u32 %v6839, %v6846
        %v6849 = vshrl.u32 %v6831, %v6847
        %v6850 = vor.u32 %v6848, %v6849
        %v6851 = vsub.s32 4294967266, %v6846
        %v6852 = vadd.s32 %v6851, 127
        %v6853 = vshll.u32 %v6852, 23
        %v6854 = vor.u32 4788187, %v6853
        %v6855 = vand.u32 2147483647, %v6854
        %v6857 = vcvt.s32.f32 %v6850
        %v6858 = vmul.f32 %v6857, %v6855
        %v6859 = vxor.u32 %v6858, 2147483648
        %v6860 = vsel %vm6739, %v6859, %v6858
        %v6861 = vsub.s32 4, %v6837
        %v6862 = vsel %vm6739, %v6861, %v6837
        %v6863 = vsel %vm6738, %v513, %v6860
        %v6864 = vsel %vm6738, 0, %v6862
        %v6865 = vmul.f32 %v6863, %v6863
        %v6866 = vmul.f32 %v6865, -0.001358992
        %v6867 = vadd.f32 %v6866, 0.041655596
        %v6868 = vmul.f32 %v6865, %v6867
        %v6869 = vadd.f32 %v6868, -0.4999988
        %v6870 = vmul.f32 %v6865, %v6869
        %v6871 = vadd.f32 1.0, %v6870
        %v6872 = vmul.f32 %v6863, %v6863
        %v6873 = vmul.f32 %v6872, -0.00019511016
        %v6874 = vadd.f32 %v6873, 0.008332121
        %v6875 = vmul.f32 %v6872, %v6874
        %v6876 = vadd.f32 %v6875, -0.16666654
        %v6877 = vmul.f32 %v6872, %v6876
        %v6878 = vadd.f32 %v6877, 1.0
        %v6879 = vmul.f32 %v6878, %v6863
        %vm6880 = vweird.f32 %v513
        %v6881 = vadd.s32 %v6864, 3
        %v6882 = vand.u32 %v6881, 3
        %vm6883 = vcmp.lt.s32.totalorder %v6882, 2
        %vm6884 = vcmp.eq.s32.totalorder %v6882, 0
        %v6885 = vxor.u32 %v6879, 2147483648
        %v6886 = vsel %vm6884, %v6871, %v6885
        %vm6887 = vcmp.eq.s32.totalorder %v6882, 2
        %v6888 = vxor.u32 %v6871, 2147483648
        %v6889 = vsel %vm6887, %v6888, %v6879
        %v6890 = vsel %vm6883, %v6886, %v6889
        %v6891 = vsel %vm6880, nan, %v6890
        %v6892 = vand.u32 2147483647, %v514
        %vm6893 = vcmp.le.f32.partialorder %v6892, 0.7853982
        %vm6894 = vcmp.lt.s32.totalorder %v514, 0
        %v6895 = vand.u32 %v514, 2139095040
        %v6896 = vshrl.u32 %v6895, 23
        %v6897 = vsub.s32 %v6896, 127
        %v6898 = vand.u32 2147483647, %v514
        %v6899 = vand.u32 %v6898, 8388607
        %v6900 = vor.u32 %v6899, 8388608
        %v6901 = vsub.s32 0, %v6900
        %v6902 = vadd.s32 %v6897, 1
        %vm6903 = vcmp.gt.s32.totalorder %v6902, 0
        %v6904 = vsel %vm6903, %v6902, 0
        %v6905 = vshrl.u32 %v6904, 5
        %v6906 = vand.u32 %v6904, 31
        %v6907 = vsub.s32 32, %v6906
        %v6908 = vshrl.u32 683565275, %v6907
        %v6909 = vshll.u32 683565275, %v6906
        %v6910 = vshrl.u32 2475754826, %v6907
        %v6911 = vor.u32 %v6909, %v6910
        %v6912 = vshll.u32 2475754826, %v6906
        %v6913 = vshrl.u32 2131351028, %v6907
        %v6914 = vor.u32 %v6912, %v6913
        %v6915 = vshll.u32 2131351028, %v6906
        %v6916 = vshrl.u32 2102212464, %v6907
        %v6917 = vor.u32 %v6915, %v6916
        %v6918 = vshll.u32 2102212464, %v6906
        %v6919 = vshrl.u32 920167782, %v6907
        %v6920 = vor.u32 %v6918, %v6919
        %v6921 = vshll.u32 920167782, %v6906
        %v6922 = vshrl.u32 1326507024, %v6907
        %v6923 = vor.u32 %v6921, %v6922
        %vm6924 = vcmp.lt.s32.totalorder %v6905, 1
        %vm6925 = vcmp.lt.s32.totalorder %v6905, 2
        %vm6926 = vcmp.lt.s32.totalorder %v6905, 3
        %vm6927 = vcmp.lt.s32.totalorder %v6905, 4
        %v6928 = vsel %vm6924, %v6908, %v6911
        %v6929 = vsel %vm6927, %v6917, 2102212464
        %v6930 = vsel %vm6926, %v6914, %v6929
        %v6931 = vsel %vm6925, %v6928, %v6930
        %v6932 = vsel %vm6924, %v6911, %v6914
        %v6933 = vsel %vm6927, %v6920, 920167782
        %v6934 = vsel %vm6926, %v6917, %v6933
        %v6935 = vsel %vm6925, %v6932, %v6934
        %v6936 = vsel %vm6924, %v6914, %v6917
        %v6937 = vsel %vm6927, %v6923, 1326507024
        %v6938 = vsel %vm6926, %v6920, %v6937
        %v6939 = vsel %vm6925, %v6936, %v6938
        %v6940 = vshll.u32 %v6900, 8
        %v6941 = vand.u32 %v6940, 65535
        %v6942 = vshrl.u32 %v6940, 16
        %v6943 = vand.u32 %v6939, 65535
        %v6944 = vshrl.u32 %v6939, 16
        %v6945 = vmul.u32 %v6941, %v6943
        %v6946 = vmul.u32 %v6941, %v6944
        %v6947 = vmul.u32 %v6942, %v6943
        %v6948 = vmul.u32 %v6942, %v6944
        %v6949 = vshll.u32 %v6946, 16
        %v6950 = vshrl.u32 %v6946, 16
        %v6951 = vshll.u32 %v6947, 16
        %v6952 = vshrl.u32 %v6947, 16
        %vm6953 = vc.u32 %v6945, %v6949
        %v6954 = vsel %vm6953, 1, 0
        %v6955 = vadd.s32 %v6945, %v6949
        %v6956 = vadd.s32 %v6948, %v6954
        %vm6957 = vc.u32 %v6955, %v6951
        %v6958 = vsel %vm6957, 1, 0
        %v6959 = vadd.s32 %v6955, %v6951
        %v6960 = vadd.s32 %v6956, %v6958
        %v6961 = vadd.s32 %v6960, %v6950
        %v6962 = vadd.s32 %v6961, %v6952
        %v6963 = vand.u32 %v6940, 65535
        %v6964 = vshrl.u32 %v6940, 16
        %v6965 = vand.u32 %v6935, 65535
        %v6966 = vshrl.u32 %v6935, 16
        %v6967 = vmul.u32 %v6963, %v6965
        %v6968 = vmul.u32 %v6963, %v6966
        %v6969 = vmul.u32 %v6964, %v6965
        %v6970 = vmul.u32 %v6964, %v6966
        %v6971 = vshll.u32 %v6968, 16
        %v6972 = vshrl.u32 %v6968, 16
        %v6973 = vshll.u32 %v6969, 16
        %v6974 = vshrl.u32 %v6969, 16
        %vm6975 = vc.u32 %v6967, %v6971
        %v6976 = vsel %vm6975, 1, 0
        %v6977 = vadd.s32 %v6967, %v6971
        %v6978 = vadd.s32 %v6970, %v6976
        %vm6979 = vc.u32 %v6977, %v6973
        %v6980 = vsel %vm6979, 1, 0
        %v6981 = vadd.s32 %v6977, %v6973
        %v6982 = vadd.s32 %v6978, %v6980
        %v6983 = vadd.s32 %v6982, %v6972
        %v6984 = vadd.s32 %v6983, %v6974
        %v6985 = vmul.u32 %v6940, %v6931
        %v6986 = vadd.s32 %v6962, %v6981
        %vm6987 = vc.u32 %v6962, %v6981
        %v6988 = vadd.s32 %v6984, 1
        %v6989 = vsel %vm6987, %v6988, %v6984
        %v6990 = vadd.s32 %v6985, %v6989
        %v6991 = vadd.s32 %v6990, 536870912
        %v6992 = vshrl.u32 %v6991, 30
        %v6993 = vshll.u32 %v6992, 30
        %v6994 = vsub.s32 %v6990, %v6993
        %vm6995 = vcmp.lt.s32.totalorder %v6994, 0
        %v6996 = vsub.s32 0, %v6994
        %v6997 = vsel %vm6995, %v6996, %v6994
        %v6998 = vclz %v6997
        %v6999 = vsub.s32 %v6998, 2
        %vm7000 = vcmp.gt.s32.totalorder 0, %v6999
        %v7001 = vsel %vm7000, 0, %v6999
        %v7002 = vsub.s32 32, %v7001
        %v7003 = vshll.u32 %v6994, %v7001
        %v7004 = vshrl.u32 %v6986, %v7002
        %v7005 = vor.u32 %v7003, %v7004
        %v7006 = vsub.s32 4294967266, %v7001
        %v7007 = vadd.s32 %v7006, 127
        %v7008 = vshll.u32 %v7007, 23
        %v7009 = vor.u32 4788187, %v7008
        %v7010 = vand.u32 2147483647, %v7009
        %v7012 = vcvt.s32.f32 %v7005
        %v7013 = vmul.f32 %v7012, %v7010
        %v7014 = vxor.u32 %v7013, 2147483648
        %v7015 = vsel %vm6894, %v7014, %v7013
        %v7016 = vsub.s32 4, %v6992
        %v7017 = vsel %vm6894, %v7016, %v6992
        %v7018 = vsel %vm6893, %v514, %v7015
        %v7019 = vsel %vm6893, 0, %v7017
        %v7020 = vmul.f32 %v7018, %v7018
        %v7021 = vmul.f32 %v7020, -0.001358992
        %v7022 = vadd.f32 %v7021, 0.041655596
        %v7023 = vmul.f32 %v7020, %v7022
        %v7024 = vadd.f32 %v7023, -0.4999988
        %v7025 = vmul.f32 %v7020, %v7024
        %v7026 = vadd.f32 1.0, %v7025
        %v7027 = vmul.f32 %v7018, %v7018
        %v7028 = vmul.f32 %v7027, -0.00019511016
        %v7029 = vadd.f32 %v7028, 0.008332121
        %v7030 = vmul.f32 %v7027, %v7029
        %v7031 = vadd.f32 %v7030, -0.16666654
        %v7032 = vmul.f32 %v7027, %v7031
        %v7033 = vadd.f32 %v7032, 1.0
        %v7034 = vmul.f32 %v7033, %v7018
        %vm7035 = vweird.f32 %v514
        %v7036 = vadd.s32 %v7019, 3
        %v7037 = vand.u32 %v7036, 3
        %vm7038 = vcmp.lt.s32.totalorder %v7037, 2
        %vm7039 = vcmp.eq.s32.totalorder %v7037, 0
        %v7040 = vxor.u32 %v7034, 2147483648
        %v7041 = vsel %vm7039, %v7026, %v7040
        %vm7042 = vcmp.eq.s32.totalorder %v7037, 2
        %v7043 = vxor.u32 %v7026, 2147483648
        %v7044 = vsel %vm7042, %v7043, %v7034
        %v7045 = vsel %vm7038, %v7041, %v7044
        %v7046 = vsel %vm7035, nan, %v7045
        %v7047 = vand.u32 2147483647, %v515
        %vm7048 = vcmp.le.f32.partialorder %v7047, 0.7853982
        %vm7049 = vcmp.lt.s32.totalorder %v515, 0
        %v7050 = vand.u32 %v515, 2139095040
        %v7051 = vshrl.u32 %v7050, 23
        %v7052 = vsub.s32 %v7051, 127
        %v7053 = vand.u32 2147483647, %v515
        %v7054 = vand.u32 %v7053, 8388607
        %v7055 = vor.u32 %v7054, 8388608
        %v7056 = vsub.s32 0, %v7055
        %v7057 = vadd.s32 %v7052, 1
        %vm7058 = vcmp.gt.s32.totalorder %v7057, 0
        %v7059 = vsel %vm7058, %v7057, 0
        %v7060 = vshrl.u32 %v7059, 5
        %v7061 = vand.u32 %v7059, 31
        %v7062 = vsub.s32 32, %v7061
        %v7063 = vshrl.u32 683565275, %v7062
        %v7064 = vshll.u32 683565275, %v7061
        %v7065 = vshrl.u32 2475754826, %v7062
        %v7066 = vor.u32 %v7064, %v7065
        %v7067 = vshll.u32 2475754826, %v7061
        %v7068 = vshrl.u32 2131351028, %v7062
        %v7069 = vor.u32 %v7067, %v7068
        %v7070 = vshll.u32 2131351028, %v7061
        %v7071 = vshrl.u32 2102212464, %v7062
        %v7072 = vor.u32 %v7070, %v7071
        %v7073 = vshll.u32 2102212464, %v7061
        %v7074 = vshrl.u32 920167782, %v7062
        %v7075 = vor.u32 %v7073, %v7074
        %v7076 = vshll.u32 920167782, %v7061
        %v7077 = vshrl.u32 1326507024, %v7062
        %v7078 = vor.u32 %v7076, %v7077
        %vm7079 = vcmp.lt.s32.totalorder %v7060, 1
        %vm7080 = vcmp.lt.s32.totalorder %v7060, 2
        %vm7081 = vcmp.lt.s32.totalorder %v7060, 3
        %vm7082 = vcmp.lt.s32.totalorder %v7060, 4
        %v7083 = vsel %vm7079, %v7063, %v7066
        %v7084 = vsel %vm7082, %v7072, 2102212464
        %v7085 = vsel %vm7081, %v7069, %v7084
        %v7086 = vsel %vm7080, %v7083, %v7085
        %v7087 = vsel %vm7079, %v7066, %v7069
        %v7088 = vsel %vm7082, %v7075, 920167782
        %v7089 = vsel %vm7081, %v7072, %v7088
        %v7090 = vsel %vm7080, %v7087, %v7089
        %v7091 = vsel %vm7079, %v7069, %v7072
        %v7092 = vsel %vm7082, %v7078, 1326507024
        %v7093 = vsel %vm7081, %v7075, %v7092
        %v7094 = vsel %vm7080, %v7091, %v7093
        %v7095 = vshll.u32 %v7055, 8
        %v7096 = vand.u32 %v7095, 65535
        %v7097 = vshrl.u32 %v7095, 16
        %v7098 = vand.u32 %v7094, 65535
        %v7099 = vshrl.u32 %v7094, 16
        %v7100 = vmul.u32 %v7096, %v7098
        %v7101 = vmul.u32 %v7096, %v7099
        %v7102 = vmul.u32 %v7097, %v7098
        %v7103 = vmul.u32 %v7097, %v7099
        %v7104 = vshll.u32 %v7101, 16
        %v7105 = vshrl.u32 %v7101, 16
        %v7106 = vshll.u32 %v7102, 16
        %v7107 = vshrl.u32 %v7102, 16
        %vm7108 = vc.u32 %v7100, %v7104
        %v7109 = vsel %vm7108, 1, 0
        %v7110 = vadd.s32 %v7100, %v7104
        %v7111 = vadd.s32 %v7103, %v7109
        %vm7112 = vc.u32 %v7110, %v7106
        %v7113 = vsel %vm7112, 1, 0
        %v7114 = vadd.s32 %v7110, %v7106
        %v7115 = vadd.s32 %v7111, %v7113
        %v7116 = vadd.s32 %v7115, %v7105
        %v7117 = vadd.s32 %v7116, %v7107
        %v7118 = vand.u32 %v7095, 65535
        %v7119 = vshrl.u32 %v7095, 16
        %v7120 = vand.u32 %v7090, 65535
        %v7121 = vshrl.u32 %v7090, 16
        %v7122 = vmul.u32 %v7118, %v7120
        %v7123 = vmul.u32 %v7118, %v7121
        %v7124 = vmul.u32 %v7119, %v7120
        %v7125 = vmul.u32 %v7119, %v7121
        %v7126 = vshll.u32 %v7123, 16
        %v7127 = vshrl.u32 %v7123, 16
        %v7128 = vshll.u32 %v7124, 16
        %v7129 = vshrl.u32 %v7124, 16
        %vm7130 = vc.u32 %v7122, %v7126
        %v7131 = vsel %vm7130, 1, 0
        %v7132 = vadd.s32 %v7122, %v7126
        %v7133 = vadd.s32 %v7125, %v7131
        %vm7134 = vc.u32 %v7132, %v7128
        %v7135 = vsel %vm7134, 1, 0
        %v7136 = vadd.s32 %v7132, %v7128
        %v7137 = vadd.s32 %v7133, %v7135
        %v7138 = vadd.s32 %v7137, %v7127
        %v7139 = vadd.s32 %v7138, %v7129
        %v7140 = vmul.u32 %v7095, %v7086
        %v7141 = vadd.s32 %v7117, %v7136
        %vm7142 = vc.u32 %v7117, %v7136
        %v7143 = vadd.s32 %v7139, 1
        %v7144 = vsel %vm7142, %v7143, %v7139
        %v7145 = vadd.s32 %v7140, %v7144
        %v7146 = vadd.s32 %v7145, 536870912
        %v7147 = vshrl.u32 %v7146, 30
        %v7148 = vshll.u32 %v7147, 30
        %v7149 = vsub.s32 %v7145, %v7148
        %vm7150 = vcmp.lt.s32.totalorder %v7149, 0
        %v7151 = vsub.s32 0, %v7149
        %v7152 = vsel %vm7150, %v7151, %v7149
        %v7153 = vclz %v7152
        %v7154 = vsub.s32 %v7153, 2
        %vm7155 = vcmp.gt.s32.totalorder 0, %v7154
        %v7156 = vsel %vm7155, 0, %v7154
        %v7157 = vsub.s32 32, %v7156
        %v7158 = vshll.u32 %v7149, %v7156
        %v7159 = vshrl.u32 %v7141, %v7157
        %v7160 = vor.u32 %v7158, %v7159
        %v7161 = vsub.s32 4294967266, %v7156
        %v7162 = vadd.s32 %v7161, 127
        %v7163 = vshll.u32 %v7162, 23
        %v7164 = vor.u32 4788187, %v7163
        %v7165 = vand.u32 2147483647, %v7164
        %v7167 = vcvt.s32.f32 %v7160
        %v7168 = vmul.f32 %v7167, %v7165
        %v7169 = vxor.u32 %v7168, 2147483648
        %v7170 = vsel %vm7049, %v7169, %v7168
        %v7171 = vsub.s32 4, %v7147
        %v7172 = vsel %vm7049, %v7171, %v7147
        %v7173 = vsel %vm7048, %v515, %v7170
        %v7174 = vsel %vm7048, 0, %v7172
        %v7175 = vmul.f32 %v7173, %v7173
        %v7176 = vmul.f32 %v7175, -0.001358992
        %v7177 = vadd.f32 %v7176, 0.041655596
        %v7178 = vmul.f32 %v7175, %v7177
        %v7179 = vadd.f32 %v7178, -0.4999988
        %v7180 = vmul.f32 %v7175, %v7179
        %v7181 = vadd.f32 1.0, %v7180
        %v7182 = vmul.f32 %v7173, %v7173
        %v7183 = vmul.f32 %v7182, -0.00019511016
        %v7184 = vadd.f32 %v7183, 0.008332121
        %v7185 = vmul.f32 %v7182, %v7184
        %v7186 = vadd.f32 %v7185, -0.16666654
        %v7187 = vmul.f32 %v7182, %v7186
        %v7188 = vadd.f32 %v7187, 1.0
        %v7189 = vmul.f32 %v7188, %v7173
        %vm7190 = vweird.f32 %v515
        %v7191 = vadd.s32 %v7174, 3
        %v7192 = vand.u32 %v7191, 3
        %vm7193 = vcmp.lt.s32.totalorder %v7192, 2
        %vm7194 = vcmp.eq.s32.totalorder %v7192, 0
        %v7195 = vxor.u32 %v7189, 2147483648
        %v7196 = vsel %vm7194, %v7181, %v7195
        %vm7197 = vcmp.eq.s32.totalorder %v7192, 2
        %v7198 = vxor.u32 %v7181, 2147483648
        %v7199 = vsel %vm7197, %v7198, %v7189
        %v7200 = vsel %vm7193, %v7196, %v7199
        %v7201 = vsel %vm7190, nan, %v7200
        %v7202 = vand.u32 2147483647, %v516
        %vm7203 = vcmp.le.f32.partialorder %v7202, 0.7853982
        %vm7204 = vcmp.lt.s32.totalorder %v516, 0
        %v7205 = vand.u32 %v516, 2139095040
        %v7206 = vshrl.u32 %v7205, 23
        %v7207 = vsub.s32 %v7206, 127
        %v7208 = vand.u32 2147483647, %v516
        %v7209 = vand.u32 %v7208, 8388607
        %v7210 = vor.u32 %v7209, 8388608
        %v7211 = vsub.s32 0, %v7210
        %v7212 = vadd.s32 %v7207, 1
        %vm7213 = vcmp.gt.s32.totalorder %v7212, 0
        %v7214 = vsel %vm7213, %v7212, 0
        %v7215 = vshrl.u32 %v7214, 5
        %v7216 = vand.u32 %v7214, 31
        %v7217 = vsub.s32 32, %v7216
        %v7218 = vshrl.u32 683565275, %v7217
        %v7219 = vshll.u32 683565275, %v7216
        %v7220 = vshrl.u32 2475754826, %v7217
        %v7221 = vor.u32 %v7219, %v7220
        %v7222 = vshll.u32 2475754826, %v7216
        %v7223 = vshrl.u32 2131351028, %v7217
        %v7224 = vor.u32 %v7222, %v7223
        %v7225 = vshll.u32 2131351028, %v7216
        %v7226 = vshrl.u32 2102212464, %v7217
        %v7227 = vor.u32 %v7225, %v7226
        %v7228 = vshll.u32 2102212464, %v7216
        %v7229 = vshrl.u32 920167782, %v7217
        %v7230 = vor.u32 %v7228, %v7229
        %v7231 = vshll.u32 920167782, %v7216
        %v7232 = vshrl.u32 1326507024, %v7217
        %v7233 = vor.u32 %v7231, %v7232
        %vm7234 = vcmp.lt.s32.totalorder %v7215, 1
        %vm7235 = vcmp.lt.s32.totalorder %v7215, 2
        %vm7236 = vcmp.lt.s32.totalorder %v7215, 3
        %vm7237 = vcmp.lt.s32.totalorder %v7215, 4
        %v7238 = vsel %vm7234, %v7218, %v7221
        %v7239 = vsel %vm7237, %v7227, 2102212464
        %v7240 = vsel %vm7236, %v7224, %v7239
        %v7241 = vsel %vm7235, %v7238, %v7240
        %v7242 = vsel %vm7234, %v7221, %v7224
        %v7243 = vsel %vm7237, %v7230, 920167782
        %v7244 = vsel %vm7236, %v7227, %v7243
        %v7245 = vsel %vm7235, %v7242, %v7244
        %v7246 = vsel %vm7234, %v7224, %v7227
        %v7247 = vsel %vm7237, %v7233, 1326507024
        %v7248 = vsel %vm7236, %v7230, %v7247
        %v7249 = vsel %vm7235, %v7246, %v7248
        %v7250 = vshll.u32 %v7210, 8
        %v7251 = vand.u32 %v7250, 65535
        %v7252 = vshrl.u32 %v7250, 16
        %v7253 = vand.u32 %v7249, 65535
        %v7254 = vshrl.u32 %v7249, 16
        %v7255 = vmul.u32 %v7251, %v7253
        %v7256 = vmul.u32 %v7251, %v7254
        %v7257 = vmul.u32 %v7252, %v7253
        %v7258 = vmul.u32 %v7252, %v7254
        %v7259 = vshll.u32 %v7256, 16
        %v7260 = vshrl.u32 %v7256, 16
        %v7261 = vshll.u32 %v7257, 16
        %v7262 = vshrl.u32 %v7257, 16
        %vm7263 = vc.u32 %v7255, %v7259
        %v7264 = vsel %vm7263, 1, 0
        %v7265 = vadd.s32 %v7255, %v7259
        %v7266 = vadd.s32 %v7258, %v7264
        %vm7267 = vc.u32 %v7265, %v7261
        %v7268 = vsel %vm7267, 1, 0
        %v7269 = vadd.s32 %v7265, %v7261
        %v7270 = vadd.s32 %v7266, %v7268
        %v7271 = vadd.s32 %v7270, %v7260
        %v7272 = vadd.s32 %v7271, %v7262
        %v7273 = vand.u32 %v7250, 65535
        %v7274 = vshrl.u32 %v7250, 16
        %v7275 = vand.u32 %v7245, 65535
        %v7276 = vshrl.u32 %v7245, 16
        %v7277 = vmul.u32 %v7273, %v7275
        %v7278 = vmul.u32 %v7273, %v7276
        %v7279 = vmul.u32 %v7274, %v7275
        %v7280 = vmul.u32 %v7274, %v7276
        %v7281 = vshll.u32 %v7278, 16
        %v7282 = vshrl.u32 %v7278, 16
        %v7283 = vshll.u32 %v7279, 16
        %v7284 = vshrl.u32 %v7279, 16
        %vm7285 = vc.u32 %v7277, %v7281
        %v7286 = vsel %vm7285, 1, 0
        %v7287 = vadd.s32 %v7277, %v7281
        %v7288 = vadd.s32 %v7280, %v7286
        %vm7289 = vc.u32 %v7287, %v7283
        %v7290 = vsel %vm7289, 1, 0
        %v7291 = vadd.s32 %v7287, %v7283
        %v7292 = vadd.s32 %v7288, %v7290
        %v7293 = vadd.s32 %v7292, %v7282
        %v7294 = vadd.s32 %v7293, %v7284
        %v7295 = vmul.u32 %v7250, %v7241
        %v7296 = vadd.s32 %v7272, %v7291
        %vm7297 = vc.u32 %v7272, %v7291
        %v7298 = vadd.s32 %v7294, 1
        %v7299 = vsel %vm7297, %v7298, %v7294
        %v7300 = vadd.s32 %v7295, %v7299
        %v7301 = vadd.s32 %v7300, 536870912
        %v7302 = vshrl.u32 %v7301, 30
        %v7303 = vshll.u32 %v7302, 30
        %v7304 = vsub.s32 %v7300, %v7303
        %vm7305 = vcmp.lt.s32.totalorder %v7304, 0
        %v7306 = vsub.s32 0, %v7304
        %v7307 = vsel %vm7305, %v7306, %v7304
        %v7308 = vclz %v7307
        %v7309 = vsub.s32 %v7308, 2
        %vm7310 = vcmp.gt.s32.totalorder 0, %v7309
        %v7311 = vsel %vm7310, 0, %v7309
        %v7312 = vsub.s32 32, %v7311
        %v7313 = vshll.u32 %v7304, %v7311
        %v7314 = vshrl.u32 %v7296, %v7312
        %v7315 = vor.u32 %v7313, %v7314
        %v7316 = vsub.s32 4294967266, %v7311
        %v7317 = vadd.s32 %v7316, 127
        %v7318 = vshll.u32 %v7317, 23
        %v7319 = vor.u32 4788187, %v7318
        %v7320 = vand.u32 2147483647, %v7319
        %v7322 = vcvt.s32.f32 %v7315
        %v7323 = vmul.f32 %v7322, %v7320
        %v7324 = vxor.u32 %v7323, 2147483648
        %v7325 = vsel %vm7204, %v7324, %v7323
        %v7326 = vsub.s32 4, %v7302
        %v7327 = vsel %vm7204, %v7326, %v7302
        %v7328 = vsel %vm7203, %v516, %v7325
        %v7329 = vsel %vm7203, 0, %v7327
        %v7330 = vmul.f32 %v7328, %v7328
        %v7331 = vmul.f32 %v7330, -0.001358992
        %v7332 = vadd.f32 %v7331, 0.041655596
        %v7333 = vmul.f32 %v7330, %v7332
        %v7334 = vadd.f32 %v7333, -0.4999988
        %v7335 = vmul.f32 %v7330, %v7334
        %v7336 = vadd.f32 1.0, %v7335
        %v7337 = vmul.f32 %v7328, %v7328
        %v7338 = vmul.f32 %v7337, -0.00019511016
        %v7339 = vadd.f32 %v7338, 0.008332121
        %v7340 = vmul.f32 %v7337, %v7339
        %v7341 = vadd.f32 %v7340, -0.16666654
        %v7342 = vmul.f32 %v7337, %v7341
        %v7343 = vadd.f32 %v7342, 1.0
        %v7344 = vmul.f32 %v7343, %v7328
        %vm7345 = vweird.f32 %v516
        %v7346 = vadd.s32 %v7329, 3
        %v7347 = vand.u32 %v7346, 3
        %vm7348 = vcmp.lt.s32.totalorder %v7347, 2
        %vm7349 = vcmp.eq.s32.totalorder %v7347, 0
        %v7350 = vxor.u32 %v7344, 2147483648
        %v7351 = vsel %vm7349, %v7336, %v7350
        %vm7352 = vcmp.eq.s32.totalorder %v7347, 2
        %v7353 = vxor.u32 %v7336, 2147483648
        %v7354 = vsel %vm7352, %v7353, %v7344
        %v7355 = vsel %vm7348, %v7351, %v7354
        %v7356 = vsel %vm7345, nan, %v7355
        %v7357 = vand.u32 2147483647, %v517
        %vm7358 = vcmp.le.f32.partialorder %v7357, 0.7853982
        %vm7359 = vcmp.lt.s32.totalorder %v517, 0
        %v7360 = vand.u32 %v517, 2139095040
        %v7361 = vshrl.u32 %v7360, 23
        %v7362 = vsub.s32 %v7361, 127
        %v7363 = vand.u32 2147483647, %v517
        %v7364 = vand.u32 %v7363, 8388607
        %v7365 = vor.u32 %v7364, 8388608
        %v7366 = vsub.s32 0, %v7365
        %v7367 = vadd.s32 %v7362, 1
        %vm7368 = vcmp.gt.s32.totalorder %v7367, 0
        %v7369 = vsel %vm7368, %v7367, 0
        %v7370 = vshrl.u32 %v7369, 5
        %v7371 = vand.u32 %v7369, 31
        %v7372 = vsub.s32 32, %v7371
        %v7373 = vshrl.u32 683565275, %v7372
        %v7374 = vshll.u32 683565275, %v7371
        %v7375 = vshrl.u32 2475754826, %v7372
        %v7376 = vor.u32 %v7374, %v7375
        %v7377 = vshll.u32 2475754826, %v7371
        %v7378 = vshrl.u32 2131351028, %v7372
        %v7379 = vor.u32 %v7377, %v7378
        %v7380 = vshll.u32 2131351028, %v7371
        %v7381 = vshrl.u32 2102212464, %v7372
        %v7382 = vor.u32 %v7380, %v7381
        %v7383 = vshll.u32 2102212464, %v7371
        %v7384 = vshrl.u32 920167782, %v7372
        %v7385 = vor.u32 %v7383, %v7384
        %v7386 = vshll.u32 920167782, %v7371
        %v7387 = vshrl.u32 1326507024, %v7372
        %v7388 = vor.u32 %v7386, %v7387
        %vm7389 = vcmp.lt.s32.totalorder %v7370, 1
        %vm7390 = vcmp.lt.s32.totalorder %v7370, 2
        %vm7391 = vcmp.lt.s32.totalorder %v7370, 3
        %vm7392 = vcmp.lt.s32.totalorder %v7370, 4
        %v7393 = vsel %vm7389, %v7373, %v7376
        %v7394 = vsel %vm7392, %v7382, 2102212464
        %v7395 = vsel %vm7391, %v7379, %v7394
        %v7396 = vsel %vm7390, %v7393, %v7395
        %v7397 = vsel %vm7389, %v7376, %v7379
        %v7398 = vsel %vm7392, %v7385, 920167782
        %v7399 = vsel %vm7391, %v7382, %v7398
        %v7400 = vsel %vm7390, %v7397, %v7399
        %v7401 = vsel %vm7389, %v7379, %v7382
        %v7402 = vsel %vm7392, %v7388, 1326507024
        %v7403 = vsel %vm7391, %v7385, %v7402
        %v7404 = vsel %vm7390, %v7401, %v7403
        %v7405 = vshll.u32 %v7365, 8
        %v7406 = vand.u32 %v7405, 65535
        %v7407 = vshrl.u32 %v7405, 16
        %v7408 = vand.u32 %v7404, 65535
        %v7409 = vshrl.u32 %v7404, 16
        %v7410 = vmul.u32 %v7406, %v7408
        %v7411 = vmul.u32 %v7406, %v7409
        %v7412 = vmul.u32 %v7407, %v7408
        %v7413 = vmul.u32 %v7407, %v7409
        %v7414 = vshll.u32 %v7411, 16
        %v7415 = vshrl.u32 %v7411, 16
        %v7416 = vshll.u32 %v7412, 16
        %v7417 = vshrl.u32 %v7412, 16
        %vm7418 = vc.u32 %v7410, %v7414
        %v7419 = vsel %vm7418, 1, 0
        %v7420 = vadd.s32 %v7410, %v7414
        %v7421 = vadd.s32 %v7413, %v7419
        %vm7422 = vc.u32 %v7420, %v7416
        %v7423 = vsel %vm7422, 1, 0
        %v7424 = vadd.s32 %v7420, %v7416
        %v7425 = vadd.s32 %v7421, %v7423
        %v7426 = vadd.s32 %v7425, %v7415
        %v7427 = vadd.s32 %v7426, %v7417
        %v7428 = vand.u32 %v7405, 65535
        %v7429 = vshrl.u32 %v7405, 16
        %v7430 = vand.u32 %v7400, 65535
        %v7431 = vshrl.u32 %v7400, 16
        %v7432 = vmul.u32 %v7428, %v7430
        %v7433 = vmul.u32 %v7428, %v7431
        %v7434 = vmul.u32 %v7429, %v7430
        %v7435 = vmul.u32 %v7429, %v7431
        %v7436 = vshll.u32 %v7433, 16
        %v7437 = vshrl.u32 %v7433, 16
        %v7438 = vshll.u32 %v7434, 16
        %v7439 = vshrl.u32 %v7434, 16
        %vm7440 = vc.u32 %v7432, %v7436
        %v7441 = vsel %vm7440, 1, 0
        %v7442 = vadd.s32 %v7432, %v7436
        %v7443 = vadd.s32 %v7435, %v7441
        %vm7444 = vc.u32 %v7442, %v7438
        %v7445 = vsel %vm7444, 1, 0
        %v7446 = vadd.s32 %v7442, %v7438
        %v7447 = vadd.s32 %v7443, %v7445
        %v7448 = vadd.s32 %v7447, %v7437
        %v7449 = vadd.s32 %v7448, %v7439
        %v7450 = vmul.u32 %v7405, %v7396
        %v7451 = vadd.s32 %v7427, %v7446
        %vm7452 = vc.u32 %v7427, %v7446
        %v7453 = vadd.s32 %v7449, 1
        %v7454 = vsel %vm7452, %v7453, %v7449
        %v7455 = vadd.s32 %v7450, %v7454
        %v7456 = vadd.s32 %v7455, 536870912
        %v7457 = vshrl.u32 %v7456, 30
        %v7458 = vshll.u32 %v7457, 30
        %v7459 = vsub.s32 %v7455, %v7458
        %vm7460 = vcmp.lt.s32.totalorder %v7459, 0
        %v7461 = vsub.s32 0, %v7459
        %v7462 = vsel %vm7460, %v7461, %v7459
        %v7463 = vclz %v7462
        %v7464 = vsub.s32 %v7463, 2
        %vm7465 = vcmp.gt.s32.totalorder 0, %v7464
        %v7466 = vsel %vm7465, 0, %v7464
        %v7467 = vsub.s32 32, %v7466
        %v7468 = vshll.u32 %v7459, %v7466
        %v7469 = vshrl.u32 %v7451, %v7467
        %v7470 = vor.u32 %v7468, %v7469
        %v7471 = vsub.s32 4294967266, %v7466
        %v7472 = vadd.s32 %v7471, 127
        %v7473 = vshll.u32 %v7472, 23
        %v7474 = vor.u32 4788187, %v7473
        %v7475 = vand.u32 2147483647, %v7474
        %v7477 = vcvt.s32.f32 %v7470
        %v7478 = vmul.f32 %v7477, %v7475
        %v7479 = vxor.u32 %v7478, 2147483648
        %v7480 = vsel %vm7359, %v7479, %v7478
        %v7481 = vsub.s32 4, %v7457
        %v7482 = vsel %vm7359, %v7481, %v7457
        %v7483 = vsel %vm7358, %v517, %v7480
        %v7484 = vsel %vm7358, 0, %v7482
        %v7485 = vmul.f32 %v7483, %v7483
        %v7486 = vmul.f32 %v7485, -0.001358992
        %v7487 = vadd.f32 %v7486, 0.041655596
        %v7488 = vmul.f32 %v7485, %v7487
        %v7489 = vadd.f32 %v7488, -0.4999988
        %v7490 = vmul.f32 %v7485, %v7489
        %v7491 = vadd.f32 1.0, %v7490
        %v7492 = vmul.f32 %v7483, %v7483
        %v7493 = vmul.f32 %v7492, -0.00019511016
        %v7494 = vadd.f32 %v7493, 0.008332121
        %v7495 = vmul.f32 %v7492, %v7494
        %v7496 = vadd.f32 %v7495, -0.16666654
        %v7497 = vmul.f32 %v7492, %v7496
        %v7498 = vadd.f32 %v7497, 1.0
        %v7499 = vmul.f32 %v7498, %v7483
        %vm7500 = vweird.f32 %v517
        %v7501 = vadd.s32 %v7484, 3
        %v7502 = vand.u32 %v7501, 3
        %vm7503 = vcmp.lt.s32.totalorder %v7502, 2
        %vm7504 = vcmp.eq.s32.totalorder %v7502, 0
        %v7505 = vxor.u32 %v7499, 2147483648
        %v7506 = vsel %vm7504, %v7491, %v7505
        %vm7507 = vcmp.eq.s32.totalorder %v7502, 2
        %v7508 = vxor.u32 %v7491, 2147483648
        %v7509 = vsel %vm7507, %v7508, %v7499
        %v7510 = vsel %vm7503, %v7506, %v7509
        %v7511 = vsel %vm7500, nan, %v7510
        %v7512 = vand.u32 2147483647, %v518
        %vm7513 = vcmp.le.f32.partialorder %v7512, 0.7853982
        %vm7514 = vcmp.lt.s32.totalorder %v518, 0
        %v7515 = vand.u32 %v518, 2139095040
        %v7516 = vshrl.u32 %v7515, 23
        %v7517 = vsub.s32 %v7516, 127
        %v7518 = vand.u32 2147483647, %v518
        %v7519 = vand.u32 %v7518, 8388607
        %v7520 = vor.u32 %v7519, 8388608
        %v7521 = vsub.s32 0, %v7520
        %v7522 = vadd.s32 %v7517, 1
        %vm7523 = vcmp.gt.s32.totalorder %v7522, 0
        %v7524 = vsel %vm7523, %v7522, 0
        %v7525 = vshrl.u32 %v7524, 5
        %v7526 = vand.u32 %v7524, 31
        %v7527 = vsub.s32 32, %v7526
        %v7528 = vshrl.u32 683565275, %v7527
        %v7529 = vshll.u32 683565275, %v7526
        %v7530 = vshrl.u32 2475754826, %v7527
        %v7531 = vor.u32 %v7529, %v7530
        %v7532 = vshll.u32 2475754826, %v7526
        %v7533 = vshrl.u32 2131351028, %v7527
        %v7534 = vor.u32 %v7532, %v7533
        %v7535 = vshll.u32 2131351028, %v7526
        %v7536 = vshrl.u32 2102212464, %v7527
        %v7537 = vor.u32 %v7535, %v7536
        %v7538 = vshll.u32 2102212464, %v7526
        %v7539 = vshrl.u32 920167782, %v7527
        %v7540 = vor.u32 %v7538, %v7539
        %v7541 = vshll.u32 920167782, %v7526
        %v7542 = vshrl.u32 1326507024, %v7527
        %v7543 = vor.u32 %v7541, %v7542
        %vm7544 = vcmp.lt.s32.totalorder %v7525, 1
        %vm7545 = vcmp.lt.s32.totalorder %v7525, 2
        %vm7546 = vcmp.lt.s32.totalorder %v7525, 3
        %vm7547 = vcmp.lt.s32.totalorder %v7525, 4
        %v7548 = vsel %vm7544, %v7528, %v7531
        %v7549 = vsel %vm7547, %v7537, 2102212464
        %v7550 = vsel %vm7546, %v7534, %v7549
        %v7551 = vsel %vm7545, %v7548, %v7550
        %v7552 = vsel %vm7544, %v7531, %v7534
        %v7553 = vsel %vm7547, %v7540, 920167782
        %v7554 = vsel %vm7546, %v7537, %v7553
        %v7555 = vsel %vm7545, %v7552, %v7554
        %v7556 = vsel %vm7544, %v7534, %v7537
        %v7557 = vsel %vm7547, %v7543, 1326507024
        %v7558 = vsel %vm7546, %v7540, %v7557
        %v7559 = vsel %vm7545, %v7556, %v7558
        %v7560 = vshll.u32 %v7520, 8
        %v7561 = vand.u32 %v7560, 65535
        %v7562 = vshrl.u32 %v7560, 16
        %v7563 = vand.u32 %v7559, 65535
        %v7564 = vshrl.u32 %v7559, 16
        %v7565 = vmul.u32 %v7561, %v7563
        %v7566 = vmul.u32 %v7561, %v7564
        %v7567 = vmul.u32 %v7562, %v7563
        %v7568 = vmul.u32 %v7562, %v7564
        %v7569 = vshll.u32 %v7566, 16
        %v7570 = vshrl.u32 %v7566, 16
        %v7571 = vshll.u32 %v7567, 16
        %v7572 = vshrl.u32 %v7567, 16
        %vm7573 = vc.u32 %v7565, %v7569
        %v7574 = vsel %vm7573, 1, 0
        %v7575 = vadd.s32 %v7565, %v7569
        %v7576 = vadd.s32 %v7568, %v7574
        %vm7577 = vc.u32 %v7575, %v7571
        %v7578 = vsel %vm7577, 1, 0
        %v7579 = vadd.s32 %v7575, %v7571
        %v7580 = vadd.s32 %v7576, %v7578
        %v7581 = vadd.s32 %v7580, %v7570
        %v7582 = vadd.s32 %v7581, %v7572
        %v7583 = vand.u32 %v7560, 65535
        %v7584 = vshrl.u32 %v7560, 16
        %v7585 = vand.u32 %v7555, 65535
        %v7586 = vshrl.u32 %v7555, 16
        %v7587 = vmul.u32 %v7583, %v7585
        %v7588 = vmul.u32 %v7583, %v7586
        %v7589 = vmul.u32 %v7584, %v7585
        %v7590 = vmul.u32 %v7584, %v7586
        %v7591 = vshll.u32 %v7588, 16
        %v7592 = vshrl.u32 %v7588, 16
        %v7593 = vshll.u32 %v7589, 16
        %v7594 = vshrl.u32 %v7589, 16
        %vm7595 = vc.u32 %v7587, %v7591
        %v7596 = vsel %vm7595, 1, 0
        %v7597 = vadd.s32 %v7587, %v7591
        %v7598 = vadd.s32 %v7590, %v7596
        %vm7599 = vc.u32 %v7597, %v7593
        %v7600 = vsel %vm7599, 1, 0
        %v7601 = vadd.s32 %v7597, %v7593
        %v7602 = vadd.s32 %v7598, %v7600
        %v7603 = vadd.s32 %v7602, %v7592
        %v7604 = vadd.s32 %v7603, %v7594
        %v7605 = vmul.u32 %v7560, %v7551
        %v7606 = vadd.s32 %v7582, %v7601
        %vm7607 = vc.u32 %v7582, %v7601
        %v7608 = vadd.s32 %v7604, 1
        %v7609 = vsel %vm7607, %v7608, %v7604
        %v7610 = vadd.s32 %v7605, %v7609
        %v7611 = vadd.s32 %v7610, 536870912
        %v7612 = vshrl.u32 %v7611, 30
        %v7613 = vshll.u32 %v7612, 30
        %v7614 = vsub.s32 %v7610, %v7613
        %vm7615 = vcmp.lt.s32.totalorder %v7614, 0
        %v7616 = vsub.s32 0, %v7614
        %v7617 = vsel %vm7615, %v7616, %v7614
        %v7618 = vclz %v7617
        %v7619 = vsub.s32 %v7618, 2
        %vm7620 = vcmp.gt.s32.totalorder 0, %v7619
        %v7621 = vsel %vm7620, 0, %v7619
        %v7622 = vsub.s32 32, %v7621
        %v7623 = vshll.u32 %v7614, %v7621
        %v7624 = vshrl.u32 %v7606, %v7622
        %v7625 = vor.u32 %v7623, %v7624
        %v7626 = vsub.s32 4294967266, %v7621
        %v7627 = vadd.s32 %v7626, 127
        %v7628 = vshll.u32 %v7627, 23
        %v7629 = vor.u32 4788187, %v7628
        %v7630 = vand.u32 2147483647, %v7629
        %v7632 = vcvt.s32.f32 %v7625
        %v7633 = vmul.f32 %v7632, %v7630
        %v7634 = vxor.u32 %v7633, 2147483648
        %v7635 = vsel %vm7514, %v7634, %v7633
        %v7636 = vsub.s32 4, %v7612
        %v7637 = vsel %vm7514, %v7636, %v7612
        %v7638 = vsel %vm7513, %v518, %v7635
        %v7639 = vsel %vm7513, 0, %v7637
        %v7640 = vmul.f32 %v7638, %v7638
        %v7641 = vmul.f32 %v7640, -0.001358992
        %v7642 = vadd.f32 %v7641, 0.041655596
        %v7643 = vmul.f32 %v7640, %v7642
        %v7644 = vadd.f32 %v7643, -0.4999988
        %v7645 = vmul.f32 %v7640, %v7644
        %v7646 = vadd.f32 1.0, %v7645
        %v7647 = vmul.f32 %v7638, %v7638
        %v7648 = vmul.f32 %v7647, -0.00019511016
        %v7649 = vadd.f32 %v7648, 0.008332121
        %v7650 = vmul.f32 %v7647, %v7649
        %v7651 = vadd.f32 %v7650, -0.16666654
        %v7652 = vmul.f32 %v7647, %v7651
        %v7653 = vadd.f32 %v7652, 1.0
        %v7654 = vmul.f32 %v7653, %v7638
        %vm7655 = vweird.f32 %v518
        %v7656 = vadd.s32 %v7639, 3
        %v7657 = vand.u32 %v7656, 3
        %vm7658 = vcmp.lt.s32.totalorder %v7657, 2
        %vm7659 = vcmp.eq.s32.totalorder %v7657, 0
        %v7660 = vxor.u32 %v7654, 2147483648
        %v7661 = vsel %vm7659, %v7646, %v7660
        %vm7662 = vcmp.eq.s32.totalorder %v7657, 2
        %v7663 = vxor.u32 %v7646, 2147483648
        %v7664 = vsel %vm7662, %v7663, %v7654
        %v7665 = vsel %vm7658, %v7661, %v7664
        %v7666 = vsel %vm7655, nan, %v7665
        %v7667 = vand.u32 2147483647, %v519
        %vm7668 = vcmp.le.f32.partialorder %v7667, 0.7853982
        %vm7669 = vcmp.lt.s32.totalorder %v519, 0
        %v7670 = vand.u32 %v519, 2139095040
        %v7671 = vshrl.u32 %v7670, 23
        %v7672 = vsub.s32 %v7671, 127
        %v7673 = vand.u32 2147483647, %v519
        %v7674 = vand.u32 %v7673, 8388607
        %v7675 = vor.u32 %v7674, 8388608
        %v7676 = vsub.s32 0, %v7675
        %v7677 = vadd.s32 %v7672, 1
        %vm7678 = vcmp.gt.s32.totalorder %v7677, 0
        %v7679 = vsel %vm7678, %v7677, 0
        %v7680 = vshrl.u32 %v7679, 5
        %v7681 = vand.u32 %v7679, 31
        %v7682 = vsub.s32 32, %v7681
        %v7683 = vshrl.u32 683565275, %v7682
        %v7684 = vshll.u32 683565275, %v7681
        %v7685 = vshrl.u32 2475754826, %v7682
        %v7686 = vor.u32 %v7684, %v7685
        %v7687 = vshll.u32 2475754826, %v7681
        %v7688 = vshrl.u32 2131351028, %v7682
        %v7689 = vor.u32 %v7687, %v7688
        %v7690 = vshll.u32 2131351028, %v7681
        %v7691 = vshrl.u32 2102212464, %v7682
        %v7692 = vor.u32 %v7690, %v7691
        %v7693 = vshll.u32 2102212464, %v7681
        %v7694 = vshrl.u32 920167782, %v7682
        %v7695 = vor.u32 %v7693, %v7694
        %v7696 = vshll.u32 920167782, %v7681
        %v7697 = vshrl.u32 1326507024, %v7682
        %v7698 = vor.u32 %v7696, %v7697
        %vm7699 = vcmp.lt.s32.totalorder %v7680, 1
        %vm7700 = vcmp.lt.s32.totalorder %v7680, 2
        %vm7701 = vcmp.lt.s32.totalorder %v7680, 3
        %vm7702 = vcmp.lt.s32.totalorder %v7680, 4
        %v7703 = vsel %vm7699, %v7683, %v7686
        %v7704 = vsel %vm7702, %v7692, 2102212464
        %v7705 = vsel %vm7701, %v7689, %v7704
        %v7706 = vsel %vm7700, %v7703, %v7705
        %v7707 = vsel %vm7699, %v7686, %v7689
        %v7708 = vsel %vm7702, %v7695, 920167782
        %v7709 = vsel %vm7701, %v7692, %v7708
        %v7710 = vsel %vm7700, %v7707, %v7709
        %v7711 = vsel %vm7699, %v7689, %v7692
        %v7712 = vsel %vm7702, %v7698, 1326507024
        %v7713 = vsel %vm7701, %v7695, %v7712
        %v7714 = vsel %vm7700, %v7711, %v7713
        %v7715 = vshll.u32 %v7675, 8
        %v7716 = vand.u32 %v7715, 65535
        %v7717 = vshrl.u32 %v7715, 16
        %v7718 = vand.u32 %v7714, 65535
        %v7719 = vshrl.u32 %v7714, 16
        %v7720 = vmul.u32 %v7716, %v7718
        %v7721 = vmul.u32 %v7716, %v7719
        %v7722 = vmul.u32 %v7717, %v7718
        %v7723 = vmul.u32 %v7717, %v7719
        %v7724 = vshll.u32 %v7721, 16
        %v7725 = vshrl.u32 %v7721, 16
        %v7726 = vshll.u32 %v7722, 16
        %v7727 = vshrl.u32 %v7722, 16
        %vm7728 = vc.u32 %v7720, %v7724
        %v7729 = vsel %vm7728, 1, 0
        %v7730 = vadd.s32 %v7720, %v7724
        %v7731 = vadd.s32 %v7723, %v7729
        %vm7732 = vc.u32 %v7730, %v7726
        %v7733 = vsel %vm7732, 1, 0
        %v7734 = vadd.s32 %v7730, %v7726
        %v7735 = vadd.s32 %v7731, %v7733
        %v7736 = vadd.s32 %v7735, %v7725
        %v7737 = vadd.s32 %v7736, %v7727
        %v7738 = vand.u32 %v7715, 65535
        %v7739 = vshrl.u32 %v7715, 16
        %v7740 = vand.u32 %v7710, 65535
        %v7741 = vshrl.u32 %v7710, 16
        %v7742 = vmul.u32 %v7738, %v7740
        %v7743 = vmul.u32 %v7738, %v7741
        %v7744 = vmul.u32 %v7739, %v7740
        %v7745 = vmul.u32 %v7739, %v7741
        %v7746 = vshll.u32 %v7743, 16
        %v7747 = vshrl.u32 %v7743, 16
        %v7748 = vshll.u32 %v7744, 16
        %v7749 = vshrl.u32 %v7744, 16
        %vm7750 = vc.u32 %v7742, %v7746
        %v7751 = vsel %vm7750, 1, 0
        %v7752 = vadd.s32 %v7742, %v7746
        %v7753 = vadd.s32 %v7745, %v7751
        %vm7754 = vc.u32 %v7752, %v7748
        %v7755 = vsel %vm7754, 1, 0
        %v7756 = vadd.s32 %v7752, %v7748
        %v7757 = vadd.s32 %v7753, %v7755
        %v7758 = vadd.s32 %v7757, %v7747
        %v7759 = vadd.s32 %v7758, %v7749
        %v7760 = vmul.u32 %v7715, %v7706
        %v7761 = vadd.s32 %v7737, %v7756
        %vm7762 = vc.u32 %v7737, %v7756
        %v7763 = vadd.s32 %v7759, 1
        %v7764 = vsel %vm7762, %v7763, %v7759
        %v7765 = vadd.s32 %v7760, %v7764
        %v7766 = vadd.s32 %v7765, 536870912
        %v7767 = vshrl.u32 %v7766, 30
        %v7768 = vshll.u32 %v7767, 30
        %v7769 = vsub.s32 %v7765, %v7768
        %vm7770 = vcmp.lt.s32.totalorder %v7769, 0
        %v7771 = vsub.s32 0, %v7769
        %v7772 = vsel %vm7770, %v7771, %v7769
        %v7773 = vclz %v7772
        %v7774 = vsub.s32 %v7773, 2
        %vm7775 = vcmp.gt.s32.totalorder 0, %v7774
        %v7776 = vsel %vm7775, 0, %v7774
        %v7777 = vsub.s32 32, %v7776
        %v7778 = vshll.u32 %v7769, %v7776
        %v7779 = vshrl.u32 %v7761, %v7777
        %v7780 = vor.u32 %v7778, %v7779
        %v7781 = vsub.s32 4294967266, %v7776
        %v7782 = vadd.s32 %v7781, 127
        %v7783 = vshll.u32 %v7782, 23
        %v7784 = vor.u32 4788187, %v7783
        %v7785 = vand.u32 2147483647, %v7784
        %v7787 = vcvt.s32.f32 %v7780
        %v7788 = vmul.f32 %v7787, %v7785
        %v7789 = vxor.u32 %v7788, 2147483648
        %v7790 = vsel %vm7669, %v7789, %v7788
        %v7791 = vsub.s32 4, %v7767
        %v7792 = vsel %vm7669, %v7791, %v7767
        %v7793 = vsel %vm7668, %v519, %v7790
        %v7794 = vsel %vm7668, 0, %v7792
        %v7795 = vmul.f32 %v7793, %v7793
        %v7796 = vmul.f32 %v7795, -0.001358992
        %v7797 = vadd.f32 %v7796, 0.041655596
        %v7798 = vmul.f32 %v7795, %v7797
        %v7799 = vadd.f32 %v7798, -0.4999988
        %v7800 = vmul.f32 %v7795, %v7799
        %v7801 = vadd.f32 1.0, %v7800
        %v7802 = vmul.f32 %v7793, %v7793
        %v7803 = vmul.f32 %v7802, -0.00019511016
        %v7804 = vadd.f32 %v7803, 0.008332121
        %v7805 = vmul.f32 %v7802, %v7804
        %v7806 = vadd.f32 %v7805, -0.16666654
        %v7807 = vmul.f32 %v7802, %v7806
        %v7808 = vadd.f32 %v7807, 1.0
        %v7809 = vmul.f32 %v7808, %v7793
        %vm7810 = vweird.f32 %v519
        %v7811 = vadd.s32 %v7794, 3
        %v7812 = vand.u32 %v7811, 3
        %vm7813 = vcmp.lt.s32.totalorder %v7812, 2
        %vm7814 = vcmp.eq.s32.totalorder %v7812, 0
        %v7815 = vxor.u32 %v7809, 2147483648
        %v7816 = vsel %vm7814, %v7801, %v7815
        %vm7817 = vcmp.eq.s32.totalorder %v7812, 2
        %v7818 = vxor.u32 %v7801, 2147483648
        %v7819 = vsel %vm7817, %v7818, %v7809
        %v7820 = vsel %vm7813, %v7816, %v7819
        %v7821 = vsel %vm7810, nan, %v7820
        %v7822 = vand.u32 2147483647, %v520
        %vm7823 = vcmp.le.f32.partialorder %v7822, 0.7853982
        %vm7824 = vcmp.lt.s32.totalorder %v520, 0
        %v7825 = vand.u32 %v520, 2139095040
        %v7826 = vshrl.u32 %v7825, 23
        %v7827 = vsub.s32 %v7826, 127
        %v7828 = vand.u32 2147483647, %v520
        %v7829 = vand.u32 %v7828, 8388607
        %v7830 = vor.u32 %v7829, 8388608
        %v7831 = vsub.s32 0, %v7830
        %v7832 = vadd.s32 %v7827, 1
        %vm7833 = vcmp.gt.s32.totalorder %v7832, 0
        %v7834 = vsel %vm7833, %v7832, 0
        %v7835 = vshrl.u32 %v7834, 5
        %v7836 = vand.u32 %v7834, 31
        %v7837 = vsub.s32 32, %v7836
        %v7838 = vshrl.u32 683565275, %v7837
        %v7839 = vshll.u32 683565275, %v7836
        %v7840 = vshrl.u32 2475754826, %v7837
        %v7841 = vor.u32 %v7839, %v7840
        %v7842 = vshll.u32 2475754826, %v7836
        %v7843 = vshrl.u32 2131351028, %v7837
        %v7844 = vor.u32 %v7842, %v7843
        %v7845 = vshll.u32 2131351028, %v7836
        %v7846 = vshrl.u32 2102212464, %v7837
        %v7847 = vor.u32 %v7845, %v7846
        %v7848 = vshll.u32 2102212464, %v7836
        %v7849 = vshrl.u32 920167782, %v7837
        %v7850 = vor.u32 %v7848, %v7849
        %v7851 = vshll.u32 920167782, %v7836
        %v7852 = vshrl.u32 1326507024, %v7837
        %v7853 = vor.u32 %v7851, %v7852
        %vm7854 = vcmp.lt.s32.totalorder %v7835, 1
        %vm7855 = vcmp.lt.s32.totalorder %v7835, 2
        %vm7856 = vcmp.lt.s32.totalorder %v7835, 3
        %vm7857 = vcmp.lt.s32.totalorder %v7835, 4
        %v7858 = vsel %vm7854, %v7838, %v7841
        %v7859 = vsel %vm7857, %v7847, 2102212464
        %v7860 = vsel %vm7856, %v7844, %v7859
        %v7861 = vsel %vm7855, %v7858, %v7860
        %v7862 = vsel %vm7854, %v7841, %v7844
        %v7863 = vsel %vm7857, %v7850, 920167782
        %v7864 = vsel %vm7856, %v7847, %v7863
        %v7865 = vsel %vm7855, %v7862, %v7864
        %v7866 = vsel %vm7854, %v7844, %v7847
        %v7867 = vsel %vm7857, %v7853, 1326507024
        %v7868 = vsel %vm7856, %v7850, %v7867
        %v7869 = vsel %vm7855, %v7866, %v7868
        %v7870 = vshll.u32 %v7830, 8
        %v7871 = vand.u32 %v7870, 65535
        %v7872 = vshrl.u32 %v7870, 16
        %v7873 = vand.u32 %v7869, 65535
        %v7874 = vshrl.u32 %v7869, 16
        %v7875 = vmul.u32 %v7871, %v7873
        %v7876 = vmul.u32 %v7871, %v7874
        %v7877 = vmul.u32 %v7872, %v7873
        %v7878 = vmul.u32 %v7872, %v7874
        %v7879 = vshll.u32 %v7876, 16
        %v7880 = vshrl.u32 %v7876, 16
        %v7881 = vshll.u32 %v7877, 16
        %v7882 = vshrl.u32 %v7877, 16
        %vm7883 = vc.u32 %v7875, %v7879
        %v7884 = vsel %vm7883, 1, 0
        %v7885 = vadd.s32 %v7875, %v7879
        %v7886 = vadd.s32 %v7878, %v7884
        %vm7887 = vc.u32 %v7885, %v7881
        %v7888 = vsel %vm7887, 1, 0
        %v7889 = vadd.s32 %v7885, %v7881
        %v7890 = vadd.s32 %v7886, %v7888
        %v7891 = vadd.s32 %v7890, %v7880
        %v7892 = vadd.s32 %v7891, %v7882
        %v7893 = vand.u32 %v7870, 65535
        %v7894 = vshrl.u32 %v7870, 16
        %v7895 = vand.u32 %v7865, 65535
        %v7896 = vshrl.u32 %v7865, 16
        %v7897 = vmul.u32 %v7893, %v7895
        %v7898 = vmul.u32 %v7893, %v7896
        %v7899 = vmul.u32 %v7894, %v7895
        %v7900 = vmul.u32 %v7894, %v7896
        %v7901 = vshll.u32 %v7898, 16
        %v7902 = vshrl.u32 %v7898, 16
        %v7903 = vshll.u32 %v7899, 16
        %v7904 = vshrl.u32 %v7899, 16
        %vm7905 = vc.u32 %v7897, %v7901
        %v7906 = vsel %vm7905, 1, 0
        %v7907 = vadd.s32 %v7897, %v7901
        %v7908 = vadd.s32 %v7900, %v7906
        %vm7909 = vc.u32 %v7907, %v7903
        %v7910 = vsel %vm7909, 1, 0
        %v7911 = vadd.s32 %v7907, %v7903
        %v7912 = vadd.s32 %v7908, %v7910
        %v7913 = vadd.s32 %v7912, %v7902
        %v7914 = vadd.s32 %v7913, %v7904
        %v7915 = vmul.u32 %v7870, %v7861
        %v7916 = vadd.s32 %v7892, %v7911
        %vm7917 = vc.u32 %v7892, %v7911
        %v7918 = vadd.s32 %v7914, 1
        %v7919 = vsel %vm7917, %v7918, %v7914
        %v7920 = vadd.s32 %v7915, %v7919
        %v7921 = vadd.s32 %v7920, 536870912
        %v7922 = vshrl.u32 %v7921, 30
        %v7923 = vshll.u32 %v7922, 30
        %v7924 = vsub.s32 %v7920, %v7923
        %vm7925 = vcmp.lt.s32.totalorder %v7924, 0
        %v7926 = vsub.s32 0, %v7924
        %v7927 = vsel %vm7925, %v7926, %v7924
        %v7928 = vclz %v7927
        %v7929 = vsub.s32 %v7928, 2
        %vm7930 = vcmp.gt.s32.totalorder 0, %v7929
        %v7931 = vsel %vm7930, 0, %v7929
        %v7932 = vsub.s32 32, %v7931
        %v7933 = vshll.u32 %v7924, %v7931
        %v7934 = vshrl.u32 %v7916, %v7932
        %v7935 = vor.u32 %v7933, %v7934
        %v7936 = vsub.s32 4294967266, %v7931
        %v7937 = vadd.s32 %v7936, 127
        %v7938 = vshll.u32 %v7937, 23
        %v7939 = vor.u32 4788187, %v7938
        %v7940 = vand.u32 2147483647, %v7939
        %v7942 = vcvt.s32.f32 %v7935
        %v7943 = vmul.f32 %v7942, %v7940
        %v7944 = vxor.u32 %v7943, 2147483648
        %v7945 = vsel %vm7824, %v7944, %v7943
        %v7946 = vsub.s32 4, %v7922
        %v7947 = vsel %vm7824, %v7946, %v7922
        %v7948 = vsel %vm7823, %v520, %v7945
        %v7949 = vsel %vm7823, 0, %v7947
        %v7950 = vmul.f32 %v7948, %v7948
        %v7951 = vmul.f32 %v7950, -0.001358992
        %v7952 = vadd.f32 %v7951, 0.041655596
        %v7953 = vmul.f32 %v7950, %v7952
        %v7954 = vadd.f32 %v7953, -0.4999988
        %v7955 = vmul.f32 %v7950, %v7954
        %v7956 = vadd.f32 1.0, %v7955
        %v7957 = vmul.f32 %v7948, %v7948
        %v7958 = vmul.f32 %v7957, -0.00019511016
        %v7959 = vadd.f32 %v7958, 0.008332121
        %v7960 = vmul.f32 %v7957, %v7959
        %v7961 = vadd.f32 %v7960, -0.16666654
        %v7962 = vmul.f32 %v7957, %v7961
        %v7963 = vadd.f32 %v7962, 1.0
        %v7964 = vmul.f32 %v7963, %v7948
        %vm7965 = vweird.f32 %v520
        %v7966 = vadd.s32 %v7949, 3
        %v7967 = vand.u32 %v7966, 3
        %vm7968 = vcmp.lt.s32.totalorder %v7967, 2
        %vm7969 = vcmp.eq.s32.totalorder %v7967, 0
        %v7970 = vxor.u32 %v7964, 2147483648
        %v7971 = vsel %vm7969, %v7956, %v7970
        %vm7972 = vcmp.eq.s32.totalorder %v7967, 2
        %v7973 = vxor.u32 %v7956, 2147483648
        %v7974 = vsel %vm7972, %v7973, %v7964
        %v7975 = vsel %vm7968, %v7971, %v7974
        %v7976 = vsel %vm7965, nan, %v7975
        %v7977 = vand.u32 2147483647, %v521
        %vm7978 = vcmp.le.f32.partialorder %v7977, 0.7853982
        %vm7979 = vcmp.lt.s32.totalorder %v521, 0
        %v7980 = vand.u32 %v521, 2139095040
        %v7981 = vshrl.u32 %v7980, 23
        %v7982 = vsub.s32 %v7981, 127
        %v7983 = vand.u32 2147483647, %v521
        %v7984 = vand.u32 %v7983, 8388607
        %v7985 = vor.u32 %v7984, 8388608
        %v7986 = vsub.s32 0, %v7985
        %v7987 = vadd.s32 %v7982, 1
        %vm7988 = vcmp.gt.s32.totalorder %v7987, 0
        %v7989 = vsel %vm7988, %v7987, 0
        %v7990 = vshrl.u32 %v7989, 5
        %v7991 = vand.u32 %v7989, 31
        %v7992 = vsub.s32 32, %v7991
        %v7993 = vshrl.u32 683565275, %v7992
        %v7994 = vshll.u32 683565275, %v7991
        %v7995 = vshrl.u32 2475754826, %v7992
        %v7996 = vor.u32 %v7994, %v7995
        %v7997 = vshll.u32 2475754826, %v7991
        %v7998 = vshrl.u32 2131351028, %v7992
        %v7999 = vor.u32 %v7997, %v7998
        %v8000 = vshll.u32 2131351028, %v7991
        %v8001 = vshrl.u32 2102212464, %v7992
        %v8002 = vor.u32 %v8000, %v8001
        %v8003 = vshll.u32 2102212464, %v7991
        %v8004 = vshrl.u32 920167782, %v7992
        %v8005 = vor.u32 %v8003, %v8004
        %v8006 = vshll.u32 920167782, %v7991
        %v8007 = vshrl.u32 1326507024, %v7992
        %v8008 = vor.u32 %v8006, %v8007
        %vm8009 = vcmp.lt.s32.totalorder %v7990, 1
        %vm8010 = vcmp.lt.s32.totalorder %v7990, 2
        %vm8011 = vcmp.lt.s32.totalorder %v7990, 3
        %vm8012 = vcmp.lt.s32.totalorder %v7990, 4
        %v8013 = vsel %vm8009, %v7993, %v7996
        %v8014 = vsel %vm8012, %v8002, 2102212464
        %v8015 = vsel %vm8011, %v7999, %v8014
        %v8016 = vsel %vm8010, %v8013, %v8015
        %v8017 = vsel %vm8009, %v7996, %v7999
        %v8018 = vsel %vm8012, %v8005, 920167782
        %v8019 = vsel %vm8011, %v8002, %v8018
        %v8020 = vsel %vm8010, %v8017, %v8019
        %v8021 = vsel %vm8009, %v7999, %v8002
        %v8022 = vsel %vm8012, %v8008, 1326507024
        %v8023 = vsel %vm8011, %v8005, %v8022
        %v8024 = vsel %vm8010, %v8021, %v8023
        %v8025 = vshll.u32 %v7985, 8
        %v8026 = vand.u32 %v8025, 65535
        %v8027 = vshrl.u32 %v8025, 16
        %v8028 = vand.u32 %v8024, 65535
        %v8029 = vshrl.u32 %v8024, 16
        %v8030 = vmul.u32 %v8026, %v8028
        %v8031 = vmul.u32 %v8026, %v8029
        %v8032 = vmul.u32 %v8027, %v8028
        %v8033 = vmul.u32 %v8027, %v8029
        %v8034 = vshll.u32 %v8031, 16
        %v8035 = vshrl.u32 %v8031, 16
        %v8036 = vshll.u32 %v8032, 16
        %v8037 = vshrl.u32 %v8032, 16
        %vm8038 = vc.u32 %v8030, %v8034
        %v8039 = vsel %vm8038, 1, 0
        %v8040 = vadd.s32 %v8030, %v8034
        %v8041 = vadd.s32 %v8033, %v8039
        %vm8042 = vc.u32 %v8040, %v8036
        %v8043 = vsel %vm8042, 1, 0
        %v8044 = vadd.s32 %v8040, %v8036
        %v8045 = vadd.s32 %v8041, %v8043
        %v8046 = vadd.s32 %v8045, %v8035
        %v8047 = vadd.s32 %v8046, %v8037
        %v8048 = vand.u32 %v8025, 65535
        %v8049 = vshrl.u32 %v8025, 16
        %v8050 = vand.u32 %v8020, 65535
        %v8051 = vshrl.u32 %v8020, 16
        %v8052 = vmul.u32 %v8048, %v8050
        %v8053 = vmul.u32 %v8048, %v8051
        %v8054 = vmul.u32 %v8049, %v8050
        %v8055 = vmul.u32 %v8049, %v8051
        %v8056 = vshll.u32 %v8053, 16
        %v8057 = vshrl.u32 %v8053, 16
        %v8058 = vshll.u32 %v8054, 16
        %v8059 = vshrl.u32 %v8054, 16
        %vm8060 = vc.u32 %v8052, %v8056
        %v8061 = vsel %vm8060, 1, 0
        %v8062 = vadd.s32 %v8052, %v8056
        %v8063 = vadd.s32 %v8055, %v8061
        %vm8064 = vc.u32 %v8062, %v8058
        %v8065 = vsel %vm8064, 1, 0
        %v8066 = vadd.s32 %v8062, %v8058
        %v8067 = vadd.s32 %v8063, %v8065
        %v8068 = vadd.s32 %v8067, %v8057
        %v8069 = vadd.s32 %v8068, %v8059
        %v8070 = vmul.u32 %v8025, %v8016
        %v8071 = vadd.s32 %v8047, %v8066
        %vm8072 = vc.u32 %v8047, %v8066
        %v8073 = vadd.s32 %v8069, 1
        %v8074 = vsel %vm8072, %v8073, %v8069
        %v8075 = vadd.s32 %v8070, %v8074
        %v8076 = vadd.s32 %v8075, 536870912
        %v8077 = vshrl.u32 %v8076, 30
        %v8078 = vshll.u32 %v8077, 30
        %v8079 = vsub.s32 %v8075, %v8078
        %vm8080 = vcmp.lt.s32.totalorder %v8079, 0
        %v8081 = vsub.s32 0, %v8079
        %v8082 = vsel %vm8080, %v8081, %v8079
        %v8083 = vclz %v8082
        %v8084 = vsub.s32 %v8083, 2
        %vm8085 = vcmp.gt.s32.totalorder 0, %v8084
        %v8086 = vsel %vm8085, 0, %v8084
        %v8087 = vsub.s32 32, %v8086
        %v8088 = vshll.u32 %v8079, %v8086
        %v8089 = vshrl.u32 %v8071, %v8087
        %v8090 = vor.u32 %v8088, %v8089
        %v8091 = vsub.s32 4294967266, %v8086
        %v8092 = vadd.s32 %v8091, 127
        %v8093 = vshll.u32 %v8092, 23
        %v8094 = vor.u32 4788187, %v8093
        %v8095 = vand.u32 2147483647, %v8094
        %v8097 = vcvt.s32.f32 %v8090
        %v8098 = vmul.f32 %v8097, %v8095
        %v8099 = vxor.u32 %v8098, 2147483648
        %v8100 = vsel %vm7979, %v8099, %v8098
        %v8101 = vsub.s32 4, %v8077
        %v8102 = vsel %vm7979, %v8101, %v8077
        %v8103 = vsel %vm7978, %v521, %v8100
        %v8104 = vsel %vm7978, 0, %v8102
        %v8105 = vmul.f32 %v8103, %v8103
        %v8106 = vmul.f32 %v8105, -0.001358992
        %v8107 = vadd.f32 %v8106, 0.041655596
        %v8108 = vmul.f32 %v8105, %v8107
        %v8109 = vadd.f32 %v8108, -0.4999988
        %v8110 = vmul.f32 %v8105, %v8109
        %v8111 = vadd.f32 1.0, %v8110
        %v8112 = vmul.f32 %v8103, %v8103
        %v8113 = vmul.f32 %v8112, -0.00019511016
        %v8114 = vadd.f32 %v8113, 0.008332121
        %v8115 = vmul.f32 %v8112, %v8114
        %v8116 = vadd.f32 %v8115, -0.16666654
        %v8117 = vmul.f32 %v8112, %v8116
        %v8118 = vadd.f32 %v8117, 1.0
        %v8119 = vmul.f32 %v8118, %v8103
        %vm8120 = vweird.f32 %v521
        %v8121 = vadd.s32 %v8104, 3
        %v8122 = vand.u32 %v8121, 3
        %vm8123 = vcmp.lt.s32.totalorder %v8122, 2
        %vm8124 = vcmp.eq.s32.totalorder %v8122, 0
        %v8125 = vxor.u32 %v8119, 2147483648
        %v8126 = vsel %vm8124, %v8111, %v8125
        %vm8127 = vcmp.eq.s32.totalorder %v8122, 2
        %v8128 = vxor.u32 %v8111, 2147483648
        %v8129 = vsel %vm8127, %v8128, %v8119
        %v8130 = vsel %vm8123, %v8126, %v8129
        %v8131 = vsel %vm8120, nan, %v8130
        %v8132 = vand.u32 2147483647, %v522
        %vm8133 = vcmp.le.f32.partialorder %v8132, 0.7853982
        %vm8134 = vcmp.lt.s32.totalorder %v522, 0
        %v8135 = vand.u32 %v522, 2139095040
        %v8136 = vshrl.u32 %v8135, 23
        %v8137 = vsub.s32 %v8136, 127
        %v8138 = vand.u32 2147483647, %v522
        %v8139 = vand.u32 %v8138, 8388607
        %v8140 = vor.u32 %v8139, 8388608
        %v8141 = vsub.s32 0, %v8140
        %v8142 = vadd.s32 %v8137, 1
        %vm8143 = vcmp.gt.s32.totalorder %v8142, 0
        %v8144 = vsel %vm8143, %v8142, 0
        %v8145 = vshrl.u32 %v8144, 5
        %v8146 = vand.u32 %v8144, 31
        %v8147 = vsub.s32 32, %v8146
        %v8148 = vshrl.u32 683565275, %v8147
        %v8149 = vshll.u32 683565275, %v8146
        %v8150 = vshrl.u32 2475754826, %v8147
        %v8151 = vor.u32 %v8149, %v8150
        %v8152 = vshll.u32 2475754826, %v8146
        %v8153 = vshrl.u32 2131351028, %v8147
        %v8154 = vor.u32 %v8152, %v8153
        %v8155 = vshll.u32 2131351028, %v8146
        %v8156 = vshrl.u32 2102212464, %v8147
        %v8157 = vor.u32 %v8155, %v8156
        %v8158 = vshll.u32 2102212464, %v8146
        %v8159 = vshrl.u32 920167782, %v8147
        %v8160 = vor.u32 %v8158, %v8159
        %v8161 = vshll.u32 920167782, %v8146
        %v8162 = vshrl.u32 1326507024, %v8147
        %v8163 = vor.u32 %v8161, %v8162
        %vm8164 = vcmp.lt.s32.totalorder %v8145, 1
        %vm8165 = vcmp.lt.s32.totalorder %v8145, 2
        %vm8166 = vcmp.lt.s32.totalorder %v8145, 3
        %vm8167 = vcmp.lt.s32.totalorder %v8145, 4
        %v8168 = vsel %vm8164, %v8148, %v8151
        %v8169 = vsel %vm8167, %v8157, 2102212464
        %v8170 = vsel %vm8166, %v8154, %v8169
        %v8171 = vsel %vm8165, %v8168, %v8170
        %v8172 = vsel %vm8164, %v8151, %v8154
        %v8173 = vsel %vm8167, %v8160, 920167782
        %v8174 = vsel %vm8166, %v8157, %v8173
        %v8175 = vsel %vm8165, %v8172, %v8174
        %v8176 = vsel %vm8164, %v8154, %v8157
        %v8177 = vsel %vm8167, %v8163, 1326507024
        %v8178 = vsel %vm8166, %v8160, %v8177
        %v8179 = vsel %vm8165, %v8176, %v8178
        %v8180 = vshll.u32 %v8140, 8
        %v8181 = vand.u32 %v8180, 65535
        %v8182 = vshrl.u32 %v8180, 16
        %v8183 = vand.u32 %v8179, 65535
        %v8184 = vshrl.u32 %v8179, 16
        %v8185 = vmul.u32 %v8181, %v8183
        %v8186 = vmul.u32 %v8181, %v8184
        %v8187 = vmul.u32 %v8182, %v8183
        %v8188 = vmul.u32 %v8182, %v8184
        %v8189 = vshll.u32 %v8186, 16
        %v8190 = vshrl.u32 %v8186, 16
        %v8191 = vshll.u32 %v8187, 16
        %v8192 = vshrl.u32 %v8187, 16
        %vm8193 = vc.u32 %v8185, %v8189
        %v8194 = vsel %vm8193, 1, 0
        %v8195 = vadd.s32 %v8185, %v8189
        %v8196 = vadd.s32 %v8188, %v8194
        %vm8197 = vc.u32 %v8195, %v8191
        %v8198 = vsel %vm8197, 1, 0
        %v8199 = vadd.s32 %v8195, %v8191
        %v8200 = vadd.s32 %v8196, %v8198
        %v8201 = vadd.s32 %v8200, %v8190
        %v8202 = vadd.s32 %v8201, %v8192
        %v8203 = vand.u32 %v8180, 65535
        %v8204 = vshrl.u32 %v8180, 16
        %v8205 = vand.u32 %v8175, 65535
        %v8206 = vshrl.u32 %v8175, 16
        %v8207 = vmul.u32 %v8203, %v8205
        %v8208 = vmul.u32 %v8203, %v8206
        %v8209 = vmul.u32 %v8204, %v8205
        %v8210 = vmul.u32 %v8204, %v8206
        %v8211 = vshll.u32 %v8208, 16
        %v8212 = vshrl.u32 %v8208, 16
        %v8213 = vshll.u32 %v8209, 16
        %v8214 = vshrl.u32 %v8209, 16
        %vm8215 = vc.u32 %v8207, %v8211
        %v8216 = vsel %vm8215, 1, 0
        %v8217 = vadd.s32 %v8207, %v8211
        %v8218 = vadd.s32 %v8210, %v8216
        %vm8219 = vc.u32 %v8217, %v8213
        %v8220 = vsel %vm8219, 1, 0
        %v8221 = vadd.s32 %v8217, %v8213
        %v8222 = vadd.s32 %v8218, %v8220
        %v8223 = vadd.s32 %v8222, %v8212
        %v8224 = vadd.s32 %v8223, %v8214
        %v8225 = vmul.u32 %v8180, %v8171
        %v8226 = vadd.s32 %v8202, %v8221
        %vm8227 = vc.u32 %v8202, %v8221
        %v8228 = vadd.s32 %v8224, 1
        %v8229 = vsel %vm8227, %v8228, %v8224
        %v8230 = vadd.s32 %v8225, %v8229
        %v8231 = vadd.s32 %v8230, 536870912
        %v8232 = vshrl.u32 %v8231, 30
        %v8233 = vshll.u32 %v8232, 30
        %v8234 = vsub.s32 %v8230, %v8233
        %vm8235 = vcmp.lt.s32.totalorder %v8234, 0
        %v8236 = vsub.s32 0, %v8234
        %v8237 = vsel %vm8235, %v8236, %v8234
        %v8238 = vclz %v8237
        %v8239 = vsub.s32 %v8238, 2
        %vm8240 = vcmp.gt.s32.totalorder 0, %v8239
        %v8241 = vsel %vm8240, 0, %v8239
        %v8242 = vsub.s32 32, %v8241
        %v8243 = vshll.u32 %v8234, %v8241
        %v8244 = vshrl.u32 %v8226, %v8242
        %v8245 = vor.u32 %v8243, %v8244
        %v8246 = vsub.s32 4294967266, %v8241
        %v8247 = vadd.s32 %v8246, 127
        %v8248 = vshll.u32 %v8247, 23
        %v8249 = vor.u32 4788187, %v8248
        %v8250 = vand.u32 2147483647, %v8249
        %v8252 = vcvt.s32.f32 %v8245
        %v8253 = vmul.f32 %v8252, %v8250
        %v8254 = vxor.u32 %v8253, 2147483648
        %v8255 = vsel %vm8134, %v8254, %v8253
        %v8256 = vsub.s32 4, %v8232
        %v8257 = vsel %vm8134, %v8256, %v8232
        %v8258 = vsel %vm8133, %v522, %v8255
        %v8259 = vsel %vm8133, 0, %v8257
        %v8260 = vmul.f32 %v8258, %v8258
        %v8261 = vmul.f32 %v8260, -0.001358992
        %v8262 = vadd.f32 %v8261, 0.041655596
        %v8263 = vmul.f32 %v8260, %v8262
        %v8264 = vadd.f32 %v8263, -0.4999988
        %v8265 = vmul.f32 %v8260, %v8264
        %v8266 = vadd.f32 1.0, %v8265
        %v8267 = vmul.f32 %v8258, %v8258
        %v8268 = vmul.f32 %v8267, -0.00019511016
        %v8269 = vadd.f32 %v8268, 0.008332121
        %v8270 = vmul.f32 %v8267, %v8269
        %v8271 = vadd.f32 %v8270, -0.16666654
        %v8272 = vmul.f32 %v8267, %v8271
        %v8273 = vadd.f32 %v8272, 1.0
        %v8274 = vmul.f32 %v8273, %v8258
        %vm8275 = vweird.f32 %v522
        %v8276 = vadd.s32 %v8259, 3
        %v8277 = vand.u32 %v8276, 3
        %vm8278 = vcmp.lt.s32.totalorder %v8277, 2
        %vm8279 = vcmp.eq.s32.totalorder %v8277, 0
        %v8280 = vxor.u32 %v8274, 2147483648
        %v8281 = vsel %vm8279, %v8266, %v8280
        %vm8282 = vcmp.eq.s32.totalorder %v8277, 2
        %v8283 = vxor.u32 %v8266, 2147483648
        %v8284 = vsel %vm8282, %v8283, %v8274
        %v8285 = vsel %vm8278, %v8281, %v8284
        %v8286 = vsel %vm8275, nan, %v8285
        %v8287 = vand.u32 2147483647, %v523
        %vm8288 = vcmp.le.f32.partialorder %v8287, 0.7853982
        %vm8289 = vcmp.lt.s32.totalorder %v523, 0
        %v8290 = vand.u32 %v523, 2139095040
        %v8291 = vshrl.u32 %v8290, 23
        %v8292 = vsub.s32 %v8291, 127
        %v8293 = vand.u32 2147483647, %v523
        %v8294 = vand.u32 %v8293, 8388607
        %v8295 = vor.u32 %v8294, 8388608
        %v8296 = vsub.s32 0, %v8295
        %v8297 = vadd.s32 %v8292, 1
        %vm8298 = vcmp.gt.s32.totalorder %v8297, 0
        %v8299 = vsel %vm8298, %v8297, 0
        %v8300 = vshrl.u32 %v8299, 5
        %v8301 = vand.u32 %v8299, 31
        %v8302 = vsub.s32 32, %v8301
        %v8303 = vshrl.u32 683565275, %v8302
        %v8304 = vshll.u32 683565275, %v8301
        %v8305 = vshrl.u32 2475754826, %v8302
        %v8306 = vor.u32 %v8304, %v8305
        %v8307 = vshll.u32 2475754826, %v8301
        %v8308 = vshrl.u32 2131351028, %v8302
        %v8309 = vor.u32 %v8307, %v8308
        %v8310 = vshll.u32 2131351028, %v8301
        %v8311 = vshrl.u32 2102212464, %v8302
        %v8312 = vor.u32 %v8310, %v8311
        %v8313 = vshll.u32 2102212464, %v8301
        %v8314 = vshrl.u32 920167782, %v8302
        %v8315 = vor.u32 %v8313, %v8314
        %v8316 = vshll.u32 920167782, %v8301
        %v8317 = vshrl.u32 1326507024, %v8302
        %v8318 = vor.u32 %v8316, %v8317
        %vm8319 = vcmp.lt.s32.totalorder %v8300, 1
        %vm8320 = vcmp.lt.s32.totalorder %v8300, 2
        %vm8321 = vcmp.lt.s32.totalorder %v8300, 3
        %vm8322 = vcmp.lt.s32.totalorder %v8300, 4
        %v8323 = vsel %vm8319, %v8303, %v8306
        %v8324 = vsel %vm8322, %v8312, 2102212464
        %v8325 = vsel %vm8321, %v8309, %v8324
        %v8326 = vsel %vm8320, %v8323, %v8325
        %v8327 = vsel %vm8319, %v8306, %v8309
        %v8328 = vsel %vm8322, %v8315, 920167782
        %v8329 = vsel %vm8321, %v8312, %v8328
        %v8330 = vsel %vm8320, %v8327, %v8329
        %v8331 = vsel %vm8319, %v8309, %v8312
        %v8332 = vsel %vm8322, %v8318, 1326507024
        %v8333 = vsel %vm8321, %v8315, %v8332
        %v8334 = vsel %vm8320, %v8331, %v8333
        %v8335 = vshll.u32 %v8295, 8
        %v8336 = vand.u32 %v8335, 65535
        %v8337 = vshrl.u32 %v8335, 16
        %v8338 = vand.u32 %v8334, 65535
        %v8339 = vshrl.u32 %v8334, 16
        %v8340 = vmul.u32 %v8336, %v8338
        %v8341 = vmul.u32 %v8336, %v8339
        %v8342 = vmul.u32 %v8337, %v8338
        %v8343 = vmul.u32 %v8337, %v8339
        %v8344 = vshll.u32 %v8341, 16
        %v8345 = vshrl.u32 %v8341, 16
        %v8346 = vshll.u32 %v8342, 16
        %v8347 = vshrl.u32 %v8342, 16
        %vm8348 = vc.u32 %v8340, %v8344
        %v8349 = vsel %vm8348, 1, 0
        %v8350 = vadd.s32 %v8340, %v8344
        %v8351 = vadd.s32 %v8343, %v8349
        %vm8352 = vc.u32 %v8350, %v8346
        %v8353 = vsel %vm8352, 1, 0
        %v8354 = vadd.s32 %v8350, %v8346
        %v8355 = vadd.s32 %v8351, %v8353
        %v8356 = vadd.s32 %v8355, %v8345
        %v8357 = vadd.s32 %v8356, %v8347
        %v8358 = vand.u32 %v8335, 65535
        %v8359 = vshrl.u32 %v8335, 16
        %v8360 = vand.u32 %v8330, 65535
        %v8361 = vshrl.u32 %v8330, 16
        %v8362 = vmul.u32 %v8358, %v8360
        %v8363 = vmul.u32 %v8358, %v8361
        %v8364 = vmul.u32 %v8359, %v8360
        %v8365 = vmul.u32 %v8359, %v8361
        %v8366 = vshll.u32 %v8363, 16
        %v8367 = vshrl.u32 %v8363, 16
        %v8368 = vshll.u32 %v8364, 16
        %v8369 = vshrl.u32 %v8364, 16
        %vm8370 = vc.u32 %v8362, %v8366
        %v8371 = vsel %vm8370, 1, 0
        %v8372 = vadd.s32 %v8362, %v8366
        %v8373 = vadd.s32 %v8365, %v8371
        %vm8374 = vc.u32 %v8372, %v8368
        %v8375 = vsel %vm8374, 1, 0
        %v8376 = vadd.s32 %v8372, %v8368
        %v8377 = vadd.s32 %v8373, %v8375
        %v8378 = vadd.s32 %v8377, %v8367
        %v8379 = vadd.s32 %v8378, %v8369
        %v8380 = vmul.u32 %v8335, %v8326
        %v8381 = vadd.s32 %v8357, %v8376
        %vm8382 = vc.u32 %v8357, %v8376
        %v8383 = vadd.s32 %v8379, 1
        %v8384 = vsel %vm8382, %v8383, %v8379
        %v8385 = vadd.s32 %v8380, %v8384
        %v8386 = vadd.s32 %v8385, 536870912
        %v8387 = vshrl.u32 %v8386, 30
        %v8388 = vshll.u32 %v8387, 30
        %v8389 = vsub.s32 %v8385, %v8388
        %vm8390 = vcmp.lt.s32.totalorder %v8389, 0
        %v8391 = vsub.s32 0, %v8389
        %v8392 = vsel %vm8390, %v8391, %v8389
        %v8393 = vclz %v8392
        %v8394 = vsub.s32 %v8393, 2
        %vm8395 = vcmp.gt.s32.totalorder 0, %v8394
        %v8396 = vsel %vm8395, 0, %v8394
        %v8397 = vsub.s32 32, %v8396
        %v8398 = vshll.u32 %v8389, %v8396
        %v8399 = vshrl.u32 %v8381, %v8397
        %v8400 = vor.u32 %v8398, %v8399
        %v8401 = vsub.s32 4294967266, %v8396
        %v8402 = vadd.s32 %v8401, 127
        %v8403 = vshll.u32 %v8402, 23
        %v8404 = vor.u32 4788187, %v8403
        %v8405 = vand.u32 2147483647, %v8404
        %v8407 = vcvt.s32.f32 %v8400
        %v8408 = vmul.f32 %v8407, %v8405
        %v8409 = vxor.u32 %v8408, 2147483648
        %v8410 = vsel %vm8289, %v8409, %v8408
        %v8411 = vsub.s32 4, %v8387
        %v8412 = vsel %vm8289, %v8411, %v8387
        %v8413 = vsel %vm8288, %v523, %v8410
        %v8414 = vsel %vm8288, 0, %v8412
        %v8415 = vmul.f32 %v8413, %v8413
        %v8416 = vmul.f32 %v8415, -0.001358992
        %v8417 = vadd.f32 %v8416, 0.041655596
        %v8418 = vmul.f32 %v8415, %v8417
        %v8419 = vadd.f32 %v8418, -0.4999988
        %v8420 = vmul.f32 %v8415, %v8419
        %v8421 = vadd.f32 1.0, %v8420
        %v8422 = vmul.f32 %v8413, %v8413
        %v8423 = vmul.f32 %v8422, -0.00019511016
        %v8424 = vadd.f32 %v8423, 0.008332121
        %v8425 = vmul.f32 %v8422, %v8424
        %v8426 = vadd.f32 %v8425, -0.16666654
        %v8427 = vmul.f32 %v8422, %v8426
        %v8428 = vadd.f32 %v8427, 1.0
        %v8429 = vmul.f32 %v8428, %v8413
        %vm8430 = vweird.f32 %v523
        %v8431 = vadd.s32 %v8414, 3
        %v8432 = vand.u32 %v8431, 3
        %vm8433 = vcmp.lt.s32.totalorder %v8432, 2
        %vm8434 = vcmp.eq.s32.totalorder %v8432, 0
        %v8435 = vxor.u32 %v8429, 2147483648
        %v8436 = vsel %vm8434, %v8421, %v8435
        %vm8437 = vcmp.eq.s32.totalorder %v8432, 2
        %v8438 = vxor.u32 %v8421, 2147483648
        %v8439 = vsel %vm8437, %v8438, %v8429
        %v8440 = vsel %vm8433, %v8436, %v8439
        %v8441 = vsel %vm8430, nan, %v8440
        %v8442 = vand.u32 2147483647, %v524
        %vm8443 = vcmp.le.f32.partialorder %v8442, 0.7853982
        %vm8444 = vcmp.lt.s32.totalorder %v524, 0
        %v8445 = vand.u32 %v524, 2139095040
        %v8446 = vshrl.u32 %v8445, 23
        %v8447 = vsub.s32 %v8446, 127
        %v8448 = vand.u32 2147483647, %v524
        %v8449 = vand.u32 %v8448, 8388607
        %v8450 = vor.u32 %v8449, 8388608
        %v8451 = vsub.s32 0, %v8450
        %v8452 = vadd.s32 %v8447, 1
        %vm8453 = vcmp.gt.s32.totalorder %v8452, 0
        %v8454 = vsel %vm8453, %v8452, 0
        %v8455 = vshrl.u32 %v8454, 5
        %v8456 = vand.u32 %v8454, 31
        %v8457 = vsub.s32 32, %v8456
        %v8458 = vshrl.u32 683565275, %v8457
        %v8459 = vshll.u32 683565275, %v8456
        %v8460 = vshrl.u32 2475754826, %v8457
        %v8461 = vor.u32 %v8459, %v8460
        %v8462 = vshll.u32 2475754826, %v8456
        %v8463 = vshrl.u32 2131351028, %v8457
        %v8464 = vor.u32 %v8462, %v8463
        %v8465 = vshll.u32 2131351028, %v8456
        %v8466 = vshrl.u32 2102212464, %v8457
        %v8467 = vor.u32 %v8465, %v8466
        %v8468 = vshll.u32 2102212464, %v8456
        %v8469 = vshrl.u32 920167782, %v8457
        %v8470 = vor.u32 %v8468, %v8469
        %v8471 = vshll.u32 920167782, %v8456
        %v8472 = vshrl.u32 1326507024, %v8457
        %v8473 = vor.u32 %v8471, %v8472
        %vm8474 = vcmp.lt.s32.totalorder %v8455, 1
        %vm8475 = vcmp.lt.s32.totalorder %v8455, 2
        %vm8476 = vcmp.lt.s32.totalorder %v8455, 3
        %vm8477 = vcmp.lt.s32.totalorder %v8455, 4
        %v8478 = vsel %vm8474, %v8458, %v8461
        %v8479 = vsel %vm8477, %v8467, 2102212464
        %v8480 = vsel %vm8476, %v8464, %v8479
        %v8481 = vsel %vm8475, %v8478, %v8480
        %v8482 = vsel %vm8474, %v8461, %v8464
        %v8483 = vsel %vm8477, %v8470, 920167782
        %v8484 = vsel %vm8476, %v8467, %v8483
        %v8485 = vsel %vm8475, %v8482, %v8484
        %v8486 = vsel %vm8474, %v8464, %v8467
        %v8487 = vsel %vm8477, %v8473, 1326507024
        %v8488 = vsel %vm8476, %v8470, %v8487
        %v8489 = vsel %vm8475, %v8486, %v8488
        %v8490 = vshll.u32 %v8450, 8
        %v8491 = vand.u32 %v8490, 65535
        %v8492 = vshrl.u32 %v8490, 16
        %v8493 = vand.u32 %v8489, 65535
        %v8494 = vshrl.u32 %v8489, 16
        %v8495 = vmul.u32 %v8491, %v8493
        %v8496 = vmul.u32 %v8491, %v8494
        %v8497 = vmul.u32 %v8492, %v8493
        %v8498 = vmul.u32 %v8492, %v8494
        %v8499 = vshll.u32 %v8496, 16
        %v8500 = vshrl.u32 %v8496, 16
        %v8501 = vshll.u32 %v8497, 16
        %v8502 = vshrl.u32 %v8497, 16
        %vm8503 = vc.u32 %v8495, %v8499
        %v8504 = vsel %vm8503, 1, 0
        %v8505 = vadd.s32 %v8495, %v8499
        %v8506 = vadd.s32 %v8498, %v8504
        %vm8507 = vc.u32 %v8505, %v8501
        %v8508 = vsel %vm8507, 1, 0
        %v8509 = vadd.s32 %v8505, %v8501
        %v8510 = vadd.s32 %v8506, %v8508
        %v8511 = vadd.s32 %v8510, %v8500
        %v8512 = vadd.s32 %v8511, %v8502
        %v8513 = vand.u32 %v8490, 65535
        %v8514 = vshrl.u32 %v8490, 16
        %v8515 = vand.u32 %v8485, 65535
        %v8516 = vshrl.u32 %v8485, 16
        %v8517 = vmul.u32 %v8513, %v8515
        %v8518 = vmul.u32 %v8513, %v8516
        %v8519 = vmul.u32 %v8514, %v8515
        %v8520 = vmul.u32 %v8514, %v8516
        %v8521 = vshll.u32 %v8518, 16
        %v8522 = vshrl.u32 %v8518, 16
        %v8523 = vshll.u32 %v8519, 16
        %v8524 = vshrl.u32 %v8519, 16
        %vm8525 = vc.u32 %v8517, %v8521
        %v8526 = vsel %vm8525, 1, 0
        %v8527 = vadd.s32 %v8517, %v8521
        %v8528 = vadd.s32 %v8520, %v8526
        %vm8529 = vc.u32 %v8527, %v8523
        %v8530 = vsel %vm8529, 1, 0
        %v8531 = vadd.s32 %v8527, %v8523
        %v8532 = vadd.s32 %v8528, %v8530
        %v8533 = vadd.s32 %v8532, %v8522
        %v8534 = vadd.s32 %v8533, %v8524
        %v8535 = vmul.u32 %v8490, %v8481
        %v8536 = vadd.s32 %v8512, %v8531
        %vm8537 = vc.u32 %v8512, %v8531
        %v8538 = vadd.s32 %v8534, 1
        %v8539 = vsel %vm8537, %v8538, %v8534
        %v8540 = vadd.s32 %v8535, %v8539
        %v8541 = vadd.s32 %v8540, 536870912
        %v8542 = vshrl.u32 %v8541, 30
        %v8543 = vshll.u32 %v8542, 30
        %v8544 = vsub.s32 %v8540, %v8543
        %vm8545 = vcmp.lt.s32.totalorder %v8544, 0
        %v8546 = vsub.s32 0, %v8544
        %v8547 = vsel %vm8545, %v8546, %v8544
        %v8548 = vclz %v8547
        %v8549 = vsub.s32 %v8548, 2
        %vm8550 = vcmp.gt.s32.totalorder 0, %v8549
        %v8551 = vsel %vm8550, 0, %v8549
        %v8552 = vsub.s32 32, %v8551
        %v8553 = vshll.u32 %v8544, %v8551
        %v8554 = vshrl.u32 %v8536, %v8552
        %v8555 = vor.u32 %v8553, %v8554
        %v8556 = vsub.s32 4294967266, %v8551
        %v8557 = vadd.s32 %v8556, 127
        %v8558 = vshll.u32 %v8557, 23
        %v8559 = vor.u32 4788187, %v8558
        %v8560 = vand.u32 2147483647, %v8559
        %v8562 = vcvt.s32.f32 %v8555
        %v8563 = vmul.f32 %v8562, %v8560
        %v8564 = vxor.u32 %v8563, 2147483648
        %v8565 = vsel %vm8444, %v8564, %v8563
        %v8566 = vsub.s32 4, %v8542
        %v8567 = vsel %vm8444, %v8566, %v8542
        %v8568 = vsel %vm8443, %v524, %v8565
        %v8569 = vsel %vm8443, 0, %v8567
        %v8570 = vmul.f32 %v8568, %v8568
        %v8571 = vmul.f32 %v8570, -0.001358992
        %v8572 = vadd.f32 %v8571, 0.041655596
        %v8573 = vmul.f32 %v8570, %v8572
        %v8574 = vadd.f32 %v8573, -0.4999988
        %v8575 = vmul.f32 %v8570, %v8574
        %v8576 = vadd.f32 1.0, %v8575
        %v8577 = vmul.f32 %v8568, %v8568
        %v8578 = vmul.f32 %v8577, -0.00019511016
        %v8579 = vadd.f32 %v8578, 0.008332121
        %v8580 = vmul.f32 %v8577, %v8579
        %v8581 = vadd.f32 %v8580, -0.16666654
        %v8582 = vmul.f32 %v8577, %v8581
        %v8583 = vadd.f32 %v8582, 1.0
        %v8584 = vmul.f32 %v8583, %v8568
        %vm8585 = vweird.f32 %v524
        %v8586 = vadd.s32 %v8569, 3
        %v8587 = vand.u32 %v8586, 3
        %vm8588 = vcmp.lt.s32.totalorder %v8587, 2
        %vm8589 = vcmp.eq.s32.totalorder %v8587, 0
        %v8590 = vxor.u32 %v8584, 2147483648
        %v8591 = vsel %vm8589, %v8576, %v8590
        %vm8592 = vcmp.eq.s32.totalorder %v8587, 2
        %v8593 = vxor.u32 %v8576, 2147483648
        %v8594 = vsel %vm8592, %v8593, %v8584
        %v8595 = vsel %vm8588, %v8591, %v8594
        %v8596 = vsel %vm8585, nan, %v8595
        %v8597 = vand.u32 2147483647, %v525
        %vm8598 = vcmp.le.f32.partialorder %v8597, 0.7853982
        %vm8599 = vcmp.lt.s32.totalorder %v525, 0
        %v8600 = vand.u32 %v525, 2139095040
        %v8601 = vshrl.u32 %v8600, 23
        %v8602 = vsub.s32 %v8601, 127
        %v8603 = vand.u32 2147483647, %v525
        %v8604 = vand.u32 %v8603, 8388607
        %v8605 = vor.u32 %v8604, 8388608
        %v8606 = vsub.s32 0, %v8605
        %v8607 = vadd.s32 %v8602, 1
        %vm8608 = vcmp.gt.s32.totalorder %v8607, 0
        %v8609 = vsel %vm8608, %v8607, 0
        %v8610 = vshrl.u32 %v8609, 5
        %v8611 = vand.u32 %v8609, 31
        %v8612 = vsub.s32 32, %v8611
        %v8613 = vshrl.u32 683565275, %v8612
        %v8614 = vshll.u32 683565275, %v8611
        %v8615 = vshrl.u32 2475754826, %v8612
        %v8616 = vor.u32 %v8614, %v8615
        %v8617 = vshll.u32 2475754826, %v8611
        %v8618 = vshrl.u32 2131351028, %v8612
        %v8619 = vor.u32 %v8617, %v8618
        %v8620 = vshll.u32 2131351028, %v8611
        %v8621 = vshrl.u32 2102212464, %v8612
        %v8622 = vor.u32 %v8620, %v8621
        %v8623 = vshll.u32 2102212464, %v8611
        %v8624 = vshrl.u32 920167782, %v8612
        %v8625 = vor.u32 %v8623, %v8624
        %v8626 = vshll.u32 920167782, %v8611
        %v8627 = vshrl.u32 1326507024, %v8612
        %v8628 = vor.u32 %v8626, %v8627
        %vm8629 = vcmp.lt.s32.totalorder %v8610, 1
        %vm8630 = vcmp.lt.s32.totalorder %v8610, 2
        %vm8631 = vcmp.lt.s32.totalorder %v8610, 3
        %vm8632 = vcmp.lt.s32.totalorder %v8610, 4
        %v8633 = vsel %vm8629, %v8613, %v8616
        %v8634 = vsel %vm8632, %v8622, 2102212464
        %v8635 = vsel %vm8631, %v8619, %v8634
        %v8636 = vsel %vm8630, %v8633, %v8635
        %v8637 = vsel %vm8629, %v8616, %v8619
        %v8638 = vsel %vm8632, %v8625, 920167782
        %v8639 = vsel %vm8631, %v8622, %v8638
        %v8640 = vsel %vm8630, %v8637, %v8639
        %v8641 = vsel %vm8629, %v8619, %v8622
        %v8642 = vsel %vm8632, %v8628, 1326507024
        %v8643 = vsel %vm8631, %v8625, %v8642
        %v8644 = vsel %vm8630, %v8641, %v8643
        %v8645 = vshll.u32 %v8605, 8
        %v8646 = vand.u32 %v8645, 65535
        %v8647 = vshrl.u32 %v8645, 16
        %v8648 = vand.u32 %v8644, 65535
        %v8649 = vshrl.u32 %v8644, 16
        %v8650 = vmul.u32 %v8646, %v8648
        %v8651 = vmul.u32 %v8646, %v8649
        %v8652 = vmul.u32 %v8647, %v8648
        %v8653 = vmul.u32 %v8647, %v8649
        %v8654 = vshll.u32 %v8651, 16
        %v8655 = vshrl.u32 %v8651, 16
        %v8656 = vshll.u32 %v8652, 16
        %v8657 = vshrl.u32 %v8652, 16
        %vm8658 = vc.u32 %v8650, %v8654
        %v8659 = vsel %vm8658, 1, 0
        %v8660 = vadd.s32 %v8650, %v8654
        %v8661 = vadd.s32 %v8653, %v8659
        %vm8662 = vc.u32 %v8660, %v8656
        %v8663 = vsel %vm8662, 1, 0
        %v8664 = vadd.s32 %v8660, %v8656
        %v8665 = vadd.s32 %v8661, %v8663
        %v8666 = vadd.s32 %v8665, %v8655
        %v8667 = vadd.s32 %v8666, %v8657
        %v8668 = vand.u32 %v8645, 65535
        %v8669 = vshrl.u32 %v8645, 16
        %v8670 = vand.u32 %v8640, 65535
        %v8671 = vshrl.u32 %v8640, 16
        %v8672 = vmul.u32 %v8668, %v8670
        %v8673 = vmul.u32 %v8668, %v8671
        %v8674 = vmul.u32 %v8669, %v8670
        %v8675 = vmul.u32 %v8669, %v8671
        %v8676 = vshll.u32 %v8673, 16
        %v8677 = vshrl.u32 %v8673, 16
        %v8678 = vshll.u32 %v8674, 16
        %v8679 = vshrl.u32 %v8674, 16
        %vm8680 = vc.u32 %v8672, %v8676
        %v8681 = vsel %vm8680, 1, 0
        %v8682 = vadd.s32 %v8672, %v8676
        %v8683 = vadd.s32 %v8675, %v8681
        %vm8684 = vc.u32 %v8682, %v8678
        %v8685 = vsel %vm8684, 1, 0
        %v8686 = vadd.s32 %v8682, %v8678
        %v8687 = vadd.s32 %v8683, %v8685
        %v8688 = vadd.s32 %v8687, %v8677
        %v8689 = vadd.s32 %v8688, %v8679
        %v8690 = vmul.u32 %v8645, %v8636
        %v8691 = vadd.s32 %v8667, %v8686
        %vm8692 = vc.u32 %v8667, %v8686
        %v8693 = vadd.s32 %v8689, 1
        %v8694 = vsel %vm8692, %v8693, %v8689
        %v8695 = vadd.s32 %v8690, %v8694
        %v8696 = vadd.s32 %v8695, 536870912
        %v8697 = vshrl.u32 %v8696, 30
        %v8698 = vshll.u32 %v8697, 30
        %v8699 = vsub.s32 %v8695, %v8698
        %vm8700 = vcmp.lt.s32.totalorder %v8699, 0
        %v8701 = vsub.s32 0, %v8699
        %v8702 = vsel %vm8700, %v8701, %v8699
        %v8703 = vclz %v8702
        %v8704 = vsub.s32 %v8703, 2
        %vm8705 = vcmp.gt.s32.totalorder 0, %v8704
        %v8706 = vsel %vm8705, 0, %v8704
        %v8707 = vsub.s32 32, %v8706
        %v8708 = vshll.u32 %v8699, %v8706
        %v8709 = vshrl.u32 %v8691, %v8707
        %v8710 = vor.u32 %v8708, %v8709
        %v8711 = vsub.s32 4294967266, %v8706
        %v8712 = vadd.s32 %v8711, 127
        %v8713 = vshll.u32 %v8712, 23
        %v8714 = vor.u32 4788187, %v8713
        %v8715 = vand.u32 2147483647, %v8714
        %v8717 = vcvt.s32.f32 %v8710
        %v8718 = vmul.f32 %v8717, %v8715
        %v8719 = vxor.u32 %v8718, 2147483648
        %v8720 = vsel %vm8599, %v8719, %v8718
        %v8721 = vsub.s32 4, %v8697
        %v8722 = vsel %vm8599, %v8721, %v8697
        %v8723 = vsel %vm8598, %v525, %v8720
        %v8724 = vsel %vm8598, 0, %v8722
        %v8725 = vmul.f32 %v8723, %v8723
        %v8726 = vmul.f32 %v8725, -0.001358992
        %v8727 = vadd.f32 %v8726, 0.041655596
        %v8728 = vmul.f32 %v8725, %v8727
        %v8729 = vadd.f32 %v8728, -0.4999988
        %v8730 = vmul.f32 %v8725, %v8729
        %v8731 = vadd.f32 1.0, %v8730
        %v8732 = vmul.f32 %v8723, %v8723
        %v8733 = vmul.f32 %v8732, -0.00019511016
        %v8734 = vadd.f32 %v8733, 0.008332121
        %v8735 = vmul.f32 %v8732, %v8734
        %v8736 = vadd.f32 %v8735, -0.16666654
        %v8737 = vmul.f32 %v8732, %v8736
        %v8738 = vadd.f32 %v8737, 1.0
        %v8739 = vmul.f32 %v8738, %v8723
        %vm8740 = vweird.f32 %v525
        %v8741 = vadd.s32 %v8724, 3
        %v8742 = vand.u32 %v8741, 3
        %vm8743 = vcmp.lt.s32.totalorder %v8742, 2
        %vm8744 = vcmp.eq.s32.totalorder %v8742, 0
        %v8745 = vxor.u32 %v8739, 2147483648
        %v8746 = vsel %vm8744, %v8731, %v8745
        %vm8747 = vcmp.eq.s32.totalorder %v8742, 2
        %v8748 = vxor.u32 %v8731, 2147483648
        %v8749 = vsel %vm8747, %v8748, %v8739
        %v8750 = vsel %vm8743, %v8746, %v8749
        %v8751 = vsel %vm8740, nan, %v8750
        %v8752 = vand.u32 2147483647, %v526
        %vm8753 = vcmp.le.f32.partialorder %v8752, 0.7853982
        %vm8754 = vcmp.lt.s32.totalorder %v526, 0
        %v8755 = vand.u32 %v526, 2139095040
        %v8756 = vshrl.u32 %v8755, 23
        %v8757 = vsub.s32 %v8756, 127
        %v8758 = vand.u32 2147483647, %v526
        %v8759 = vand.u32 %v8758, 8388607
        %v8760 = vor.u32 %v8759, 8388608
        %v8761 = vsub.s32 0, %v8760
        %v8762 = vadd.s32 %v8757, 1
        %vm8763 = vcmp.gt.s32.totalorder %v8762, 0
        %v8764 = vsel %vm8763, %v8762, 0
        %v8765 = vshrl.u32 %v8764, 5
        %v8766 = vand.u32 %v8764, 31
        %v8767 = vsub.s32 32, %v8766
        %v8768 = vshrl.u32 683565275, %v8767
        %v8769 = vshll.u32 683565275, %v8766
        %v8770 = vshrl.u32 2475754826, %v8767
        %v8771 = vor.u32 %v8769, %v8770
        %v8772 = vshll.u32 2475754826, %v8766
        %v8773 = vshrl.u32 2131351028, %v8767
        %v8774 = vor.u32 %v8772, %v8773
        %v8775 = vshll.u32 2131351028, %v8766
        %v8776 = vshrl.u32 2102212464, %v8767
        %v8777 = vor.u32 %v8775, %v8776
        %v8778 = vshll.u32 2102212464, %v8766
        %v8779 = vshrl.u32 920167782, %v8767
        %v8780 = vor.u32 %v8778, %v8779
        %v8781 = vshll.u32 920167782, %v8766
        %v8782 = vshrl.u32 1326507024, %v8767
        %v8783 = vor.u32 %v8781, %v8782
        %vm8784 = vcmp.lt.s32.totalorder %v8765, 1
        %vm8785 = vcmp.lt.s32.totalorder %v8765, 2
        %vm8786 = vcmp.lt.s32.totalorder %v8765, 3
        %vm8787 = vcmp.lt.s32.totalorder %v8765, 4
        %v8788 = vsel %vm8784, %v8768, %v8771
        %v8789 = vsel %vm8787, %v8777, 2102212464
        %v8790 = vsel %vm8786, %v8774, %v8789
        %v8791 = vsel %vm8785, %v8788, %v8790
        %v8792 = vsel %vm8784, %v8771, %v8774
        %v8793 = vsel %vm8787, %v8780, 920167782
        %v8794 = vsel %vm8786, %v8777, %v8793
        %v8795 = vsel %vm8785, %v8792, %v8794
        %v8796 = vsel %vm8784, %v8774, %v8777
        %v8797 = vsel %vm8787, %v8783, 1326507024
        %v8798 = vsel %vm8786, %v8780, %v8797
        %v8799 = vsel %vm8785, %v8796, %v8798
        %v8800 = vshll.u32 %v8760, 8
        %v8801 = vand.u32 %v8800, 65535
        %v8802 = vshrl.u32 %v8800, 16
        %v8803 = vand.u32 %v8799, 65535
        %v8804 = vshrl.u32 %v8799, 16
        %v8805 = vmul.u32 %v8801, %v8803
        %v8806 = vmul.u32 %v8801, %v8804
        %v8807 = vmul.u32 %v8802, %v8803
        %v8808 = vmul.u32 %v8802, %v8804
        %v8809 = vshll.u32 %v8806, 16
        %v8810 = vshrl.u32 %v8806, 16
        %v8811 = vshll.u32 %v8807, 16
        %v8812 = vshrl.u32 %v8807, 16
        %vm8813 = vc.u32 %v8805, %v8809
        %v8814 = vsel %vm8813, 1, 0
        %v8815 = vadd.s32 %v8805, %v8809
        %v8816 = vadd.s32 %v8808, %v8814
        %vm8817 = vc.u32 %v8815, %v8811
        %v8818 = vsel %vm8817, 1, 0
        %v8819 = vadd.s32 %v8815, %v8811
        %v8820 = vadd.s32 %v8816, %v8818
        %v8821 = vadd.s32 %v8820, %v8810
        %v8822 = vadd.s32 %v8821, %v8812
        %v8823 = vand.u32 %v8800, 65535
        %v8824 = vshrl.u32 %v8800, 16
        %v8825 = vand.u32 %v8795, 65535
        %v8826 = vshrl.u32 %v8795, 16
        %v8827 = vmul.u32 %v8823, %v8825
        %v8828 = vmul.u32 %v8823, %v8826
        %v8829 = vmul.u32 %v8824, %v8825
        %v8830 = vmul.u32 %v8824, %v8826
        %v8831 = vshll.u32 %v8828, 16
        %v8832 = vshrl.u32 %v8828, 16
        %v8833 = vshll.u32 %v8829, 16
        %v8834 = vshrl.u32 %v8829, 16
        %vm8835 = vc.u32 %v8827, %v8831
        %v8836 = vsel %vm8835, 1, 0
        %v8837 = vadd.s32 %v8827, %v8831
        %v8838 = vadd.s32 %v8830, %v8836
        %vm8839 = vc.u32 %v8837, %v8833
        %v8840 = vsel %vm8839, 1, 0
        %v8841 = vadd.s32 %v8837, %v8833
        %v8842 = vadd.s32 %v8838, %v8840
        %v8843 = vadd.s32 %v8842, %v8832
        %v8844 = vadd.s32 %v8843, %v8834
        %v8845 = vmul.u32 %v8800, %v8791
        %v8846 = vadd.s32 %v8822, %v8841
        %vm8847 = vc.u32 %v8822, %v8841
        %v8848 = vadd.s32 %v8844, 1
        %v8849 = vsel %vm8847, %v8848, %v8844
        %v8850 = vadd.s32 %v8845, %v8849
        %v8851 = vadd.s32 %v8850, 536870912
        %v8852 = vshrl.u32 %v8851, 30
        %v8853 = vshll.u32 %v8852, 30
        %v8854 = vsub.s32 %v8850, %v8853
        %vm8855 = vcmp.lt.s32.totalorder %v8854, 0
        %v8856 = vsub.s32 0, %v8854
        %v8857 = vsel %vm8855, %v8856, %v8854
        %v8858 = vclz %v8857
        %v8859 = vsub.s32 %v8858, 2
        %vm8860 = vcmp.gt.s32.totalorder 0, %v8859
        %v8861 = vsel %vm8860, 0, %v8859
        %v8862 = vsub.s32 32, %v8861
        %v8863 = vshll.u32 %v8854, %v8861
        %v8864 = vshrl.u32 %v8846, %v8862
        %v8865 = vor.u32 %v8863, %v8864
        %v8866 = vsub.s32 4294967266, %v8861
        %v8867 = vadd.s32 %v8866, 127
        %v8868 = vshll.u32 %v8867, 23
        %v8869 = vor.u32 4788187, %v8868
        %v8870 = vand.u32 2147483647, %v8869
        %v8872 = vcvt.s32.f32 %v8865
        %v8873 = vmul.f32 %v8872, %v8870
        %v8874 = vxor.u32 %v8873, 2147483648
        %v8875 = vsel %vm8754, %v8874, %v8873
        %v8876 = vsub.s32 4, %v8852
        %v8877 = vsel %vm8754, %v8876, %v8852
        %v8878 = vsel %vm8753, %v526, %v8875
        %v8879 = vsel %vm8753, 0, %v8877
        %v8880 = vmul.f32 %v8878, %v8878
        %v8881 = vmul.f32 %v8880, -0.001358992
        %v8882 = vadd.f32 %v8881, 0.041655596
        %v8883 = vmul.f32 %v8880, %v8882
        %v8884 = vadd.f32 %v8883, -0.4999988
        %v8885 = vmul.f32 %v8880, %v8884
        %v8886 = vadd.f32 1.0, %v8885
        %v8887 = vmul.f32 %v8878, %v8878
        %v8888 = vmul.f32 %v8887, -0.00019511016
        %v8889 = vadd.f32 %v8888, 0.008332121
        %v8890 = vmul.f32 %v8887, %v8889
        %v8891 = vadd.f32 %v8890, -0.16666654
        %v8892 = vmul.f32 %v8887, %v8891
        %v8893 = vadd.f32 %v8892, 1.0
        %v8894 = vmul.f32 %v8893, %v8878
        %vm8895 = vweird.f32 %v526
        %v8896 = vadd.s32 %v8879, 3
        %v8897 = vand.u32 %v8896, 3
        %vm8898 = vcmp.lt.s32.totalorder %v8897, 2
        %vm8899 = vcmp.eq.s32.totalorder %v8897, 0
        %v8900 = vxor.u32 %v8894, 2147483648
        %v8901 = vsel %vm8899, %v8886, %v8900
        %vm8902 = vcmp.eq.s32.totalorder %v8897, 2
        %v8903 = vxor.u32 %v8886, 2147483648
        %v8904 = vsel %vm8902, %v8903, %v8894
        %v8905 = vsel %vm8898, %v8901, %v8904
        %v8906 = vsel %vm8895, nan, %v8905
        %v8907 = vand.u32 2147483647, %v527
        %vm8908 = vcmp.le.f32.partialorder %v8907, 0.7853982
        %vm8909 = vcmp.lt.s32.totalorder %v527, 0
        %v8910 = vand.u32 %v527, 2139095040
        %v8911 = vshrl.u32 %v8910, 23
        %v8912 = vsub.s32 %v8911, 127
        %v8913 = vand.u32 2147483647, %v527
        %v8914 = vand.u32 %v8913, 8388607
        %v8915 = vor.u32 %v8914, 8388608
        %v8916 = vsub.s32 0, %v8915
        %v8917 = vadd.s32 %v8912, 1
        %vm8918 = vcmp.gt.s32.totalorder %v8917, 0
        %v8919 = vsel %vm8918, %v8917, 0
        %v8920 = vshrl.u32 %v8919, 5
        %v8921 = vand.u32 %v8919, 31
        %v8922 = vsub.s32 32, %v8921
        %v8923 = vshrl.u32 683565275, %v8922
        %v8924 = vshll.u32 683565275, %v8921
        %v8925 = vshrl.u32 2475754826, %v8922
        %v8926 = vor.u32 %v8924, %v8925
        %v8927 = vshll.u32 2475754826, %v8921
        %v8928 = vshrl.u32 2131351028, %v8922
        %v8929 = vor.u32 %v8927, %v8928
        %v8930 = vshll.u32 2131351028, %v8921
        %v8931 = vshrl.u32 2102212464, %v8922
        %v8932 = vor.u32 %v8930, %v8931
        %v8933 = vshll.u32 2102212464, %v8921
        %v8934 = vshrl.u32 920167782, %v8922
        %v8935 = vor.u32 %v8933, %v8934
        %v8936 = vshll.u32 920167782, %v8921
        %v8937 = vshrl.u32 1326507024, %v8922
        %v8938 = vor.u32 %v8936, %v8937
        %vm8939 = vcmp.lt.s32.totalorder %v8920, 1
        %vm8940 = vcmp.lt.s32.totalorder %v8920, 2
        %vm8941 = vcmp.lt.s32.totalorder %v8920, 3
        %vm8942 = vcmp.lt.s32.totalorder %v8920, 4
        %v8943 = vsel %vm8939, %v8923, %v8926
        %v8944 = vsel %vm8942, %v8932, 2102212464
        %v8945 = vsel %vm8941, %v8929, %v8944
        %v8946 = vsel %vm8940, %v8943, %v8945
        %v8947 = vsel %vm8939, %v8926, %v8929
        %v8948 = vsel %vm8942, %v8935, 920167782
        %v8949 = vsel %vm8941, %v8932, %v8948
        %v8950 = vsel %vm8940, %v8947, %v8949
        %v8951 = vsel %vm8939, %v8929, %v8932
        %v8952 = vsel %vm8942, %v8938, 1326507024
        %v8953 = vsel %vm8941, %v8935, %v8952
        %v8954 = vsel %vm8940, %v8951, %v8953
        %v8955 = vshll.u32 %v8915, 8
        %v8956 = vand.u32 %v8955, 65535
        %v8957 = vshrl.u32 %v8955, 16
        %v8958 = vand.u32 %v8954, 65535
        %v8959 = vshrl.u32 %v8954, 16
        %v8960 = vmul.u32 %v8956, %v8958
        %v8961 = vmul.u32 %v8956, %v8959
        %v8962 = vmul.u32 %v8957, %v8958
        %v8963 = vmul.u32 %v8957, %v8959
        %v8964 = vshll.u32 %v8961, 16
        %v8965 = vshrl.u32 %v8961, 16
        %v8966 = vshll.u32 %v8962, 16
        %v8967 = vshrl.u32 %v8962, 16
        %vm8968 = vc.u32 %v8960, %v8964
        %v8969 = vsel %vm8968, 1, 0
        %v8970 = vadd.s32 %v8960, %v8964
        %v8971 = vadd.s32 %v8963, %v8969
        %vm8972 = vc.u32 %v8970, %v8966
        %v8973 = vsel %vm8972, 1, 0
        %v8974 = vadd.s32 %v8970, %v8966
        %v8975 = vadd.s32 %v8971, %v8973
        %v8976 = vadd.s32 %v8975, %v8965
        %v8977 = vadd.s32 %v8976, %v8967
        %v8978 = vand.u32 %v8955, 65535
        %v8979 = vshrl.u32 %v8955, 16
        %v8980 = vand.u32 %v8950, 65535
        %v8981 = vshrl.u32 %v8950, 16
        %v8982 = vmul.u32 %v8978, %v8980
        %v8983 = vmul.u32 %v8978, %v8981
        %v8984 = vmul.u32 %v8979, %v8980
        %v8985 = vmul.u32 %v8979, %v8981
        %v8986 = vshll.u32 %v8983, 16
        %v8987 = vshrl.u32 %v8983, 16
        %v8988 = vshll.u32 %v8984, 16
        %v8989 = vshrl.u32 %v8984, 16
        %vm8990 = vc.u32 %v8982, %v8986
        %v8991 = vsel %vm8990, 1, 0
        %v8992 = vadd.s32 %v8982, %v8986
        %v8993 = vadd.s32 %v8985, %v8991
        %vm8994 = vc.u32 %v8992, %v8988
        %v8995 = vsel %vm8994, 1, 0
        %v8996 = vadd.s32 %v8992, %v8988
        %v8997 = vadd.s32 %v8993, %v8995
        %v8998 = vadd.s32 %v8997, %v8987
        %v8999 = vadd.s32 %v8998, %v8989
        %v9000 = vmul.u32 %v8955, %v8946
        %v9001 = vadd.s32 %v8977, %v8996
        %vm9002 = vc.u32 %v8977, %v8996
        %v9003 = vadd.s32 %v8999, 1
        %v9004 = vsel %vm9002, %v9003, %v8999
        %v9005 = vadd.s32 %v9000, %v9004
        %v9006 = vadd.s32 %v9005, 536870912
        %v9007 = vshrl.u32 %v9006, 30
        %v9008 = vshll.u32 %v9007, 30
        %v9009 = vsub.s32 %v9005, %v9008
        %vm9010 = vcmp.lt.s32.totalorder %v9009, 0
        %v9011 = vsub.s32 0, %v9009
        %v9012 = vsel %vm9010, %v9011, %v9009
        %v9013 = vclz %v9012
        %v9014 = vsub.s32 %v9013, 2
        %vm9015 = vcmp.gt.s32.totalorder 0, %v9014
        %v9016 = vsel %vm9015, 0, %v9014
        %v9017 = vsub.s32 32, %v9016
        %v9018 = vshll.u32 %v9009, %v9016
        %v9019 = vshrl.u32 %v9001, %v9017
        %v9020 = vor.u32 %v9018, %v9019
        %v9021 = vsub.s32 4294967266, %v9016
        %v9022 = vadd.s32 %v9021, 127
        %v9023 = vshll.u32 %v9022, 23
        %v9024 = vor.u32 4788187, %v9023
        %v9025 = vand.u32 2147483647, %v9024
        %v9027 = vcvt.s32.f32 %v9020
        %v9028 = vmul.f32 %v9027, %v9025
        %v9029 = vxor.u32 %v9028, 2147483648
        %v9030 = vsel %vm8909, %v9029, %v9028
        %v9031 = vsub.s32 4, %v9007
        %v9032 = vsel %vm8909, %v9031, %v9007
        %v9033 = vsel %vm8908, %v527, %v9030
        %v9034 = vsel %vm8908, 0, %v9032
        %v9035 = vmul.f32 %v9033, %v9033
        %v9036 = vmul.f32 %v9035, -0.001358992
        %v9037 = vadd.f32 %v9036, 0.041655596
        %v9038 = vmul.f32 %v9035, %v9037
        %v9039 = vadd.f32 %v9038, -0.4999988
        %v9040 = vmul.f32 %v9035, %v9039
        %v9041 = vadd.f32 1.0, %v9040
        %v9042 = vmul.f32 %v9033, %v9033
        %v9043 = vmul.f32 %v9042, -0.00019511016
        %v9044 = vadd.f32 %v9043, 0.008332121
        %v9045 = vmul.f32 %v9042, %v9044
        %v9046 = vadd.f32 %v9045, -0.16666654
        %v9047 = vmul.f32 %v9042, %v9046
        %v9048 = vadd.f32 %v9047, 1.0
        %v9049 = vmul.f32 %v9048, %v9033
        %vm9050 = vweird.f32 %v527
        %v9051 = vadd.s32 %v9034, 3
        %v9052 = vand.u32 %v9051, 3
        %vm9053 = vcmp.lt.s32.totalorder %v9052, 2
        %vm9054 = vcmp.eq.s32.totalorder %v9052, 0
        %v9055 = vxor.u32 %v9049, 2147483648
        %v9056 = vsel %vm9054, %v9041, %v9055
        %vm9057 = vcmp.eq.s32.totalorder %v9052, 2
        %v9058 = vxor.u32 %v9041, 2147483648
        %v9059 = vsel %vm9057, %v9058, %v9049
        %v9060 = vsel %vm9053, %v9056, %v9059
        %v9061 = vsel %vm9050, nan, %v9060
        %v9062 = vand.u32 2147483647, %v528
        %vm9063 = vcmp.le.f32.partialorder %v9062, 0.7853982
        %vm9064 = vcmp.lt.s32.totalorder %v528, 0
        %v9065 = vand.u32 %v528, 2139095040
        %v9066 = vshrl.u32 %v9065, 23
        %v9067 = vsub.s32 %v9066, 127
        %v9068 = vand.u32 2147483647, %v528
        %v9069 = vand.u32 %v9068, 8388607
        %v9070 = vor.u32 %v9069, 8388608
        %v9071 = vsub.s32 0, %v9070
        %v9072 = vadd.s32 %v9067, 1
        %vm9073 = vcmp.gt.s32.totalorder %v9072, 0
        %v9074 = vsel %vm9073, %v9072, 0
        %v9075 = vshrl.u32 %v9074, 5
        %v9076 = vand.u32 %v9074, 31
        %v9077 = vsub.s32 32, %v9076
        %v9078 = vshrl.u32 683565275, %v9077
        %v9079 = vshll.u32 683565275, %v9076
        %v9080 = vshrl.u32 2475754826, %v9077
        %v9081 = vor.u32 %v9079, %v9080
        %v9082 = vshll.u32 2475754826, %v9076
        %v9083 = vshrl.u32 2131351028, %v9077
        %v9084 = vor.u32 %v9082, %v9083
        %v9085 = vshll.u32 2131351028, %v9076
        %v9086 = vshrl.u32 2102212464, %v9077
        %v9087 = vor.u32 %v9085, %v9086
        %v9088 = vshll.u32 2102212464, %v9076
        %v9089 = vshrl.u32 920167782, %v9077
        %v9090 = vor.u32 %v9088, %v9089
        %v9091 = vshll.u32 920167782, %v9076
        %v9092 = vshrl.u32 1326507024, %v9077
        %v9093 = vor.u32 %v9091, %v9092
        %vm9094 = vcmp.lt.s32.totalorder %v9075, 1
        %vm9095 = vcmp.lt.s32.totalorder %v9075, 2
        %vm9096 = vcmp.lt.s32.totalorder %v9075, 3
        %vm9097 = vcmp.lt.s32.totalorder %v9075, 4
        %v9098 = vsel %vm9094, %v9078, %v9081
        %v9099 = vsel %vm9097, %v9087, 2102212464
        %v9100 = vsel %vm9096, %v9084, %v9099
        %v9101 = vsel %vm9095, %v9098, %v9100
        %v9102 = vsel %vm9094, %v9081, %v9084
        %v9103 = vsel %vm9097, %v9090, 920167782
        %v9104 = vsel %vm9096, %v9087, %v9103
        %v9105 = vsel %vm9095, %v9102, %v9104
        %v9106 = vsel %vm9094, %v9084, %v9087
        %v9107 = vsel %vm9097, %v9093, 1326507024
        %v9108 = vsel %vm9096, %v9090, %v9107
        %v9109 = vsel %vm9095, %v9106, %v9108
        %v9110 = vshll.u32 %v9070, 8
        %v9111 = vand.u32 %v9110, 65535
        %v9112 = vshrl.u32 %v9110, 16
        %v9113 = vand.u32 %v9109, 65535
        %v9114 = vshrl.u32 %v9109, 16
        %v9115 = vmul.u32 %v9111, %v9113
        %v9116 = vmul.u32 %v9111, %v9114
        %v9117 = vmul.u32 %v9112, %v9113
        %v9118 = vmul.u32 %v9112, %v9114
        %v9119 = vshll.u32 %v9116, 16
        %v9120 = vshrl.u32 %v9116, 16
        %v9121 = vshll.u32 %v9117, 16
        %v9122 = vshrl.u32 %v9117, 16
        %vm9123 = vc.u32 %v9115, %v9119
        %v9124 = vsel %vm9123, 1, 0
        %v9125 = vadd.s32 %v9115, %v9119
        %v9126 = vadd.s32 %v9118, %v9124
        %vm9127 = vc.u32 %v9125, %v9121
        %v9128 = vsel %vm9127, 1, 0
        %v9129 = vadd.s32 %v9125, %v9121
        %v9130 = vadd.s32 %v9126, %v9128
        %v9131 = vadd.s32 %v9130, %v9120
        %v9132 = vadd.s32 %v9131, %v9122
        %v9133 = vand.u32 %v9110, 65535
        %v9134 = vshrl.u32 %v9110, 16
        %v9135 = vand.u32 %v9105, 65535
        %v9136 = vshrl.u32 %v9105, 16
        %v9137 = vmul.u32 %v9133, %v9135
        %v9138 = vmul.u32 %v9133, %v9136
        %v9139 = vmul.u32 %v9134, %v9135
        %v9140 = vmul.u32 %v9134, %v9136
        %v9141 = vshll.u32 %v9138, 16
        %v9142 = vshrl.u32 %v9138, 16
        %v9143 = vshll.u32 %v9139, 16
        %v9144 = vshrl.u32 %v9139, 16
        %vm9145 = vc.u32 %v9137, %v9141
        %v9146 = vsel %vm9145, 1, 0
        %v9147 = vadd.s32 %v9137, %v9141
        %v9148 = vadd.s32 %v9140, %v9146
        %vm9149 = vc.u32 %v9147, %v9143
        %v9150 = vsel %vm9149, 1, 0
        %v9151 = vadd.s32 %v9147, %v9143
        %v9152 = vadd.s32 %v9148, %v9150
        %v9153 = vadd.s32 %v9152, %v9142
        %v9154 = vadd.s32 %v9153, %v9144
        %v9155 = vmul.u32 %v9110, %v9101
        %v9156 = vadd.s32 %v9132, %v9151
        %vm9157 = vc.u32 %v9132, %v9151
        %v9158 = vadd.s32 %v9154, 1
        %v9159 = vsel %vm9157, %v9158, %v9154
        %v9160 = vadd.s32 %v9155, %v9159
        %v9161 = vadd.s32 %v9160, 536870912
        %v9162 = vshrl.u32 %v9161, 30
        %v9163 = vshll.u32 %v9162, 30
        %v9164 = vsub.s32 %v9160, %v9163
        %vm9165 = vcmp.lt.s32.totalorder %v9164, 0
        %v9166 = vsub.s32 0, %v9164
        %v9167 = vsel %vm9165, %v9166, %v9164
        %v9168 = vclz %v9167
        %v9169 = vsub.s32 %v9168, 2
        %vm9170 = vcmp.gt.s32.totalorder 0, %v9169
        %v9171 = vsel %vm9170, 0, %v9169
        %v9172 = vsub.s32 32, %v9171
        %v9173 = vshll.u32 %v9164, %v9171
        %v9174 = vshrl.u32 %v9156, %v9172
        %v9175 = vor.u32 %v9173, %v9174
        %v9176 = vsub.s32 4294967266, %v9171
        %v9177 = vadd.s32 %v9176, 127
        %v9178 = vshll.u32 %v9177, 23
        %v9179 = vor.u32 4788187, %v9178
        %v9180 = vand.u32 2147483647, %v9179
        %v9182 = vcvt.s32.f32 %v9175
        %v9183 = vmul.f32 %v9182, %v9180
        %v9184 = vxor.u32 %v9183, 2147483648
        %v9185 = vsel %vm9064, %v9184, %v9183
        %v9186 = vsub.s32 4, %v9162
        %v9187 = vsel %vm9064, %v9186, %v9162
        %v9188 = vsel %vm9063, %v528, %v9185
        %v9189 = vsel %vm9063, 0, %v9187
        %v9190 = vmul.f32 %v9188, %v9188
        %v9191 = vmul.f32 %v9190, -0.001358992
        %v9192 = vadd.f32 %v9191, 0.041655596
        %v9193 = vmul.f32 %v9190, %v9192
        %v9194 = vadd.f32 %v9193, -0.4999988
        %v9195 = vmul.f32 %v9190, %v9194
        %v9196 = vadd.f32 1.0, %v9195
        %v9197 = vmul.f32 %v9188, %v9188
        %v9198 = vmul.f32 %v9197, -0.00019511016
        %v9199 = vadd.f32 %v9198, 0.008332121
        %v9200 = vmul.f32 %v9197, %v9199
        %v9201 = vadd.f32 %v9200, -0.16666654
        %v9202 = vmul.f32 %v9197, %v9201
        %v9203 = vadd.f32 %v9202, 1.0
        %v9204 = vmul.f32 %v9203, %v9188
        %vm9205 = vweird.f32 %v528
        %v9206 = vadd.s32 %v9189, 3
        %v9207 = vand.u32 %v9206, 3
        %vm9208 = vcmp.lt.s32.totalorder %v9207, 2
        %vm9209 = vcmp.eq.s32.totalorder %v9207, 0
        %v9210 = vxor.u32 %v9204, 2147483648
        %v9211 = vsel %vm9209, %v9196, %v9210
        %vm9212 = vcmp.eq.s32.totalorder %v9207, 2
        %v9213 = vxor.u32 %v9196, 2147483648
        %v9214 = vsel %vm9212, %v9213, %v9204
        %v9215 = vsel %vm9208, %v9211, %v9214
        %v9216 = vsel %vm9205, nan, %v9215
        %v9217 = vand.u32 2147483647, %v529
        %vm9218 = vcmp.le.f32.partialorder %v9217, 0.7853982
        %vm9219 = vcmp.lt.s32.totalorder %v529, 0
        %v9220 = vand.u32 %v529, 2139095040
        %v9221 = vshrl.u32 %v9220, 23
        %v9222 = vsub.s32 %v9221, 127
        %v9223 = vand.u32 2147483647, %v529
        %v9224 = vand.u32 %v9223, 8388607
        %v9225 = vor.u32 %v9224, 8388608
        %v9226 = vsub.s32 0, %v9225
        %v9227 = vadd.s32 %v9222, 1
        %vm9228 = vcmp.gt.s32.totalorder %v9227, 0
        %v9229 = vsel %vm9228, %v9227, 0
        %v9230 = vshrl.u32 %v9229, 5
        %v9231 = vand.u32 %v9229, 31
        %v9232 = vsub.s32 32, %v9231
        %v9233 = vshrl.u32 683565275, %v9232
        %v9234 = vshll.u32 683565275, %v9231
        %v9235 = vshrl.u32 2475754826, %v9232
        %v9236 = vor.u32 %v9234, %v9235
        %v9237 = vshll.u32 2475754826, %v9231
        %v9238 = vshrl.u32 2131351028, %v9232
        %v9239 = vor.u32 %v9237, %v9238
        %v9240 = vshll.u32 2131351028, %v9231
        %v9241 = vshrl.u32 2102212464, %v9232
        %v9242 = vor.u32 %v9240, %v9241
        %v9243 = vshll.u32 2102212464, %v9231
        %v9244 = vshrl.u32 920167782, %v9232
        %v9245 = vor.u32 %v9243, %v9244
        %v9246 = vshll.u32 920167782, %v9231
        %v9247 = vshrl.u32 1326507024, %v9232
        %v9248 = vor.u32 %v9246, %v9247
        %vm9249 = vcmp.lt.s32.totalorder %v9230, 1
        %vm9250 = vcmp.lt.s32.totalorder %v9230, 2
        %vm9251 = vcmp.lt.s32.totalorder %v9230, 3
        %vm9252 = vcmp.lt.s32.totalorder %v9230, 4
        %v9253 = vsel %vm9249, %v9233, %v9236
        %v9254 = vsel %vm9252, %v9242, 2102212464
        %v9255 = vsel %vm9251, %v9239, %v9254
        %v9256 = vsel %vm9250, %v9253, %v9255
        %v9257 = vsel %vm9249, %v9236, %v9239
        %v9258 = vsel %vm9252, %v9245, 920167782
        %v9259 = vsel %vm9251, %v9242, %v9258
        %v9260 = vsel %vm9250, %v9257, %v9259
        %v9261 = vsel %vm9249, %v9239, %v9242
        %v9262 = vsel %vm9252, %v9248, 1326507024
        %v9263 = vsel %vm9251, %v9245, %v9262
        %v9264 = vsel %vm9250, %v9261, %v9263
        %v9265 = vshll.u32 %v9225, 8
        %v9266 = vand.u32 %v9265, 65535
        %v9267 = vshrl.u32 %v9265, 16
        %v9268 = vand.u32 %v9264, 65535
        %v9269 = vshrl.u32 %v9264, 16
        %v9270 = vmul.u32 %v9266, %v9268
        %v9271 = vmul.u32 %v9266, %v9269
        %v9272 = vmul.u32 %v9267, %v9268
        %v9273 = vmul.u32 %v9267, %v9269
        %v9274 = vshll.u32 %v9271, 16
        %v9275 = vshrl.u32 %v9271, 16
        %v9276 = vshll.u32 %v9272, 16
        %v9277 = vshrl.u32 %v9272, 16
        %vm9278 = vc.u32 %v9270, %v9274
        %v9279 = vsel %vm9278, 1, 0
        %v9280 = vadd.s32 %v9270, %v9274
        %v9281 = vadd.s32 %v9273, %v9279
        %vm9282 = vc.u32 %v9280, %v9276
        %v9283 = vsel %vm9282, 1, 0
        %v9284 = vadd.s32 %v9280, %v9276
        %v9285 = vadd.s32 %v9281, %v9283
        %v9286 = vadd.s32 %v9285, %v9275
        %v9287 = vadd.s32 %v9286, %v9277
        %v9288 = vand.u32 %v9265, 65535
        %v9289 = vshrl.u32 %v9265, 16
        %v9290 = vand.u32 %v9260, 65535
        %v9291 = vshrl.u32 %v9260, 16
        %v9292 = vmul.u32 %v9288, %v9290
        %v9293 = vmul.u32 %v9288, %v9291
        %v9294 = vmul.u32 %v9289, %v9290
        %v9295 = vmul.u32 %v9289, %v9291
        %v9296 = vshll.u32 %v9293, 16
        %v9297 = vshrl.u32 %v9293, 16
        %v9298 = vshll.u32 %v9294, 16
        %v9299 = vshrl.u32 %v9294, 16
        %vm9300 = vc.u32 %v9292, %v9296
        %v9301 = vsel %vm9300, 1, 0
        %v9302 = vadd.s32 %v9292, %v9296
        %v9303 = vadd.s32 %v9295, %v9301
        %vm9304 = vc.u32 %v9302, %v9298
        %v9305 = vsel %vm9304, 1, 0
        %v9306 = vadd.s32 %v9302, %v9298
        %v9307 = vadd.s32 %v9303, %v9305
        %v9308 = vadd.s32 %v9307, %v9297
        %v9309 = vadd.s32 %v9308, %v9299
        %v9310 = vmul.u32 %v9265, %v9256
        %v9311 = vadd.s32 %v9287, %v9306
        %vm9312 = vc.u32 %v9287, %v9306
        %v9313 = vadd.s32 %v9309, 1
        %v9314 = vsel %vm9312, %v9313, %v9309
        %v9315 = vadd.s32 %v9310, %v9314
        %v9316 = vadd.s32 %v9315, 536870912
        %v9317 = vshrl.u32 %v9316, 30
        %v9318 = vshll.u32 %v9317, 30
        %v9319 = vsub.s32 %v9315, %v9318
        %vm9320 = vcmp.lt.s32.totalorder %v9319, 0
        %v9321 = vsub.s32 0, %v9319
        %v9322 = vsel %vm9320, %v9321, %v9319
        %v9323 = vclz %v9322
        %v9324 = vsub.s32 %v9323, 2
        %vm9325 = vcmp.gt.s32.totalorder 0, %v9324
        %v9326 = vsel %vm9325, 0, %v9324
        %v9327 = vsub.s32 32, %v9326
        %v9328 = vshll.u32 %v9319, %v9326
        %v9329 = vshrl.u32 %v9311, %v9327
        %v9330 = vor.u32 %v9328, %v9329
        %v9331 = vsub.s32 4294967266, %v9326
        %v9332 = vadd.s32 %v9331, 127
        %v9333 = vshll.u32 %v9332, 23
        %v9334 = vor.u32 4788187, %v9333
        %v9335 = vand.u32 2147483647, %v9334
        %v9337 = vcvt.s32.f32 %v9330
        %v9338 = vmul.f32 %v9337, %v9335
        %v9339 = vxor.u32 %v9338, 2147483648
        %v9340 = vsel %vm9219, %v9339, %v9338
        %v9341 = vsub.s32 4, %v9317
        %v9342 = vsel %vm9219, %v9341, %v9317
        %v9343 = vsel %vm9218, %v529, %v9340
        %v9344 = vsel %vm9218, 0, %v9342
        %v9345 = vmul.f32 %v9343, %v9343
        %v9346 = vmul.f32 %v9345, -0.001358992
        %v9347 = vadd.f32 %v9346, 0.041655596
        %v9348 = vmul.f32 %v9345, %v9347
        %v9349 = vadd.f32 %v9348, -0.4999988
        %v9350 = vmul.f32 %v9345, %v9349
        %v9351 = vadd.f32 1.0, %v9350
        %v9352 = vmul.f32 %v9343, %v9343
        %v9353 = vmul.f32 %v9352, -0.00019511016
        %v9354 = vadd.f32 %v9353, 0.008332121
        %v9355 = vmul.f32 %v9352, %v9354
        %v9356 = vadd.f32 %v9355, -0.16666654
        %v9357 = vmul.f32 %v9352, %v9356
        %v9358 = vadd.f32 %v9357, 1.0
        %v9359 = vmul.f32 %v9358, %v9343
        %vm9360 = vweird.f32 %v529
        %v9361 = vadd.s32 %v9344, 3
        %v9362 = vand.u32 %v9361, 3
        %vm9363 = vcmp.lt.s32.totalorder %v9362, 2
        %vm9364 = vcmp.eq.s32.totalorder %v9362, 0
        %v9365 = vxor.u32 %v9359, 2147483648
        %v9366 = vsel %vm9364, %v9351, %v9365
        %vm9367 = vcmp.eq.s32.totalorder %v9362, 2
        %v9368 = vxor.u32 %v9351, 2147483648
        %v9369 = vsel %vm9367, %v9368, %v9359
        %v9370 = vsel %vm9363, %v9366, %v9369
        %v9371 = vsel %vm9360, nan, %v9370
        %v9372 = vand.u32 2147483647, %v530
        %vm9373 = vcmp.le.f32.partialorder %v9372, 0.7853982
        %vm9374 = vcmp.lt.s32.totalorder %v530, 0
        %v9375 = vand.u32 %v530, 2139095040
        %v9376 = vshrl.u32 %v9375, 23
        %v9377 = vsub.s32 %v9376, 127
        %v9378 = vand.u32 2147483647, %v530
        %v9379 = vand.u32 %v9378, 8388607
        %v9380 = vor.u32 %v9379, 8388608
        %v9381 = vsub.s32 0, %v9380
        %v9382 = vadd.s32 %v9377, 1
        %vm9383 = vcmp.gt.s32.totalorder %v9382, 0
        %v9384 = vsel %vm9383, %v9382, 0
        %v9385 = vshrl.u32 %v9384, 5
        %v9386 = vand.u32 %v9384, 31
        %v9387 = vsub.s32 32, %v9386
        %v9388 = vshrl.u32 683565275, %v9387
        %v9389 = vshll.u32 683565275, %v9386
        %v9390 = vshrl.u32 2475754826, %v9387
        %v9391 = vor.u32 %v9389, %v9390
        %v9392 = vshll.u32 2475754826, %v9386
        %v9393 = vshrl.u32 2131351028, %v9387
        %v9394 = vor.u32 %v9392, %v9393
        %v9395 = vshll.u32 2131351028, %v9386
        %v9396 = vshrl.u32 2102212464, %v9387
        %v9397 = vor.u32 %v9395, %v9396
        %v9398 = vshll.u32 2102212464, %v9386
        %v9399 = vshrl.u32 920167782, %v9387
        %v9400 = vor.u32 %v9398, %v9399
        %v9401 = vshll.u32 920167782, %v9386
        %v9402 = vshrl.u32 1326507024, %v9387
        %v9403 = vor.u32 %v9401, %v9402
        %vm9404 = vcmp.lt.s32.totalorder %v9385, 1
        %vm9405 = vcmp.lt.s32.totalorder %v9385, 2
        %vm9406 = vcmp.lt.s32.totalorder %v9385, 3
        %vm9407 = vcmp.lt.s32.totalorder %v9385, 4
        %v9408 = vsel %vm9404, %v9388, %v9391
        %v9409 = vsel %vm9407, %v9397, 2102212464
        %v9410 = vsel %vm9406, %v9394, %v9409
        %v9411 = vsel %vm9405, %v9408, %v9410
        %v9412 = vsel %vm9404, %v9391, %v9394
        %v9413 = vsel %vm9407, %v9400, 920167782
        %v9414 = vsel %vm9406, %v9397, %v9413
        %v9415 = vsel %vm9405, %v9412, %v9414
        %v9416 = vsel %vm9404, %v9394, %v9397
        %v9417 = vsel %vm9407, %v9403, 1326507024
        %v9418 = vsel %vm9406, %v9400, %v9417
        %v9419 = vsel %vm9405, %v9416, %v9418
        %v9420 = vshll.u32 %v9380, 8
        %v9421 = vand.u32 %v9420, 65535
        %v9422 = vshrl.u32 %v9420, 16
        %v9423 = vand.u32 %v9419, 65535
        %v9424 = vshrl.u32 %v9419, 16
        %v9425 = vmul.u32 %v9421, %v9423
        %v9426 = vmul.u32 %v9421, %v9424
        %v9427 = vmul.u32 %v9422, %v9423
        %v9428 = vmul.u32 %v9422, %v9424
        %v9429 = vshll.u32 %v9426, 16
        %v9430 = vshrl.u32 %v9426, 16
        %v9431 = vshll.u32 %v9427, 16
        %v9432 = vshrl.u32 %v9427, 16
        %vm9433 = vc.u32 %v9425, %v9429
        %v9434 = vsel %vm9433, 1, 0
        %v9435 = vadd.s32 %v9425, %v9429
        %v9436 = vadd.s32 %v9428, %v9434
        %vm9437 = vc.u32 %v9435, %v9431
        %v9438 = vsel %vm9437, 1, 0
        %v9439 = vadd.s32 %v9435, %v9431
        %v9440 = vadd.s32 %v9436, %v9438
        %v9441 = vadd.s32 %v9440, %v9430
        %v9442 = vadd.s32 %v9441, %v9432
        %v9443 = vand.u32 %v9420, 65535
        %v9444 = vshrl.u32 %v9420, 16
        %v9445 = vand.u32 %v9415, 65535
        %v9446 = vshrl.u32 %v9415, 16
        %v9447 = vmul.u32 %v9443, %v9445
        %v9448 = vmul.u32 %v9443, %v9446
        %v9449 = vmul.u32 %v9444, %v9445
        %v9450 = vmul.u32 %v9444, %v9446
        %v9451 = vshll.u32 %v9448, 16
        %v9452 = vshrl.u32 %v9448, 16
        %v9453 = vshll.u32 %v9449, 16
        %v9454 = vshrl.u32 %v9449, 16
        %vm9455 = vc.u32 %v9447, %v9451
        %v9456 = vsel %vm9455, 1, 0
        %v9457 = vadd.s32 %v9447, %v9451
        %v9458 = vadd.s32 %v9450, %v9456
        %vm9459 = vc.u32 %v9457, %v9453
        %v9460 = vsel %vm9459, 1, 0
        %v9461 = vadd.s32 %v9457, %v9453
        %v9462 = vadd.s32 %v9458, %v9460
        %v9463 = vadd.s32 %v9462, %v9452
        %v9464 = vadd.s32 %v9463, %v9454
        %v9465 = vmul.u32 %v9420, %v9411
        %v9466 = vadd.s32 %v9442, %v9461
        %vm9467 = vc.u32 %v9442, %v9461
        %v9468 = vadd.s32 %v9464, 1
        %v9469 = vsel %vm9467, %v9468, %v9464
        %v9470 = vadd.s32 %v9465, %v9469
        %v9471 = vadd.s32 %v9470, 536870912
        %v9472 = vshrl.u32 %v9471, 30
        %v9473 = vshll.u32 %v9472, 30
        %v9474 = vsub.s32 %v9470, %v9473
        %vm9475 = vcmp.lt.s32.totalorder %v9474, 0
        %v9476 = vsub.s32 0, %v9474
        %v9477 = vsel %vm9475, %v9476, %v9474
        %v9478 = vclz %v9477
        %v9479 = vsub.s32 %v9478, 2
        %vm9480 = vcmp.gt.s32.totalorder 0, %v9479
        %v9481 = vsel %vm9480, 0, %v9479
        %v9482 = vsub.s32 32, %v9481
        %v9483 = vshll.u32 %v9474, %v9481
        %v9484 = vshrl.u32 %v9466, %v9482
        %v9485 = vor.u32 %v9483, %v9484
        %v9486 = vsub.s32 4294967266, %v9481
        %v9487 = vadd.s32 %v9486, 127
        %v9488 = vshll.u32 %v9487, 23
        %v9489 = vor.u32 4788187, %v9488
        %v9490 = vand.u32 2147483647, %v9489
        %v9492 = vcvt.s32.f32 %v9485
        %v9493 = vmul.f32 %v9492, %v9490
        %v9494 = vxor.u32 %v9493, 2147483648
        %v9495 = vsel %vm9374, %v9494, %v9493
        %v9496 = vsub.s32 4, %v9472
        %v9497 = vsel %vm9374, %v9496, %v9472
        %v9498 = vsel %vm9373, %v530, %v9495
        %v9499 = vsel %vm9373, 0, %v9497
        %v9500 = vmul.f32 %v9498, %v9498
        %v9501 = vmul.f32 %v9500, -0.001358992
        %v9502 = vadd.f32 %v9501, 0.041655596
        %v9503 = vmul.f32 %v9500, %v9502
        %v9504 = vadd.f32 %v9503, -0.4999988
        %v9505 = vmul.f32 %v9500, %v9504
        %v9506 = vadd.f32 1.0, %v9505
        %v9507 = vmul.f32 %v9498, %v9498
        %v9508 = vmul.f32 %v9507, -0.00019511016
        %v9509 = vadd.f32 %v9508, 0.008332121
        %v9510 = vmul.f32 %v9507, %v9509
        %v9511 = vadd.f32 %v9510, -0.16666654
        %v9512 = vmul.f32 %v9507, %v9511
        %v9513 = vadd.f32 %v9512, 1.0
        %v9514 = vmul.f32 %v9513, %v9498
        %vm9515 = vweird.f32 %v530
        %v9516 = vadd.s32 %v9499, 3
        %v9517 = vand.u32 %v9516, 3
        %vm9518 = vcmp.lt.s32.totalorder %v9517, 2
        %vm9519 = vcmp.eq.s32.totalorder %v9517, 0
        %v9520 = vxor.u32 %v9514, 2147483648
        %v9521 = vsel %vm9519, %v9506, %v9520
        %vm9522 = vcmp.eq.s32.totalorder %v9517, 2
        %v9523 = vxor.u32 %v9506, 2147483648
        %v9524 = vsel %vm9522, %v9523, %v9514
        %v9525 = vsel %vm9518, %v9521, %v9524
        %v9526 = vsel %vm9515, nan, %v9525
        %v9527 = vand.u32 2147483647, %v531
        %vm9528 = vcmp.le.f32.partialorder %v9527, 0.7853982
        %vm9529 = vcmp.lt.s32.totalorder %v531, 0
        %v9530 = vand.u32 %v531, 2139095040
        %v9531 = vshrl.u32 %v9530, 23
        %v9532 = vsub.s32 %v9531, 127
        %v9533 = vand.u32 2147483647, %v531
        %v9534 = vand.u32 %v9533, 8388607
        %v9535 = vor.u32 %v9534, 8388608
        %v9536 = vsub.s32 0, %v9535
        %v9537 = vadd.s32 %v9532, 1
        %vm9538 = vcmp.gt.s32.totalorder %v9537, 0
        %v9539 = vsel %vm9538, %v9537, 0
        %v9540 = vshrl.u32 %v9539, 5
        %v9541 = vand.u32 %v9539, 31
        %v9542 = vsub.s32 32, %v9541
        %v9543 = vshrl.u32 683565275, %v9542
        %v9544 = vshll.u32 683565275, %v9541
        %v9545 = vshrl.u32 2475754826, %v9542
        %v9546 = vor.u32 %v9544, %v9545
        %v9547 = vshll.u32 2475754826, %v9541
        %v9548 = vshrl.u32 2131351028, %v9542
        %v9549 = vor.u32 %v9547, %v9548
        %v9550 = vshll.u32 2131351028, %v9541
        %v9551 = vshrl.u32 2102212464, %v9542
        %v9552 = vor.u32 %v9550, %v9551
        %v9553 = vshll.u32 2102212464, %v9541
        %v9554 = vshrl.u32 920167782, %v9542
        %v9555 = vor.u32 %v9553, %v9554
        %v9556 = vshll.u32 920167782, %v9541
        %v9557 = vshrl.u32 1326507024, %v9542
        %v9558 = vor.u32 %v9556, %v9557
        %vm9559 = vcmp.lt.s32.totalorder %v9540, 1
        %vm9560 = vcmp.lt.s32.totalorder %v9540, 2
        %vm9561 = vcmp.lt.s32.totalorder %v9540, 3
        %vm9562 = vcmp.lt.s32.totalorder %v9540, 4
        %v9563 = vsel %vm9559, %v9543, %v9546
        %v9564 = vsel %vm9562, %v9552, 2102212464
        %v9565 = vsel %vm9561, %v9549, %v9564
        %v9566 = vsel %vm9560, %v9563, %v9565
        %v9567 = vsel %vm9559, %v9546, %v9549
        %v9568 = vsel %vm9562, %v9555, 920167782
        %v9569 = vsel %vm9561, %v9552, %v9568
        %v9570 = vsel %vm9560, %v9567, %v9569
        %v9571 = vsel %vm9559, %v9549, %v9552
        %v9572 = vsel %vm9562, %v9558, 1326507024
        %v9573 = vsel %vm9561, %v9555, %v9572
        %v9574 = vsel %vm9560, %v9571, %v9573
        %v9575 = vshll.u32 %v9535, 8
        %v9576 = vand.u32 %v9575, 65535
        %v9577 = vshrl.u32 %v9575, 16
        %v9578 = vand.u32 %v9574, 65535
        %v9579 = vshrl.u32 %v9574, 16
        %v9580 = vmul.u32 %v9576, %v9578
        %v9581 = vmul.u32 %v9576, %v9579
        %v9582 = vmul.u32 %v9577, %v9578
        %v9583 = vmul.u32 %v9577, %v9579
        %v9584 = vshll.u32 %v9581, 16
        %v9585 = vshrl.u32 %v9581, 16
        %v9586 = vshll.u32 %v9582, 16
        %v9587 = vshrl.u32 %v9582, 16
        %vm9588 = vc.u32 %v9580, %v9584
        %v9589 = vsel %vm9588, 1, 0
        %v9590 = vadd.s32 %v9580, %v9584
        %v9591 = vadd.s32 %v9583, %v9589
        %vm9592 = vc.u32 %v9590, %v9586
        %v9593 = vsel %vm9592, 1, 0
        %v9594 = vadd.s32 %v9590, %v9586
        %v9595 = vadd.s32 %v9591, %v9593
        %v9596 = vadd.s32 %v9595, %v9585
        %v9597 = vadd.s32 %v9596, %v9587
        %v9598 = vand.u32 %v9575, 65535
        %v9599 = vshrl.u32 %v9575, 16
        %v9600 = vand.u32 %v9570, 65535
        %v9601 = vshrl.u32 %v9570, 16
        %v9602 = vmul.u32 %v9598, %v9600
        %v9603 = vmul.u32 %v9598, %v9601
        %v9604 = vmul.u32 %v9599, %v9600
        %v9605 = vmul.u32 %v9599, %v9601
        %v9606 = vshll.u32 %v9603, 16
        %v9607 = vshrl.u32 %v9603, 16
        %v9608 = vshll.u32 %v9604, 16
        %v9609 = vshrl.u32 %v9604, 16
        %vm9610 = vc.u32 %v9602, %v9606
        %v9611 = vsel %vm9610, 1, 0
        %v9612 = vadd.s32 %v9602, %v9606
        %v9613 = vadd.s32 %v9605, %v9611
        %vm9614 = vc.u32 %v9612, %v9608
        %v9615 = vsel %vm9614, 1, 0
        %v9616 = vadd.s32 %v9612, %v9608
        %v9617 = vadd.s32 %v9613, %v9615
        %v9618 = vadd.s32 %v9617, %v9607
        %v9619 = vadd.s32 %v9618, %v9609
        %v9620 = vmul.u32 %v9575, %v9566
        %v9621 = vadd.s32 %v9597, %v9616
        %vm9622 = vc.u32 %v9597, %v9616
        %v9623 = vadd.s32 %v9619, 1
        %v9624 = vsel %vm9622, %v9623, %v9619
        %v9625 = vadd.s32 %v9620, %v9624
        %v9626 = vadd.s32 %v9625, 536870912
        %v9627 = vshrl.u32 %v9626, 30
        %v9628 = vshll.u32 %v9627, 30
        %v9629 = vsub.s32 %v9625, %v9628
        %vm9630 = vcmp.lt.s32.totalorder %v9629, 0
        %v9631 = vsub.s32 0, %v9629
        %v9632 = vsel %vm9630, %v9631, %v9629
        %v9633 = vclz %v9632
        %v9634 = vsub.s32 %v9633, 2
        %vm9635 = vcmp.gt.s32.totalorder 0, %v9634
        %v9636 = vsel %vm9635, 0, %v9634
        %v9637 = vsub.s32 32, %v9636
        %v9638 = vshll.u32 %v9629, %v9636
        %v9639 = vshrl.u32 %v9621, %v9637
        %v9640 = vor.u32 %v9638, %v9639
        %v9641 = vsub.s32 4294967266, %v9636
        %v9642 = vadd.s32 %v9641, 127
        %v9643 = vshll.u32 %v9642, 23
        %v9644 = vor.u32 4788187, %v9643
        %v9645 = vand.u32 2147483647, %v9644
        %v9647 = vcvt.s32.f32 %v9640
        %v9648 = vmul.f32 %v9647, %v9645
        %v9649 = vxor.u32 %v9648, 2147483648
        %v9650 = vsel %vm9529, %v9649, %v9648
        %v9651 = vsub.s32 4, %v9627
        %v9652 = vsel %vm9529, %v9651, %v9627
        %v9653 = vsel %vm9528, %v531, %v9650
        %v9654 = vsel %vm9528, 0, %v9652
        %v9655 = vmul.f32 %v9653, %v9653
        %v9656 = vmul.f32 %v9655, -0.001358992
        %v9657 = vadd.f32 %v9656, 0.041655596
        %v9658 = vmul.f32 %v9655, %v9657
        %v9659 = vadd.f32 %v9658, -0.4999988
        %v9660 = vmul.f32 %v9655, %v9659
        %v9661 = vadd.f32 1.0, %v9660
        %v9662 = vmul.f32 %v9653, %v9653
        %v9663 = vmul.f32 %v9662, -0.00019511016
        %v9664 = vadd.f32 %v9663, 0.008332121
        %v9665 = vmul.f32 %v9662, %v9664
        %v9666 = vadd.f32 %v9665, -0.16666654
        %v9667 = vmul.f32 %v9662, %v9666
        %v9668 = vadd.f32 %v9667, 1.0
        %v9669 = vmul.f32 %v9668, %v9653
        %vm9670 = vweird.f32 %v531
        %v9671 = vadd.s32 %v9654, 3
        %v9672 = vand.u32 %v9671, 3
        %vm9673 = vcmp.lt.s32.totalorder %v9672, 2
        %vm9674 = vcmp.eq.s32.totalorder %v9672, 0
        %v9675 = vxor.u32 %v9669, 2147483648
        %v9676 = vsel %vm9674, %v9661, %v9675
        %vm9677 = vcmp.eq.s32.totalorder %v9672, 2
        %v9678 = vxor.u32 %v9661, 2147483648
        %v9679 = vsel %vm9677, %v9678, %v9669
        %v9680 = vsel %vm9673, %v9676, %v9679
        %v9681 = vsel %vm9670, nan, %v9680
        %v9682 = vand.u32 2147483647, %v532
        %vm9683 = vcmp.le.f32.partialorder %v9682, 0.7853982
        %vm9684 = vcmp.lt.s32.totalorder %v532, 0
        %v9685 = vand.u32 %v532, 2139095040
        %v9686 = vshrl.u32 %v9685, 23
        %v9687 = vsub.s32 %v9686, 127
        %v9688 = vand.u32 2147483647, %v532
        %v9689 = vand.u32 %v9688, 8388607
        %v9690 = vor.u32 %v9689, 8388608
        %v9691 = vsub.s32 0, %v9690
        %v9692 = vadd.s32 %v9687, 1
        %vm9693 = vcmp.gt.s32.totalorder %v9692, 0
        %v9694 = vsel %vm9693, %v9692, 0
        %v9695 = vshrl.u32 %v9694, 5
        %v9696 = vand.u32 %v9694, 31
        %v9697 = vsub.s32 32, %v9696
        %v9698 = vshrl.u32 683565275, %v9697
        %v9699 = vshll.u32 683565275, %v9696
        %v9700 = vshrl.u32 2475754826, %v9697
        %v9701 = vor.u32 %v9699, %v9700
        %v9702 = vshll.u32 2475754826, %v9696
        %v9703 = vshrl.u32 2131351028, %v9697
        %v9704 = vor.u32 %v9702, %v9703
        %v9705 = vshll.u32 2131351028, %v9696
        %v9706 = vshrl.u32 2102212464, %v9697
        %v9707 = vor.u32 %v9705, %v9706
        %v9708 = vshll.u32 2102212464, %v9696
        %v9709 = vshrl.u32 920167782, %v9697
        %v9710 = vor.u32 %v9708, %v9709
        %v9711 = vshll.u32 920167782, %v9696
        %v9712 = vshrl.u32 1326507024, %v9697
        %v9713 = vor.u32 %v9711, %v9712
        %vm9714 = vcmp.lt.s32.totalorder %v9695, 1
        %vm9715 = vcmp.lt.s32.totalorder %v9695, 2
        %vm9716 = vcmp.lt.s32.totalorder %v9695, 3
        %vm9717 = vcmp.lt.s32.totalorder %v9695, 4
        %v9718 = vsel %vm9714, %v9698, %v9701
        %v9719 = vsel %vm9717, %v9707, 2102212464
        %v9720 = vsel %vm9716, %v9704, %v9719
        %v9721 = vsel %vm9715, %v9718, %v9720
        %v9722 = vsel %vm9714, %v9701, %v9704
        %v9723 = vsel %vm9717, %v9710, 920167782
        %v9724 = vsel %vm9716, %v9707, %v9723
        %v9725 = vsel %vm9715, %v9722, %v9724
        %v9726 = vsel %vm9714, %v9704, %v9707
        %v9727 = vsel %vm9717, %v9713, 1326507024
        %v9728 = vsel %vm9716, %v9710, %v9727
        %v9729 = vsel %vm9715, %v9726, %v9728
        %v9730 = vshll.u32 %v9690, 8
        %v9731 = vand.u32 %v9730, 65535
        %v9732 = vshrl.u32 %v9730, 16
        %v9733 = vand.u32 %v9729, 65535
        %v9734 = vshrl.u32 %v9729, 16
        %v9735 = vmul.u32 %v9731, %v9733
        %v9736 = vmul.u32 %v9731, %v9734
        %v9737 = vmul.u32 %v9732, %v9733
        %v9738 = vmul.u32 %v9732, %v9734
        %v9739 = vshll.u32 %v9736, 16
        %v9740 = vshrl.u32 %v9736, 16
        %v9741 = vshll.u32 %v9737, 16
        %v9742 = vshrl.u32 %v9737, 16
        %vm9743 = vc.u32 %v9735, %v9739
        %v9744 = vsel %vm9743, 1, 0
        %v9745 = vadd.s32 %v9735, %v9739
        %v9746 = vadd.s32 %v9738, %v9744
        %vm9747 = vc.u32 %v9745, %v9741
        %v9748 = vsel %vm9747, 1, 0
        %v9749 = vadd.s32 %v9745, %v9741
        %v9750 = vadd.s32 %v9746, %v9748
        %v9751 = vadd.s32 %v9750, %v9740
        %v9752 = vadd.s32 %v9751, %v9742
        %v9753 = vand.u32 %v9730, 65535
        %v9754 = vshrl.u32 %v9730, 16
        %v9755 = vand.u32 %v9725, 65535
        %v9756 = vshrl.u32 %v9725, 16
        %v9757 = vmul.u32 %v9753, %v9755
        %v9758 = vmul.u32 %v9753, %v9756
        %v9759 = vmul.u32 %v9754, %v9755
        %v9760 = vmul.u32 %v9754, %v9756
        %v9761 = vshll.u32 %v9758, 16
        %v9762 = vshrl.u32 %v9758, 16
        %v9763 = vshll.u32 %v9759, 16
        %v9764 = vshrl.u32 %v9759, 16
        %vm9765 = vc.u32 %v9757, %v9761
        %v9766 = vsel %vm9765, 1, 0
        %v9767 = vadd.s32 %v9757, %v9761
        %v9768 = vadd.s32 %v9760, %v9766
        %vm9769 = vc.u32 %v9767, %v9763
        %v9770 = vsel %vm9769, 1, 0
        %v9771 = vadd.s32 %v9767, %v9763
        %v9772 = vadd.s32 %v9768, %v9770
        %v9773 = vadd.s32 %v9772, %v9762
        %v9774 = vadd.s32 %v9773, %v9764
        %v9775 = vmul.u32 %v9730, %v9721
        %v9776 = vadd.s32 %v9752, %v9771
        %vm9777 = vc.u32 %v9752, %v9771
        %v9778 = vadd.s32 %v9774, 1
        %v9779 = vsel %vm9777, %v9778, %v9774
        %v9780 = vadd.s32 %v9775, %v9779
        %v9781 = vadd.s32 %v9780, 536870912
        %v9782 = vshrl.u32 %v9781, 30
        %v9783 = vshll.u32 %v9782, 30
        %v9784 = vsub.s32 %v9780, %v9783
        %vm9785 = vcmp.lt.s32.totalorder %v9784, 0
        %v9786 = vsub.s32 0, %v9784
        %v9787 = vsel %vm9785, %v9786, %v9784
        %v9788 = vclz %v9787
        %v9789 = vsub.s32 %v9788, 2
        %vm9790 = vcmp.gt.s32.totalorder 0, %v9789
        %v9791 = vsel %vm9790, 0, %v9789
        %v9792 = vsub.s32 32, %v9791
        %v9793 = vshll.u32 %v9784, %v9791
        %v9794 = vshrl.u32 %v9776, %v9792
        %v9795 = vor.u32 %v9793, %v9794
        %v9796 = vsub.s32 4294967266, %v9791
        %v9797 = vadd.s32 %v9796, 127
        %v9798 = vshll.u32 %v9797, 23
        %v9799 = vor.u32 4788187, %v9798
        %v9800 = vand.u32 2147483647, %v9799
        %v9802 = vcvt.s32.f32 %v9795
        %v9803 = vmul.f32 %v9802, %v9800
        %v9804 = vxor.u32 %v9803, 2147483648
        %v9805 = vsel %vm9684, %v9804, %v9803
        %v9806 = vsub.s32 4, %v9782
        %v9807 = vsel %vm9684, %v9806, %v9782
        %v9808 = vsel %vm9683, %v532, %v9805
        %v9809 = vsel %vm9683, 0, %v9807
        %v9810 = vmul.f32 %v9808, %v9808
        %v9811 = vmul.f32 %v9810, -0.001358992
        %v9812 = vadd.f32 %v9811, 0.041655596
        %v9813 = vmul.f32 %v9810, %v9812
        %v9814 = vadd.f32 %v9813, -0.4999988
        %v9815 = vmul.f32 %v9810, %v9814
        %v9816 = vadd.f32 1.0, %v9815
        %v9817 = vmul.f32 %v9808, %v9808
        %v9818 = vmul.f32 %v9817, -0.00019511016
        %v9819 = vadd.f32 %v9818, 0.008332121
        %v9820 = vmul.f32 %v9817, %v9819
        %v9821 = vadd.f32 %v9820, -0.16666654
        %v9822 = vmul.f32 %v9817, %v9821
        %v9823 = vadd.f32 %v9822, 1.0
        %v9824 = vmul.f32 %v9823, %v9808
        %vm9825 = vweird.f32 %v532
        %v9826 = vadd.s32 %v9809, 3
        %v9827 = vand.u32 %v9826, 3
        %vm9828 = vcmp.lt.s32.totalorder %v9827, 2
        %vm9829 = vcmp.eq.s32.totalorder %v9827, 0
        %v9830 = vxor.u32 %v9824, 2147483648
        %v9831 = vsel %vm9829, %v9816, %v9830
        %vm9832 = vcmp.eq.s32.totalorder %v9827, 2
        %v9833 = vxor.u32 %v9816, 2147483648
        %v9834 = vsel %vm9832, %v9833, %v9824
        %v9835 = vsel %vm9828, %v9831, %v9834
        %v9836 = vsel %vm9825, nan, %v9835
        %v9837 = vand.u32 2147483647, %v533
        %vm9838 = vcmp.le.f32.partialorder %v9837, 0.7853982
        %vm9839 = vcmp.lt.s32.totalorder %v533, 0
        %v9840 = vand.u32 %v533, 2139095040
        %v9841 = vshrl.u32 %v9840, 23
        %v9842 = vsub.s32 %v9841, 127
        %v9843 = vand.u32 2147483647, %v533
        %v9844 = vand.u32 %v9843, 8388607
        %v9845 = vor.u32 %v9844, 8388608
        %v9846 = vsub.s32 0, %v9845
        %v9847 = vadd.s32 %v9842, 1
        %vm9848 = vcmp.gt.s32.totalorder %v9847, 0
        %v9849 = vsel %vm9848, %v9847, 0
        %v9850 = vshrl.u32 %v9849, 5
        %v9851 = vand.u32 %v9849, 31
        %v9852 = vsub.s32 32, %v9851
        %v9853 = vshrl.u32 683565275, %v9852
        %v9854 = vshll.u32 683565275, %v9851
        %v9855 = vshrl.u32 2475754826, %v9852
        %v9856 = vor.u32 %v9854, %v9855
        %v9857 = vshll.u32 2475754826, %v9851
        %v9858 = vshrl.u32 2131351028, %v9852
        %v9859 = vor.u32 %v9857, %v9858
        %v9860 = vshll.u32 2131351028, %v9851
        %v9861 = vshrl.u32 2102212464, %v9852
        %v9862 = vor.u32 %v9860, %v9861
        %v9863 = vshll.u32 2102212464, %v9851
        %v9864 = vshrl.u32 920167782, %v9852
        %v9865 = vor.u32 %v9863, %v9864
        %v9866 = vshll.u32 920167782, %v9851
        %v9867 = vshrl.u32 1326507024, %v9852
        %v9868 = vor.u32 %v9866, %v9867
        %vm9869 = vcmp.lt.s32.totalorder %v9850, 1
        %vm9870 = vcmp.lt.s32.totalorder %v9850, 2
        %vm9871 = vcmp.lt.s32.totalorder %v9850, 3
        %vm9872 = vcmp.lt.s32.totalorder %v9850, 4
        %v9873 = vsel %vm9869, %v9853, %v9856
        %v9874 = vsel %vm9872, %v9862, 2102212464
        %v9875 = vsel %vm9871, %v9859, %v9874
        %v9876 = vsel %vm9870, %v9873, %v9875
        %v9877 = vsel %vm9869, %v9856, %v9859
        %v9878 = vsel %vm9872, %v9865, 920167782
        %v9879 = vsel %vm9871, %v9862, %v9878
        %v9880 = vsel %vm9870, %v9877, %v9879
        %v9881 = vsel %vm9869, %v9859, %v9862
        %v9882 = vsel %vm9872, %v9868, 1326507024
        %v9883 = vsel %vm9871, %v9865, %v9882
        %v9884 = vsel %vm9870, %v9881, %v9883
        %v9885 = vshll.u32 %v9845, 8
        %v9886 = vand.u32 %v9885, 65535
        %v9887 = vshrl.u32 %v9885, 16
        %v9888 = vand.u32 %v9884, 65535
        %v9889 = vshrl.u32 %v9884, 16
        %v9890 = vmul.u32 %v9886, %v9888
        %v9891 = vmul.u32 %v9886, %v9889
        %v9892 = vmul.u32 %v9887, %v9888
        %v9893 = vmul.u32 %v9887, %v9889
        %v9894 = vshll.u32 %v9891, 16
        %v9895 = vshrl.u32 %v9891, 16
        %v9896 = vshll.u32 %v9892, 16
        %v9897 = vshrl.u32 %v9892, 16
        %vm9898 = vc.u32 %v9890, %v9894
        %v9899 = vsel %vm9898, 1, 0
        %v9900 = vadd.s32 %v9890, %v9894
        %v9901 = vadd.s32 %v9893, %v9899
        %vm9902 = vc.u32 %v9900, %v9896
        %v9903 = vsel %vm9902, 1, 0
        %v9904 = vadd.s32 %v9900, %v9896
        %v9905 = vadd.s32 %v9901, %v9903
        %v9906 = vadd.s32 %v9905, %v9895
        %v9907 = vadd.s32 %v9906, %v9897
        %v9908 = vand.u32 %v9885, 65535
        %v9909 = vshrl.u32 %v9885, 16
        %v9910 = vand.u32 %v9880, 65535
        %v9911 = vshrl.u32 %v9880, 16
        %v9912 = vmul.u32 %v9908, %v9910
        %v9913 = vmul.u32 %v9908, %v9911
        %v9914 = vmul.u32 %v9909, %v9910
        %v9915 = vmul.u32 %v9909, %v9911
        %v9916 = vshll.u32 %v9913, 16
        %v9917 = vshrl.u32 %v9913, 16
        %v9918 = vshll.u32 %v9914, 16
        %v9919 = vshrl.u32 %v9914, 16
        %vm9920 = vc.u32 %v9912, %v9916
        %v9921 = vsel %vm9920, 1, 0
        %v9922 = vadd.s32 %v9912, %v9916
        %v9923 = vadd.s32 %v9915, %v9921
        %vm9924 = vc.u32 %v9922, %v9918
        %v9925 = vsel %vm9924, 1, 0
        %v9926 = vadd.s32 %v9922, %v9918
        %v9927 = vadd.s32 %v9923, %v9925
        %v9928 = vadd.s32 %v9927, %v9917
        %v9929 = vadd.s32 %v9928, %v9919
        %v9930 = vmul.u32 %v9885, %v9876
        %v9931 = vadd.s32 %v9907, %v9926
        %vm9932 = vc.u32 %v9907, %v9926
        %v9933 = vadd.s32 %v9929, 1
        %v9934 = vsel %vm9932, %v9933, %v9929
        %v9935 = vadd.s32 %v9930, %v9934
        %v9936 = vadd.s32 %v9935, 536870912
        %v9937 = vshrl.u32 %v9936, 30
        %v9938 = vshll.u32 %v9937, 30
        %v9939 = vsub.s32 %v9935, %v9938
        %vm9940 = vcmp.lt.s32.totalorder %v9939, 0
        %v9941 = vsub.s32 0, %v9939
        %v9942 = vsel %vm9940, %v9941, %v9939
        %v9943 = vclz %v9942
        %v9944 = vsub.s32 %v9943, 2
        %vm9945 = vcmp.gt.s32.totalorder 0, %v9944
        %v9946 = vsel %vm9945, 0, %v9944
        %v9947 = vsub.s32 32, %v9946
        %v9948 = vshll.u32 %v9939, %v9946
        %v9949 = vshrl.u32 %v9931, %v9947
        %v9950 = vor.u32 %v9948, %v9949
        %v9951 = vsub.s32 4294967266, %v9946
        %v9952 = vadd.s32 %v9951, 127
        %v9953 = vshll.u32 %v9952, 23
        %v9954 = vor.u32 4788187, %v9953
        %v9955 = vand.u32 2147483647, %v9954
        %v9957 = vcvt.s32.f32 %v9950
        %v9958 = vmul.f32 %v9957, %v9955
        %v9959 = vxor.u32 %v9958, 2147483648
        %v9960 = vsel %vm9839, %v9959, %v9958
        %v9961 = vsub.s32 4, %v9937
        %v9962 = vsel %vm9839, %v9961, %v9937
        %v9963 = vsel %vm9838, %v533, %v9960
        %v9964 = vsel %vm9838, 0, %v9962
        %v9965 = vmul.f32 %v9963, %v9963
        %v9966 = vmul.f32 %v9965, -0.001358992
        %v9967 = vadd.f32 %v9966, 0.041655596
        %v9968 = vmul.f32 %v9965, %v9967
        %v9969 = vadd.f32 %v9968, -0.4999988
        %v9970 = vmul.f32 %v9965, %v9969
        %v9971 = vadd.f32 1.0, %v9970
        %v9972 = vmul.f32 %v9963, %v9963
        %v9973 = vmul.f32 %v9972, -0.00019511016
        %v9974 = vadd.f32 %v9973, 0.008332121
        %v9975 = vmul.f32 %v9972, %v9974
        %v9976 = vadd.f32 %v9975, -0.16666654
        %v9977 = vmul.f32 %v9972, %v9976
        %v9978 = vadd.f32 %v9977, 1.0
        %v9979 = vmul.f32 %v9978, %v9963
        %vm9980 = vweird.f32 %v533
        %v9981 = vadd.s32 %v9964, 3
        %v9982 = vand.u32 %v9981, 3
        %vm9983 = vcmp.lt.s32.totalorder %v9982, 2
        %vm9984 = vcmp.eq.s32.totalorder %v9982, 0
        %v9985 = vxor.u32 %v9979, 2147483648
        %v9986 = vsel %vm9984, %v9971, %v9985
        %vm9987 = vcmp.eq.s32.totalorder %v9982, 2
        %v9988 = vxor.u32 %v9971, 2147483648
        %v9989 = vsel %vm9987, %v9988, %v9979
        %v9990 = vsel %vm9983, %v9986, %v9989
        %v9991 = vsel %vm9980, nan, %v9990
        %v9992 = vand.u32 2147483647, %v534
        %vm9993 = vcmp.le.f32.partialorder %v9992, 0.7853982
        %vm9994 = vcmp.lt.s32.totalorder %v534, 0
        %v9995 = vand.u32 %v534, 2139095040
        %v9996 = vshrl.u32 %v9995, 23
        %v9997 = vsub.s32 %v9996, 127
        %v9998 = vand.u32 2147483647, %v534
        %v9999 = vand.u32 %v9998, 8388607
        %v10000 = vor.u32 %v9999, 8388608
        %v10001 = vsub.s32 0, %v10000
        %v10002 = vadd.s32 %v9997, 1
        %vm10003 = vcmp.gt.s32.totalorder %v10002, 0
        %v10004 = vsel %vm10003, %v10002, 0
        %v10005 = vshrl.u32 %v10004, 5
        %v10006 = vand.u32 %v10004, 31
        %v10007 = vsub.s32 32, %v10006
        %v10008 = vshrl.u32 683565275, %v10007
        %v10009 = vshll.u32 683565275, %v10006
        %v10010 = vshrl.u32 2475754826, %v10007
        %v10011 = vor.u32 %v10009, %v10010
        %v10012 = vshll.u32 2475754826, %v10006
        %v10013 = vshrl.u32 2131351028, %v10007
        %v10014 = vor.u32 %v10012, %v10013
        %v10015 = vshll.u32 2131351028, %v10006
        %v10016 = vshrl.u32 2102212464, %v10007
        %v10017 = vor.u32 %v10015, %v10016
        %v10018 = vshll.u32 2102212464, %v10006
        %v10019 = vshrl.u32 920167782, %v10007
        %v10020 = vor.u32 %v10018, %v10019
        %v10021 = vshll.u32 920167782, %v10006
        %v10022 = vshrl.u32 1326507024, %v10007
        %v10023 = vor.u32 %v10021, %v10022
        %vm10024 = vcmp.lt.s32.totalorder %v10005, 1
        %vm10025 = vcmp.lt.s32.totalorder %v10005, 2
        %vm10026 = vcmp.lt.s32.totalorder %v10005, 3
        %vm10027 = vcmp.lt.s32.totalorder %v10005, 4
        %v10028 = vsel %vm10024, %v10008, %v10011
        %v10029 = vsel %vm10027, %v10017, 2102212464
        %v10030 = vsel %vm10026, %v10014, %v10029
        %v10031 = vsel %vm10025, %v10028, %v10030
        %v10032 = vsel %vm10024, %v10011, %v10014
        %v10033 = vsel %vm10027, %v10020, 920167782
        %v10034 = vsel %vm10026, %v10017, %v10033
        %v10035 = vsel %vm10025, %v10032, %v10034
        %v10036 = vsel %vm10024, %v10014, %v10017
        %v10037 = vsel %vm10027, %v10023, 1326507024
        %v10038 = vsel %vm10026, %v10020, %v10037
        %v10039 = vsel %vm10025, %v10036, %v10038
        %v10040 = vshll.u32 %v10000, 8
        %v10041 = vand.u32 %v10040, 65535
        %v10042 = vshrl.u32 %v10040, 16
        %v10043 = vand.u32 %v10039, 65535
        %v10044 = vshrl.u32 %v10039, 16
        %v10045 = vmul.u32 %v10041, %v10043
        %v10046 = vmul.u32 %v10041, %v10044
        %v10047 = vmul.u32 %v10042, %v10043
        %v10048 = vmul.u32 %v10042, %v10044
        %v10049 = vshll.u32 %v10046, 16
        %v10050 = vshrl.u32 %v10046, 16
        %v10051 = vshll.u32 %v10047, 16
        %v10052 = vshrl.u32 %v10047, 16
        %vm10053 = vc.u32 %v10045, %v10049
        %v10054 = vsel %vm10053, 1, 0
        %v10055 = vadd.s32 %v10045, %v10049
        %v10056 = vadd.s32 %v10048, %v10054
        %vm10057 = vc.u32 %v10055, %v10051
        %v10058 = vsel %vm10057, 1, 0
        %v10059 = vadd.s32 %v10055, %v10051
        %v10060 = vadd.s32 %v10056, %v10058
        %v10061 = vadd.s32 %v10060, %v10050
        %v10062 = vadd.s32 %v10061, %v10052
        %v10063 = vand.u32 %v10040, 65535
        %v10064 = vshrl.u32 %v10040, 16
        %v10065 = vand.u32 %v10035, 65535
        %v10066 = vshrl.u32 %v10035, 16
        %v10067 = vmul.u32 %v10063, %v10065
        %v10068 = vmul.u32 %v10063, %v10066
        %v10069 = vmul.u32 %v10064, %v10065
        %v10070 = vmul.u32 %v10064, %v10066
        %v10071 = vshll.u32 %v10068, 16
        %v10072 = vshrl.u32 %v10068, 16
        %v10073 = vshll.u32 %v10069, 16
        %v10074 = vshrl.u32 %v10069, 16
        %vm10075 = vc.u32 %v10067, %v10071
        %v10076 = vsel %vm10075, 1, 0
        %v10077 = vadd.s32 %v10067, %v10071
        %v10078 = vadd.s32 %v10070, %v10076
        %vm10079 = vc.u32 %v10077, %v10073
        %v10080 = vsel %vm10079, 1, 0
        %v10081 = vadd.s32 %v10077, %v10073
        %v10082 = vadd.s32 %v10078, %v10080
        %v10083 = vadd.s32 %v10082, %v10072
        %v10084 = vadd.s32 %v10083, %v10074
        %v10085 = vmul.u32 %v10040, %v10031
        %v10086 = vadd.s32 %v10062, %v10081
        %vm10087 = vc.u32 %v10062, %v10081
        %v10088 = vadd.s32 %v10084, 1
        %v10089 = vsel %vm10087, %v10088, %v10084
        %v10090 = vadd.s32 %v10085, %v10089
        %v10091 = vadd.s32 %v10090, 536870912
        %v10092 = vshrl.u32 %v10091, 30
        %v10093 = vshll.u32 %v10092, 30
        %v10094 = vsub.s32 %v10090, %v10093
        %vm10095 = vcmp.lt.s32.totalorder %v10094, 0
        %v10096 = vsub.s32 0, %v10094
        %v10097 = vsel %vm10095, %v10096, %v10094
        %v10098 = vclz %v10097
        %v10099 = vsub.s32 %v10098, 2
        %vm10100 = vcmp.gt.s32.totalorder 0, %v10099
        %v10101 = vsel %vm10100, 0, %v10099
        %v10102 = vsub.s32 32, %v10101
        %v10103 = vshll.u32 %v10094, %v10101
        %v10104 = vshrl.u32 %v10086, %v10102
        %v10105 = vor.u32 %v10103, %v10104
        %v10106 = vsub.s32 4294967266, %v10101
        %v10107 = vadd.s32 %v10106, 127
        %v10108 = vshll.u32 %v10107, 23
        %v10109 = vor.u32 4788187, %v10108
        %v10110 = vand.u32 2147483647, %v10109
        %v10112 = vcvt.s32.f32 %v10105
        %v10113 = vmul.f32 %v10112, %v10110
        %v10114 = vxor.u32 %v10113, 2147483648
        %v10115 = vsel %vm9994, %v10114, %v10113
        %v10116 = vsub.s32 4, %v10092
        %v10117 = vsel %vm9994, %v10116, %v10092
        %v10118 = vsel %vm9993, %v534, %v10115
        %v10119 = vsel %vm9993, 0, %v10117
        %v10120 = vmul.f32 %v10118, %v10118
        %v10121 = vmul.f32 %v10120, -0.001358992
        %v10122 = vadd.f32 %v10121, 0.041655596
        %v10123 = vmul.f32 %v10120, %v10122
        %v10124 = vadd.f32 %v10123, -0.4999988
        %v10125 = vmul.f32 %v10120, %v10124
        %v10126 = vadd.f32 1.0, %v10125
        %v10127 = vmul.f32 %v10118, %v10118
        %v10128 = vmul.f32 %v10127, -0.00019511016
        %v10129 = vadd.f32 %v10128, 0.008332121
        %v10130 = vmul.f32 %v10127, %v10129
        %v10131 = vadd.f32 %v10130, -0.16666654
        %v10132 = vmul.f32 %v10127, %v10131
        %v10133 = vadd.f32 %v10132, 1.0
        %v10134 = vmul.f32 %v10133, %v10118
        %vm10135 = vweird.f32 %v534
        %v10136 = vadd.s32 %v10119, 3
        %v10137 = vand.u32 %v10136, 3
        %vm10138 = vcmp.lt.s32.totalorder %v10137, 2
        %vm10139 = vcmp.eq.s32.totalorder %v10137, 0
        %v10140 = vxor.u32 %v10134, 2147483648
        %v10141 = vsel %vm10139, %v10126, %v10140
        %vm10142 = vcmp.eq.s32.totalorder %v10137, 2
        %v10143 = vxor.u32 %v10126, 2147483648
        %v10144 = vsel %vm10142, %v10143, %v10134
        %v10145 = vsel %vm10138, %v10141, %v10144
        %v10146 = vsel %vm10135, nan, %v10145
        %v10147 = vand.u32 2147483647, %v535
        %vm10148 = vcmp.le.f32.partialorder %v10147, 0.7853982
        %vm10149 = vcmp.lt.s32.totalorder %v535, 0
        %v10150 = vand.u32 %v535, 2139095040
        %v10151 = vshrl.u32 %v10150, 23
        %v10152 = vsub.s32 %v10151, 127
        %v10153 = vand.u32 2147483647, %v535
        %v10154 = vand.u32 %v10153, 8388607
        %v10155 = vor.u32 %v10154, 8388608
        %v10156 = vsub.s32 0, %v10155
        %v10157 = vadd.s32 %v10152, 1
        %vm10158 = vcmp.gt.s32.totalorder %v10157, 0
        %v10159 = vsel %vm10158, %v10157, 0
        %v10160 = vshrl.u32 %v10159, 5
        %v10161 = vand.u32 %v10159, 31
        %v10162 = vsub.s32 32, %v10161
        %v10163 = vshrl.u32 683565275, %v10162
        %v10164 = vshll.u32 683565275, %v10161
        %v10165 = vshrl.u32 2475754826, %v10162
        %v10166 = vor.u32 %v10164, %v10165
        %v10167 = vshll.u32 2475754826, %v10161
        %v10168 = vshrl.u32 2131351028, %v10162
        %v10169 = vor.u32 %v10167, %v10168
        %v10170 = vshll.u32 2131351028, %v10161
        %v10171 = vshrl.u32 2102212464, %v10162
        %v10172 = vor.u32 %v10170, %v10171
        %v10173 = vshll.u32 2102212464, %v10161
        %v10174 = vshrl.u32 920167782, %v10162
        %v10175 = vor.u32 %v10173, %v10174
        %v10176 = vshll.u32 920167782, %v10161
        %v10177 = vshrl.u32 1326507024, %v10162
        %v10178 = vor.u32 %v10176, %v10177
        %vm10179 = vcmp.lt.s32.totalorder %v10160, 1
        %vm10180 = vcmp.lt.s32.totalorder %v10160, 2
        %vm10181 = vcmp.lt.s32.totalorder %v10160, 3
        %vm10182 = vcmp.lt.s32.totalorder %v10160, 4
        %v10183 = vsel %vm10179, %v10163, %v10166
        %v10184 = vsel %vm10182, %v10172, 2102212464
        %v10185 = vsel %vm10181, %v10169, %v10184
        %v10186 = vsel %vm10180, %v10183, %v10185
        %v10187 = vsel %vm10179, %v10166, %v10169
        %v10188 = vsel %vm10182, %v10175, 920167782
        %v10189 = vsel %vm10181, %v10172, %v10188
        %v10190 = vsel %vm10180, %v10187, %v10189
        %v10191 = vsel %vm10179, %v10169, %v10172
        %v10192 = vsel %vm10182, %v10178, 1326507024
        %v10193 = vsel %vm10181, %v10175, %v10192
        %v10194 = vsel %vm10180, %v10191, %v10193
        %v10195 = vshll.u32 %v10155, 8
        %v10196 = vand.u32 %v10195, 65535
        %v10197 = vshrl.u32 %v10195, 16
        %v10198 = vand.u32 %v10194, 65535
        %v10199 = vshrl.u32 %v10194, 16
        %v10200 = vmul.u32 %v10196, %v10198
        %v10201 = vmul.u32 %v10196, %v10199
        %v10202 = vmul.u32 %v10197, %v10198
        %v10203 = vmul.u32 %v10197, %v10199
        %v10204 = vshll.u32 %v10201, 16
        %v10205 = vshrl.u32 %v10201, 16
        %v10206 = vshll.u32 %v10202, 16
        %v10207 = vshrl.u32 %v10202, 16
        %vm10208 = vc.u32 %v10200, %v10204
        %v10209 = vsel %vm10208, 1, 0
        %v10210 = vadd.s32 %v10200, %v10204
        %v10211 = vadd.s32 %v10203, %v10209
        %vm10212 = vc.u32 %v10210, %v10206
        %v10213 = vsel %vm10212, 1, 0
        %v10214 = vadd.s32 %v10210, %v10206
        %v10215 = vadd.s32 %v10211, %v10213
        %v10216 = vadd.s32 %v10215, %v10205
        %v10217 = vadd.s32 %v10216, %v10207
        %v10218 = vand.u32 %v10195, 65535
        %v10219 = vshrl.u32 %v10195, 16
        %v10220 = vand.u32 %v10190, 65535
        %v10221 = vshrl.u32 %v10190, 16
        %v10222 = vmul.u32 %v10218, %v10220
        %v10223 = vmul.u32 %v10218, %v10221
        %v10224 = vmul.u32 %v10219, %v10220
        %v10225 = vmul.u32 %v10219, %v10221
        %v10226 = vshll.u32 %v10223, 16
        %v10227 = vshrl.u32 %v10223, 16
        %v10228 = vshll.u32 %v10224, 16
        %v10229 = vshrl.u32 %v10224, 16
        %vm10230 = vc.u32 %v10222, %v10226
        %v10231 = vsel %vm10230, 1, 0
        %v10232 = vadd.s32 %v10222, %v10226
        %v10233 = vadd.s32 %v10225, %v10231
        %vm10234 = vc.u32 %v10232, %v10228
        %v10235 = vsel %vm10234, 1, 0
        %v10236 = vadd.s32 %v10232, %v10228
        %v10237 = vadd.s32 %v10233, %v10235
        %v10238 = vadd.s32 %v10237, %v10227
        %v10239 = vadd.s32 %v10238, %v10229
        %v10240 = vmul.u32 %v10195, %v10186
        %v10241 = vadd.s32 %v10217, %v10236
        %vm10242 = vc.u32 %v10217, %v10236
        %v10243 = vadd.s32 %v10239, 1
        %v10244 = vsel %vm10242, %v10243, %v10239
        %v10245 = vadd.s32 %v10240, %v10244
        %v10246 = vadd.s32 %v10245, 536870912
        %v10247 = vshrl.u32 %v10246, 30
        %v10248 = vshll.u32 %v10247, 30
        %v10249 = vsub.s32 %v10245, %v10248
        %vm10250 = vcmp.lt.s32.totalorder %v10249, 0
        %v10251 = vsub.s32 0, %v10249
        %v10252 = vsel %vm10250, %v10251, %v10249
        %v10253 = vclz %v10252
        %v10254 = vsub.s32 %v10253, 2
        %vm10255 = vcmp.gt.s32.totalorder 0, %v10254
        %v10256 = vsel %vm10255, 0, %v10254
        %v10257 = vsub.s32 32, %v10256
        %v10258 = vshll.u32 %v10249, %v10256
        %v10259 = vshrl.u32 %v10241, %v10257
        %v10260 = vor.u32 %v10258, %v10259
        %v10261 = vsub.s32 4294967266, %v10256
        %v10262 = vadd.s32 %v10261, 127
        %v10263 = vshll.u32 %v10262, 23
        %v10264 = vor.u32 4788187, %v10263
        %v10265 = vand.u32 2147483647, %v10264
        %v10267 = vcvt.s32.f32 %v10260
        %v10268 = vmul.f32 %v10267, %v10265
        %v10269 = vxor.u32 %v10268, 2147483648
        %v10270 = vsel %vm10149, %v10269, %v10268
        %v10271 = vsub.s32 4, %v10247
        %v10272 = vsel %vm10149, %v10271, %v10247
        %v10273 = vsel %vm10148, %v535, %v10270
        %v10274 = vsel %vm10148, 0, %v10272
        %v10275 = vmul.f32 %v10273, %v10273
        %v10276 = vmul.f32 %v10275, -0.001358992
        %v10277 = vadd.f32 %v10276, 0.041655596
        %v10278 = vmul.f32 %v10275, %v10277
        %v10279 = vadd.f32 %v10278, -0.4999988
        %v10280 = vmul.f32 %v10275, %v10279
        %v10281 = vadd.f32 1.0, %v10280
        %v10282 = vmul.f32 %v10273, %v10273
        %v10283 = vmul.f32 %v10282, -0.00019511016
        %v10284 = vadd.f32 %v10283, 0.008332121
        %v10285 = vmul.f32 %v10282, %v10284
        %v10286 = vadd.f32 %v10285, -0.16666654
        %v10287 = vmul.f32 %v10282, %v10286
        %v10288 = vadd.f32 %v10287, 1.0
        %v10289 = vmul.f32 %v10288, %v10273
        %vm10290 = vweird.f32 %v535
        %v10291 = vadd.s32 %v10274, 3
        %v10292 = vand.u32 %v10291, 3
        %vm10293 = vcmp.lt.s32.totalorder %v10292, 2
        %vm10294 = vcmp.eq.s32.totalorder %v10292, 0
        %v10295 = vxor.u32 %v10289, 2147483648
        %v10296 = vsel %vm10294, %v10281, %v10295
        %vm10297 = vcmp.eq.s32.totalorder %v10292, 2
        %v10298 = vxor.u32 %v10281, 2147483648
        %v10299 = vsel %vm10297, %v10298, %v10289
        %v10300 = vsel %vm10293, %v10296, %v10299
        %v10301 = vsel %vm10290, nan, %v10300
        %v10302 = vand.u32 2147483647, %v536
        %vm10303 = vcmp.le.f32.partialorder %v10302, 0.7853982
        %vm10304 = vcmp.lt.s32.totalorder %v536, 0
        %v10305 = vand.u32 %v536, 2139095040
        %v10306 = vshrl.u32 %v10305, 23
        %v10307 = vsub.s32 %v10306, 127
        %v10308 = vand.u32 2147483647, %v536
        %v10309 = vand.u32 %v10308, 8388607
        %v10310 = vor.u32 %v10309, 8388608
        %v10311 = vsub.s32 0, %v10310
        %v10312 = vadd.s32 %v10307, 1
        %vm10313 = vcmp.gt.s32.totalorder %v10312, 0
        %v10314 = vsel %vm10313, %v10312, 0
        %v10315 = vshrl.u32 %v10314, 5
        %v10316 = vand.u32 %v10314, 31
        %v10317 = vsub.s32 32, %v10316
        %v10318 = vshrl.u32 683565275, %v10317
        %v10319 = vshll.u32 683565275, %v10316
        %v10320 = vshrl.u32 2475754826, %v10317
        %v10321 = vor.u32 %v10319, %v10320
        %v10322 = vshll.u32 2475754826, %v10316
        %v10323 = vshrl.u32 2131351028, %v10317
        %v10324 = vor.u32 %v10322, %v10323
        %v10325 = vshll.u32 2131351028, %v10316
        %v10326 = vshrl.u32 2102212464, %v10317
        %v10327 = vor.u32 %v10325, %v10326
        %v10328 = vshll.u32 2102212464, %v10316
        %v10329 = vshrl.u32 920167782, %v10317
        %v10330 = vor.u32 %v10328, %v10329
        %v10331 = vshll.u32 920167782, %v10316
        %v10332 = vshrl.u32 1326507024, %v10317
        %v10333 = vor.u32 %v10331, %v10332
        %vm10334 = vcmp.lt.s32.totalorder %v10315, 1
        %vm10335 = vcmp.lt.s32.totalorder %v10315, 2
        %vm10336 = vcmp.lt.s32.totalorder %v10315, 3
        %vm10337 = vcmp.lt.s32.totalorder %v10315, 4
        %v10338 = vsel %vm10334, %v10318, %v10321
        %v10339 = vsel %vm10337, %v10327, 2102212464
        %v10340 = vsel %vm10336, %v10324, %v10339
        %v10341 = vsel %vm10335, %v10338, %v10340
        %v10342 = vsel %vm10334, %v10321, %v10324
        %v10343 = vsel %vm10337, %v10330, 920167782
        %v10344 = vsel %vm10336, %v10327, %v10343
        %v10345 = vsel %vm10335, %v10342, %v10344
        %v10346 = vsel %vm10334, %v10324, %v10327
        %v10347 = vsel %vm10337, %v10333, 1326507024
        %v10348 = vsel %vm10336, %v10330, %v10347
        %v10349 = vsel %vm10335, %v10346, %v10348
        %v10350 = vshll.u32 %v10310, 8
        %v10351 = vand.u32 %v10350, 65535
        %v10352 = vshrl.u32 %v10350, 16
        %v10353 = vand.u32 %v10349, 65535
        %v10354 = vshrl.u32 %v10349, 16
        %v10355 = vmul.u32 %v10351, %v10353
        %v10356 = vmul.u32 %v10351, %v10354
        %v10357 = vmul.u32 %v10352, %v10353
        %v10358 = vmul.u32 %v10352, %v10354
        %v10359 = vshll.u32 %v10356, 16
        %v10360 = vshrl.u32 %v10356, 16
        %v10361 = vshll.u32 %v10357, 16
        %v10362 = vshrl.u32 %v10357, 16
        %vm10363 = vc.u32 %v10355, %v10359
        %v10364 = vsel %vm10363, 1, 0
        %v10365 = vadd.s32 %v10355, %v10359
        %v10366 = vadd.s32 %v10358, %v10364
        %vm10367 = vc.u32 %v10365, %v10361
        %v10368 = vsel %vm10367, 1, 0
        %v10369 = vadd.s32 %v10365, %v10361
        %v10370 = vadd.s32 %v10366, %v10368
        %v10371 = vadd.s32 %v10370, %v10360
        %v10372 = vadd.s32 %v10371, %v10362
        %v10373 = vand.u32 %v10350, 65535
        %v10374 = vshrl.u32 %v10350, 16
        %v10375 = vand.u32 %v10345, 65535
        %v10376 = vshrl.u32 %v10345, 16
        %v10377 = vmul.u32 %v10373, %v10375
        %v10378 = vmul.u32 %v10373, %v10376
        %v10379 = vmul.u32 %v10374, %v10375
        %v10380 = vmul.u32 %v10374, %v10376
        %v10381 = vshll.u32 %v10378, 16
        %v10382 = vshrl.u32 %v10378, 16
        %v10383 = vshll.u32 %v10379, 16
        %v10384 = vshrl.u32 %v10379, 16
        %vm10385 = vc.u32 %v10377, %v10381
        %v10386 = vsel %vm10385, 1, 0
        %v10387 = vadd.s32 %v10377, %v10381
        %v10388 = vadd.s32 %v10380, %v10386
        %vm10389 = vc.u32 %v10387, %v10383
        %v10390 = vsel %vm10389, 1, 0
        %v10391 = vadd.s32 %v10387, %v10383
        %v10392 = vadd.s32 %v10388, %v10390
        %v10393 = vadd.s32 %v10392, %v10382
        %v10394 = vadd.s32 %v10393, %v10384
        %v10395 = vmul.u32 %v10350, %v10341
        %v10396 = vadd.s32 %v10372, %v10391
        %vm10397 = vc.u32 %v10372, %v10391
        %v10398 = vadd.s32 %v10394, 1
        %v10399 = vsel %vm10397, %v10398, %v10394
        %v10400 = vadd.s32 %v10395, %v10399
        %v10401 = vadd.s32 %v10400, 536870912
        %v10402 = vshrl.u32 %v10401, 30
        %v10403 = vshll.u32 %v10402, 30
        %v10404 = vsub.s32 %v10400, %v10403
        %vm10405 = vcmp.lt.s32.totalorder %v10404, 0
        %v10406 = vsub.s32 0, %v10404
        %v10407 = vsel %vm10405, %v10406, %v10404
        %v10408 = vclz %v10407
        %v10409 = vsub.s32 %v10408, 2
        %vm10410 = vcmp.gt.s32.totalorder 0, %v10409
        %v10411 = vsel %vm10410, 0, %v10409
        %v10412 = vsub.s32 32, %v10411
        %v10413 = vshll.u32 %v10404, %v10411
        %v10414 = vshrl.u32 %v10396, %v10412
        %v10415 = vor.u32 %v10413, %v10414
        %v10416 = vsub.s32 4294967266, %v10411
        %v10417 = vadd.s32 %v10416, 127
        %v10418 = vshll.u32 %v10417, 23
        %v10419 = vor.u32 4788187, %v10418
        %v10420 = vand.u32 2147483647, %v10419
        %v10422 = vcvt.s32.f32 %v10415
        %v10423 = vmul.f32 %v10422, %v10420
        %v10424 = vxor.u32 %v10423, 2147483648
        %v10425 = vsel %vm10304, %v10424, %v10423
        %v10426 = vsub.s32 4, %v10402
        %v10427 = vsel %vm10304, %v10426, %v10402
        %v10428 = vsel %vm10303, %v536, %v10425
        %v10429 = vsel %vm10303, 0, %v10427
        %v10430 = vmul.f32 %v10428, %v10428
        %v10431 = vmul.f32 %v10430, -0.001358992
        %v10432 = vadd.f32 %v10431, 0.041655596
        %v10433 = vmul.f32 %v10430, %v10432
        %v10434 = vadd.f32 %v10433, -0.4999988
        %v10435 = vmul.f32 %v10430, %v10434
        %v10436 = vadd.f32 1.0, %v10435
        %v10437 = vmul.f32 %v10428, %v10428
        %v10438 = vmul.f32 %v10437, -0.00019511016
        %v10439 = vadd.f32 %v10438, 0.008332121
        %v10440 = vmul.f32 %v10437, %v10439
        %v10441 = vadd.f32 %v10440, -0.16666654
        %v10442 = vmul.f32 %v10437, %v10441
        %v10443 = vadd.f32 %v10442, 1.0
        %v10444 = vmul.f32 %v10443, %v10428
        %vm10445 = vweird.f32 %v536
        %v10446 = vadd.s32 %v10429, 3
        %v10447 = vand.u32 %v10446, 3
        %vm10448 = vcmp.lt.s32.totalorder %v10447, 2
        %vm10449 = vcmp.eq.s32.totalorder %v10447, 0
        %v10450 = vxor.u32 %v10444, 2147483648
        %v10451 = vsel %vm10449, %v10436, %v10450
        %vm10452 = vcmp.eq.s32.totalorder %v10447, 2
        %v10453 = vxor.u32 %v10436, 2147483648
        %v10454 = vsel %vm10452, %v10453, %v10444
        %v10455 = vsel %vm10448, %v10451, %v10454
        %v10456 = vsel %vm10445, nan, %v10455
        %10457 = vst [vmem:[%s255] sm:$0xff] %v691
        %10458 = vst [vmem:[%s255 + $0x8] sm:$0xff] %v846
        %10459 = vst [vmem:[%s255 + $0x10] sm:$0xff] %v1001
        %10460 = vst [vmem:[%s255 + $0x18] sm:$0xff] %v1156
        %10461 = vst [vmem:[%s255 + $0x20] sm:$0xff] %v1311
        %10462 = vst [vmem:[%s255 + $0x28] sm:$0xff] %v1466
        %10463 = vst [vmem:[%s255 + $0x30] sm:$0xff] %v1621
        %10464 = vst [vmem:[%s255 + $0x38] sm:$0xff] %v1776
        %10465 = vst [vmem:[%s255 + $0x40] sm:$0xff] %v1931
        %10466 = vst [vmem:[%s255 + $0x48] sm:$0xff] %v2086
        %10467 = vst [vmem:[%s255 + $0x50] sm:$0xff] %v2241
        %10468 = vst [vmem:[%s255 + $0x58] sm:$0xff] %v2396
        %10469 = vst [vmem:[%s255 + $0x60] sm:$0xff] %v2551
        %10470 = vst [vmem:[%s255 + $0x68] sm:$0xff] %v2706
        %10471 = vst [vmem:[%s255 + $0x70] sm:$0xff] %v2861
        %10472 = vst [vmem:[%s255 + $0x78] sm:$0xff] %v3016
        %10473 = vst [vmem:[%s255 + $0x80] sm:$0xff] %v3171
        %10474 = vst [vmem:[%s255 + $0x88] sm:$0xff] %v3326
        %10475 = vst [vmem:[%s255 + $0x90] sm:$0xff] %v3481
        %10476 = vst [vmem:[%s255 + $0x98] sm:$0xff] %v3636
        %10477 = vst [vmem:[%s255 + $0xa0] sm:$0xff] %v3791
        %10478 = vst [vmem:[%s255 + $0xa8] sm:$0xff] %v3946
        %10479 = vst [vmem:[%s255 + $0xb0] sm:$0xff] %v4101
        %10480 = vst [vmem:[%s255 + $0xb8] sm:$0xff] %v4256
        %10481 = vst [vmem:[%s255 + $0xc0] sm:$0xff] %v4411
        %10482 = vst [vmem:[%s255 + $0xc8] sm:$0xff] %v4566
        %10483 = vst [vmem:[%s255 + $0xd0] sm:$0xff] %v4721
        %10484 = vst [vmem:[%s255 + $0xd8] sm:$0xff] %v4876
        %10485 = vst [vmem:[%s255 + $0xe0] sm:$0xff] %v5031
        %10486 = vst [vmem:[%s255 + $0xe8] sm:$0xff] %v5186
        %10487 = vst [vmem:[%s255 + $0xf0] sm:$0xff] %v5341
        %10488 = vst [vmem:[%s255 + $0xf8] sm:$0xff] %v5496
        %10489 = vst [vmem:[%s255 + $0x100] sm:$0xff] %v5651
        %10490 = vst [vmem:[%s255 + $0x108] sm:$0xff] %v5806
        %10491 = vst [vmem:[%s255 + $0x110] sm:$0xff] %v5961
        %10492 = vst [vmem:[%s255 + $0x118] sm:$0xff] %v6116
        %10493 = vst [vmem:[%s255 + $0x120] sm:$0xff] %v6271
        %10494 = vst [vmem:[%s255 + $0x128] sm:$0xff] %v6426
        %10495 = vst [vmem:[%s255 + $0x130] sm:$0xff] %v6581
        %10496 = vst [vmem:[%s255 + $0x138] sm:$0xff] %v6736
        %10497 = vst [vmem:[%s255 + $0x140] sm:$0xff] %v6891
        %10498 = vst [vmem:[%s255 + $0x148] sm:$0xff] %v7046
        %10499 = vst [vmem:[%s255 + $0x150] sm:$0xff] %v7201
        %10500 = vst [vmem:[%s255 + $0x158] sm:$0xff] %v7356
        %10501 = vst [vmem:[%s255 + $0x160] sm:$0xff] %v7511
        %10502 = vst [vmem:[%s255 + $0x168] sm:$0xff] %v7666
        %10503 = vst [vmem:[%s255 + $0x170] sm:$0xff] %v7821
        %10504 = vst [vmem:[%s255 + $0x178] sm:$0xff] %v7976
        %10505 = vst [vmem:[%s255 + $0x180] sm:$0xff] %v8131
        %10506 = vst [vmem:[%s255 + $0x188] sm:$0xff] %v8286
        %10507 = vst [vmem:[%s255 + $0x190] sm:$0xff] %v8441
        %10508 = vst [vmem:[%s255 + $0x198] sm:$0xff] %v8596
        %10509 = vst [vmem:[%s255 + $0x1a0] sm:$0xff] %v8751
        %10510 = vst [vmem:[%s255 + $0x1a8] sm:$0xff] %v8906
        %10511 = vst [vmem:[%s255 + $0x1b0] sm:$0xff] %v9061
        %10512 = vst [vmem:[%s255 + $0x1b8] sm:$0xff] %v9216
        %10513 = vst [vmem:[%s255 + $0x1c0] sm:$0xff] %v9371
        %10514 = vst [vmem:[%s255 + $0x1c8] sm:$0xff] %v9526
        %10515 = vst [vmem:[%s255 + $0x1d0] sm:$0xff] %v9681
        %10516 = vst [vmem:[%s255 + $0x1d8] sm:$0xff] %v9836
        %10517 = vst [vmem:[%s255 + $0x1e0] sm:$0xff] %v9991
        %10518 = vst [vmem:[%s255 + $0x1e8] sm:$0xff] %v10146
        %10519 = vst [vmem:[%s255 + $0x1f0] sm:$0xff] %v10301
        %10520 = vst [vmem:[%s255 + $0x1f8] sm:$0xff] %v10456
        %s10521 = sand.u32 %s150, 1
        %s10522 = sand.u32 %s150, 1
        %s10523 = smul.addr %s10522, 512
        %s10524 = scalar_lea.vmem [#allocation6], %s10523
        // Predicated region
        $region49: #{positional_embedding.1} parent=39 // pred_check
          %p10525 = pneg %p160
        $region50: #{positional_embedding.1} parent=39 // pred_check_branch
          %10527 = sbr.rel (%p10525) target = $region52
        $region51: #{positional_embedding.1} parent=39 // pred_region
          %s10528 = smul.u32 64, %s23
          %s10529 = ssub.s32 126, %s10528
          %p10530 = scmp.lt.s32.totalorder %s10529, 64
          %s10531 = scalar_select %p10530, %s10529, 64
          %s10532 = smul.u32 8, %s10531
          %p10533 = scmp.ne.s32.totalorder 0, %s10532
          %s10534 = smul.addr %s22, 126
          %s10535 = sadd.s32 %s10528, %s10534
          %s10536 = smul.addr %s10535, 8
          %s10537 = scalar_lea.vmem %s5, %s10536
          // Predicated region
          $region53: #{positional_embedding.1} parent=51 // pred_check
            %p10538 = pneg %p10533
          $region54: #{positional_embedding.1} parent=51 // pred_check_branch
            %10540 = sbr.rel (%p10538) target = $region56
          $region55: #{positional_embedding.1} parent=51 // pred_region
            // Predicated region
            $region57: #{positional_embedding.1} parent=55 // pred_check
              _
            $region58: #{positional_embedding.1} parent=55 // pred_check_branch
              %10542 = sbr.rel (0) target = $region60
            $region59: #{positional_embedding.1} parent=55 // pred_region
              // Predicated region
              $region79: #{positional_embedding.1} parent=59 // pred_check
                _
              $region80: #{positional_embedding.1} parent=59 // pred_check_branch
                %10654 = sbr.rel (0) target = $region82
              $region81: #{positional_embedding.1} parent=59 // pred_region
                %s10655 = sshrl.u32 %s10531, 5
                // While loop
                $region83: #{positional_embedding.1} parent=81 // loop_pre_header
                  _
                $region84: #{positional_embedding.1} parent=81 // loop_header
                  %s10657 = sphi 0, %s10659
                  %p10658 = scmp.ge.s32.totalorder %s10657, %s10655
                  %s10662 = sphi 0, %s10731
                  %s10663 = sphi %s10524, %s10734
                  %s10664 = sphi %s10537, %s10735
                $region85: #{positional_embedding.1} parent=81 // loop_header_branch
                  %10661 = sbr.rel (%p10658) target = $region89
                $region86: #{positional_embedding.1} parent=81 // loop_body
                  %v10665 = vld [vmem:[%s10663] sm:$0xff]
                  %10666 = vst [vmem:[%s10664] sm:$0xff] %v10665
                  %v10667 = vld [vmem:[%s10663 + $0x8] sm:$0xff]
                  %10668 = vst [vmem:[%s10664 + $0x8] sm:$0xff] %v10667
                  %v10669 = vld [vmem:[%s10663 + $0x10] sm:$0xff]
                  %10670 = vst [vmem:[%s10664 + $0x10] sm:$0xff] %v10669
                  %v10671 = vld [vmem:[%s10663 + $0x18] sm:$0xff]
                  %10672 = vst [vmem:[%s10664 + $0x18] sm:$0xff] %v10671
                  %v10673 = vld [vmem:[%s10663 + $0x20] sm:$0xff]
                  %10674 = vst [vmem:[%s10664 + $0x20] sm:$0xff] %v10673
                  %v10675 = vld [vmem:[%s10663 + $0x28] sm:$0xff]
                  %10676 = vst [vmem:[%s10664 + $0x28] sm:$0xff] %v10675
                  %v10677 = vld [vmem:[%s10663 + $0x30] sm:$0xff]
                  %10678 = vst [vmem:[%s10664 + $0x30] sm:$0xff] %v10677
                  %v10679 = vld [vmem:[%s10663 + $0x38] sm:$0xff]
                  %10680 = vst [vmem:[%s10664 + $0x38] sm:$0xff] %v10679
                  %v10681 = vld [vmem:[%s10663 + $0x40] sm:$0xff]
                  %10682 = vst [vmem:[%s10664 + $0x40] sm:$0xff] %v10681
                  %v10683 = vld [vmem:[%s10663 + $0x48] sm:$0xff]
                  %10684 = vst [vmem:[%s10664 + $0x48] sm:$0xff] %v10683
                  %v10685 = vld [vmem:[%s10663 + $0x50] sm:$0xff]
                  %10686 = vst [vmem:[%s10664 + $0x50] sm:$0xff] %v10685
                  %v10687 = vld [vmem:[%s10663 + $0x58] sm:$0xff]
                  %10688 = vst [vmem:[%s10664 + $0x58] sm:$0xff] %v10687
                  %v10689 = vld [vmem:[%s10663 + $0x60] sm:$0xff]
                  %10690 = vst [vmem:[%s10664 + $0x60] sm:$0xff] %v10689
                  %v10691 = vld [vmem:[%s10663 + $0x68] sm:$0xff]
                  %10692 = vst [vmem:[%s10664 + $0x68] sm:$0xff] %v10691
                  %v10693 = vld [vmem:[%s10663 + $0x70] sm:$0xff]
                  %10694 = vst [vmem:[%s10664 + $0x70] sm:$0xff] %v10693
                  %v10695 = vld [vmem:[%s10663 + $0x78] sm:$0xff]
                  %10696 = vst [vmem:[%s10664 + $0x78] sm:$0xff] %v10695
                  %v10697 = vld [vmem:[%s10663 + $0x80] sm:$0xff]
                  %10698 = vst [vmem:[%s10664 + $0x80] sm:$0xff] %v10697
                  %v10699 = vld [vmem:[%s10663 + $0x88] sm:$0xff]
                  %10700 = vst [vmem:[%s10664 + $0x88] sm:$0xff] %v10699
                  %v10701 = vld [vmem:[%s10663 + $0x90] sm:$0xff]
                  %10702 = vst [vmem:[%s10664 + $0x90] sm:$0xff] %v10701
                  %v10703 = vld [vmem:[%s10663 + $0x98] sm:$0xff]
                  %10704 = vst [vmem:[%s10664 + $0x98] sm:$0xff] %v10703
                  %v10705 = vld [vmem:[%s10663 + $0xa0] sm:$0xff]
                  %10706 = vst [vmem:[%s10664 + $0xa0] sm:$0xff] %v10705
                  %v10707 = vld [vmem:[%s10663 + $0xa8] sm:$0xff]
                  %10708 = vst [vmem:[%s10664 + $0xa8] sm:$0xff] %v10707
                  %v10709 = vld [vmem:[%s10663 + $0xb0] sm:$0xff]
                  %10710 = vst [vmem:[%s10664 + $0xb0] sm:$0xff] %v10709
                  %v10711 = vld [vmem:[%s10663 + $0xb8] sm:$0xff]
                  %10712 = vst [vmem:[%s10664 + $0xb8] sm:$0xff] %v10711
                  %v10713 = vld [vmem:[%s10663 + $0xc0] sm:$0xff]
                  %10714 = vst [vmem:[%s10664 + $0xc0] sm:$0xff] %v10713
                  %v10715 = vld [vmem:[%s10663 + $0xc8] sm:$0xff]
                  %10716 = vst [vmem:[%s10664 + $0xc8] sm:$0xff] %v10715
                  %v10717 = vld [vmem:[%s10663 + $0xd0] sm:$0xff]
                  %10718 = vst [vmem:[%s10664 + $0xd0] sm:$0xff] %v10717
                  %v10719 = vld [vmem:[%s10663 + $0xd8] sm:$0xff]
                  %10720 = vst [vmem:[%s10664 + $0xd8] sm:$0xff] %v10719
                  %v10721 = vld [vmem:[%s10663 + $0xe0] sm:$0xff]
                  %10722 = vst [vmem:[%s10664 + $0xe0] sm:$0xff] %v10721
                  %v10723 = vld [vmem:[%s10663 + $0xe8] sm:$0xff]
                  %10724 = vst [vmem:[%s10664 + $0xe8] sm:$0xff] %v10723
                  %v10725 = vld [vmem:[%s10663 + $0xf0] sm:$0xff]
                  %10726 = vst [vmem:[%s10664 + $0xf0] sm:$0xff] %v10725
                  %v10727 = vld [vmem:[%s10663 + $0xf8] sm:$0xff]
                  %10728 = vst [vmem:[%s10664 + $0xf8] sm:$0xff] %v10727
                  %s10729 = sadd.s32 1, %s10662
                  %p10730 = scmp.ge.s32.totalorder %s10729, %s10655
                  %s10731 = scalar_select %p10730, 0, %s10729
                  %s10732 = smul.u32 %s10731, 256
                  %s10733 = smul.u32 %s10731, 256
                  %s10734 = scalar_lea.vmem %s10524, %s10732 [#allocation6]
                  %s10735 = scalar_lea.vmem %s10537, %s10733
                $region87: #{positional_embedding.1} parent=81 // loop_footer
                  %s10659 = sadd.s32 %s10657, 1
                $region88: #{positional_embedding.1} parent=81 // loop_footer_branch
                  %10656 = sbr.rel target = $region84
                $region89: #{positional_embedding.1} parent=81 // loop_exit
                  _
                %s10736 = sshrl.u32 %s10531, 5
                %s10737 = sand.u32 %s10531, 31
                %s10738 = smul.u32 %s10736, 32
                %s10739 = smul.u32 8, %s10738
                %s10740 = scalar_lea.vmem %s10524, %s10739 [#allocation6]
                %s10741 = smul.u32 8, %s10738
                %s10742 = scalar_lea.vmem %s10537, %s10741
                // While loop
                $region90: #{positional_embedding.1} parent=81 // loop_pre_header
                  _
                $region91: #{positional_embedding.1} parent=81 // loop_header
                  %s10744 = sphi 0, %s10746
                  %p10745 = scmp.ge.s32.totalorder %s10744, %s10737
                  %s10749 = sphi 0, %s10756
                  %s10750 = sphi %s10740, %s10759
                  %s10751 = sphi %s10742, %s10760
                $region92: #{positional_embedding.1} parent=81 // loop_header_branch
                  %10748 = sbr.rel (%p10745) target = $region96
                $region93: #{positional_embedding.1} parent=81 // loop_body
                  %v10752 = vld [vmem:[%s10750] sm:$0xff]
                  %10753 = vst [vmem:[%s10751] sm:$0xff] %v10752
                  %s10754 = sadd.s32 1, %s10749
                  %p10755 = scmp.ge.s32.totalorder %s10754, %s10737
                  %s10756 = scalar_select %p10755, 0, %s10754
                  %s10757 = smul.u32 %s10756, 8
                  %s10758 = smul.u32 %s10756, 8
                  %s10759 = scalar_lea.vmem %s10740, %s10757 [#allocation6]
                  %s10760 = scalar_lea.vmem %s10742, %s10758
                $region94: #{positional_embedding.1} parent=81 // loop_footer
                  %s10746 = sadd.s32 %s10744, 1
                $region95: #{positional_embedding.1} parent=81 // loop_footer_branch
                  %10743 = sbr.rel target = $region91
                $region96: #{positional_embedding.1} parent=81 // loop_exit
                  _
              $region82: #{positional_embedding.1} parent=59 // pred_fallthru
                _
              // Predicated region
              $region97: #{positional_embedding.1} parent=59 // pred_check
                _
              $region98: #{positional_embedding.1} parent=59 // pred_check_branch
                %10762 = sbr.rel target = $region100
              $region99: #{positional_embedding.1} parent=59 // pred_region
                _
              $region100: #{positional_embedding.1} parent=59 // pred_fallthru
                _
            $region60: #{positional_embedding.1} parent=55 // pred_fallthru
              _
            // Predicated region
            $region61: #{positional_embedding.1} parent=55 // pred_check
              _
            $region62: #{positional_embedding.1} parent=55 // pred_check_branch
              %10544 = sbr.rel target = $region64
            $region63: #{positional_embedding.1} parent=55 // pred_region
              %s10546 = ssub.s32 256, 1
              %s10547 = sshrl.u32 %s10531, 5
              // While loop
              $region65: #{positional_embedding.1} parent=63 // loop_pre_header
                _
              $region66: #{positional_embedding.1} parent=63 // loop_header
                %s10549 = sphi 0, %s10551
                %p10550 = scmp.ge.s32.totalorder %s10549, %s10547
                %s10554 = sphi 0, %s10623
                %s10555 = sphi %s10524, %s10626
                %s10556 = sphi %s10537, %s10627
              $region67: #{positional_embedding.1} parent=63 // loop_header_branch
                %10553 = sbr.rel (%p10550) target = $region71
              $region68: #{positional_embedding.1} parent=63 // loop_body
                %v10557 = vld [vmem:[%s10555] sm:%s10546]
                %10558 = vst [vmem:[%s10556] sm:%s10546] %v10557
                %v10559 = vld [vmem:[%s10555 + $0x8] sm:%s10546]
                %10560 = vst [vmem:[%s10556 + $0x8] sm:%s10546] %v10559
                %v10561 = vld [vmem:[%s10555 + $0x10] sm:%s10546]
                %10562 = vst [vmem:[%s10556 + $0x10] sm:%s10546] %v10561
                %v10563 = vld [vmem:[%s10555 + $0x18] sm:%s10546]
                %10564 = vst [vmem:[%s10556 + $0x18] sm:%s10546] %v10563
                %v10565 = vld [vmem:[%s10555 + $0x20] sm:%s10546]
                %10566 = vst [vmem:[%s10556 + $0x20] sm:%s10546] %v10565
                %v10567 = vld [vmem:[%s10555 + $0x28] sm:%s10546]
                %10568 = vst [vmem:[%s10556 + $0x28] sm:%s10546] %v10567
                %v10569 = vld [vmem:[%s10555 + $0x30] sm:%s10546]
                %10570 = vst [vmem:[%s10556 + $0x30] sm:%s10546] %v10569
                %v10571 = vld [vmem:[%s10555 + $0x38] sm:%s10546]
                %10572 = vst [vmem:[%s10556 + $0x38] sm:%s10546] %v10571
                %v10573 = vld [vmem:[%s10555 + $0x40] sm:%s10546]
                %10574 = vst [vmem:[%s10556 + $0x40] sm:%s10546] %v10573
                %v10575 = vld [vmem:[%s10555 + $0x48] sm:%s10546]
                %10576 = vst [vmem:[%s10556 + $0x48] sm:%s10546] %v10575
                %v10577 = vld [vmem:[%s10555 + $0x50] sm:%s10546]
                %10578 = vst [vmem:[%s10556 + $0x50] sm:%s10546] %v10577
                %v10579 = vld [vmem:[%s10555 + $0x58] sm:%s10546]
                %10580 = vst [vmem:[%s10556 + $0x58] sm:%s10546] %v10579
                %v10581 = vld [vmem:[%s10555 + $0x60] sm:%s10546]
                %10582 = vst [vmem:[%s10556 + $0x60] sm:%s10546] %v10581
                %v10583 = vld [vmem:[%s10555 + $0x68] sm:%s10546]
                %10584 = vst [vmem:[%s10556 + $0x68] sm:%s10546] %v10583
                %v10585 = vld [vmem:[%s10555 + $0x70] sm:%s10546]
                %10586 = vst [vmem:[%s10556 + $0x70] sm:%s10546] %v10585
                %v10587 = vld [vmem:[%s10555 + $0x78] sm:%s10546]
                %10588 = vst [vmem:[%s10556 + $0x78] sm:%s10546] %v10587
                %v10589 = vld [vmem:[%s10555 + $0x80] sm:%s10546]
                %10590 = vst [vmem:[%s10556 + $0x80] sm:%s10546] %v10589
                %v10591 = vld [vmem:[%s10555 + $0x88] sm:%s10546]
                %10592 = vst [vmem:[%s10556 + $0x88] sm:%s10546] %v10591
                %v10593 = vld [vmem:[%s10555 + $0x90] sm:%s10546]
                %10594 = vst [vmem:[%s10556 + $0x90] sm:%s10546] %v10593
                %v10595 = vld [vmem:[%s10555 + $0x98] sm:%s10546]
                %10596 = vst [vmem:[%s10556 + $0x98] sm:%s10546] %v10595
                %v10597 = vld [vmem:[%s10555 + $0xa0] sm:%s10546]
                %10598 = vst [vmem:[%s10556 + $0xa0] sm:%s10546] %v10597
                %v10599 = vld [vmem:[%s10555 + $0xa8] sm:%s10546]
                %10600 = vst [vmem:[%s10556 + $0xa8] sm:%s10546] %v10599
                %v10601 = vld [vmem:[%s10555 + $0xb0] sm:%s10546]
                %10602 = vst [vmem:[%s10556 + $0xb0] sm:%s10546] %v10601
                %v10603 = vld [vmem:[%s10555 + $0xb8] sm:%s10546]
                %10604 = vst [vmem:[%s10556 + $0xb8] sm:%s10546] %v10603
                %v10605 = vld [vmem:[%s10555 + $0xc0] sm:%s10546]
                %10606 = vst [vmem:[%s10556 + $0xc0] sm:%s10546] %v10605
                %v10607 = vld [vmem:[%s10555 + $0xc8] sm:%s10546]
                %10608 = vst [vmem:[%s10556 + $0xc8] sm:%s10546] %v10607
                %v10609 = vld [vmem:[%s10555 + $0xd0] sm:%s10546]
                %10610 = vst [vmem:[%s10556 + $0xd0] sm:%s10546] %v10609
                %v10611 = vld [vmem:[%s10555 + $0xd8] sm:%s10546]
                %10612 = vst [vmem:[%s10556 + $0xd8] sm:%s10546] %v10611
                %v10613 = vld [vmem:[%s10555 + $0xe0] sm:%s10546]
                %10614 = vst [vmem:[%s10556 + $0xe0] sm:%s10546] %v10613
                %v10615 = vld [vmem:[%s10555 + $0xe8] sm:%s10546]
                %10616 = vst [vmem:[%s10556 + $0xe8] sm:%s10546] %v10615
                %v10617 = vld [vmem:[%s10555 + $0xf0] sm:%s10546]
                %10618 = vst [vmem:[%s10556 + $0xf0] sm:%s10546] %v10617
                %v10619 = vld [vmem:[%s10555 + $0xf8] sm:%s10546]
                %10620 = vst [vmem:[%s10556 + $0xf8] sm:%s10546] %v10619
                %s10621 = sadd.s32 1, %s10554
                %p10622 = scmp.ge.s32.totalorder %s10621, %s10547
                %s10623 = scalar_select %p10622, 0, %s10621
                %s10624 = smul.u32 %s10623, 256
                %s10625 = smul.u32 %s10623, 256
                %s10626 = scalar_lea.vmem %s10524, %s10624 [#allocation6]
                %s10627 = scalar_lea.vmem %s10537, %s10625
              $region69: #{positional_embedding.1} parent=63 // loop_footer
                %s10551 = sadd.s32 %s10549, 1
              $region70: #{positional_embedding.1} parent=63 // loop_footer_branch
                %10548 = sbr.rel target = $region66
              $region71: #{positional_embedding.1} parent=63 // loop_exit
                _
              %s10628 = sshrl.u32 %s10531, 5
              %s10629 = sand.u32 %s10531, 31
              %s10630 = smul.u32 %s10628, 32
              %s10631 = smul.u32 8, %s10630
              %s10632 = scalar_lea.vmem %s10524, %s10631 [#allocation6]
              %s10633 = smul.u32 8, %s10630
              %s10634 = scalar_lea.vmem %s10537, %s10633
              // While loop
              $region72: #{positional_embedding.1} parent=63 // loop_pre_header
                _
              $region73: #{positional_embedding.1} parent=63 // loop_header
                %s10636 = sphi 0, %s10638
                %p10637 = scmp.ge.s32.totalorder %s10636, %s10629
                %s10641 = sphi 0, %s10648
                %s10642 = sphi %s10632, %s10651
                %s10643 = sphi %s10634, %s10652
              $region74: #{positional_embedding.1} parent=63 // loop_header_branch
                %10640 = sbr.rel (%p10637) target = $region78
              $region75: #{positional_embedding.1} parent=63 // loop_body
                %v10644 = vld [vmem:[%s10642] sm:%s10546]
                %10645 = vst [vmem:[%s10643] sm:%s10546] %v10644
                %s10646 = sadd.s32 1, %s10641
                %p10647 = scmp.ge.s32.totalorder %s10646, %s10629
                %s10648 = scalar_select %p10647, 0, %s10646
                %s10649 = smul.u32 %s10648, 8
                %s10650 = smul.u32 %s10648, 8
                %s10651 = scalar_lea.vmem %s10632, %s10649 [#allocation6]
                %s10652 = scalar_lea.vmem %s10634, %s10650
              $region76: #{positional_embedding.1} parent=63 // loop_footer
                %s10638 = sadd.s32 %s10636, 1
              $region77: #{positional_embedding.1} parent=63 // loop_footer_branch
                %10635 = sbr.rel target = $region73
              $region78: #{positional_embedding.1} parent=63 // loop_exit
                _
            $region64: #{positional_embedding.1} parent=55 // pred_fallthru
              _
          $region56: #{positional_embedding.1} parent=51 // pred_fallthru
            _
          %10763 = vnop
        $region52: #{positional_embedding.1} parent=39 // pred_fallthru
          _
      $region40: #{positional_embedding.1} parent=5 // pred_fallthru
        _
      %p10764 = scmp.le.s32.totalorder 2, %s13
      // Predicated region
      $region101: #{positional_embedding.1} parent=5 // pred_check
        %p10765 = pneg %p10764
      $region102: #{positional_embedding.1} parent=5 // pred_check_branch
        %10767 = sbr.rel (%p10765) target = $region104
      $region103: #{positional_embedding.1} parent=5 // pred_region
        %s10768 = ssub.s32 %s13, 2
        // Predicated region
        $region105: #{positional_embedding.1} parent=103 // pred_check
          %p10769 = pneg %p166
        $region106: #{positional_embedding.1} parent=103 // pred_check_branch
          %10771 = sbr.rel (%p10769) target = $region108
        $region107: #{positional_embedding.1} parent=103 // pred_region
          %s10772 = sand.u32 %s151, 1
          %s10773 = sand.u32 %s151, 1
          %s10774 = smul.addr %s10773, 512
          %s10775 = scalar_lea.vmem [#allocation6], %s10774
        $region108: #{positional_embedding.1} parent=103 // pred_fallthru
          _
      $region104: #{positional_embedding.1} parent=5 // pred_fallthru
        _
    $region6: #{positional_embedding.1} parent=1 // loop_footer
      %s17 = sadd.s32 1, %s13
    $region7: #{positional_embedding.1} parent=1 // loop_footer_branch
      %12 = sbr.rel target = $region3
    $region8: #{positional_embedding.1} parent=1 // loop_exit
      _
    %10776 = vsyncpa [#allocation3], 1
    %s10777 = scalar_lea.sflag [#allocation3], 1
    %10778 = vsyncpa %s10777, 1
    %10779 = vsyncpa [#allocation5], 1

</llo_original>
